<compile_context>
chip_gen: v6e
topology: v6e:2x2x1
jax: 0.10.0
libtpu: 0.0.40
codegen_flags: <defaults>
</compile_context>

<pallas_src>
import math
import functools

import jax
import jax.numpy as jnp
from jax import lax
from jax.experimental import pallas as pl
from jax.experimental.pallas import tpu as pltpu

CHANNEL_GROUPS = [[0, 1, 2, 3], [4, 5, 6, 7], [8, 9, 10, 11], [12, 13, 14, 15, 16]]

_F32 = jnp.float32
_BF16 = jnp.bfloat16


def _round_up(x, m):
    return (x + m - 1) // m * m


# ------------------------------------------------------------------ in-kernel helpers

def _mm(a, b_):
    return lax.dot_general(a, b_, (((1,), (0,)), ((), ())),
                           preferred_element_type=_F32)


def _mm_nt(a, b_):
    return lax.dot_general(a, b_, (((1,), (1,)), ((), ())),
                           preferred_element_type=_F32)


def _layernorm(x, g, b, dmask, d_real, eps=1e-5):
    """Two-pass LayerNorm over the first d_real features of a lane-padded slab.

    Pad lanes of x are exactly 0 (so sum(x) over the padded width equals the sum over
    the real features); (x - mu) is re-masked before the variance so pad lanes do not
    bias it; zero gamma/beta pads keep pad lanes at exactly 0 in the output.
    """
    inv_n = 1.0 / d_real
    mu = jnp.sum(x, axis=-1, keepdims=True) * inv_n
    xc = (x - mu) * dmask
    var = jnp.sum(xc * xc, axis=-1, keepdims=True) * inv_n
    return xc * lax.rsqrt(var + eps) * g + b


def _gelu_tanh(x):
    # TODO(synk): tanh-approx GELU (EUP tanh); PyTorch nn.GELU default is erf-exact.
    c = math.sqrt(2.0 / math.pi)
    return 0.5 * x * (1.0 + jnp.tanh(c * (x + 0.044715 * x * x * x)))


# ------------------------------------------------------------------ fused kernel

def _fused_forward_kernel(x_ref, emb_w_ref, emb_b_ref,
                          wqkv_ref, bqkv_ref, wo_ref, bo_ref,
                          ln1g_ref, ln1b_ref, w1_ref, b1_ref,
                          w2_ref, b2_ref, ln2g_ref, ln2b_ref,
                          pool_ref, pinv_ref, cw1_ref, cb1_ref, cw2_ref, cb2_ref,
                          z_ref, logit_ref, h_ref,
                          *, nhead, dhp, scale, d_real):
    l = pl.program_id(1)

    # ---- l == 0: fused patch-embedding matmul initializes the resident activation ----
    @pl.when(l == 0)
    def _():
        h_ref[...] = _mm(x_ref[0], emb_w_ref[...]) + emb_b_ref[...]

    h = h_ref[...]                                          # [S, Dp] f32, pad lanes = 0
    sdim, dp = h.shape
    dmask = (lax.broadcasted_iota(jnp.int32, (1, dp), 1) < d_real).astype(_F32)

    # ---- fused QKV projection: single lane-dense MXU pass, N = 3*Dp ----
    qkv = _mm(h.astype(_BF16), wqkv_ref[0]) + bqkv_ref[0]   # [S, 3*Dp] f32
    q = qkv[:, 0 * dp:1 * dp]                               # 128-aligned value slices
    k = qkv[:, 1 * dp:2 * dp]
    v = qkv[:, 2 * dp:3 * dp]

    # ---- multi-head attention, processed per 128-lane half (4 heads per half).
    #      K of Q@K^T and N of P@V are 128 instead of 256 (halves the redundant
    #      contraction on v5e's 128-wide MXU; neutral on v6e/v7x), and per-head
    #      mask-multiplies act on [S,128] halves instead of [S,256].
    half = dp // 2
    hph = nhead // 2
    lane = lax.broadcasted_iota(jnp.int32, (1, half), 1)
    halves = []
    for hf in range(2):
        qh = q[:, hf * half:(hf + 1) * half]
        kh = k[:, hf * half:(hf + 1) * half].astype(_BF16)
        vh = v[:, hf * half:(hf + 1) * half]
        acc = jnp.zeros((sdim, half), _F32)
        for j in range(hph):
            m = ((lane >= j * dhp) & (lane < (j + 1) * dhp)).astype(_F32)
            s = _mm_nt((qh * m).astype(_BF16), kh) * scale          # [S, S] f32
            s = s - jnp.max(s, axis=-1, keepdims=True)
            p = jnp.exp(s)
            p = p * (1.0 / jnp.sum(p, axis=-1, keepdims=True))      # exact reciprocal
            acc = acc + _mm(p.astype(_BF16), (vh * m).astype(_BF16))
        halves.append(acc)
    attn_cat = jnp.concatenate(halves, axis=-1)             # [S, Dp], head-concat layout

    attn = _mm(attn_cat.astype(_BF16), wo_ref[0]) + bo_ref[0]
    h1 = _layernorm(h + attn, ln1g_ref[0], ln1b_ref[0], dmask, d_real)

    # ---- feed-forward (Fp = 896 lanes) ----
    f = _mm(h1.astype(_BF16), w1_ref[0]) + b1_ref[0]
    f = _gelu_tanh(f)
    f2 = _mm(f.astype(_BF16), w2_ref[0]) + b2_ref[0]
    h2 = _layernorm(h1 + f2, ln2g_ref[0], ln2b_ref[0], dmask, d_real)

    h_ref[...] = h2                                         # stays resident for layer l+1

    # ---- l == L-1: fused region mean-pool + classifier head ----
    @pl.when(l == pl.num_programs(1) - 1)
    def _():
        # binary selection matrix on the MXU, exact f32 1/count scale afterwards
        zp = _mm(pool_ref[...].astype(_BF16), h2.astype(_BF16)) * pinv_ref[...]
        z_ref[0] = zp                                       # [G, Dp] lane-dense
        # Linear(G*d_model -> 512) as G row-slice matmuls (no XLU mask-reductions)
        hc = cb1_ref[...]
        for g in range(cw1_ref.shape[0]):
            hc = hc + _mm(zp[g:g + 1].astype(_BF16), cw1_ref[g])    # [1, 512]
        hc = jnp.where(hc > 0, hc, jnp.exp(jnp.minimum(hc, 0.0)) - 1.0)   # ELU(alpha=1)
        # Dropout is eval-mode identity.
        logit_ref[0] = _mm(hc.astype(_BF16), cw2_ref[...]) + cb2_ref[...]  # [1, 128]


# ------------------------------------------------------------------ pallas_call wrapper

def _fused_forward(x_pad, pool, pinv, params, *, nhead, d_model):
    B, S, Dinp = x_pad.shape
    Dp = params["emb_w"].shape[1]
    L = params["wqkv"].shape[0]
    G = pool.shape[0]
    NCp = params["cls_w2"].shape[-1]
    dh = d_model // nhead
    dhp = Dp // nhead

    layer_keys = ("wqkv", "bqkv", "wo", "bo", "ln1_g", "ln1_b",
                  "w1", "b1", "w2", "b2", "ln2_g", "ln2_b")
    layer_args = [params[k] for k in layer_keys]
    head_args = [pool, pinv, params["cls_w1"], params["cls_b1"],
                 params["cls_w2"], params["cls_b2"]]

    def layer_spec(a):       # streamed per layer: prefetched under previous layer's compute
        return pl.BlockSpec((1,) + a.shape[1:], lambda b, l: (l, 0, 0))

    def const_spec(a):       # constant block index: DMA'd once, stays resident in VMEM
        nd = a.ndim
        return pl.BlockSpec(a.shape, lambda b, l, _nd=nd: (0,) * _nd)

    kernel = functools.partial(_fused_forward_kernel, nhead=nhead, dhp=dhp,
                               scale=1.0 / math.sqrt(dh), d_real=d_model)

    return pl.pallas_call(
        kernel,
        out_shape=(jax.ShapeDtypeStruct((B, G, Dp), _F32),
                   jax.ShapeDtypeStruct((B, 1, NCp), _F32)),
        grid=(B, L),
        in_specs=[pl.BlockSpec((1, S, Dinp), lambda b, l: (b, 0, 0)),
                  const_spec(params["emb_w"]), const_spec(params["emb_b"])]
                 + [layer_spec(a) for a in layer_args]
                 + [const_spec(a) for a in head_args],
        out_specs=(pl.BlockSpec((1, G, Dp), lambda b, l: (b, 0, 0)),
                   pl.BlockSpec((1, 1, NCp), lambda b, l: (b, 0, 0))),
        scratch_shapes=[pltpu.VMEM((S, Dp), _F32)],          # resident activation h
        compiler_params=pltpu.CompilerParams(
            dimension_semantics=("parallel", "arbitrary")),   # batch across TCs (v7x)
    )(x_pad, params["emb_w"], params["emb_b"], *layer_args, *head_args)


# ------------------------------------------------------------------ params / forward

def init_params(key, *, d_model=200, in_dim=200, n_layer=2, dim_ff=800,
                nhead=8, hidden=512, num_classes=3):
    G = len(CHANNEL_GROUPS)
    dh = d_model // nhead                       # 25
    Dp = _round_up(d_model, 128)                # 256  (lane-aligned d_model)
    assert Dp % nhead == 0 and nhead % 2 == 0
    dhp = Dp // nhead                           # 32   (per-head lane band)
    Fp = _round_up(dim_ff, 128)                 # 896  (7*128, per review)
    Dinp = _round_up(in_dim, 128)               # 256  (lane-dense embed K)
    NCp = _round_up(num_classes, 128)           # 128  (lane-dense logits slab)

    def nrm(k, shape, std=0.02):
        return std * jax.random.normal(k, shape, dtype=_F32)

    keys = jax.random.split(key, 3 + n_layer)

    ones_pad = jnp.pad(jnp.ones((d_model,), _F32), (0, Dp - d_model)).reshape(1, Dp)
    zeros_dp = jnp.zeros((1, Dp), _F32)

    def head_pad_cols(w):
        # [d_model, d_model] -> [Dp, Dp]; original column h*dh+j -> padded h*dhp+j.
        w3 = w.reshape(d_model, nhead, dh)
        w3 = jnp.pad(w3, ((0, Dp - d_model), (0, 0), (0, dhp - dh)))
        return w3.reshape(Dp, nhead * dhp)

    def head_pad_rows(w):
        # [d_model, d_model] -> [Dp, Dp]; original row h*dh+j -> padded h*dhp+j.
        w3 = w.reshape(nhead, dh, d_model)
        w3 = jnp.pad(w3, ((0, 0), (0, dhp - dh), (0, Dp - d_model)))
        return w3.reshape(nhead * dhp, Dp)

    params = {
        "emb_w": jnp.pad(nrm(keys[0], (in_dim, d_model)),
                         ((0, Dinp - in_dim), (0, Dp - d_model))).astype(_BF16),
        "emb_b": jnp.zeros((1, Dp), _F32),
        "cls_w1": jnp.pad(nrm(keys[1], (G * d_model, hidden)).reshape(G, d_model, hidden),
                          ((0, 0), (0, Dp - d_model), (0, 0))).astype(_BF16),
        "cls_b1": jnp.zeros((1, hidden), _F32),
        "cls_w2": jnp.pad(nrm(keys[2], (hidden, num_classes)),
                          ((0, 0), (0, NCp - num_classes))).astype(_BF16),
        "cls_b2": jnp.zeros((1, NCp), _F32),
    }

    per_layer = {k: [] for k in ("wqkv", "bqkv", "wo", "bo", "ln1_g", "ln1_b",
                                 "w1", "b1", "w2", "b2", "ln2_g", "ln2_b")}
    for li in range(n_layer):
        lk = jax.random.split(keys[3 + li], 6)
        wq, wk, wv, wo = (nrm(lk[i], (d_model, d_model)) for i in range(4))
        w1 = nrm(lk[4], (d_model, dim_ff))
        w2 = nrm(lk[5], (dim_ff, d_model))
        per_layer["wqkv"].append(jnp.concatenate(
            [head_pad_cols(wq), head_pad_cols(wk), head_pad_cols(wv)],
            axis=1).astype(_BF16))
        per_layer["bqkv"].append(jnp.zeros((1, 3 * Dp), _F32))
        per_layer["wo"].append(head_pad_rows(wo).astype(_BF16))
        per_layer["bo"].append(zeros_dp)
        per_layer["ln1_g"].append(ones_pad)
        per_layer["ln1_b"].append(zeros_dp)
        per_layer["w1"].append(
            jnp.pad(w1, ((0, Dp - d_model), (0, Fp - dim_ff))).astype(_BF16))
        per_layer["b1"].append(jnp.zeros((1, Fp), _F32))
        per_layer["w2"].append(
            jnp.pad(w2, ((0, Fp - dim_ff), (0, Dp - d_model))).astype(_BF16))
        per_layer["b2"].append(zeros_dp)
        per_layer["ln2_g"].append(ones_pad)
        per_layer["ln2_b"].append(zeros_dp)

    # stack per-layer weights along a leading layer axis so the fused kernel can
    # stream them with grid=(B, L) and index_map=lambda b,l:(l,0,0)
    for k_, vlist in per_layer.items():
        params[k_] = jnp.stack(vlist, axis=0)
    return params


def cbramod_text_classifier_forward(params, x, *, nhead=8, d_model=200, num_classes=3):
    """Returns (z, logits) exactly as the PyTorch module's forward (eval mode)."""
    B, C, P, Din = x.shape
    S = C * P
    Dinp, Dp = params["emb_w"].shape

    # host-side prep (plain XLA): flatten patches, zero-pad feature dim, cast to bf16
    xs = jnp.pad(x.reshape(B, S, Din),
                 ((0, 0), (0, 0), (0, Dinp - Din))).astype(_BF16)

    # region mean-pool as a binary selection matrix (exact in bf16) plus an exact
    # f32 1/count column scale applied inside the kernel.
    G = len(CHANNEL_GROUPS)
    pool_rows, inv_cnt = [], []
    for idxs in CHANNEL_GROUPS:
        row = [0.0] * S
        for c in idxs:
            for p_ in range(P):
                row[c * P + p_] = 1.0
        pool_rows.append(row)
        inv_cnt.append(1.0 / (len(idxs) * P))
    pool = jnp.asarray(pool_rows, dtype=_F32)            # [G, S]
    pinv = jnp.asarray(inv_cnt, dtype=_F32).reshape(G, 1)

    z_pad, logits_pad = _fused_forward(xs, pool, pinv, params,
                                       nhead=nhead, d_model=d_model)
    z = z_pad[:, :, :d_model].reshape(B, G * d_model)    # drop lane padding (XLA)
    logits = logits_pad[:, 0, :num_classes]
    return z, logits


# ------------------------------------------------------------------ main

if __name__ == "__main__":
    # 17 EEG channels (required by CHANNEL_GROUPS), 4 patches of 200 samples each,
    # d_model=200, 2 encoder layers (real CBraMod uses 12), 3 classes.
    B, C, P, Din = 2, 17, 4, 200
    key = jax.random.PRNGKey(0)
    kx, kp = jax.random.split(key)
    x = jax.random.normal(kx, (B, C, P, Din), dtype=jnp.float32)
    params = init_params(kp, d_model=200, in_dim=Din, n_layer=2,
                         dim_ff=800, nhead=8, hidden=512, num_classes=3)

    fwd = jax.jit(functools.partial(cbramod_text_classifier_forward,
                                    nhead=8, d_model=200, num_classes=3))
    z, logits = fwd(params, x)
    jax.block_until_ready((z, logits))

    assert z.shape == (B, len(CHANNEL_GROUPS) * 200), z.shape
    assert logits.shape == (B, 3), logits.shape
    assert bool(jnp.all(jnp.isfinite(z))) and bool(jnp.all(jnp.isfinite(logits)))
    print("KERNEL_OK")
</pallas_src>

<mosaic_0001>
module attributes {stable_mosaic.version = 11 : i64} {
  func.func @_fused_forward_kernel(%arg0: i32, %arg1: i32, %arg2: memref<1x68x256xbf16, #tpu.memory_space<vmem>>, %arg3: memref<256x256xbf16, #tpu.memory_space<vmem>>, %arg4: memref<1x256xf32, #tpu.memory_space<vmem>>, %arg5: memref<1x256x768xbf16, #tpu.memory_space<vmem>>, %arg6: memref<1x1x768xf32, #tpu.memory_space<vmem>>, %arg7: memref<1x256x256xbf16, #tpu.memory_space<vmem>>, %arg8: memref<1x1x256xf32, #tpu.memory_space<vmem>>, %arg9: memref<1x1x256xf32, #tpu.memory_space<vmem>>, %arg10: memref<1x1x256xf32, #tpu.memory_space<vmem>>, %arg11: memref<1x256x896xbf16, #tpu.memory_space<vmem>>, %arg12: memref<1x1x896xf32, #tpu.memory_space<vmem>>, %arg13: memref<1x896x256xbf16, #tpu.memory_space<vmem>>, %arg14: memref<1x1x256xf32, #tpu.memory_space<vmem>>, %arg15: memref<1x1x256xf32, #tpu.memory_space<vmem>>, %arg16: memref<1x1x256xf32, #tpu.memory_space<vmem>>, %arg17: memref<4x68xf32, #tpu.memory_space<vmem>>, %arg18: memref<4x1xf32, #tpu.memory_space<vmem>>, %arg19: memref<4x256x512xbf16, #tpu.memory_space<vmem>>, %arg20: memref<1x512xf32, #tpu.memory_space<vmem>>, %arg21: memref<512x128xbf16, #tpu.memory_space<vmem>>, %arg22: memref<1x128xf32, #tpu.memory_space<vmem>>, %arg23: memref<1x4x256xf32, #tpu.memory_space<vmem>>, %arg24: memref<1x1x128xf32, #tpu.memory_space<vmem>>, %arg25: memref<68x256xf32, #tpu.memory_space<vmem>>) attributes {dimension_semantics = [#tpu.dimension_semantics<parallel>, #tpu.dimension_semantics<arbitrary>], iteration_bounds = array<i64: 2, 2>, scalar_prefetch = 0 : i64, scratch_operands = 1 : i64, tpu.core_type = #tpu.core_type<tc>, window_params = [{transform_indices = @transform_0, window_bounds = array<i64: 1, 68, 256>}, {pipeline_mode = #tpu.pipeline_mode<synchronous>, transform_indices = @transform_1, window_bounds = array<i64: 256, 256>}, {pipeline_mode = #tpu.pipeline_mode<synchronous>, transform_indices = @transform_2, window_bounds = array<i64: 1, 256>}, {transform_indices = @transform_3, window_bounds = array<i64: 1, 256, 768>}, {transform_indices = @transform_4, window_bounds = array<i64: 1, 1, 768>}, {transform_indices = @transform_5, window_bounds = array<i64: 1, 256, 256>}, {transform_indices = @transform_6, window_bounds = array<i64: 1, 1, 256>}, {transform_indices = @transform_7, window_bounds = array<i64: 1, 1, 256>}, {transform_indices = @transform_8, window_bounds = array<i64: 1, 1, 256>}, {transform_indices = @transform_9, window_bounds = array<i64: 1, 256, 896>}, {transform_indices = @transform_10, window_bounds = array<i64: 1, 1, 896>}, {transform_indices = @transform_11, window_bounds = array<i64: 1, 896, 256>}, {transform_indices = @transform_12, window_bounds = array<i64: 1, 1, 256>}, {transform_indices = @transform_13, window_bounds = array<i64: 1, 1, 256>}, {transform_indices = @transform_14, window_bounds = array<i64: 1, 1, 256>}, {pipeline_mode = #tpu.pipeline_mode<synchronous>, transform_indices = @transform_15, window_bounds = array<i64: 4, 68>}, {pipeline_mode = #tpu.pipeline_mode<synchronous>, transform_indices = @transform_16, window_bounds = array<i64: 4, 1>}, {pipeline_mode = #tpu.pipeline_mode<synchronous>, transform_indices = @transform_17, window_bounds = array<i64: 4, 256, 512>}, {pipeline_mode = #tpu.pipeline_mode<synchronous>, transform_indices = @transform_18, window_bounds = array<i64: 1, 512>}, {pipeline_mode = #tpu.pipeline_mode<synchronous>, transform_indices = @transform_19, window_bounds = array<i64: 512, 128>}, {pipeline_mode = #tpu.pipeline_mode<synchronous>, transform_indices = @transform_20, window_bounds = array<i64: 1, 128>}, {transform_indices = @transform_21, window_bounds = array<i64: 1, 4, 256>}, {transform_indices = @transform_22, window_bounds = array<i64: 1, 1, 128>}]} {
    %c0_i32 = arith.constant 0 : i32
    %0 = arith.cmpi eq, %arg1, %c0_i32 : i32
    %1 = arith.extui %0 : i1 to i32
    %c0_i32_0 = arith.constant 0 : i32
    %2 = arith.cmpi ne, %1, %c0_i32_0 : i32
    scf.if %2 {
      %c0_120 = arith.constant 0 : index
      %c0_121 = arith.constant 0 : index
      %c0_122 = arith.constant 0 : index
      %367 = vector.load %arg2[%c0_120, %c0_121, %c0_122] : memref<1x68x256xbf16, #tpu.memory_space<vmem>>, vector<1x68x256xbf16>
      %368 = vector.shape_cast %367 : vector<1x68x256xbf16> to vector<68x256xbf16>
      %c0_123 = arith.constant 0 : index
      %c0_124 = arith.constant 0 : index
      %369 = vector.load %arg3[%c0_123, %c0_124] : memref<256x256xbf16, #tpu.memory_space<vmem>>, vector<256x256xbf16>
      %cst_125 = arith.constant dense<0.000000e+00> : vector<68x256xf32>
      %370 = tpu.matmul %368, %369, %cst_125 {dimension_numbers = #tpu.dot_dimension_numbers<[1], [0], [0], [1], [0, 0, 1, 1], [], []>} : vector<68x256xbf16>, vector<256x256xbf16>, vector<68x256xf32> -> vector<68x256xf32>
      %c0_126 = arith.constant 0 : index
      %c0_127 = arith.constant 0 : index
      %371 = vector.load %arg4[%c0_126, %c0_127] : memref<1x256xf32, #tpu.memory_space<vmem>>, vector<1x256xf32>
      %372 = vector.broadcast %371 : vector<1x256xf32> to vector<68x256xf32>
      %373 = arith.addf %370, %372 : vector<68x256xf32>
      %c0_128 = arith.constant 0 : index
      %c0_129 = arith.constant 0 : index
      %374 = vector.load %arg25[%c0_128, %c0_129] : memref<68x256xf32, #tpu.memory_space<vmem>>, vector<68x256xf32>
      tpu.vector_store %arg25[%c0_128, %c0_129], %373 {strides = array<i32>} : memref<68x256xf32, #tpu.memory_space<vmem>>, vector<68x256xf32>,
    } else {
    }
    %c0 = arith.constant 0 : index
    %c0_1 = arith.constant 0 : index
    %3 = vector.load %arg25[%c0, %c0_1] : memref<68x256xf32, #tpu.memory_space<vmem>>, vector<68x256xf32>
    %4 = tpu.iota {dimensions = array<i32: 1>} : vector<1x256xi32>
    %c200_i32 = arith.constant 200 : i32
    %5 = vector.broadcast %c200_i32 : i32 to vector<1x256xi32>
    %6 = arith.cmpi slt, %4, %5 : vector<1x256xi32>
    %7 = arith.extui %6 : vector<1x256xi1> to vector<1x256xi32>
    %8 = arith.sitofp %7 : vector<1x256xi32> to vector<1x256xf32>
    %9 = arith.truncf %3 : vector<68x256xf32> to vector<68x256xbf16>
    %c0_2 = arith.constant 0 : index
    %c0_3 = arith.constant 0 : index
    %c0_4 = arith.constant 0 : index
    %10 = vector.load %arg5[%c0_2, %c0_3, %c0_4] : memref<1x256x768xbf16, #tpu.memory_space<vmem>>, vector<1x256x768xbf16>
    %11 = vector.shape_cast %10 : vector<1x256x768xbf16> to vector<256x768xbf16>
    %cst = arith.constant dense<0.000000e+00> : vector<68x768xf32>
    %12 = tpu.matmul %9, %11, %cst {dimension_numbers = #tpu.dot_dimension_numbers<[1], [0], [0], [1], [0, 0, 1, 1], [], []>} : vector<68x256xbf16>, vector<256x768xbf16>, vector<68x768xf32> -> vector<68x768xf32>
    %c0_5 = arith.constant 0 : index
    %c0_6 = arith.constant 0 : index
    %c0_7 = arith.constant 0 : index
    %13 = vector.load %arg6[%c0_5, %c0_6, %c0_7] : memref<1x1x768xf32, #tpu.memory_space<vmem>>, vector<1x1x768xf32>
    %14 = vector.shape_cast %13 : vector<1x1x768xf32> to vector<1x768xf32>
    %15 = vector.broadcast %14 : vector<1x768xf32> to vector<68x768xf32>
    %16 = arith.addf %12, %15 : vector<68x768xf32>
    %17 = vector.extract_strided_slice %16 {offsets = [0, 0], sizes = [68, 256], strides = [1, 1]} : vector<68x768xf32> to vector<68x256xf32>
    %18 = vector.extract_strided_slice %16 {offsets = [0, 256], sizes = [68, 256], strides = [1, 1]} : vector<68x768xf32> to vector<68x256xf32>
    %19 = vector.extract_strided_slice %16 {offsets = [0, 512], sizes = [68, 256], strides = [1, 1]} : vector<68x768xf32> to vector<68x256xf32>
    %20 = tpu.iota {dimensions = array<i32: 1>} : vector<1x128xi32>
    %21 = vector.extract_strided_slice %17 {offsets = [0, 0], sizes = [68, 128], strides = [1, 1]} : vector<68x256xf32> to vector<68x128xf32>
    %22 = vector.extract_strided_slice %18 {offsets = [0, 0], sizes = [68, 128], strides = [1, 1]} : vector<68x256xf32> to vector<68x128xf32>
    %23 = arith.truncf %22 : vector<68x128xf32> to vector<68x128xbf16>
    %24 = vector.extract_strided_slice %19 {offsets = [0, 0], sizes = [68, 128], strides = [1, 1]} : vector<68x256xf32> to vector<68x128xf32>
    %cst_8 = arith.constant 0.000000e+00 : f32
    %25 = vector.broadcast %cst_8 : f32 to vector<68x128xf32>
    %c0_i32_9 = arith.constant 0 : i32
    %26 = vector.broadcast %c0_i32_9 : i32 to vector<1x128xi32>
    %27 = arith.cmpi sge, %20, %26 : vector<1x128xi32>
    %c32_i32 = arith.constant 32 : i32
    %28 = vector.broadcast %c32_i32 : i32 to vector<1x128xi32>
    %29 = arith.cmpi slt, %20, %28 : vector<1x128xi32>
    %30 = arith.andi %27, %29 : vector<1x128xi1>
    %31 = arith.extui %30 : vector<1x128xi1> to vector<1x128xi32>
    %32 = arith.sitofp %31 : vector<1x128xi32> to vector<1x128xf32>
    %33 = vector.broadcast %32 : vector<1x128xf32> to vector<68x128xf32>
    %34 = arith.mulf %21, %33 : vector<68x128xf32>
    %35 = arith.truncf %34 : vector<68x128xf32> to vector<68x128xbf16>
    %cst_10 = arith.constant dense<0.000000e+00> : vector<68x68xf32>
    %36 = tpu.matmul %35, %23, %cst_10 {dimension_numbers = #tpu.dot_dimension_numbers<[1], [1], [0], [0], [0, 0, 1, 0], [], []>} : vector<68x128xbf16>, vector<68x128xbf16>, vector<68x68xf32> -> vector<68x68xf32>
    %cst_11 = arith.constant 2.000000e-01 : f32
    %37 = vector.broadcast %cst_11 : f32 to vector<68x68xf32>
    %38 = arith.mulf %36, %37 : vector<68x68xf32>
    %cst_12 = arith.constant dense<0xFF800000> : vector<68xf32>
    %39 = vector.multi_reduction <maximumf>, %38, %cst_12 [1] : vector<68x68xf32> to vector<68xf32>
    %40 = vector.shape_cast %39 : vector<68xf32> to vector<68x1xf32>
    %41 = vector.broadcast %40 : vector<68x1xf32> to vector<68x68xf32>
    %42 = arith.subf %38, %41 : vector<68x68xf32>
    %43 = math.exp %42 : vector<68x68xf32>
    %cst_13 = arith.constant dense<0.000000e+00> : vector<68xf32>
    %44 = vector.multi_reduction <add>, %43, %cst_13 [1] : vector<68x68xf32> to vector<68xf32>
    %45 = vector.shape_cast %44 : vector<68xf32> to vector<68x1xf32>
    %cst_14 = arith.constant 1.000000e+00 : f32
    %46 = vector.broadcast %cst_14 : f32 to vector<68x1xf32>
    %47 = arith.divf %46, %45 : vector<68x1xf32>
    %48 = vector.broadcast %47 : vector<68x1xf32> to vector<68x68xf32>
    %49 = arith.mulf %43, %48 : vector<68x68xf32>
    %50 = arith.truncf %49 : vector<68x68xf32> to vector<68x68xbf16>
    %51 = vector.broadcast %32 : vector<1x128xf32> to vector<68x128xf32>
    %52 = arith.mulf %24, %51 : vector<68x128xf32>
    %53 = arith.truncf %52 : vector<68x128xf32> to vector<68x128xbf16>
    %cst_15 = arith.constant dense<0.000000e+00> : vector<68x128xf32>
    %54 = tpu.matmul %50, %53, %cst_15 {dimension_numbers = #tpu.dot_dimension_numbers<[1], [0], [0], [1], [0, 0, 1, 1], [], []>} : vector<68x68xbf16>, vector<68x128xbf16>, vector<68x128xf32> -> vector<68x128xf32>
    %55 = arith.addf %25, %54 : vector<68x128xf32>
    %c32_i32_16 = arith.constant 32 : i32
    %56 = vector.broadcast %c32_i32_16 : i32 to vector<1x128xi32>
    %57 = arith.cmpi sge, %20, %56 : vector<1x128xi32>
    %c64_i32 = arith.constant 64 : i32
    %58 = vector.broadcast %c64_i32 : i32 to vector<1x128xi32>
    %59 = arith.cmpi slt, %20, %58 : vector<1x128xi32>
    %60 = arith.andi %57, %59 : vector<1x128xi1>
    %61 = arith.extui %60 : vector<1x128xi1> to vector<1x128xi32>
    %62 = arith.sitofp %61 : vector<1x128xi32> to vector<1x128xf32>
    %63 = vector.broadcast %62 : vector<1x128xf32> to vector<68x128xf32>
    %64 = arith.mulf %21, %63 : vector<68x128xf32>
    %65 = arith.truncf %64 : vector<68x128xf32> to vector<68x128xbf16>
    %cst_17 = arith.constant dense<0.000000e+00> : vector<68x68xf32>
    %66 = tpu.matmul %65, %23, %cst_17 {dimension_numbers = #tpu.dot_dimension_numbers<[1], [1], [0], [0], [0, 0, 1, 0], [], []>} : vector<68x128xbf16>, vector<68x128xbf16>, vector<68x68xf32> -> vector<68x68xf32>
    %cst_18 = arith.constant 2.000000e-01 : f32
    %67 = vector.broadcast %cst_18 : f32 to vector<68x68xf32>
    %68 = arith.mulf %66, %67 : vector<68x68xf32>
    %cst_19 = arith.constant dense<0xFF800000> : vector<68xf32>
    %69 = vector.multi_reduction <maximumf>, %68, %cst_19 [1] : vector<68x68xf32> to vector<68xf32>
    %70 = vector.shape_cast %69 : vector<68xf32> to vector<68x1xf32>
    %71 = vector.broadcast %70 : vector<68x1xf32> to vector<68x68xf32>
    %72 = arith.subf %68, %71 : vector<68x68xf32>
    %73 = math.exp %72 : vector<68x68xf32>
    %cst_20 = arith.constant dense<0.000000e+00> : vector<68xf32>
    %74 = vector.multi_reduction <add>, %73, %cst_20 [1] : vector<68x68xf32> to vector<68xf32>
    %75 = vector.shape_cast %74 : vector<68xf32> to vector<68x1xf32>
    %cst_21 = arith.constant 1.000000e+00 : f32
    %76 = vector.broadcast %cst_21 : f32 to vector<68x1xf32>
    %77 = arith.divf %76, %75 : vector<68x1xf32>
    %78 = vector.broadcast %77 : vector<68x1xf32> to vector<68x68xf32>
    %79 = arith.mulf %73, %78 : vector<68x68xf32>
    %80 = arith.truncf %79 : vector<68x68xf32> to vector<68x68xbf16>
    %81 = vector.broadcast %62 : vector<1x128xf32> to vector<68x128xf32>
    %82 = arith.mulf %24, %81 : vector<68x128xf32>
    %83 = arith.truncf %82 : vector<68x128xf32> to vector<68x128xbf16>
    %cst_22 = arith.constant dense<0.000000e+00> : vector<68x128xf32>
    %84 = tpu.matmul %80, %83, %cst_22 {dimension_numbers = #tpu.dot_dimension_numbers<[1], [0], [0], [1], [0, 0, 1, 1], [], []>} : vector<68x68xbf16>, vector<68x128xbf16>, vector<68x128xf32> -> vector<68x128xf32>
    %85 = arith.addf %55, %84 : vector<68x128xf32>
    %c64_i32_23 = arith.constant 64 : i32
    %86 = vector.broadcast %c64_i32_23 : i32 to vector<1x128xi32>
    %87 = arith.cmpi sge, %20, %86 : vector<1x128xi32>
    %c96_i32 = arith.constant 96 : i32
    %88 = vector.broadcast %c96_i32 : i32 to vector<1x128xi32>
    %89 = arith.cmpi slt, %20, %88 : vector<1x128xi32>
    %90 = arith.andi %87, %89 : vector<1x128xi1>
    %91 = arith.extui %90 : vector<1x128xi1> to vector<1x128xi32>
    %92 = arith.sitofp %91 : vector<1x128xi32> to vector<1x128xf32>
    %93 = vector.broadcast %92 : vector<1x128xf32> to vector<68x128xf32>
    %94 = arith.mulf %21, %93 : vector<68x128xf32>
    %95 = arith.truncf %94 : vector<68x128xf32> to vector<68x128xbf16>
    %cst_24 = arith.constant dense<0.000000e+00> : vector<68x68xf32>
    %96 = tpu.matmul %95, %23, %cst_24 {dimension_numbers = #tpu.dot_dimension_numbers<[1], [1], [0], [0], [0, 0, 1, 0], [], []>} : vector<68x128xbf16>, vector<68x128xbf16>, vector<68x68xf32> -> vector<68x68xf32>
    %cst_25 = arith.constant 2.000000e-01 : f32
    %97 = vector.broadcast %cst_25 : f32 to vector<68x68xf32>
    %98 = arith.mulf %96, %97 : vector<68x68xf32>
    %cst_26 = arith.constant dense<0xFF800000> : vector<68xf32>
    %99 = vector.multi_reduction <maximumf>, %98, %cst_26 [1] : vector<68x68xf32> to vector<68xf32>
    %100 = vector.shape_cast %99 : vector<68xf32> to vector<68x1xf32>
    %101 = vector.broadcast %100 : vector<68x1xf32> to vector<68x68xf32>
    %102 = arith.subf %98, %101 : vector<68x68xf32>
    %103 = math.exp %102 : vector<68x68xf32>
    %cst_27 = arith.constant dense<0.000000e+00> : vector<68xf32>
    %104 = vector.multi_reduction <add>, %103, %cst_27 [1] : vector<68x68xf32> to vector<68xf32>
    %105 = vector.shape_cast %104 : vector<68xf32> to vector<68x1xf32>
    %cst_28 = arith.constant 1.000000e+00 : f32
    %106 = vector.broadcast %cst_28 : f32 to vector<68x1xf32>
    %107 = arith.divf %106, %105 : vector<68x1xf32>
    %108 = vector.broadcast %107 : vector<68x1xf32> to vector<68x68xf32>
    %109 = arith.mulf %103, %108 : vector<68x68xf32>
    %110 = arith.truncf %109 : vector<68x68xf32> to vector<68x68xbf16>
    %111 = vector.broadcast %92 : vector<1x128xf32> to vector<68x128xf32>
    %112 = arith.mulf %24, %111 : vector<68x128xf32>
    %113 = arith.truncf %112 : vector<68x128xf32> to vector<68x128xbf16>
    %cst_29 = arith.constant dense<0.000000e+00> : vector<68x128xf32>
    %114 = tpu.matmul %110, %113, %cst_29 {dimension_numbers = #tpu.dot_dimension_numbers<[1], [0], [0], [1], [0, 0, 1, 1], [], []>} : vector<68x68xbf16>, vector<68x128xbf16>, vector<68x128xf32> -> vector<68x128xf32>
    %115 = arith.addf %85, %114 : vector<68x128xf32>
    %c96_i32_30 = arith.constant 96 : i32
    %116 = vector.broadcast %c96_i32_30 : i32 to vector<1x128xi32>
    %117 = arith.cmpi sge, %20, %116 : vector<1x128xi32>
    %c128_i32 = arith.constant 128 : i32
    %118 = vector.broadcast %c128_i32 : i32 to vector<1x128xi32>
    %119 = arith.cmpi slt, %20, %118 : vector<1x128xi32>
    %120 = arith.andi %117, %119 : vector<1x128xi1>
    %121 = arith.extui %120 : vector<1x128xi1> to vector<1x128xi32>
    %122 = arith.sitofp %121 : vector<1x128xi32> to vector<1x128xf32>
    %123 = vector.broadcast %122 : vector<1x128xf32> to vector<68x128xf32>
    %124 = arith.mulf %21, %123 : vector<68x128xf32>
    %125 = arith.truncf %124 : vector<68x128xf32> to vector<68x128xbf16>
    %cst_31 = arith.constant dense<0.000000e+00> : vector<68x68xf32>
    %126 = tpu.matmul %125, %23, %cst_31 {dimension_numbers = #tpu.dot_dimension_numbers<[1], [1], [0], [0], [0, 0, 1, 0], [], []>} : vector<68x128xbf16>, vector<68x128xbf16>, vector<68x68xf32> -> vector<68x68xf32>
    %cst_32 = arith.constant 2.000000e-01 : f32
    %127 = vector.broadcast %cst_32 : f32 to vector<68x68xf32>
    %128 = arith.mulf %126, %127 : vector<68x68xf32>
    %cst_33 = arith.constant dense<0xFF800000> : vector<68xf32>
    %129 = vector.multi_reduction <maximumf>, %128, %cst_33 [1] : vector<68x68xf32> to vector<68xf32>
    %130 = vector.shape_cast %129 : vector<68xf32> to vector<68x1xf32>
    %131 = vector.broadcast %130 : vector<68x1xf32> to vector<68x68xf32>
    %132 = arith.subf %128, %131 : vector<68x68xf32>
    %133 = math.exp %132 : vector<68x68xf32>
    %cst_34 = arith.constant dense<0.000000e+00> : vector<68xf32>
    %134 = vector.multi_reduction <add>, %133, %cst_34 [1] : vector<68x68xf32> to vector<68xf32>
    %135 = vector.shape_cast %134 : vector<68xf32> to vector<68x1xf32>
    %cst_35 = arith.constant 1.000000e+00 : f32
    %136 = vector.broadcast %cst_35 : f32 to vector<68x1xf32>
    %137 = arith.divf %136, %135 : vector<68x1xf32>
    %138 = vector.broadcast %137 : vector<68x1xf32> to vector<68x68xf32>
    %139 = arith.mulf %133, %138 : vector<68x68xf32>
    %140 = arith.truncf %139 : vector<68x68xf32> to vector<68x68xbf16>
    %141 = vector.broadcast %122 : vector<1x128xf32> to vector<68x128xf32>
    %142 = arith.mulf %24, %141 : vector<68x128xf32>
    %143 = arith.truncf %142 : vector<68x128xf32> to vector<68x128xbf16>
    %cst_36 = arith.constant dense<0.000000e+00> : vector<68x128xf32>
    %144 = tpu.matmul %140, %143, %cst_36 {dimension_numbers = #tpu.dot_dimension_numbers<[1], [0], [0], [1], [0, 0, 1, 1], [], []>} : vector<68x68xbf16>, vector<68x128xbf16>, vector<68x128xf32> -> vector<68x128xf32>
    %145 = arith.addf %115, %144 : vector<68x128xf32>
    %146 = vector.extract_strided_slice %17 {offsets = [0, 128], sizes = [68, 128], strides = [1, 1]} : vector<68x256xf32> to vector<68x128xf32>
    %147 = vector.extract_strided_slice %18 {offsets = [0, 128], sizes = [68, 128], strides = [1, 1]} : vector<68x256xf32> to vector<68x128xf32>
    %148 = arith.truncf %147 : vector<68x128xf32> to vector<68x128xbf16>
    %149 = vector.extract_strided_slice %19 {offsets = [0, 128], sizes = [68, 128], strides = [1, 1]} : vector<68x256xf32> to vector<68x128xf32>
    %cst_37 = arith.constant 0.000000e+00 : f32
    %150 = vector.broadcast %cst_37 : f32 to vector<68x128xf32>
    %c0_i32_38 = arith.constant 0 : i32
    %151 = vector.broadcast %c0_i32_38 : i32 to vector<1x128xi32>
    %152 = arith.cmpi sge, %20, %151 : vector<1x128xi32>
    %c32_i32_39 = arith.constant 32 : i32
    %153 = vector.broadcast %c32_i32_39 : i32 to vector<1x128xi32>
    %154 = arith.cmpi slt, %20, %153 : vector<1x128xi32>
    %155 = arith.andi %152, %154 : vector<1x128xi1>
    %156 = arith.extui %155 : vector<1x128xi1> to vector<1x128xi32>
    %157 = arith.sitofp %156 : vector<1x128xi32> to vector<1x128xf32>
    %158 = vector.broadcast %157 : vector<1x128xf32> to vector<68x128xf32>
    %159 = arith.mulf %146, %158 : vector<68x128xf32>
    %160 = arith.truncf %159 : vector<68x128xf32> to vector<68x128xbf16>
    %cst_40 = arith.constant dense<0.000000e+00> : vector<68x68xf32>
    %161 = tpu.matmul %160, %148, %cst_40 {dimension_numbers = #tpu.dot_dimension_numbers<[1], [1], [0], [0], [0, 0, 1, 0], [], []>} : vector<68x128xbf16>, vector<68x128xbf16>, vector<68x68xf32> -> vector<68x68xf32>
    %cst_41 = arith.constant 2.000000e-01 : f32
    %162 = vector.broadcast %cst_41 : f32 to vector<68x68xf32>
    %163 = arith.mulf %161, %162 : vector<68x68xf32>
    %cst_42 = arith.constant dense<0xFF800000> : vector<68xf32>
    %164 = vector.multi_reduction <maximumf>, %163, %cst_42 [1] : vector<68x68xf32> to vector<68xf32>
    %165 = vector.shape_cast %164 : vector<68xf32> to vector<68x1xf32>
    %166 = vector.broadcast %165 : vector<68x1xf32> to vector<68x68xf32>
    %167 = arith.subf %163, %166 : vector<68x68xf32>
    %168 = math.exp %167 : vector<68x68xf32>
    %cst_43 = arith.constant dense<0.000000e+00> : vector<68xf32>
    %169 = vector.multi_reduction <add>, %168, %cst_43 [1] : vector<68x68xf32> to vector<68xf32>
    %170 = vector.shape_cast %169 : vector<68xf32> to vector<68x1xf32>
    %cst_44 = arith.constant 1.000000e+00 : f32
    %171 = vector.broadcast %cst_44 : f32 to vector<68x1xf32>
    %172 = arith.divf %171, %170 : vector<68x1xf32>
    %173 = vector.broadcast %172 : vector<68x1xf32> to vector<68x68xf32>
    %174 = arith.mulf %168, %173 : vector<68x68xf32>
    %175 = arith.truncf %174 : vector<68x68xf32> to vector<68x68xbf16>
    %176 = vector.broadcast %157 : vector<1x128xf32> to vector<68x128xf32>
    %177 = arith.mulf %149, %176 : vector<68x128xf32>
    %178 = arith.truncf %177 : vector<68x128xf32> to vector<68x128xbf16>
    %cst_45 = arith.constant dense<0.000000e+00> : vector<68x128xf32>
    %179 = tpu.matmul %175, %178, %cst_45 {dimension_numbers = #tpu.dot_dimension_numbers<[1], [0], [0], [1], [0, 0, 1, 1], [], []>} : vector<68x68xbf16>, vector<68x128xbf16>, vector<68x128xf32> -> vector<68x128xf32>
    %180 = arith.addf %150, %179 : vector<68x128xf32>
    %c32_i32_46 = arith.constant 32 : i32
    %181 = vector.broadcast %c32_i32_46 : i32 to vector<1x128xi32>
    %182 = arith.cmpi sge, %20, %181 : vector<1x128xi32>
    %c64_i32_47 = arith.constant 64 : i32
    %183 = vector.broadcast %c64_i32_47 : i32 to vector<1x128xi32>
    %184 = arith.cmpi slt, %20, %183 : vector<1x128xi32>
    %185 = arith.andi %182, %184 : vector<1x128xi1>
    %186 = arith.extui %185 : vector<1x128xi1> to vector<1x128xi32>
    %187 = arith.sitofp %186 : vector<1x128xi32> to vector<1x128xf32>
    %188 = vector.broadcast %187 : vector<1x128xf32> to vector<68x128xf32>
    %189 = arith.mulf %146, %188 : vector<68x128xf32>
    %190 = arith.truncf %189 : vector<68x128xf32> to vector<68x128xbf16>
    %cst_48 = arith.constant dense<0.000000e+00> : vector<68x68xf32>
    %191 = tpu.matmul %190, %148, %cst_48 {dimension_numbers = #tpu.dot_dimension_numbers<[1], [1], [0], [0], [0, 0, 1, 0], [], []>} : vector<68x128xbf16>, vector<68x128xbf16>, vector<68x68xf32> -> vector<68x68xf32>
    %cst_49 = arith.constant 2.000000e-01 : f32
    %192 = vector.broadcast %cst_49 : f32 to vector<68x68xf32>
    %193 = arith.mulf %191, %192 : vector<68x68xf32>
    %cst_50 = arith.constant dense<0xFF800000> : vector<68xf32>
    %194 = vector.multi_reduction <maximumf>, %193, %cst_50 [1] : vector<68x68xf32> to vector<68xf32>
    %195 = vector.shape_cast %194 : vector<68xf32> to vector<68x1xf32>
    %196 = vector.broadcast %195 : vector<68x1xf32> to vector<68x68xf32>
    %197 = arith.subf %193, %196 : vector<68x68xf32>
    %198 = math.exp %197 : vector<68x68xf32>
    %cst_51 = arith.constant dense<0.000000e+00> : vector<68xf32>
    %199 = vector.multi_reduction <add>, %198, %cst_51 [1] : vector<68x68xf32> to vector<68xf32>
    %200 = vector.shape_cast %199 : vector<68xf32> to vector<68x1xf32>
    %cst_52 = arith.constant 1.000000e+00 : f32
    %201 = vector.broadcast %cst_52 : f32 to vector<68x1xf32>
    %202 = arith.divf %201, %200 : vector<68x1xf32>
    %203 = vector.broadcast %202 : vector<68x1xf32> to vector<68x68xf32>
    %204 = arith.mulf %198, %203 : vector<68x68xf32>
    %205 = arith.truncf %204 : vector<68x68xf32> to vector<68x68xbf16>
    %206 = vector.broadcast %187 : vector<1x128xf32> to vector<68x128xf32>
    %207 = arith.mulf %149, %206 : vector<68x128xf32>
    %208 = arith.truncf %207 : vector<68x128xf32> to vector<68x128xbf16>
    %cst_53 = arith.constant dense<0.000000e+00> : vector<68x128xf32>
    %209 = tpu.matmul %205, %208, %cst_53 {dimension_numbers = #tpu.dot_dimension_numbers<[1], [0], [0], [1], [0, 0, 1, 1], [], []>} : vector<68x68xbf16>, vector<68x128xbf16>, vector<68x128xf32> -> vector<68x128xf32>
    %210 = arith.addf %180, %209 : vector<68x128xf32>
    %c64_i32_54 = arith.constant 64 : i32
    %211 = vector.broadcast %c64_i32_54 : i32 to vector<1x128xi32>
    %212 = arith.cmpi sge, %20, %211 : vector<1x128xi32>
    %c96_i32_55 = arith.constant 96 : i32
    %213 = vector.broadcast %c96_i32_55 : i32 to vector<1x128xi32>
    %214 = arith.cmpi slt, %20, %213 : vector<1x128xi32>
    %215 = arith.andi %212, %214 : vector<1x128xi1>
    %216 = arith.extui %215 : vector<1x128xi1> to vector<1x128xi32>
    %217 = arith.sitofp %216 : vector<1x128xi32> to vector<1x128xf32>
    %218 = vector.broadcast %217 : vector<1x128xf32> to vector<68x128xf32>
    %219 = arith.mulf %146, %218 : vector<68x128xf32>
    %220 = arith.truncf %219 : vector<68x128xf32> to vector<68x128xbf16>
    %cst_56 = arith.constant dense<0.000000e+00> : vector<68x68xf32>
    %221 = tpu.matmul %220, %148, %cst_56 {dimension_numbers = #tpu.dot_dimension_numbers<[1], [1], [0], [0], [0, 0, 1, 0], [], []>} : vector<68x128xbf16>, vector<68x128xbf16>, vector<68x68xf32> -> vector<68x68xf32>
    %cst_57 = arith.constant 2.000000e-01 : f32
    %222 = vector.broadcast %cst_57 : f32 to vector<68x68xf32>
    %223 = arith.mulf %221, %222 : vector<68x68xf32>
    %cst_58 = arith.constant dense<0xFF800000> : vector<68xf32>
    %224 = vector.multi_reduction <maximumf>, %223, %cst_58 [1] : vector<68x68xf32> to vector<68xf32>
    %225 = vector.shape_cast %224 : vector<68xf32> to vector<68x1xf32>
    %226 = vector.broadcast %225 : vector<68x1xf32> to vector<68x68xf32>
    %227 = arith.subf %223, %226 : vector<68x68xf32>
    %228 = math.exp %227 : vector<68x68xf32>
    %cst_59 = arith.constant dense<0.000000e+00> : vector<68xf32>
    %229 = vector.multi_reduction <add>, %228, %cst_59 [1] : vector<68x68xf32> to vector<68xf32>
    %230 = vector.shape_cast %229 : vector<68xf32> to vector<68x1xf32>
    %cst_60 = arith.constant 1.000000e+00 : f32
    %231 = vector.broadcast %cst_60 : f32 to vector<68x1xf32>
    %232 = arith.divf %231, %230 : vector<68x1xf32>
    %233 = vector.broadcast %232 : vector<68x1xf32> to vector<68x68xf32>
    %234 = arith.mulf %228, %233 : vector<68x68xf32>
    %235 = arith.truncf %234 : vector<68x68xf32> to vector<68x68xbf16>
    %236 = vector.broadcast %217 : vector<1x128xf32> to vector<68x128xf32>
    %237 = arith.mulf %149, %236 : vector<68x128xf32>
    %238 = arith.truncf %237 : vector<68x128xf32> to vector<68x128xbf16>
    %cst_61 = arith.constant dense<0.000000e+00> : vector<68x128xf32>
    %239 = tpu.matmul %235, %238, %cst_61 {dimension_numbers = #tpu.dot_dimension_numbers<[1], [0], [0], [1], [0, 0, 1, 1], [], []>} : vector<68x68xbf16>, vector<68x128xbf16>, vector<68x128xf32> -> vector<68x128xf32>
    %240 = arith.addf %210, %239 : vector<68x128xf32>
    %c96_i32_62 = arith.constant 96 : i32
    %241 = vector.broadcast %c96_i32_62 : i32 to vector<1x128xi32>
    %242 = arith.cmpi sge, %20, %241 : vector<1x128xi32>
    %c128_i32_63 = arith.constant 128 : i32
    %243 = vector.broadcast %c128_i32_63 : i32 to vector<1x128xi32>
    %244 = arith.cmpi slt, %20, %243 : vector<1x128xi32>
    %245 = arith.andi %242, %244 : vector<1x128xi1>
    %246 = arith.extui %245 : vector<1x128xi1> to vector<1x128xi32>
    %247 = arith.sitofp %246 : vector<1x128xi32> to vector<1x128xf32>
    %248 = vector.broadcast %247 : vector<1x128xf32> to vector<68x128xf32>
    %249 = arith.mulf %146, %248 : vector<68x128xf32>
    %250 = arith.truncf %249 : vector<68x128xf32> to vector<68x128xbf16>
    %cst_64 = arith.constant dense<0.000000e+00> : vector<68x68xf32>
    %251 = tpu.matmul %250, %148, %cst_64 {dimension_numbers = #tpu.dot_dimension_numbers<[1], [1], [0], [0], [0, 0, 1, 0], [], []>} : vector<68x128xbf16>, vector<68x128xbf16>, vector<68x68xf32> -> vector<68x68xf32>
    %cst_65 = arith.constant 2.000000e-01 : f32
    %252 = vector.broadcast %cst_65 : f32 to vector<68x68xf32>
    %253 = arith.mulf %251, %252 : vector<68x68xf32>
    %cst_66 = arith.constant dense<0xFF800000> : vector<68xf32>
    %254 = vector.multi_reduction <maximumf>, %253, %cst_66 [1] : vector<68x68xf32> to vector<68xf32>
    %255 = vector.shape_cast %254 : vector<68xf32> to vector<68x1xf32>
    %256 = vector.broadcast %255 : vector<68x1xf32> to vector<68x68xf32>
    %257 = arith.subf %253, %256 : vector<68x68xf32>
    %258 = math.exp %257 : vector<68x68xf32>
    %cst_67 = arith.constant dense<0.000000e+00> : vector<68xf32>
    %259 = vector.multi_reduction <add>, %258, %cst_67 [1] : vector<68x68xf32> to vector<68xf32>
    %260 = vector.shape_cast %259 : vector<68xf32> to vector<68x1xf32>
    %cst_68 = arith.constant 1.000000e+00 : f32
    %261 = vector.broadcast %cst_68 : f32 to vector<68x1xf32>
    %262 = arith.divf %261, %260 : vector<68x1xf32>
    %263 = vector.broadcast %262 : vector<68x1xf32> to vector<68x68xf32>
    %264 = arith.mulf %258, %263 : vector<68x68xf32>
    %265 = arith.truncf %264 : vector<68x68xf32> to vector<68x68xbf16>
    %266 = vector.broadcast %247 : vector<1x128xf32> to vector<68x128xf32>
    %267 = arith.mulf %149, %266 : vector<68x128xf32>
    %268 = arith.truncf %267 : vector<68x128xf32> to vector<68x128xbf16>
    %cst_69 = arith.constant dense<0.000000e+00> : vector<68x128xf32>
    %269 = tpu.matmul %265, %268, %cst_69 {dimension_numbers = #tpu.dot_dimension_numbers<[1], [0], [0], [1], [0, 0, 1, 1], [], []>} : vector<68x68xbf16>, vector<68x128xbf16>, vector<68x128xf32> -> vector<68x128xf32>
    %270 = arith.addf %240, %269 : vector<68x128xf32>
    %271 = tpu.concatenate %145, %270 in 1 : vector<68x128xf32>, vector<68x128xf32> -> vector<68x256xf32>
    %272 = arith.truncf %271 : vector<68x256xf32> to vector<68x256xbf16>
    %c0_70 = arith.constant 0 : index
    %c0_71 = arith.constant 0 : index
    %c0_72 = arith.constant 0 : index
    %273 = vector.load %arg7[%c0_70, %c0_71, %c0_72] : memref<1x256x256xbf16, #tpu.memory_space<vmem>>, vector<1x256x256xbf16>
    %274 = vector.shape_cast %273 : vector<1x256x256xbf16> to vector<256x256xbf16>
    %cst_73 = arith.constant dense<0.000000e+00> : vector<68x256xf32>
    %275 = tpu.matmul %272, %274, %cst_73 {dimension_numbers = #tpu.dot_dimension_numbers<[1], [0], [0], [1], [0, 0, 1, 1], [], []>} : vector<68x256xbf16>, vector<256x256xbf16>, vector<68x256xf32> -> vector<68x256xf32>
    %c0_74 = arith.constant 0 : index
    %c0_75 = arith.constant 0 : index
    %c0_76 = arith.constant 0 : index
    %276 = vector.load %arg8[%c0_74, %c0_75, %c0_76] : memref<1x1x256xf32, #tpu.memory_space<vmem>>, vector<1x1x256xf32>
    %277 = vector.shape_cast %276 : vector<1x1x256xf32> to vector<1x256xf32>
    %278 = vector.broadcast %277 : vector<1x256xf32> to vector<68x256xf32>
    %279 = arith.addf %275, %278 : vector<68x256xf32>
    %280 = arith.addf %3, %279 : vector<68x256xf32>
    %c0_77 = arith.constant 0 : index
    %c0_78 = arith.constant 0 : index
    %c0_79 = arith.constant 0 : index
    %281 = vector.load %arg9[%c0_77, %c0_78, %c0_79] : memref<1x1x256xf32, #tpu.memory_space<vmem>>, vector<1x1x256xf32>
    %282 = vector.shape_cast %281 : vector<1x1x256xf32> to vector<1x256xf32>
    %c0_80 = arith.constant 0 : index
    %c0_81 = arith.constant 0 : index
    %c0_82 = arith.constant 0 : index
    %283 = vector.load %arg10[%c0_80, %c0_81, %c0_82] : memref<1x1x256xf32, #tpu.memory_space<vmem>>, vector<1x1x256xf32>
    %284 = vector.shape_cast %283 : vector<1x1x256xf32> to vector<1x256xf32>
    %cst_83 = arith.constant dense<0.000000e+00> : vector<68xf32>
    %285 = vector.multi_reduction <add>, %280, %cst_83 [1] : vector<68x256xf32> to vector<68xf32>
    %286 = vector.shape_cast %285 : vector<68xf32> to vector<68x1xf32>
    %cst_84 = arith.constant 5.000000e-03 : f32
    %287 = vector.broadcast %cst_84 : f32 to vector<68x1xf32>
    %288 = arith.mulf %286, %287 : vector<68x1xf32>
    %289 = vector.broadcast %288 : vector<68x1xf32> to vector<68x256xf32>
    %290 = arith.subf %280, %289 : vector<68x256xf32>
    %291 = vector.broadcast %8 : vector<1x256xf32> to vector<68x256xf32>
    %292 = arith.mulf %290, %291 : vector<68x256xf32>
    %293 = arith.mulf %292, %292 : vector<68x256xf32>
    %cst_85 = arith.constant dense<0.000000e+00> : vector<68xf32>
    %294 = vector.multi_reduction <add>, %293, %cst_85 [1] : vector<68x256xf32> to vector<68xf32>
    %295 = vector.shape_cast %294 : vector<68xf32> to vector<68x1xf32>
    %cst_86 = arith.constant 5.000000e-03 : f32
    %296 = vector.broadcast %cst_86 : f32 to vector<68x1xf32>
    %297 = arith.mulf %295, %296 : vector<68x1xf32>
    %cst_87 = arith.constant 9.99999974E-6 : f32
    %298 = vector.broadcast %cst_87 : f32 to vector<68x1xf32>
    %299 = arith.addf %297, %298 : vector<68x1xf32>
    %300 = math.rsqrt %299 : vector<68x1xf32>
    %301 = vector.broadcast %300 : vector<68x1xf32> to vector<68x256xf32>
    %302 = arith.mulf %292, %301 : vector<68x256xf32>
    %303 = vector.broadcast %282 : vector<1x256xf32> to vector<68x256xf32>
    %304 = arith.mulf %302, %303 : vector<68x256xf32>
    %305 = vector.broadcast %284 : vector<1x256xf32> to vector<68x256xf32>
    %306 = arith.addf %304, %305 : vector<68x256xf32>
    %307 = arith.truncf %306 : vector<68x256xf32> to vector<68x256xbf16>
    %c0_88 = arith.constant 0 : index
    %c0_89 = arith.constant 0 : index
    %c0_90 = arith.constant 0 : index
    %308 = vector.load %arg11[%c0_88, %c0_89, %c0_90] : memref<1x256x896xbf16, #tpu.memory_space<vmem>>, vector<1x256x896xbf16>
    %309 = vector.shape_cast %308 : vector<1x256x896xbf16> to vector<256x896xbf16>
    %cst_91 = arith.constant dense<0.000000e+00> : vector<68x896xf32>
    %310 = tpu.matmul %307, %309, %cst_91 {dimension_numbers = #tpu.dot_dimension_numbers<[1], [0], [0], [1], [0, 0, 1, 1], [], []>} : vector<68x256xbf16>, vector<256x896xbf16>, vector<68x896xf32> -> vector<68x896xf32>
    %c0_92 = arith.constant 0 : index
    %c0_93 = arith.constant 0 : index
    %c0_94 = arith.constant 0 : index
    %311 = vector.load %arg12[%c0_92, %c0_93, %c0_94] : memref<1x1x896xf32, #tpu.memory_space<vmem>>, vector<1x1x896xf32>
    %312 = vector.shape_cast %311 : vector<1x1x896xf32> to vector<1x896xf32>
    %313 = vector.broadcast %312 : vector<1x896xf32> to vector<68x896xf32>
    %314 = arith.addf %310, %313 : vector<68x896xf32>
    %cst_95 = arith.constant 5.000000e-01 : f32
    %315 = vector.broadcast %cst_95 : f32 to vector<68x896xf32>
    %316 = arith.mulf %315, %314 : vector<68x896xf32>
    %cst_96 = arith.constant 4.471500e-02 : f32
    %317 = vector.broadcast %cst_96 : f32 to vector<68x896xf32>
    %318 = arith.mulf %317, %314 : vector<68x896xf32>
    %319 = arith.mulf %318, %314 : vector<68x896xf32>
    %320 = arith.mulf %319, %314 : vector<68x896xf32>
    %321 = arith.addf %314, %320 : vector<68x896xf32>
    %cst_97 = arith.constant 0.797884583 : f32
    %322 = vector.broadcast %cst_97 : f32 to vector<68x896xf32>
    %323 = arith.mulf %322, %321 : vector<68x896xf32>
    %324 = math.tanh %323 : vector<68x896xf32>
    %cst_98 = arith.constant 1.000000e+00 : f32
    %325 = vector.broadcast %cst_98 : f32 to vector<68x896xf32>
    %326 = arith.addf %325, %324 : vector<68x896xf32>
    %327 = arith.mulf %316, %326 : vector<68x896xf32>
    %328 = arith.truncf %327 : vector<68x896xf32> to vector<68x896xbf16>
    %c0_99 = arith.constant 0 : index
    %c0_100 = arith.constant 0 : index
    %c0_101 = arith.constant 0 : index
    %329 = vector.load %arg13[%c0_99, %c0_100, %c0_101] : memref<1x896x256xbf16, #tpu.memory_space<vmem>>, vector<1x896x256xbf16>
    %330 = vector.shape_cast %329 : vector<1x896x256xbf16> to vector<896x256xbf16>
    %cst_102 = arith.constant dense<0.000000e+00> : vector<68x256xf32>
    %331 = tpu.matmul %328, %330, %cst_102 {dimension_numbers = #tpu.dot_dimension_numbers<[1], [0], [0], [1], [0, 0, 1, 1], [], []>} : vector<68x896xbf16>, vector<896x256xbf16>, vector<68x256xf32> -> vector<68x256xf32>
    %c0_103 = arith.constant 0 : index
    %c0_104 = arith.constant 0 : index
    %c0_105 = arith.constant 0 : index
    %332 = vector.load %arg14[%c0_103, %c0_104, %c0_105] : memref<1x1x256xf32, #tpu.memory_space<vmem>>, vector<1x1x256xf32>
    %333 = vector.shape_cast %332 : vector<1x1x256xf32> to vector<1x256xf32>
    %334 = vector.broadcast %333 : vector<1x256xf32> to vector<68x256xf32>
    %335 = arith.addf %331, %334 : vector<68x256xf32>
    %336 = arith.addf %306, %335 : vector<68x256xf32>
    %c0_106 = arith.constant 0 : index
    %c0_107 = arith.constant 0 : index
    %c0_108 = arith.constant 0 : index
    %337 = vector.load %arg15[%c0_106, %c0_107, %c0_108] : memref<1x1x256xf32, #tpu.memory_space<vmem>>, vector<1x1x256xf32>
    %338 = vector.shape_cast %337 : vector<1x1x256xf32> to vector<1x256xf32>
    %c0_109 = arith.constant 0 : index
    %c0_110 = arith.constant 0 : index
    %c0_111 = arith.constant 0 : index
    %339 = vector.load %arg16[%c0_109, %c0_110, %c0_111] : memref<1x1x256xf32, #tpu.memory_space<vmem>>, vector<1x1x256xf32>
    %340 = vector.shape_cast %339 : vector<1x1x256xf32> to vector<1x256xf32>
    %cst_112 = arith.constant dense<0.000000e+00> : vector<68xf32>
    %341 = vector.multi_reduction <add>, %336, %cst_112 [1] : vector<68x256xf32> to vector<68xf32>
    %342 = vector.shape_cast %341 : vector<68xf32> to vector<68x1xf32>
    %cst_113 = arith.constant 5.000000e-03 : f32
    %343 = vector.broadcast %cst_113 : f32 to vector<68x1xf32>
    %344 = arith.mulf %342, %343 : vector<68x1xf32>
    %345 = vector.broadcast %344 : vector<68x1xf32> to vector<68x256xf32>
    %346 = arith.subf %336, %345 : vector<68x256xf32>
    %347 = vector.broadcast %8 : vector<1x256xf32> to vector<68x256xf32>
    %348 = arith.mulf %346, %347 : vector<68x256xf32>
    %349 = arith.mulf %348, %348 : vector<68x256xf32>
    %cst_114 = arith.constant dense<0.000000e+00> : vector<68xf32>
    %350 = vector.multi_reduction <add>, %349, %cst_114 [1] : vector<68x256xf32> to vector<68xf32>
    %351 = vector.shape_cast %350 : vector<68xf32> to vector<68x1xf32>
    %cst_115 = arith.constant 5.000000e-03 : f32
    %352 = vector.broadcast %cst_115 : f32 to vector<68x1xf32>
    %353 = arith.mulf %351, %352 : vector<68x1xf32>
    %cst_116 = arith.constant 9.99999974E-6 : f32
    %354 = vector.broadcast %cst_116 : f32 to vector<68x1xf32>
    %355 = arith.addf %353, %354 : vector<68x1xf32>
    %356 = math.rsqrt %355 : vector<68x1xf32>
    %357 = vector.broadcast %356 : vector<68x1xf32> to vector<68x256xf32>
    %358 = arith.mulf %348, %357 : vector<68x256xf32>
    %359 = vector.broadcast %338 : vector<1x256xf32> to vector<68x256xf32>
    %360 = arith.mulf %358, %359 : vector<68x256xf32>
    %361 = vector.broadcast %340 : vector<1x256xf32> to vector<68x256xf32>
    %362 = arith.addf %360, %361 : vector<68x256xf32>
    %c0_117 = arith.constant 0 : index
    %c0_118 = arith.constant 0 : index
    %363 = vector.load %arg25[%c0_117, %c0_118] : memref<68x256xf32, #tpu.memory_space<vmem>>, vector<68x256xf32>
    tpu.vector_store %arg25[%c0_117, %c0_118], %362 {strides = array<i32>} : memref<68x256xf32, #tpu.memory_space<vmem>>, vector<68x256xf32>,
    %c1_i32 = arith.constant 1 : i32
    %364 = arith.cmpi eq, %arg1, %c1_i32 : i32
    %365 = arith.extui %364 : i1 to i32
    %c0_i32_119 = arith.constant 0 : i32
    %366 = arith.cmpi ne, %365, %c0_i32_119 : i32
    scf.if %366 {
      %c0_120 = arith.constant 0 : index
      %c0_121 = arith.constant 0 : index
      %367 = vector.load %arg17[%c0_120, %c0_121] : memref<4x68xf32, #tpu.memory_space<vmem>>, vector<4x68xf32>
      %368 = arith.truncf %367 : vector<4x68xf32> to vector<4x68xbf16>
      %369 = arith.truncf %362 : vector<68x256xf32> to vector<68x256xbf16>
      %cst_122 = arith.constant dense<0.000000e+00> : vector<4x256xf32>
      %370 = tpu.matmul %368, %369, %cst_122 {dimension_numbers = #tpu.dot_dimension_numbers<[1], [0], [0], [1], [0, 0, 1, 1], [], []>} : vector<4x68xbf16>, vector<68x256xbf16>, vector<4x256xf32> -> vector<4x256xf32>
      %c0_123 = arith.constant 0 : index
      %c0_124 = arith.constant 0 : index
      %371 = vector.load %arg18[%c0_123, %c0_124] : memref<4x1xf32, #tpu.memory_space<vmem>>, vector<4x1xf32>
      %372 = vector.broadcast %371 : vector<4x1xf32> to vector<4x256xf32>
      %373 = arith.mulf %370, %372 : vector<4x256xf32>
      %c0_125 = arith.constant 0 : index
      %c0_126 = arith.constant 0 : index
      %c0_127 = arith.constant 0 : index
      %374 = vector.load %arg23[%c0_125, %c0_126, %c0_127] : memref<1x4x256xf32, #tpu.memory_space<vmem>>, vector<1x4x256xf32>
      %375 = vector.shape_cast %374 : vector<1x4x256xf32> to vector<4x256xf32>
      %376 = vector.shape_cast %373 : vector<4x256xf32> to vector<1x4x256xf32>
      tpu.vector_store %arg23[%c0_125, %c0_126, %c0_127], %376 {strides = array<i32>} : memref<1x4x256xf32, #tpu.memory_space<vmem>>, vector<1x4x256xf32>,
      %c0_128 = arith.constant 0 : index
      %c0_129 = arith.constant 0 : index
      %377 = vector.load %arg20[%c0_128, %c0_129] : memref<1x512xf32, #tpu.memory_space<vmem>>, vector<1x512xf32>
      %378 = vector.extract_strided_slice %373 {offsets = [0, 0], sizes = [1, 256], strides = [1, 1]} : vector<4x256xf32> to vector<1x256xf32>
      %379 = arith.truncf %378 : vector<1x256xf32> to vector<1x256xbf16>
      %c0_130 = arith.constant 0 : index
      %c0_131 = arith.constant 0 : index
      %c0_132 = arith.constant 0 : index
      %380 = vector.load %arg19[%c0_130, %c0_131, %c0_132] : memref<4x256x512xbf16, #tpu.memory_space<vmem>>, vector<1x256x512xbf16>
      %381 = vector.shape_cast %380 : vector<1x256x512xbf16> to vector<256x512xbf16>
      %cst_133 = arith.constant dense<0.000000e+00> : vector<1x512xf32>
      %382 = tpu.matmul %379, %381, %cst_133 {dimension_numbers = #tpu.dot_dimension_numbers<[1], [0], [0], [1], [0, 0, 1, 1], [], []>} : vector<1x256xbf16>, vector<256x512xbf16>, vector<1x512xf32> -> vector<1x512xf32>
      %383 = arith.addf %377, %382 : vector<1x512xf32>
      %384 = vector.extract_strided_slice %373 {offsets = [1, 0], sizes = [1, 256], strides = [1, 1]} : vector<4x256xf32> to vector<1x256xf32>
      %385 = arith.truncf %384 : vector<1x256xf32> to vector<1x256xbf16>
      %c1 = arith.constant 1 : index
      %c0_134 = arith.constant 0 : index
      %c0_135 = arith.constant 0 : index
      %386 = vector.load %arg19[%c1, %c0_134, %c0_135] : memref<4x256x512xbf16, #tpu.memory_space<vmem>>, vector<1x256x512xbf16>
      %387 = vector.shape_cast %386 : vector<1x256x512xbf16> to vector<256x512xbf16>
      %cst_136 = arith.constant dense<0.000000e+00> : vector<1x512xf32>
      %388 = tpu.matmul %385, %387, %cst_136 {dimension_numbers = #tpu.dot_dimension_numbers<[1], [0], [0], [1], [0, 0, 1, 1], [], []>} : vector<1x256xbf16>, vector<256x512xbf16>, vector<1x512xf32> -> vector<1x512xf32>
      %389 = arith.addf %383, %388 : vector<1x512xf32>
      %390 = vector.extract_strided_slice %373 {offsets = [2, 0], sizes = [1, 256], strides = [1, 1]} : vector<4x256xf32> to vector<1x256xf32>
      %391 = arith.truncf %390 : vector<1x256xf32> to vector<1x256xbf16>
      %c2 = arith.constant 2 : index
      %c0_137 = arith.constant 0 : index
      %c0_138 = arith.constant 0 : index
      %392 = vector.load %arg19[%c2, %c0_137, %c0_138] : memref<4x256x512xbf16, #tpu.memory_space<vmem>>, vector<1x256x512xbf16>
      %393 = vector.shape_cast %392 : vector<1x256x512xbf16> to vector<256x512xbf16>
      %cst_139 = arith.constant dense<0.000000e+00> : vector<1x512xf32>
      %394 = tpu.matmul %391, %393, %cst_139 {dimension_numbers = #tpu.dot_dimension_numbers<[1], [0], [0], [1], [0, 0, 1, 1], [], []>} : vector<1x256xbf16>, vector<256x512xbf16>, vector<1x512xf32> -> vector<1x512xf32>
      %395 = arith.addf %389, %394 : vector<1x512xf32>
      %396 = vector.extract_strided_slice %373 {offsets = [3, 0], sizes = [1, 256], strides = [1, 1]} : vector<4x256xf32> to vector<1x256xf32>
      %397 = arith.truncf %396 : vector<1x256xf32> to vector<1x256xbf16>
      %c3 = arith.constant 3 : index
      %c0_140 = arith.constant 0 : index
      %c0_141 = arith.constant 0 : index
      %398 = vector.load %arg19[%c3, %c0_140, %c0_141] : memref<4x256x512xbf16, #tpu.memory_space<vmem>>, vector<1x256x512xbf16>
      %399 = vector.shape_cast %398 : vector<1x256x512xbf16> to vector<256x512xbf16>
      %cst_142 = arith.constant dense<0.000000e+00> : vector<1x512xf32>
      %400 = tpu.matmul %397, %399, %cst_142 {dimension_numbers = #tpu.dot_dimension_numbers<[1], [0], [0], [1], [0, 0, 1, 1], [], []>} : vector<1x256xbf16>, vector<256x512xbf16>, vector<1x512xf32> -> vector<1x512xf32>
      %401 = arith.addf %395, %400 : vector<1x512xf32>
      %cst_143 = arith.constant 0.000000e+00 : f32
      %402 = vector.broadcast %cst_143 : f32 to vector<1x512xf32>
      %403 = arith.cmpf ogt, %401, %402 : vector<1x512xf32>
      %cst_144 = arith.constant 0.000000e+00 : f32
      %404 = vector.broadcast %cst_144 : f32 to vector<1x512xf32>
      %405 = arith.minimumf %401, %404 : vector<1x512xf32>
      %406 = math.exp %405 : vector<1x512xf32>
      %cst_145 = arith.constant 1.000000e+00 : f32
      %407 = vector.broadcast %cst_145 : f32 to vector<1x512xf32>
      %408 = arith.subf %406, %407 : vector<1x512xf32>
      %409 = arith.select %403, %401, %408 : vector<1x512xi1>, vector<1x512xf32>
      %410 = arith.truncf %409 : vector<1x512xf32> to vector<1x512xbf16>
      %c0_146 = arith.constant 0 : index
      %c0_147 = arith.constant 0 : index
      %411 = vector.load %arg21[%c0_146, %c0_147] : memref<512x128xbf16, #tpu.memory_space<vmem>>, vector<512x128xbf16>
      %cst_148 = arith.constant dense<0.000000e+00> : vector<1x128xf32>
      %412 = tpu.matmul %410, %411, %cst_148 {dimension_numbers = #tpu.dot_dimension_numbers<[1], [0], [0], [1], [0, 0, 1, 1], [], []>} : vector<1x512xbf16>, vector<512x128xbf16>, vector<1x128xf32> -> vector<1x128xf32>
      %c0_149 = arith.constant 0 : index
      %c0_150 = arith.constant 0 : index
      %413 = vector.load %arg22[%c0_149, %c0_150] : memref<1x128xf32, #tpu.memory_space<vmem>>, vector<1x128xf32>
      %414 = arith.addf %412, %413 : vector<1x128xf32>
      %c0_151 = arith.constant 0 : index
      %c0_152 = arith.constant 0 : index
      %c0_153 = arith.constant 0 : index
      %415 = vector.load %arg24[%c0_151, %c0_152, %c0_153] : memref<1x1x128xf32, #tpu.memory_space<vmem>>, vector<1x1x128xf32>
      %416 = vector.shape_cast %415 : vector<1x1x128xf32> to vector<1x128xf32>
      %417 = vector.shape_cast %414 : vector<1x128xf32> to vector<1x1x128xf32>
      tpu.vector_store %arg24[%c0_151, %c0_152, %c0_153], %417 {strides = array<i32>} : memref<1x1x128xf32, #tpu.memory_space<vmem>>, vector<1x1x128xf32>,
    } else {
    }
    return
  }
  func.func @transform_0(%arg0: i32, %arg1: i32) -> (i32, i32, i32) {
    %c0_i32 = arith.constant 0 : i32
    %c0_i32_0 = arith.constant 0 : i32
    %c0_i32_1 = arith.constant 0 : i32
    return %arg0, %c0_i32, %c0_i32_0 : i32, i32, i32
  }
  func.func @transform_1(%arg0: i32, %arg1: i32) -> (i32, i32) {
    %c0_i32 = arith.constant 0 : i32
    %c0_i32_0 = arith.constant 0 : i32
    %c0_i32_1 = arith.constant 0 : i32
    return %c0_i32, %c0_i32_0 : i32, i32
  }
  func.func @transform_2(%arg0: i32, %arg1: i32) -> (i32, i32) {
    %c0_i32 = arith.constant 0 : i32
    %c0_i32_0 = arith.constant 0 : i32
    %c0_i32_1 = arith.constant 0 : i32
    return %c0_i32, %c0_i32_0 : i32, i32
  }
  func.func @transform_3(%arg0: i32, %arg1: i32) -> (i32, i32, i32) {
    %c0_i32 = arith.constant 0 : i32
    %c0_i32_0 = arith.constant 0 : i32
    %c0_i32_1 = arith.constant 0 : i32
    return %arg1, %c0_i32, %c0_i32_0 : i32, i32, i32
  }
  func.func @transform_4(%arg0: i32, %arg1: i32) -> (i32, i32, i32) {
    %c0_i32 = arith.constant 0 : i32
    %c0_i32_0 = arith.constant 0 : i32
    %c0_i32_1 = arith.constant 0 : i32
    return %arg1, %c0_i32, %c0_i32_0 : i32, i32, i32
  }
  func.func @transform_5(%arg0: i32, %arg1: i32) -> (i32, i32, i32) {
    %c0_i32 = arith.constant 0 : i32
    %c0_i32_0 = arith.constant 0 : i32
    %c0_i32_1 = arith.constant 0 : i32
    return %arg1, %c0_i32, %c0_i32_0 : i32, i32, i32
  }
  func.func @transform_6(%arg0: i32, %arg1: i32) -> (i32, i32, i32) {
    %c0_i32 = arith.constant 0 : i32
    %c0_i32_0 = arith.constant 0 : i32
    %c0_i32_1 = arith.constant 0 : i32
    return %arg1, %c0_i32, %c0_i32_0 : i32, i32, i32
  }
  func.func @transform_7(%arg0: i32, %arg1: i32) -> (i32, i32, i32) {
    %c0_i32 = arith.constant 0 : i32
    %c0_i32_0 = arith.constant 0 : i32
    %c0_i32_1 = arith.constant 0 : i32
    return %arg1, %c0_i32, %c0_i32_0 : i32, i32, i32
  }
  func.func @transform_8(%arg0: i32, %arg1: i32) -> (i32, i32, i32) {
    %c0_i32 = arith.constant 0 : i32
    %c0_i32_0 = arith.constant 0 : i32
    %c0_i32_1 = arith.constant 0 : i32
    return %arg1, %c0_i32, %c0_i32_0 : i32, i32, i32
  }
  func.func @transform_9(%arg0: i32, %arg1: i32) -> (i32, i32, i32) {
    %c0_i32 = arith.constant 0 : i32
    %c0_i32_0 = arith.constant 0 : i32
    %c0_i32_1 = arith.constant 0 : i32
    return %arg1, %c0_i32, %c0_i32_0 : i32, i32, i32
  }
  func.func @transform_10(%arg0: i32, %arg1: i32) -> (i32, i32, i32) {
    %c0_i32 = arith.constant 0 : i32
    %c0_i32_0 = arith.constant 0 : i32
    %c0_i32_1 = arith.constant 0 : i32
    return %arg1, %c0_i32, %c0_i32_0 : i32, i32, i32
  }
  func.func @transform_11(%arg0: i32, %arg1: i32) -> (i32, i32, i32) {
    %c0_i32 = arith.constant 0 : i32
    %c0_i32_0 = arith.constant 0 : i32
    %c0_i32_1 = arith.constant 0 : i32
    return %arg1, %c0_i32, %c0_i32_0 : i32, i32, i32
  }
  func.func @transform_12(%arg0: i32, %arg1: i32) -> (i32, i32, i32) {
    %c0_i32 = arith.constant 0 : i32
    %c0_i32_0 = arith.constant 0 : i32
    %c0_i32_1 = arith.constant 0 : i32
    return %arg1, %c0_i32, %c0_i32_0 : i32, i32, i32
  }
  func.func @transform_13(%arg0: i32, %arg1: i32) -> (i32, i32, i32) {
    %c0_i32 = arith.constant 0 : i32
    %c0_i32_0 = arith.constant 0 : i32
    %c0_i32_1 = arith.constant 0 : i32
    return %arg1, %c0_i32, %c0_i32_0 : i32, i32, i32
  }
  func.func @transform_14(%arg0: i32, %arg1: i32) -> (i32, i32, i32) {
    %c0_i32 = arith.constant 0 : i32
    %c0_i32_0 = arith.constant 0 : i32
    %c0_i32_1 = arith.constant 0 : i32
    return %arg1, %c0_i32, %c0_i32_0 : i32, i32, i32
  }
  func.func @transform_15(%arg0: i32, %arg1: i32) -> (i32, i32) {
    %c0_i32 = arith.constant 0 : i32
    %c0_i32_0 = arith.constant 0 : i32
    %c0_i32_1 = arith.constant 0 : i32
    return %c0_i32, %c0_i32_0 : i32, i32
  }
  func.func @transform_16(%arg0: i32, %arg1: i32) -> (i32, i32) {
    %c0_i32 = arith.constant 0 : i32
    %c0_i32_0 = arith.constant 0 : i32
    %c0_i32_1 = arith.constant 0 : i32
    return %c0_i32, %c0_i32_0 : i32, i32
  }
  func.func @transform_17(%arg0: i32, %arg1: i32) -> (i32, i32, i32) {
    %c0_i32 = arith.constant 0 : i32
    %c0_i32_0 = arith.constant 0 : i32
    %c0_i32_1 = arith.constant 0 : i32
    %c0_i32_2 = arith.constant 0 : i32
    return %c0_i32, %c0_i32_0, %c0_i32_1 : i32, i32, i32
  }
  func.func @transform_18(%arg0: i32, %arg1: i32) -> (i32, i32) {
    %c0_i32 = arith.constant 0 : i32
    %c0_i32_0 = arith.constant 0 : i32
    %c0_i32_1 = arith.constant 0 : i32
    return %c0_i32, %c0_i32_0 : i32, i32
  }
  func.func @transform_19(%arg0: i32, %arg1: i32) -> (i32, i32) {
    %c0_i32 = arith.constant 0 : i32
    %c0_i32_0 = arith.constant 0 : i32
    %c0_i32_1 = arith.constant 0 : i32
    return %c0_i32, %c0_i32_0 : i32, i32
  }
  func.func @transform_20(%arg0: i32, %arg1: i32) -> (i32, i32) {
    %c0_i32 = arith.constant 0 : i32
    %c0_i32_0 = arith.constant 0 : i32
    %c0_i32_1 = arith.constant 0 : i32
    return %c0_i32, %c0_i32_0 : i32, i32
  }
  func.func @transform_21(%arg0: i32, %arg1: i32) -> (i32, i32, i32) {
    %c0_i32 = arith.constant 0 : i32
    %c0_i32_0 = arith.constant 0 : i32
    %c0_i32_1 = arith.constant 0 : i32
    return %arg0, %c0_i32, %c0_i32_0 : i32, i32, i32
  }
  func.func @transform_22(%arg0: i32, %arg1: i32) -> (i32, i32, i32) {
    %c0_i32 = arith.constant 0 : i32
    %c0_i32_0 = arith.constant 0 : i32
    %c0_i32_1 = arith.constant 0 : i32
    return %arg0, %c0_i32, %c0_i32_0 : i32, i32, i32
  }
}

</mosaic_0001>

<llo_original>
// kernel: cbramod_text_classifier_forward.1
$region0: #{cbramod_text_classifier_forward.1}
  #allocation0 [shape = 'u32[]', space=smem, size = 0x4, offset = 0x4, fixed_abs, tag = 'smem constant byte address 0x4 - core index']
  #allocation1 [shape = 'u32[144,128]{1,0:T(1,128)}', space=vmem, size = 0x12000, scoped, tag = 'internal scratch']
  #allocation2 [shape = 'f32[68,256]{1,0:T(8,128)}', space=vmem, size = 0x12000, scoped, tag = 'scratch operand']
  %s0 = inlined_call_operand.vmem [shape: bf16[2,68,256], index: 0, kind: input, shape index: {}]
  %s1 = inlined_call_operand.vmem [shape: bf16[256,256], index: 1, kind: input, shape index: {}]
  %s2 = inlined_call_operand.vmem [shape: f32[1,256], index: 2, kind: input, shape index: {}]
  %s3 = inlined_call_operand.hbm [shape: bf16[2,256,768], index: 3, kind: input, shape index: {}]
  %s4 = inlined_call_operand.vmem [shape: f32[2,1,768], index: 4, kind: input, shape index: {}]
  %s5 = inlined_call_operand.vmem [shape: bf16[2,256,256], index: 5, kind: input, shape index: {}]
  %s6 = inlined_call_operand.vmem [shape: f32[2,1,256], index: 6, kind: input, shape index: {}]
  %s7 = inlined_call_operand.vmem [shape: f32[2,1,256], index: 7, kind: input, shape index: {}]
  %s8 = inlined_call_operand.vmem [shape: f32[2,1,256], index: 8, kind: input, shape index: {}]
  %s9 = inlined_call_operand.hbm [shape: bf16[2,256,896], index: 9, kind: input, shape index: {}]
  %s10 = inlined_call_operand.vmem [shape: f32[2,1,896], index: 10, kind: input, shape index: {}]
  %s11 = inlined_call_operand.hbm [shape: bf16[2,896,256], index: 11, kind: input, shape index: {}]
  %s12 = inlined_call_operand.vmem [shape: f32[2,1,256], index: 12, kind: input, shape index: {}]
  %s13 = inlined_call_operand.vmem [shape: f32[2,1,256], index: 13, kind: input, shape index: {}]
  %s14 = inlined_call_operand.vmem [shape: f32[2,1,256], index: 14, kind: input, shape index: {}]
  %s15 = inlined_call_operand.vmem [shape: f32[4,68], index: 15, kind: input, shape index: {}]
  %s16 = inlined_call_operand.vmem [shape: f32[4,1], index: 16, kind: input, shape index: {}]
  %s17 = inlined_call_operand.hbm [shape: bf16[4,256,512], index: 17, kind: input, shape index: {}]
  %s18 = inlined_call_operand.vmem [shape: f32[1,512], index: 18, kind: input, shape index: {}]
  %s19 = inlined_call_operand.vmem [shape: bf16[512,128], index: 19, kind: input, shape index: {}]
  %s20 = inlined_call_operand.vmem [shape: f32[1,128], index: 20, kind: input, shape index: {}]
  %s21 = inlined_call_operand.vmem [shape: f32[2,4,256], index: 21, kind: output, shape index: {0}]
  %s22 = inlined_call_operand.hbm [shape: f32[2,1,128], index: 22, kind: output, shape index: {1}]
  %23 = xla_tuple %s21, %s22
  %s24 = sld [smem:[#allocation0]]
  $region149: #{cbramod_text_classifier_forward.1} parent=0
    _
  %s26 = ssub.s32 1, %s24
  %s27 = scalar_select 0, %s26, %s24
  $region1: #{cbramod_text_classifier_forward.1} parent=0
    #allocation3 [shape = 'u8[786432]{0}', space=vmem, size = 0xc0000, scoped, tag = 'input window, operand 3']
    #allocation4 [shape = 's32[2]{0}', space=sflag, size = 0x8, scoped, tag = 'scoped memory for cbramod_text_classifier_forward.1']
    #allocation5 [shape = 's32[2]{0}', space=sflag, size = 0x8, scoped, tag = 'scoped memory for cbramod_text_classifier_forward.1']
    #allocation6 [shape = 'u8[917504]{0}', space=vmem, size = 0xe0000, scoped, tag = 'input window, operand 9']
    #allocation7 [shape = 's32[2]{0}', space=sflag, size = 0x8, scoped, tag = 'scoped memory for cbramod_text_classifier_forward.1']
    #allocation8 [shape = 'u8[917504]{0}', space=vmem, size = 0xe0000, scoped, tag = 'input window, operand 11']
    #allocation9 [shape = 'u8[1048576]{0}', space=vmem, size = 0x100000, scoped, tag = 'input window, operand 17, single buffered']
    #allocation10 [shape = 's32[1]{0}', space=sflag, size = 0x4, scoped, tag = 'scoped memory for cbramod_text_classifier_forward.1']
    #allocation11 [shape = 'u8[1024]{0}', space=vmem, size = 0x400, scoped, tag = 'output window, operand 1']
    %28 = vsyncpa [#allocation4], 0
    %s29 = scalar_lea.sflag [#allocation4], 1
    %30 = vsyncpa %s29, 0
    %31 = vsyncpa [#allocation7], 0
    %s32 = scalar_lea.sflag [#allocation7], 1
    %33 = vsyncpa %s32, 0
    %34 = vsyncpa [#allocation10], 0
    %35 = vsyncpa [#allocation5], 0
    %s36 = scalar_lea.sflag [#allocation5], 1
    %37 = vsyncpa %s36, 0
    loop: start=0, step=1, limit=6
    $region2: #{cbramod_text_classifier_forward.1} parent=1 // loop_pre_header
      _
    $region3: #{cbramod_text_classifier_forward.1} parent=1 // loop_header
      %s39 = sphi 0, %s43
      %p40 = scmp.ge.s32.totalorder %s39, 6
      %s46 = sphi 0, %s58
      %s47 = sphi 0, %s54
      %s48 = sphi 0, %s46
      %s49 = sphi 0, %s47
      %s50 = sphi 0, %s48
      %s51 = sphi 0, %s49
      %s61 = sphi 0, %s63
      %s64 = sphi 0, %s61
      %s65 = sphi 0, %s64
      %s81 = sphi 0, %s65
      %s85 = sphi 0, %s85
      %s87 = sphi 0, %s85
      %s88 = sphi 0, %s87
      %s102 = sphi 0, %s88
      %s106 = sphi 0, %s106
      %s108 = sphi 0, %s106
      %s109 = sphi 0, %s108
      %s123 = sphi 0, %s109
      %s129 = sphi 0, %s131
      %s132 = sphi 0, %s129
      %s133 = sphi 0, %s132
      %s149 = sphi 0, %s133
      %s155 = sphi 0, %s157
      %s158 = sphi 0, %s155
      %s159 = sphi 0, %s158
      %s175 = sphi 0, %s159
      %s181 = sphi 0, %s183
      %s184 = sphi 0, %s181
      %s185 = sphi 0, %s184
      %s201 = sphi 0, %s185
      %s207 = sphi 0, %s209
      %s210 = sphi 0, %s207
      %s211 = sphi 0, %s210
      %s227 = sphi 0, %s211
      %s233 = sphi 0, %s235
      %s236 = sphi 0, %s233
      %s237 = sphi 0, %s236
      %s253 = sphi 0, %s237
      %s259 = sphi 0, %s261
      %s262 = sphi 0, %s259
      %s263 = sphi 0, %s262
      %s279 = sphi 0, %s263
      %s285 = sphi 0, %s287
      %s288 = sphi 0, %s285
      %s289 = sphi 0, %s288
      %s305 = sphi 0, %s289
      %s311 = sphi 0, %s313
      %s314 = sphi 0, %s311
      %s315 = sphi 0, %s314
      %s331 = sphi 0, %s315
      %s337 = sphi 0, %s339
      %s340 = sphi 0, %s337
      %s341 = sphi 0, %s340
      %s357 = sphi 0, %s341
      %s363 = sphi 0, %s365
      %s366 = sphi 0, %s363
      %s367 = sphi 0, %s366
      %s383 = sphi 0, %s367
      %s389 = sphi 0, %s391
      %s392 = sphi 0, %s389
      %s393 = sphi 0, %s392
      %s409 = sphi 0, %s393
      %s415 = sphi 0, %s417
      %s418 = sphi 0, %s415
      %s419 = sphi 0, %s418
      %s435 = sphi 0, %s419
      %s439 = sphi 0, %s439
      %s441 = sphi 0, %s439
      %s442 = sphi 0, %s441
      %s456 = sphi 0, %s442
      %s460 = sphi 0, %s460
      %s462 = sphi 0, %s460
      %s463 = sphi 0, %s462
      %s477 = sphi 0, %s463
      %s481 = sphi 0, %s481
      %s483 = sphi 0, %s481
      %s484 = sphi 0, %s483
      %s498 = sphi 0, %s484
      %s502 = sphi 0, %s502
      %s504 = sphi 0, %s502
      %s505 = sphi 0, %s504
      %s519 = sphi 0, %s505
      %s523 = sphi 0, %s523
      %s525 = sphi 0, %s523
      %s526 = sphi 0, %s525
      %s540 = sphi 0, %s526
      %s544 = sphi 0, %s544
      %s546 = sphi 0, %s544
      %s547 = sphi 0, %s546
      %s561 = sphi 0, %s547
      %s567 = sphi 0, %s569
      %s570 = sphi 0, %s567
      %s571 = sphi 0, %s570
      %s587 = sphi 0, %s571
      %s593 = sphi 0, %s595
      %s596 = sphi 0, %s593
      %s597 = sphi 0, %s596
      %s613 = sphi 0, %s597
    $region4: #{cbramod_text_classifier_forward.1} parent=1 // loop_header_branch
      %42 = sbr.rel (%p40) target = $region8
    $region5: #{cbramod_text_classifier_forward.1} parent=1 // loop_body
      %s44 = ssub.s32 %s39, 1
      %s45 = ssub.s32 %s39, 2
      %s52 = sadd.s32 1, %s47
      %p53 = scmp.ge.s32.totalorder %s52, 2
      %s54 = scalar_select %p53, 0, %s52
      %s55 = sadd.s32 1, %s46
      %s56 = scalar_select %p53, %s55, %s46
      %p57 = scmp.ge.s32.totalorder %s56, 2
      %s58 = scalar_select %p57, 0, %s56
      %s59 = ssub.s32 %s46, %s58
      %p60 = scmp.eq.s32.totalorder %s59, 0
      %s62 = sadd.s32 %s61, 1
      %s63 = scalar_select %p60, %s61, %s62
      %p66 = pneg %p60
      %p67 = scmp.eq.s32.totalorder %s39, 3
      %p68 = por %p66, %p67
      %p69 = scmp.ne.s32.totalorder %s61, %s64
      %p70 = scmp.eq.s32.totalorder %s39, 0
      %p71 = por %p69, %p70
      %p72 = scmp.ne.s32.totalorder %s61, %s64
      %p73 = scmp.eq.s32.totalorder %s44, 3
      %p74 = por %p72, %p73
      %p75 = scmp.ne.s32.totalorder %s64, %s65
      %p76 = scmp.eq.s32.totalorder %s44, 0
      %p77 = por %p75, %p76
      %p78 = scmp.ne.s32.totalorder %s64, %s65
      %p79 = scmp.eq.s32.totalorder %s45, 3
      %p80 = por %p78, %p79
      %p82 = scmp.ne.s32.totalorder %s65, %s81
      %p83 = scmp.eq.s32.totalorder %s45, 0
      %p84 = por %p82, %p83
      %s86 = sadd.s32 %s85, 1
      %p89 = scmp.eq.s32.totalorder %s39, 3
      %p90 = scmp.ne.s32.totalorder %s85, %s87
      %p91 = scmp.eq.s32.totalorder %s39, 0
      %p92 = por %p90, %p91
      %p93 = scmp.ne.s32.totalorder %s85, %s87
      %p94 = scmp.eq.s32.totalorder %s44, 3
      %p95 = por %p93, %p94
      %p96 = scmp.ne.s32.totalorder %s87, %s88
      %p97 = scmp.eq.s32.totalorder %s44, 0
      %p98 = por %p96, %p97
      %p99 = scmp.ne.s32.totalorder %s87, %s88
      %p100 = scmp.eq.s32.totalorder %s45, 3
      %p101 = por %p99, %p100
      %p103 = scmp.ne.s32.totalorder %s88, %s102
      %p104 = scmp.eq.s32.totalorder %s45, 0
      %p105 = por %p103, %p104
      %s107 = sadd.s32 %s106, 1
      %p110 = scmp.eq.s32.totalorder %s39, 3
      %p111 = scmp.ne.s32.totalorder %s106, %s108
      %p112 = scmp.eq.s32.totalorder %s39, 0
      %p113 = por %p111, %p112
      %p114 = scmp.ne.s32.totalorder %s106, %s108
      %p115 = scmp.eq.s32.totalorder %s44, 3
      %p116 = por %p114, %p115
      %p117 = scmp.ne.s32.totalorder %s108, %s109
      %p118 = scmp.eq.s32.totalorder %s44, 0
      %p119 = por %p117, %p118
      %p120 = scmp.ne.s32.totalorder %s108, %s109
      %p121 = scmp.eq.s32.totalorder %s45, 3
      %p122 = por %p120, %p121
      %p124 = scmp.ne.s32.totalorder %s109, %s123
      %p125 = scmp.eq.s32.totalorder %s45, 0
      %p126 = por %p124, %p125
      %s127 = ssub.s32 %s47, %s54
      %p128 = scmp.eq.s32.totalorder %s127, 0
      %s130 = sadd.s32 %s129, 1
      %s131 = scalar_select %p128, %s129, %s130
      %p134 = pneg %p128
      %p135 = scmp.eq.s32.totalorder %s39, 3
      %p136 = por %p134, %p135
      %p137 = scmp.ne.s32.totalorder %s129, %s132
      %p138 = scmp.eq.s32.totalorder %s39, 0
      %p139 = por %p137, %p138
      %p140 = scmp.ne.s32.totalorder %s129, %s132
      %p141 = scmp.eq.s32.totalorder %s44, 3
      %p142 = por %p140, %p141
      %p143 = scmp.ne.s32.totalorder %s132, %s133
      %p144 = scmp.eq.s32.totalorder %s44, 0
      %p145 = por %p143, %p144
      %p146 = scmp.ne.s32.totalorder %s132, %s133
      %p147 = scmp.eq.s32.totalorder %s45, 3
      %p148 = por %p146, %p147
      %p150 = scmp.ne.s32.totalorder %s133, %s149
      %p151 = scmp.eq.s32.totalorder %s45, 0
      %p152 = por %p150, %p151
      %s153 = ssub.s32 %s47, %s54
      %p154 = scmp.eq.s32.totalorder %s153, 0
      %s156 = sadd.s32 %s155, 1
      %s157 = scalar_select %p154, %s155, %s156
      %p160 = pneg %p154
      %p161 = scmp.eq.s32.totalorder %s39, 3
      %p162 = por %p160, %p161
      %p163 = scmp.ne.s32.totalorder %s155, %s158
      %p164 = scmp.eq.s32.totalorder %s39, 0
      %p165 = por %p163, %p164
      %p166 = scmp.ne.s32.totalorder %s155, %s158
      %p167 = scmp.eq.s32.totalorder %s44, 3
      %p168 = por %p166, %p167
      %p169 = scmp.ne.s32.totalorder %s158, %s159
      %p170 = scmp.eq.s32.totalorder %s44, 0
      %p171 = por %p169, %p170
      %p172 = scmp.ne.s32.totalorder %s158, %s159
      %p173 = scmp.eq.s32.totalorder %s45, 3
      %p174 = por %p172, %p173
      %p176 = scmp.ne.s32.totalorder %s159, %s175
      %p177 = scmp.eq.s32.totalorder %s45, 0
      %p178 = por %p176, %p177
      %s179 = ssub.s32 %s47, %s54
      %p180 = scmp.eq.s32.totalorder %s179, 0
      %s182 = sadd.s32 %s181, 1
      %s183 = scalar_select %p180, %s181, %s182
      %p186 = pneg %p180
      %p187 = scmp.eq.s32.totalorder %s39, 3
      %p188 = por %p186, %p187
      %p189 = scmp.ne.s32.totalorder %s181, %s184
      %p190 = scmp.eq.s32.totalorder %s39, 0
      %p191 = por %p189, %p190
      %p192 = scmp.ne.s32.totalorder %s181, %s184
      %p193 = scmp.eq.s32.totalorder %s44, 3
      %p194 = por %p192, %p193
      %p195 = scmp.ne.s32.totalorder %s184, %s185
      %p196 = scmp.eq.s32.totalorder %s44, 0
      %p197 = por %p195, %p196
      %p198 = scmp.ne.s32.totalorder %s184, %s185
      %p199 = scmp.eq.s32.totalorder %s45, 3
      %p200 = por %p198, %p199
      %p202 = scmp.ne.s32.totalorder %s185, %s201
      %p203 = scmp.eq.s32.totalorder %s45, 0
      %p204 = por %p202, %p203
      %s205 = ssub.s32 %s47, %s54
      %p206 = scmp.eq.s32.totalorder %s205, 0
      %s208 = sadd.s32 %s207, 1
      %s209 = scalar_select %p206, %s207, %s208
      %p212 = pneg %p206
      %p213 = scmp.eq.s32.totalorder %s39, 3
      %p214 = por %p212, %p213
      %p215 = scmp.ne.s32.totalorder %s207, %s210
      %p216 = scmp.eq.s32.totalorder %s39, 0
      %p217 = por %p215, %p216
      %p218 = scmp.ne.s32.totalorder %s207, %s210
      %p219 = scmp.eq.s32.totalorder %s44, 3
      %p220 = por %p218, %p219
      %p221 = scmp.ne.s32.totalorder %s210, %s211
      %p222 = scmp.eq.s32.totalorder %s44, 0
      %p223 = por %p221, %p222
      %p224 = scmp.ne.s32.totalorder %s210, %s211
      %p225 = scmp.eq.s32.totalorder %s45, 3
      %p226 = por %p224, %p225
      %p228 = scmp.ne.s32.totalorder %s211, %s227
      %p229 = scmp.eq.s32.totalorder %s45, 0
      %p230 = por %p228, %p229
      %s231 = ssub.s32 %s47, %s54
      %p232 = scmp.eq.s32.totalorder %s231, 0
      %s234 = sadd.s32 %s233, 1
      %s235 = scalar_select %p232, %s233, %s234
      %p238 = pneg %p232
      %p239 = scmp.eq.s32.totalorder %s39, 3
      %p240 = por %p238, %p239
      %p241 = scmp.ne.s32.totalorder %s233, %s236
      %p242 = scmp.eq.s32.totalorder %s39, 0
      %p243 = por %p241, %p242
      %p244 = scmp.ne.s32.totalorder %s233, %s236
      %p245 = scmp.eq.s32.totalorder %s44, 3
      %p246 = por %p244, %p245
      %p247 = scmp.ne.s32.totalorder %s236, %s237
      %p248 = scmp.eq.s32.totalorder %s44, 0
      %p249 = por %p247, %p248
      %p250 = scmp.ne.s32.totalorder %s236, %s237
      %p251 = scmp.eq.s32.totalorder %s45, 3
      %p252 = por %p250, %p251
      %p254 = scmp.ne.s32.totalorder %s237, %s253
      %p255 = scmp.eq.s32.totalorder %s45, 0
      %p256 = por %p254, %p255
      %s257 = ssub.s32 %s47, %s54
      %p258 = scmp.eq.s32.totalorder %s257, 0
      %s260 = sadd.s32 %s259, 1
      %s261 = scalar_select %p258, %s259, %s260
      %p264 = pneg %p258
      %p265 = scmp.eq.s32.totalorder %s39, 3
      %p266 = por %p264, %p265
      %p267 = scmp.ne.s32.totalorder %s259, %s262
      %p268 = scmp.eq.s32.totalorder %s39, 0
      %p269 = por %p267, %p268
      %p270 = scmp.ne.s32.totalorder %s259, %s262
      %p271 = scmp.eq.s32.totalorder %s44, 3
      %p272 = por %p270, %p271
      %p273 = scmp.ne.s32.totalorder %s262, %s263
      %p274 = scmp.eq.s32.totalorder %s44, 0
      %p275 = por %p273, %p274
      %p276 = scmp.ne.s32.totalorder %s262, %s263
      %p277 = scmp.eq.s32.totalorder %s45, 3
      %p278 = por %p276, %p277
      %p280 = scmp.ne.s32.totalorder %s263, %s279
      %p281 = scmp.eq.s32.totalorder %s45, 0
      %p282 = por %p280, %p281
      %s283 = ssub.s32 %s47, %s54
      %p284 = scmp.eq.s32.totalorder %s283, 0
      %s286 = sadd.s32 %s285, 1
      %s287 = scalar_select %p284, %s285, %s286
      %p290 = pneg %p284
      %p291 = scmp.eq.s32.totalorder %s39, 3
      %p292 = por %p290, %p291
      %p293 = scmp.ne.s32.totalorder %s285, %s288
      %p294 = scmp.eq.s32.totalorder %s39, 0
      %p295 = por %p293, %p294
      %p296 = scmp.ne.s32.totalorder %s285, %s288
      %p297 = scmp.eq.s32.totalorder %s44, 3
      %p298 = por %p296, %p297
      %p299 = scmp.ne.s32.totalorder %s288, %s289
      %p300 = scmp.eq.s32.totalorder %s44, 0
      %p301 = por %p299, %p300
      %p302 = scmp.ne.s32.totalorder %s288, %s289
      %p303 = scmp.eq.s32.totalorder %s45, 3
      %p304 = por %p302, %p303
      %p306 = scmp.ne.s32.totalorder %s289, %s305
      %p307 = scmp.eq.s32.totalorder %s45, 0
      %p308 = por %p306, %p307
      %s309 = ssub.s32 %s47, %s54
      %p310 = scmp.eq.s32.totalorder %s309, 0
      %s312 = sadd.s32 %s311, 1
      %s313 = scalar_select %p310, %s311, %s312
      %p316 = pneg %p310
      %p317 = scmp.eq.s32.totalorder %s39, 3
      %p318 = por %p316, %p317
      %p319 = scmp.ne.s32.totalorder %s311, %s314
      %p320 = scmp.eq.s32.totalorder %s39, 0
      %p321 = por %p319, %p320
      %p322 = scmp.ne.s32.totalorder %s311, %s314
      %p323 = scmp.eq.s32.totalorder %s44, 3
      %p324 = por %p322, %p323
      %p325 = scmp.ne.s32.totalorder %s314, %s315
      %p326 = scmp.eq.s32.totalorder %s44, 0
      %p327 = por %p325, %p326
      %p328 = scmp.ne.s32.totalorder %s314, %s315
      %p329 = scmp.eq.s32.totalorder %s45, 3
      %p330 = por %p328, %p329
      %p332 = scmp.ne.s32.totalorder %s315, %s331
      %p333 = scmp.eq.s32.totalorder %s45, 0
      %p334 = por %p332, %p333
      %s335 = ssub.s32 %s47, %s54
      %p336 = scmp.eq.s32.totalorder %s335, 0
      %s338 = sadd.s32 %s337, 1
      %s339 = scalar_select %p336, %s337, %s338
      %p342 = pneg %p336
      %p343 = scmp.eq.s32.totalorder %s39, 3
      %p344 = por %p342, %p343
      %p345 = scmp.ne.s32.totalorder %s337, %s340
      %p346 = scmp.eq.s32.totalorder %s39, 0
      %p347 = por %p345, %p346
      %p348 = scmp.ne.s32.totalorder %s337, %s340
      %p349 = scmp.eq.s32.totalorder %s44, 3
      %p350 = por %p348, %p349
      %p351 = scmp.ne.s32.totalorder %s340, %s341
      %p352 = scmp.eq.s32.totalorder %s44, 0
      %p353 = por %p351, %p352
      %p354 = scmp.ne.s32.totalorder %s340, %s341
      %p355 = scmp.eq.s32.totalorder %s45, 3
      %p356 = por %p354, %p355
      %p358 = scmp.ne.s32.totalorder %s341, %s357
      %p359 = scmp.eq.s32.totalorder %s45, 0
      %p360 = por %p358, %p359
      %s361 = ssub.s32 %s47, %s54
      %p362 = scmp.eq.s32.totalorder %s361, 0
      %s364 = sadd.s32 %s363, 1
      %s365 = scalar_select %p362, %s363, %s364
      %p368 = pneg %p362
      %p369 = scmp.eq.s32.totalorder %s39, 3
      %p370 = por %p368, %p369
      %p371 = scmp.ne.s32.totalorder %s363, %s366
      %p372 = scmp.eq.s32.totalorder %s39, 0
      %p373 = por %p371, %p372
      %p374 = scmp.ne.s32.totalorder %s363, %s366
      %p375 = scmp.eq.s32.totalorder %s44, 3
      %p376 = por %p374, %p375
      %p377 = scmp.ne.s32.totalorder %s366, %s367
      %p378 = scmp.eq.s32.totalorder %s44, 0
      %p379 = por %p377, %p378
      %p380 = scmp.ne.s32.totalorder %s366, %s367
      %p381 = scmp.eq.s32.totalorder %s45, 3
      %p382 = por %p380, %p381
      %p384 = scmp.ne.s32.totalorder %s367, %s383
      %p385 = scmp.eq.s32.totalorder %s45, 0
      %p386 = por %p384, %p385
      %s387 = ssub.s32 %s47, %s54
      %p388 = scmp.eq.s32.totalorder %s387, 0
      %s390 = sadd.s32 %s389, 1
      %s391 = scalar_select %p388, %s389, %s390
      %p394 = pneg %p388
      %p395 = scmp.eq.s32.totalorder %s39, 3
      %p396 = por %p394, %p395
      %p397 = scmp.ne.s32.totalorder %s389, %s392
      %p398 = scmp.eq.s32.totalorder %s39, 0
      %p399 = por %p397, %p398
      %p400 = scmp.ne.s32.totalorder %s389, %s392
      %p401 = scmp.eq.s32.totalorder %s44, 3
      %p402 = por %p400, %p401
      %p403 = scmp.ne.s32.totalorder %s392, %s393
      %p404 = scmp.eq.s32.totalorder %s44, 0
      %p405 = por %p403, %p404
      %p406 = scmp.ne.s32.totalorder %s392, %s393
      %p407 = scmp.eq.s32.totalorder %s45, 3
      %p408 = por %p406, %p407
      %p410 = scmp.ne.s32.totalorder %s393, %s409
      %p411 = scmp.eq.s32.totalorder %s45, 0
      %p412 = por %p410, %p411
      %s413 = ssub.s32 %s47, %s54
      %p414 = scmp.eq.s32.totalorder %s413, 0
      %s416 = sadd.s32 %s415, 1
      %s417 = scalar_select %p414, %s415, %s416
      %p420 = pneg %p414
      %p421 = scmp.eq.s32.totalorder %s39, 3
      %p422 = por %p420, %p421
      %p423 = scmp.ne.s32.totalorder %s415, %s418
      %p424 = scmp.eq.s32.totalorder %s39, 0
      %p425 = por %p423, %p424
      %p426 = scmp.ne.s32.totalorder %s415, %s418
      %p427 = scmp.eq.s32.totalorder %s44, 3
      %p428 = por %p426, %p427
      %p429 = scmp.ne.s32.totalorder %s418, %s419
      %p430 = scmp.eq.s32.totalorder %s44, 0
      %p431 = por %p429, %p430
      %p432 = scmp.ne.s32.totalorder %s418, %s419
      %p433 = scmp.eq.s32.totalorder %s45, 3
      %p434 = por %p432, %p433
      %p436 = scmp.ne.s32.totalorder %s419, %s435
      %p437 = scmp.eq.s32.totalorder %s45, 0
      %p438 = por %p436, %p437
      %s440 = sadd.s32 %s439, 1
      %p443 = scmp.eq.s32.totalorder %s39, 3
      %p444 = scmp.ne.s32.totalorder %s439, %s441
      %p445 = scmp.eq.s32.totalorder %s39, 0
      %p446 = por %p444, %p445
      %p447 = scmp.ne.s32.totalorder %s439, %s441
      %p448 = scmp.eq.s32.totalorder %s44, 3
      %p449 = por %p447, %p448
      %p450 = scmp.ne.s32.totalorder %s441, %s442
      %p451 = scmp.eq.s32.totalorder %s44, 0
      %p452 = por %p450, %p451
      %p453 = scmp.ne.s32.totalorder %s441, %s442
      %p454 = scmp.eq.s32.totalorder %s45, 3
      %p455 = por %p453, %p454
      %p457 = scmp.ne.s32.totalorder %s442, %s456
      %p458 = scmp.eq.s32.totalorder %s45, 0
      %p459 = por %p457, %p458
      %s461 = sadd.s32 %s460, 1
      %p464 = scmp.eq.s32.totalorder %s39, 3
      %p465 = scmp.ne.s32.totalorder %s460, %s462
      %p466 = scmp.eq.s32.totalorder %s39, 0
      %p467 = por %p465, %p466
      %p468 = scmp.ne.s32.totalorder %s460, %s462
      %p469 = scmp.eq.s32.totalorder %s44, 3
      %p470 = por %p468, %p469
      %p471 = scmp.ne.s32.totalorder %s462, %s463
      %p472 = scmp.eq.s32.totalorder %s44, 0
      %p473 = por %p471, %p472
      %p474 = scmp.ne.s32.totalorder %s462, %s463
      %p475 = scmp.eq.s32.totalorder %s45, 3
      %p476 = por %p474, %p475
      %p478 = scmp.ne.s32.totalorder %s463, %s477
      %p479 = scmp.eq.s32.totalorder %s45, 0
      %p480 = por %p478, %p479
      %s482 = sadd.s32 %s481, 1
      %p485 = scmp.eq.s32.totalorder %s39, 3
      %p486 = scmp.ne.s32.totalorder %s481, %s483
      %p487 = scmp.eq.s32.totalorder %s39, 0
      %p488 = por %p486, %p487
      %p489 = scmp.ne.s32.totalorder %s481, %s483
      %p490 = scmp.eq.s32.totalorder %s44, 3
      %p491 = por %p489, %p490
      %p492 = scmp.ne.s32.totalorder %s483, %s484
      %p493 = scmp.eq.s32.totalorder %s44, 0
      %p494 = por %p492, %p493
      %p495 = scmp.ne.s32.totalorder %s483, %s484
      %p496 = scmp.eq.s32.totalorder %s45, 3
      %p497 = por %p495, %p496
      %p499 = scmp.ne.s32.totalorder %s484, %s498
      %p500 = scmp.eq.s32.totalorder %s45, 0
      %p501 = por %p499, %p500
      %s503 = sadd.s32 %s502, 1
      %p506 = scmp.eq.s32.totalorder %s39, 3
      %p507 = scmp.ne.s32.totalorder %s502, %s504
      %p508 = scmp.eq.s32.totalorder %s39, 0
      %p509 = por %p507, %p508
      %p510 = scmp.ne.s32.totalorder %s502, %s504
      %p511 = scmp.eq.s32.totalorder %s44, 3
      %p512 = por %p510, %p511
      %p513 = scmp.ne.s32.totalorder %s504, %s505
      %p514 = scmp.eq.s32.totalorder %s44, 0
      %p515 = por %p513, %p514
      %p516 = scmp.ne.s32.totalorder %s504, %s505
      %p517 = scmp.eq.s32.totalorder %s45, 3
      %p518 = por %p516, %p517
      %p520 = scmp.ne.s32.totalorder %s505, %s519
      %p521 = scmp.eq.s32.totalorder %s45, 0
      %p522 = por %p520, %p521
      %s524 = sadd.s32 %s523, 1
      %p527 = scmp.eq.s32.totalorder %s39, 3
      %p528 = scmp.ne.s32.totalorder %s523, %s525
      %p529 = scmp.eq.s32.totalorder %s39, 0
      %p530 = por %p528, %p529
      %p531 = scmp.ne.s32.totalorder %s523, %s525
      %p532 = scmp.eq.s32.totalorder %s44, 3
      %p533 = por %p531, %p532
      %p534 = scmp.ne.s32.totalorder %s525, %s526
      %p535 = scmp.eq.s32.totalorder %s44, 0
      %p536 = por %p534, %p535
      %p537 = scmp.ne.s32.totalorder %s525, %s526
      %p538 = scmp.eq.s32.totalorder %s45, 3
      %p539 = por %p537, %p538
      %p541 = scmp.ne.s32.totalorder %s526, %s540
      %p542 = scmp.eq.s32.totalorder %s45, 0
      %p543 = por %p541, %p542
      %s545 = sadd.s32 %s544, 1
      %p548 = scmp.eq.s32.totalorder %s39, 3
      %p549 = scmp.ne.s32.totalorder %s544, %s546
      %p550 = scmp.eq.s32.totalorder %s39, 0
      %p551 = por %p549, %p550
      %p552 = scmp.ne.s32.totalorder %s544, %s546
      %p553 = scmp.eq.s32.totalorder %s44, 3
      %p554 = por %p552, %p553
      %p555 = scmp.ne.s32.totalorder %s546, %s547
      %p556 = scmp.eq.s32.totalorder %s44, 0
      %p557 = por %p555, %p556
      %p558 = scmp.ne.s32.totalorder %s546, %s547
      %p559 = scmp.eq.s32.totalorder %s45, 3
      %p560 = por %p558, %p559
      %p562 = scmp.ne.s32.totalorder %s547, %s561
      %p563 = scmp.eq.s32.totalorder %s45, 0
      %p564 = por %p562, %p563
      %s565 = ssub.s32 %s46, %s58
      %p566 = scmp.eq.s32.totalorder %s565, 0
      %s568 = sadd.s32 %s567, 1
      %s569 = scalar_select %p566, %s567, %s568
      %p572 = pneg %p566
      %p573 = scmp.eq.s32.totalorder %s39, 3
      %p574 = por %p572, %p573
      %p575 = scmp.ne.s32.totalorder %s567, %s570
      %p576 = scmp.eq.s32.totalorder %s39, 0
      %p577 = por %p575, %p576
      %p578 = scmp.ne.s32.totalorder %s567, %s570
      %p579 = scmp.eq.s32.totalorder %s44, 3
      %p580 = por %p578, %p579
      %p581 = scmp.ne.s32.totalorder %s570, %s571
      %p582 = scmp.eq.s32.totalorder %s44, 0
      %p583 = por %p581, %p582
      %p584 = scmp.ne.s32.totalorder %s570, %s571
      %p585 = scmp.eq.s32.totalorder %s45, 3
      %p586 = por %p584, %p585
      %p588 = scmp.ne.s32.totalorder %s571, %s587
      %p589 = scmp.eq.s32.totalorder %s45, 0
      %p590 = por %p588, %p589
      %s591 = ssub.s32 %s46, %s58
      %p592 = scmp.eq.s32.totalorder %s591, 0
      %s594 = sadd.s32 %s593, 1
      %s595 = scalar_select %p592, %s593, %s594
      %p598 = pneg %p592
      %p599 = scmp.eq.s32.totalorder %s39, 3
      %p600 = por %p598, %p599
      %p601 = scmp.ne.s32.totalorder %s593, %s596
      %p602 = scmp.eq.s32.totalorder %s39, 0
      %p603 = por %p601, %p602
      %p604 = scmp.ne.s32.totalorder %s593, %s596
      %p605 = scmp.eq.s32.totalorder %s44, 3
      %p606 = por %p604, %p605
      %p607 = scmp.ne.s32.totalorder %s596, %s597
      %p608 = scmp.eq.s32.totalorder %s44, 0
      %p609 = por %p607, %p608
      %p610 = scmp.ne.s32.totalorder %s596, %s597
      %p611 = scmp.eq.s32.totalorder %s45, 3
      %p612 = por %p610, %p611
      %p614 = scmp.ne.s32.totalorder %s597, %s613
      %p615 = scmp.eq.s32.totalorder %s45, 0
      %p616 = por %p614, %p615
      %p617 = scmp.le.s32.totalorder 1, %s39
      %p618 = scmp.lt.s32.totalorder %s39, 5
      %p619 = pnand %p617, %p618
      %p620 = pneg %p619
      // Predicated region
      $region9: #{cbramod_text_classifier_forward.1} parent=5 // pred_check
        _
      $region10: #{cbramod_text_classifier_forward.1} parent=5 // pred_check_branch
        %622 = sbr.rel (%p619) target = $region12
      $region11: #{cbramod_text_classifier_forward.1} parent=5 // pred_region
        %s623 = ssub.s32 %s39, 1
        // Predicated region
        $region13: #{cbramod_text_classifier_forward.1} parent=11 // pred_check
          %p624 = pneg %p98
        $region14: #{cbramod_text_classifier_forward.1} parent=11 // pred_check_branch
          %626 = sbr.rel (%p624) target = $region16
        $region15: #{cbramod_text_classifier_forward.1} parent=11 // pred_region
          _
        $region16: #{cbramod_text_classifier_forward.1} parent=11 // pred_fallthru
          _
        // Predicated region
        $region17: #{cbramod_text_classifier_forward.1} parent=11 // pred_check
          %p627 = pneg %p119
        $region18: #{cbramod_text_classifier_forward.1} parent=11 // pred_check_branch
          %629 = sbr.rel (%p627) target = $region20
        $region19: #{cbramod_text_classifier_forward.1} parent=11 // pred_region
          _
        $region20: #{cbramod_text_classifier_forward.1} parent=11 // pred_fallthru
          _
        // Predicated region
        $region21: #{cbramod_text_classifier_forward.1} parent=11 // pred_check
          %p630 = pneg %p452
        $region22: #{cbramod_text_classifier_forward.1} parent=11 // pred_check_branch
          %632 = sbr.rel (%p630) target = $region24
        $region23: #{cbramod_text_classifier_forward.1} parent=11 // pred_region
          _
        $region24: #{cbramod_text_classifier_forward.1} parent=11 // pred_fallthru
          _
        // Predicated region
        $region25: #{cbramod_text_classifier_forward.1} parent=11 // pred_check
          %p633 = pneg %p473
        $region26: #{cbramod_text_classifier_forward.1} parent=11 // pred_check_branch
          %635 = sbr.rel (%p633) target = $region28
        $region27: #{cbramod_text_classifier_forward.1} parent=11 // pred_region
          _
        $region28: #{cbramod_text_classifier_forward.1} parent=11 // pred_fallthru
          _
        // Predicated region
        $region29: #{cbramod_text_classifier_forward.1} parent=11 // pred_check
          %p636 = pneg %p494
        $region30: #{cbramod_text_classifier_forward.1} parent=11 // pred_check_branch
          %638 = sbr.rel (%p636) target = $region32
        $region31: #{cbramod_text_classifier_forward.1} parent=11 // pred_region
          %s640 = ssub.s32 32768, 32768
          %641 = vsyncadd [#allocation10], %s640
          %s642 = sshll.u32 [#allocation9], 4
          %s643 = int_to_ptr.vmem [resolvable:$true] %s642
          %648 = dma.hbm_to_vmem [thread:$0]  %s17, 32768, %s643, [#allocation10], 256, 256, 16
        $region32: #{cbramod_text_classifier_forward.1} parent=11 // pred_fallthru
          _
        // Predicated region
        $region33: #{cbramod_text_classifier_forward.1} parent=11 // pred_check
          %p649 = pneg %p515
        $region34: #{cbramod_text_classifier_forward.1} parent=11 // pred_check_branch
          %651 = sbr.rel (%p649) target = $region36
        $region35: #{cbramod_text_classifier_forward.1} parent=11 // pred_region
          _
        $region36: #{cbramod_text_classifier_forward.1} parent=11 // pred_fallthru
          _
        // Predicated region
        $region37: #{cbramod_text_classifier_forward.1} parent=11 // pred_check
          %p652 = pneg %p536
        $region38: #{cbramod_text_classifier_forward.1} parent=11 // pred_check_branch
          %654 = sbr.rel (%p652) target = $region40
        $region39: #{cbramod_text_classifier_forward.1} parent=11 // pred_region
          _
        $region40: #{cbramod_text_classifier_forward.1} parent=11 // pred_fallthru
          _
        // Predicated region
        $region41: #{cbramod_text_classifier_forward.1} parent=11 // pred_check
          %p655 = pneg %p557
        $region42: #{cbramod_text_classifier_forward.1} parent=11 // pred_check_branch
          %657 = sbr.rel (%p655) target = $region44
        $region43: #{cbramod_text_classifier_forward.1} parent=11 // pred_region
          _
        $region44: #{cbramod_text_classifier_forward.1} parent=11 // pred_fallthru
          _
      $region12: #{cbramod_text_classifier_forward.1} parent=5 // pred_fallthru
        _
      %p658 = scmp.lt.s32.totalorder %s39, 4
      // Predicated region
      $region45: #{cbramod_text_classifier_forward.1} parent=5 // pred_check
        %p659 = pneg %p658
      $region46: #{cbramod_text_classifier_forward.1} parent=5 // pred_check_branch
        %661 = sbr.rel (%p659) target = $region48
      $region47: #{cbramod_text_classifier_forward.1} parent=5 // pred_region
        // Predicated region
        $region49: #{cbramod_text_classifier_forward.1} parent=47 // pred_check
          %p662 = pneg %p71
        $region50: #{cbramod_text_classifier_forward.1} parent=47 // pred_check_branch
          %664 = sbr.rel (%p662) target = $region52
        $region51: #{cbramod_text_classifier_forward.1} parent=47 // pred_region
          %p665 = scmp.lt.s32.totalorder %s46, 1
          %s666 = scalar_select %p665, %s46, 1
          %s667 = smul.addr %s666, 18
          %s668 = smul.addr %s667, 4
          %s669 = scalar_lea.vmem %s0, %s668
        $region52: #{cbramod_text_classifier_forward.1} parent=47 // pred_fallthru
          _
        // Predicated region
        $region53: #{cbramod_text_classifier_forward.1} parent=47 // pred_check
          %p670 = pneg %p139
        $region54: #{cbramod_text_classifier_forward.1} parent=47 // pred_check_branch
          %672 = sbr.rel (%p670) target = $region56
        $region55: #{cbramod_text_classifier_forward.1} parent=47 // pred_region
          %s673 = sand.u32 %s129, 1
          %s674 = scalar_lea.sflag [#allocation4], %s673
          %s675 = sand.u32 %s129, 1
          %s676 = smul.addr %s675, 768
          %s677 = scalar_lea.vmem [#allocation3], %s676
          %s679 = ssub.s32 12288, 12288
          %680 = vsyncadd %s674, %s679
          %s681 = smul.addr %s47, 192
          %s682 = smul.addr %s681, 64
          %s683 = scalar_lea.hbm %s3, %s682
          %s684 = sshll.u32 %s677, 4
          %s685 = int_to_ptr.vmem [resolvable:$true] %s684
          %690 = dma.hbm_to_vmem [thread:$0]  %s683, 12288, %s685, %s674, 384, 384, 24
        $region56: #{cbramod_text_classifier_forward.1} parent=47 // pred_fallthru
          _
        // Predicated region
        $region57: #{cbramod_text_classifier_forward.1} parent=47 // pred_check
          %p691 = pneg %p165
        $region58: #{cbramod_text_classifier_forward.1} parent=47 // pred_check_branch
          %693 = sbr.rel (%p691) target = $region60
        $region59: #{cbramod_text_classifier_forward.1} parent=47 // pred_region
          %p694 = scmp.lt.s32.totalorder %s47, 1
          %s695 = scalar_select %p694, %s47, 1
          %s696 = smul.addr %s695, 6
          %s697 = scalar_lea.vmem %s4, %s696
        $region60: #{cbramod_text_classifier_forward.1} parent=47 // pred_fallthru
          _
        // Predicated region
        $region61: #{cbramod_text_classifier_forward.1} parent=47 // pred_check
          %p698 = pneg %p191
        $region62: #{cbramod_text_classifier_forward.1} parent=47 // pred_check_branch
          %700 = sbr.rel (%p698) target = $region64
        $region63: #{cbramod_text_classifier_forward.1} parent=47 // pred_region
          %p701 = scmp.lt.s32.totalorder %s47, 1
          %s702 = scalar_select %p701, %s47, 1
          %s703 = smul.addr %s702, 64
          %s704 = smul.addr %s703, 4
          %s705 = scalar_lea.vmem %s5, %s704
        $region64: #{cbramod_text_classifier_forward.1} parent=47 // pred_fallthru
          _
        // Predicated region
        $region65: #{cbramod_text_classifier_forward.1} parent=47 // pred_check
          %p706 = pneg %p217
        $region66: #{cbramod_text_classifier_forward.1} parent=47 // pred_check_branch
          %708 = sbr.rel (%p706) target = $region68
        $region67: #{cbramod_text_classifier_forward.1} parent=47 // pred_region
          %p709 = scmp.lt.s32.totalorder %s47, 1
          %s710 = scalar_select %p709, %s47, 1
          %s711 = smul.addr %s710, 2
          %s712 = scalar_lea.vmem %s6, %s711
        $region68: #{cbramod_text_classifier_forward.1} parent=47 // pred_fallthru
          _
        // Predicated region
        $region69: #{cbramod_text_classifier_forward.1} parent=47 // pred_check
          %p713 = pneg %p243
        $region70: #{cbramod_text_classifier_forward.1} parent=47 // pred_check_branch
          %715 = sbr.rel (%p713) target = $region72
        $region71: #{cbramod_text_classifier_forward.1} parent=47 // pred_region
          %p716 = scmp.lt.s32.totalorder %s47, 1
          %s717 = scalar_select %p716, %s47, 1
          %s718 = smul.addr %s717, 2
          %s719 = scalar_lea.vmem %s7, %s718
        $region72: #{cbramod_text_classifier_forward.1} parent=47 // pred_fallthru
          _
        // Predicated region
        $region73: #{cbramod_text_classifier_forward.1} parent=47 // pred_check
          %p720 = pneg %p269
        $region74: #{cbramod_text_classifier_forward.1} parent=47 // pred_check_branch
          %722 = sbr.rel (%p720) target = $region76
        $region75: #{cbramod_text_classifier_forward.1} parent=47 // pred_region
          %p723 = scmp.lt.s32.totalorder %s47, 1
          %s724 = scalar_select %p723, %s47, 1
          %s725 = smul.addr %s724, 2
          %s726 = scalar_lea.vmem %s8, %s725
        $region76: #{cbramod_text_classifier_forward.1} parent=47 // pred_fallthru
          _
        // Predicated region
        $region77: #{cbramod_text_classifier_forward.1} parent=47 // pred_check
          %p727 = pneg %p295
        $region78: #{cbramod_text_classifier_forward.1} parent=47 // pred_check_branch
          %729 = sbr.rel (%p727) target = $region80
        $region79: #{cbramod_text_classifier_forward.1} parent=47 // pred_region
          %s730 = sand.u32 %s39, 1
          %s731 = scalar_lea.sflag [#allocation7], %s730
          %s732 = sand.u32 %s285, 1
          %s733 = smul.addr %s732, 896
          %s734 = scalar_lea.vmem [#allocation6], %s733
          %s736 = ssub.s32 14336, 14336
          %737 = vsyncadd %s731, %s736
          %s738 = smul.addr %s47, 224
          %s739 = smul.addr %s738, 64
          %s740 = scalar_lea.hbm %s9, %s739
          %s741 = sshll.u32 %s734, 4
          %s742 = int_to_ptr.vmem [resolvable:$true] %s741
          %747 = dma.hbm_to_vmem [thread:$0]  %s740, 14336, %s742, %s731, 448, 448, 28
        $region80: #{cbramod_text_classifier_forward.1} parent=47 // pred_fallthru
          _
        // Predicated region
        $region81: #{cbramod_text_classifier_forward.1} parent=47 // pred_check
          %p748 = pneg %p321
        $region82: #{cbramod_text_classifier_forward.1} parent=47 // pred_check_branch
          %750 = sbr.rel (%p748) target = $region84
        $region83: #{cbramod_text_classifier_forward.1} parent=47 // pred_region
          %p751 = scmp.lt.s32.totalorder %s47, 1
          %s752 = scalar_select %p751, %s47, 1
          %s753 = smul.addr %s752, 7
          %s754 = scalar_lea.vmem %s10, %s753
        $region84: #{cbramod_text_classifier_forward.1} parent=47 // pred_fallthru
          _
        // Predicated region
        $region85: #{cbramod_text_classifier_forward.1} parent=47 // pred_check
          %p755 = pneg %p347
        $region86: #{cbramod_text_classifier_forward.1} parent=47 // pred_check_branch
          %757 = sbr.rel (%p755) target = $region88
        $region87: #{cbramod_text_classifier_forward.1} parent=47 // pred_region
          %s758 = sand.u32 %s39, 1
          %s759 = scalar_lea.sflag [#allocation7], %s758
          %s760 = sand.u32 %s337, 1
          %s761 = smul.addr %s760, 896
          %s762 = scalar_lea.vmem [#allocation8], %s761
          %s764 = ssub.s32 14336, 14336
          %765 = vsyncadd %s759, %s764
          %s766 = smul.addr %s47, 224
          %s767 = smul.addr %s766, 64
          %s768 = scalar_lea.hbm %s11, %s767
          %s769 = sshll.u32 %s762, 4
          %s770 = int_to_ptr.vmem [resolvable:$true] %s769
          %775 = dma.hbm_to_vmem [thread:$0]  %s768, 14336, %s770, %s759, 128, 128, 8
        $region88: #{cbramod_text_classifier_forward.1} parent=47 // pred_fallthru
          _
        // Predicated region
        $region89: #{cbramod_text_classifier_forward.1} parent=47 // pred_check
          %p776 = pneg %p373
        $region90: #{cbramod_text_classifier_forward.1} parent=47 // pred_check_branch
          %778 = sbr.rel (%p776) target = $region92
        $region91: #{cbramod_text_classifier_forward.1} parent=47 // pred_region
          %p779 = scmp.lt.s32.totalorder %s47, 1
          %s780 = scalar_select %p779, %s47, 1
          %s781 = smul.addr %s780, 2
          %s782 = scalar_lea.vmem %s12, %s781
        $region92: #{cbramod_text_classifier_forward.1} parent=47 // pred_fallthru
          _
        // Predicated region
        $region93: #{cbramod_text_classifier_forward.1} parent=47 // pred_check
          %p783 = pneg %p399
        $region94: #{cbramod_text_classifier_forward.1} parent=47 // pred_check_branch
          %785 = sbr.rel (%p783) target = $region96
        $region95: #{cbramod_text_classifier_forward.1} parent=47 // pred_region
          %p786 = scmp.lt.s32.totalorder %s47, 1
          %s787 = scalar_select %p786, %s47, 1
          %s788 = smul.addr %s787, 2
          %s789 = scalar_lea.vmem %s13, %s788
        $region96: #{cbramod_text_classifier_forward.1} parent=47 // pred_fallthru
          _
        // Predicated region
        $region97: #{cbramod_text_classifier_forward.1} parent=47 // pred_check
          %p790 = pneg %p425
        $region98: #{cbramod_text_classifier_forward.1} parent=47 // pred_check_branch
          %792 = sbr.rel (%p790) target = $region100
        $region99: #{cbramod_text_classifier_forward.1} parent=47 // pred_region
          %p793 = scmp.lt.s32.totalorder %s47, 1
          %s794 = scalar_select %p793, %s47, 1
          %s795 = smul.addr %s794, 2
          %s796 = scalar_lea.vmem %s14, %s795
        $region100: #{cbramod_text_classifier_forward.1} parent=47 // pred_fallthru
          _
      $region48: #{cbramod_text_classifier_forward.1} parent=5 // pred_fallthru
        _
      %p797 = scmp.le.s32.totalorder 1, %s39
      %p798 = scmp.lt.s32.totalorder %s39, 5
      %p799 = pnand %p797, %p798
      %p800 = pneg %p799
      // Predicated region
      $region101: #{cbramod_text_classifier_forward.1} parent=5 // pred_check
        _
      $region102: #{cbramod_text_classifier_forward.1} parent=5 // pred_check_branch
        %802 = sbr.rel (%p799) target = $region104
      $region103: #{cbramod_text_classifier_forward.1} parent=5 // pred_region
        %s803 = ssub.s32 %s39, 1
        %s804 = sand.u32 %s132, 1
        %s805 = scalar_lea.sflag [#allocation4], %s804
        %s806 = sand.u32 %s132, 1
        %s807 = smul.addr %s806, 768
        %s808 = scalar_lea.vmem [#allocation3], %s807
        // Predicated region
        $region105: #{cbramod_text_classifier_forward.1} parent=103 // pred_check
          %p809 = pneg %p145
        $region106: #{cbramod_text_classifier_forward.1} parent=103 // pred_check_branch
          %811 = sbr.rel (%p809) target = $region108
        $region107: #{cbramod_text_classifier_forward.1} parent=103 // pred_region
          %812 = dma.done %s805, 12288
        $region108: #{cbramod_text_classifier_forward.1} parent=103 // pred_fallthru
          _
        %s813 = sand.u32 %s44, 1
        %s814 = scalar_lea.sflag [#allocation7], %s813
        %s815 = sand.u32 %s288, 1
        %s816 = smul.addr %s815, 896
        %s817 = scalar_lea.vmem [#allocation6], %s816
        // Predicated region
        $region109: #{cbramod_text_classifier_forward.1} parent=103 // pred_check
          %p818 = pneg %p301
        $region110: #{cbramod_text_classifier_forward.1} parent=103 // pred_check_branch
          %820 = sbr.rel (%p818) target = $region112
        $region111: #{cbramod_text_classifier_forward.1} parent=103 // pred_region
          %821 = dma.done %s814, 14336
        $region112: #{cbramod_text_classifier_forward.1} parent=103 // pred_fallthru
          _
        %s822 = sand.u32 %s44, 1
        %s823 = scalar_lea.sflag [#allocation7], %s822
        %s824 = sand.u32 %s340, 1
        %s825 = smul.addr %s824, 896
        %s826 = scalar_lea.vmem [#allocation8], %s825
        // Predicated region
        $region113: #{cbramod_text_classifier_forward.1} parent=103 // pred_check
          %p827 = pneg %p353
        $region114: #{cbramod_text_classifier_forward.1} parent=103 // pred_check_branch
          %829 = sbr.rel (%p827) target = $region116
        $region115: #{cbramod_text_classifier_forward.1} parent=103 // pred_region
          %830 = dma.done %s823, 14336
        $region116: #{cbramod_text_classifier_forward.1} parent=103 // pred_fallthru
          _
        // Predicated region
        $region117: #{cbramod_text_classifier_forward.1} parent=103 // pred_check
          %p831 = pneg %p494
        $region118: #{cbramod_text_classifier_forward.1} parent=103 // pred_check_branch
          %833 = sbr.rel (%p831) target = $region120
        $region119: #{cbramod_text_classifier_forward.1} parent=103 // pred_region
          %834 = dma.done [#allocation10], 32768
        $region120: #{cbramod_text_classifier_forward.1} parent=103 // pred_fallthru
          _
        %p835 = scmp.lt.s32.totalorder %s48, 1
        %s836 = scalar_select %p835, %s48, 1
        %s837 = smul.addr %s836, 18
        %s838 = smul.addr %s837, 4
        %s839 = scalar_lea.vmem %s0, %s838
        %p840 = pneg %p77
        %p841 = pneg %p74
        %p842 = pneg %p98
        %p843 = pneg %p95
        %p844 = pneg %p119
        %p845 = pneg %p116
        %s846 = sand.u32 %s132, 1
        %s847 = scalar_lea.sflag [#allocation4], %s846
        %s848 = sand.u32 %s132, 1
        %s849 = smul.addr %s848, 768
        %s850 = scalar_lea.vmem [#allocation3], %s849
        %p851 = pneg %p145
        %p852 = pneg %p142
        %p853 = scmp.lt.s32.totalorder %s49, 1
        %s854 = scalar_select %p853, %s49, 1
        %s855 = smul.addr %s854, 6
        %s856 = scalar_lea.vmem %s4, %s855
        %p857 = pneg %p171
        %p858 = pneg %p168
        %p859 = scmp.lt.s32.totalorder %s49, 1
        %s860 = scalar_select %p859, %s49, 1
        %s861 = smul.addr %s860, 64
        %s862 = smul.addr %s861, 4
        %s863 = scalar_lea.vmem %s5, %s862
        %p864 = pneg %p197
        %p865 = pneg %p194
        %p866 = scmp.lt.s32.totalorder %s49, 1
        %s867 = scalar_select %p866, %s49, 1
        %s868 = smul.addr %s867, 2
        %s869 = scalar_lea.vmem %s6, %s868
        %p870 = pneg %p223
        %p871 = pneg %p220
        %p872 = scmp.lt.s32.totalorder %s49, 1
        %s873 = scalar_select %p872, %s49, 1
        %s874 = smul.addr %s873, 2
        %s875 = scalar_lea.vmem %s7, %s874
        %p876 = pneg %p249
        %p877 = pneg %p246
        %p878 = scmp.lt.s32.totalorder %s49, 1
        %s879 = scalar_select %p878, %s49, 1
        %s880 = smul.addr %s879, 2
        %s881 = scalar_lea.vmem %s8, %s880
        %p882 = pneg %p275
        %p883 = pneg %p272
        %s884 = sand.u32 %s44, 1
        %s885 = scalar_lea.sflag [#allocation7], %s884
        %s886 = sand.u32 %s288, 1
        %s887 = smul.addr %s886, 896
        %s888 = scalar_lea.vmem [#allocation6], %s887
        %p889 = pneg %p301
        %p890 = pneg %p298
        %p891 = scmp.lt.s32.totalorder %s49, 1
        %s892 = scalar_select %p891, %s49, 1
        %s893 = smul.addr %s892, 7
        %s894 = scalar_lea.vmem %s10, %s893
        %p895 = pneg %p327
        %p896 = pneg %p324
        %s897 = sand.u32 %s44, 1
        %s898 = scalar_lea.sflag [#allocation7], %s897
        %s899 = sand.u32 %s340, 1
        %s900 = smul.addr %s899, 896
        %s901 = scalar_lea.vmem [#allocation8], %s900
        %p902 = pneg %p353
        %p903 = pneg %p350
        %p904 = scmp.lt.s32.totalorder %s49, 1
        %s905 = scalar_select %p904, %s49, 1
        %s906 = smul.addr %s905, 2
        %s907 = scalar_lea.vmem %s12, %s906
        %p908 = pneg %p379
        %p909 = pneg %p376
        %p910 = scmp.lt.s32.totalorder %s49, 1
        %s911 = scalar_select %p910, %s49, 1
        %s912 = smul.addr %s911, 2
        %s913 = scalar_lea.vmem %s13, %s912
        %p914 = pneg %p405
        %p915 = pneg %p402
        %p916 = scmp.lt.s32.totalorder %s49, 1
        %s917 = scalar_select %p916, %s49, 1
        %s918 = smul.addr %s917, 2
        %s919 = scalar_lea.vmem %s14, %s918
        %p920 = pneg %p431
        %p921 = pneg %p428
        %p922 = pneg %p452
        %p923 = pneg %p449
        %p924 = pneg %p473
        %p925 = pneg %p470
        %p926 = pneg %p494
        %p927 = pneg %p491
        %p928 = pneg %p515
        %p929 = pneg %p512
        %p930 = pneg %p536
        %p931 = pneg %p533
        %p932 = pneg %p557
        %p933 = pneg %p554
        %p934 = pneg %p583
        %p935 = pneg %p580
        %p936 = scmp.lt.s32.totalorder %s48, 1
        %s937 = scalar_select %p936, %s48, 1
        %s938 = smul.addr %s937, 2
        %s939 = smul.addr %s938, 4
        %s940 = scalar_lea.vmem %s21, %s939
        %p941 = pneg %p609
        %p942 = pneg %p606
        %s943 = sand.u32 %s596, 1
        %s944 = scalar_lea.sflag [#allocation5], %s943
        %s945 = sand.u32 %s596, 1
        %s946 = scalar_lea.vmem [#allocation11], %s945
        %p947 = scmp.lt.s32.totalorder %s48, 1
        %s948 = scalar_select %p947, %s48, 1
        %s949 = smul.addr %s948, 18
        %s950 = smul.addr %s949, 4
        %s951 = scalar_lea.vmem %s0, %s950
        %p952 = scmp.lt.s32.totalorder %s49, 1
        %s953 = scalar_select %p952, %s49, 1
        %s954 = smul.addr %s953, 6
        %s955 = scalar_lea.vmem %s4, %s954
        %p956 = scmp.lt.s32.totalorder %s49, 1
        %s957 = scalar_select %p956, %s49, 1
        %s958 = smul.addr %s957, 64
        %s959 = smul.addr %s958, 4
        %s960 = scalar_lea.vmem %s5, %s959
        %p961 = scmp.lt.s32.totalorder %s49, 1
        %s962 = scalar_select %p961, %s49, 1
        %s963 = smul.addr %s962, 2
        %s964 = scalar_lea.vmem %s6, %s963
        %p965 = scmp.lt.s32.totalorder %s49, 1
        %s966 = scalar_select %p965, %s49, 1
        %s967 = smul.addr %s966, 2
        %s968 = scalar_lea.vmem %s7, %s967
        %p969 = scmp.lt.s32.totalorder %s49, 1
        %s970 = scalar_select %p969, %s49, 1
        %s971 = smul.addr %s970, 2
        %s972 = scalar_lea.vmem %s8, %s971
        %p973 = scmp.lt.s32.totalorder %s49, 1
        %s974 = scalar_select %p973, %s49, 1
        %s975 = smul.addr %s974, 7
        %s976 = scalar_lea.vmem %s10, %s975
        %p977 = scmp.lt.s32.totalorder %s49, 1
        %s978 = scalar_select %p977, %s49, 1
        %s979 = smul.addr %s978, 2
        %s980 = scalar_lea.vmem %s12, %s979
        %p981 = scmp.lt.s32.totalorder %s49, 1
        %s982 = scalar_select %p981, %s49, 1
        %s983 = smul.addr %s982, 2
        %s984 = scalar_lea.vmem %s13, %s983
        %p985 = scmp.lt.s32.totalorder %s49, 1
        %s986 = scalar_select %p985, %s49, 1
        %s987 = smul.addr %s986, 2
        %s988 = scalar_lea.vmem %s14, %s987
        %p989 = scmp.lt.s32.totalorder %s48, 1
        %s990 = scalar_select %p989, %s48, 1
        %s991 = smul.addr %s990, 2
        %s992 = smul.addr %s991, 4
        %s993 = scalar_lea.vmem %s21, %s992
        %p995 = scmp.eq.s32.totalorder %s49, 0
        // Predicated region
        $region121: #{cbramod_text_classifier_forward.1} parent=103 // pred_check
          %p996 = pneg %p995
        $region122: #{cbramod_text_classifier_forward.1} parent=103 // pred_check_branch
          %998 = sbr.rel (%p996) target = $region124
        $region123: #{cbramod_text_classifier_forward.1} parent=103 // pred_region
          %v999 = vld [vmem:[%s951] sm:$0xff]
          %v1000 = vld [vmem:[%s951 + $0x8] sm:$0xff]
          %v1001 = vld [vmem:[%s951 + $0x10] sm:$0xff]
          %v1002 = vld [vmem:[%s951 + $0x18] sm:$0xff]
          %v1003 = vld [vmem:[%s951 + $0x20] sm:$0xff]
          %v1004 = vld [vmem:[%s951 + $0x28] sm:$0xff]
          %v1005 = vld [vmem:[%s951 + $0x30] sm:$0xff]
          %v1006 = vld [vmem:[%s951 + $0x38] sm:$0xff]
          %v1007 = vld [vmem:[%s951 + $0x40] sm:$0x33]
          %v1008 = vld [vmem:[%s1] sm:$0xff]
          %v1009 = vld [vmem:[%s1 + $0x8] sm:$0xff]
          %v1010 = vld [vmem:[%s1 + $0x10] sm:$0xff]
          %v1011 = vld [vmem:[%s1 + $0x18] sm:$0xff]
          %v1012 = vld [vmem:[%s1 + $0x20] sm:$0xff]
          %v1013 = vld [vmem:[%s1 + $0x28] sm:$0xff]
          %v1014 = vld [vmem:[%s1 + $0x30] sm:$0xff]
          %v1015 = vld [vmem:[%s1 + $0x38] sm:$0xff]
          %v1016 = vld [vmem:[%s1 + $0x40] sm:$0xff]
          %v1017 = vld [vmem:[%s1 + $0x48] sm:$0xff]
          %v1018 = vld [vmem:[%s1 + $0x50] sm:$0xff]
          %v1019 = vld [vmem:[%s1 + $0x58] sm:$0xff]
          %v1020 = vld [vmem:[%s1 + $0x60] sm:$0xff]
          %v1021 = vld [vmem:[%s1 + $0x68] sm:$0xff]
          %v1022 = vld [vmem:[%s1 + $0x70] sm:$0xff]
          %v1023 = vld [vmem:[%s1 + $0x78] sm:$0xff]
          %v1024 = vld [vmem:[%s1 + $0x80] sm:$0xff]
          %v1025 = vld [vmem:[%s1 + $0x88] sm:$0xff]
          %v1026 = vld [vmem:[%s1 + $0x90] sm:$0xff]
          %v1027 = vld [vmem:[%s1 + $0x98] sm:$0xff]
          %v1028 = vld [vmem:[%s1 + $0xa0] sm:$0xff]
          %v1029 = vld [vmem:[%s1 + $0xa8] sm:$0xff]
          %v1030 = vld [vmem:[%s1 + $0xb0] sm:$0xff]
          %v1031 = vld [vmem:[%s1 + $0xb8] sm:$0xff]
          %v1032 = vld [vmem:[%s1 + $0xc0] sm:$0xff]
          %v1033 = vld [vmem:[%s1 + $0xc8] sm:$0xff]
          %v1034 = vld [vmem:[%s1 + $0xd0] sm:$0xff]
          %v1035 = vld [vmem:[%s1 + $0xd8] sm:$0xff]
          %v1036 = vld [vmem:[%s1 + $0xe0] sm:$0xff]
          %v1037 = vld [vmem:[%s1 + $0xe8] sm:$0xff]
          %v1038 = vld [vmem:[%s1 + $0xf0] sm:$0xff]
          %v1039 = vld [vmem:[%s1 + $0xf8] sm:$0xff]
          %v1040 = vld [vmem:[%s2] sm:$0x3]
          %v1042 = vlaneseq
          %v1043 = vshrl.u32 %v1042, 7
          %v1044 = vsub.s32 0, %v1043
          %v1045 = vrot.slane %v1040, %v1044
          %v1046 = vlaneseq
          %v1047 = vshrl.u32 %v1046, 7
          %v1048 = vsub.s32 1, %v1047
          %v1049 = vrot.slane %v1040, %v1048
          %v1061 = vunpack.c.l.b16 %v999
          %v1062 = vunpack.c.h.b16 %v999
          %v1063 = vunpack.c.l.b16 %v1000
          %v1064 = vunpack.c.h.b16 %v1000
          %v1065 = vunpack.c.l.b16 %v1001
          %v1066 = vunpack.c.h.b16 %v1001
          %v1067 = vunpack.c.l.b16 %v1002
          %v1068 = vunpack.c.h.b16 %v1002
          %v1069 = vunpack.c.l.b16 %v1003
          %v1070 = vunpack.c.h.b16 %v1003
          %v1071 = vunpack.c.l.b16 %v1004
          %v1072 = vunpack.c.h.b16 %v1004
          %v1073 = vunpack.c.l.b16 %v1005
          %v1074 = vunpack.c.h.b16 %v1005
          %v1075 = vunpack.c.l.b16 %v1006
          %v1076 = vunpack.c.h.b16 %v1006
          %v1077 = vunpack.c.l.b16 %v1007
          %v1078 = vunpack.c.h.b16 %v1007
          %v1079 = vpack.c.b16 %v1063, %v1061
          %v1080 = vpack.c.b16 %v1064, %v1062
          %v1081 = vpack.c.b16 %v1067, %v1065
          %v1082 = vpack.c.b16 %v1068, %v1066
          %v1083 = vpack.c.b16 %v1071, %v1069
          %v1084 = vpack.c.b16 %v1072, %v1070
          %v1085 = vpack.c.b16 %v1075, %v1073
          %v1086 = vpack.c.b16 %v1076, %v1074
          %v1087 = vpack.c.b16 %v1077, %v1077
          %v1088 = vpack.c.b16 %v1078, %v1078
          %v1131 = vunpack.c.l.b16 %v1008
          %v1132 = vunpack.c.h.b16 %v1008
          %v1133 = vunpack.c.l.b16 %v1009
          %v1134 = vunpack.c.h.b16 %v1009
          %v1135 = vunpack.c.l.b16 %v1010
          %v1136 = vunpack.c.h.b16 %v1010
          %v1137 = vunpack.c.l.b16 %v1011
          %v1138 = vunpack.c.h.b16 %v1011
          %v1139 = vunpack.c.l.b16 %v1012
          %v1140 = vunpack.c.h.b16 %v1012
          %v1141 = vunpack.c.l.b16 %v1013
          %v1142 = vunpack.c.h.b16 %v1013
          %v1143 = vunpack.c.l.b16 %v1014
          %v1144 = vunpack.c.h.b16 %v1014
          %v1145 = vunpack.c.l.b16 %v1015
          %v1146 = vunpack.c.h.b16 %v1015
          %v1147 = vunpack.c.l.b16 %v1016
          %v1148 = vunpack.c.h.b16 %v1016
          %v1149 = vunpack.c.l.b16 %v1017
          %v1150 = vunpack.c.h.b16 %v1017
          %v1151 = vunpack.c.l.b16 %v1018
          %v1152 = vunpack.c.h.b16 %v1018
          %v1153 = vunpack.c.l.b16 %v1019
          %v1154 = vunpack.c.h.b16 %v1019
          %v1155 = vunpack.c.l.b16 %v1020
          %v1156 = vunpack.c.h.b16 %v1020
          %v1157 = vunpack.c.l.b16 %v1021
          %v1158 = vunpack.c.h.b16 %v1021
          %v1159 = vunpack.c.l.b16 %v1022
          %v1160 = vunpack.c.h.b16 %v1022
          %v1161 = vunpack.c.l.b16 %v1023
          %v1162 = vunpack.c.h.b16 %v1023
          %v1163 = vunpack.c.l.b16 %v1024
          %v1164 = vunpack.c.h.b16 %v1024
          %v1165 = vunpack.c.l.b16 %v1025
          %v1166 = vunpack.c.h.b16 %v1025
          %v1167 = vunpack.c.l.b16 %v1026
          %v1168 = vunpack.c.h.b16 %v1026
          %v1169 = vunpack.c.l.b16 %v1027
          %v1170 = vunpack.c.h.b16 %v1027
          %v1171 = vunpack.c.l.b16 %v1028
          %v1172 = vunpack.c.h.b16 %v1028
          %v1173 = vunpack.c.l.b16 %v1029
          %v1174 = vunpack.c.h.b16 %v1029
          %v1175 = vunpack.c.l.b16 %v1030
          %v1176 = vunpack.c.h.b16 %v1030
          %v1177 = vunpack.c.l.b16 %v1031
          %v1178 = vunpack.c.h.b16 %v1031
          %v1179 = vunpack.c.l.b16 %v1032
          %v1180 = vunpack.c.h.b16 %v1032
          %v1181 = vunpack.c.l.b16 %v1033
          %v1182 = vunpack.c.h.b16 %v1033
          %v1183 = vunpack.c.l.b16 %v1034
          %v1184 = vunpack.c.h.b16 %v1034
          %v1185 = vunpack.c.l.b16 %v1035
          %v1186 = vunpack.c.h.b16 %v1035
          %v1187 = vunpack.c.l.b16 %v1036
          %v1188 = vunpack.c.h.b16 %v1036
          %v1189 = vunpack.c.l.b16 %v1037
          %v1190 = vunpack.c.h.b16 %v1037
          %v1191 = vunpack.c.l.b16 %v1038
          %v1192 = vunpack.c.h.b16 %v1038
          %v1193 = vunpack.c.l.b16 %v1039
          %v1194 = vunpack.c.h.b16 %v1039
          %v1195 = vpack.c.b16 %v1133, %v1131
          %v1196 = vpack.c.b16 %v1134, %v1132
          %v1197 = vpack.c.b16 %v1137, %v1135
          %v1198 = vpack.c.b16 %v1138, %v1136
          %v1199 = vpack.c.b16 %v1141, %v1139
          %v1200 = vpack.c.b16 %v1142, %v1140
          %v1201 = vpack.c.b16 %v1145, %v1143
          %v1202 = vpack.c.b16 %v1146, %v1144
          %v1203 = vpack.c.b16 %v1149, %v1147
          %v1204 = vpack.c.b16 %v1150, %v1148
          %v1205 = vpack.c.b16 %v1153, %v1151
          %v1206 = vpack.c.b16 %v1154, %v1152
          %v1207 = vpack.c.b16 %v1157, %v1155
          %v1208 = vpack.c.b16 %v1158, %v1156
          %v1209 = vpack.c.b16 %v1161, %v1159
          %v1210 = vpack.c.b16 %v1162, %v1160
          %v1211 = vpack.c.b16 %v1165, %v1163
          %v1212 = vpack.c.b16 %v1166, %v1164
          %v1213 = vpack.c.b16 %v1169, %v1167
          %v1214 = vpack.c.b16 %v1170, %v1168
          %v1215 = vpack.c.b16 %v1173, %v1171
          %v1216 = vpack.c.b16 %v1174, %v1172
          %v1217 = vpack.c.b16 %v1177, %v1175
          %v1218 = vpack.c.b16 %v1178, %v1176
          %v1219 = vpack.c.b16 %v1181, %v1179
          %v1220 = vpack.c.b16 %v1182, %v1180
          %v1221 = vpack.c.b16 %v1185, %v1183
          %v1222 = vpack.c.b16 %v1186, %v1184
          %v1223 = vpack.c.b16 %v1189, %v1187
          %v1224 = vpack.c.b16 %v1190, %v1188
          %v1225 = vpack.c.b16 %v1193, %v1191
          %v1226 = vpack.c.b16 %v1194, %v1192
          %1259 = vmatprep.subr.bf16.mxu0 %v1210
          %1260 = vmatpush1.bf16.msra.mxu0 %v1209
          %1261 = vmatprep.subr.bf16.mxu0 %v1208
          %1262 = vmatpush1.bf16.msra.mxu0 %v1207
          %1263 = vmatprep.subr.bf16.mxu0 %v1206
          %1264 = vmatpush1.bf16.msra.mxu0 %v1205
          %1265 = vmatprep.subr.bf16.mxu0 %v1204
          %1266 = vmatpush1.bf16.msra.mxu0 %v1203
          %1267 = vmatprep.subr.bf16.mxu0 %v1202
          %1268 = vmatpush1.bf16.msra.mxu0 %v1201
          %1269 = vmatprep.subr.bf16.mxu0 %v1200
          %1270 = vmatpush1.bf16.msra.mxu0 %v1199
          %1271 = vmatprep.subr.bf16.mxu0 %v1198
          %1272 = vmatpush1.bf16.msra.mxu0 %v1197
          %1273 = vmatprep.subr.bf16.mxu0 %v1196
          %1274 = vmatpush1.bf16.msra.mxu0 %v1195
          %1275 = vmatprep.subr.bf16.mxu0 %v1226
          %1276 = vmatpush2.bf16.msra.mxu0 %v1225
          %1277 = vmatprep.subr.bf16.mxu0 %v1224
          %1278 = vmatpush2.bf16.msra.mxu0 %v1223
          %1279 = vmatprep.subr.bf16.mxu0 %v1222
          %1280 = vmatpush2.bf16.msra.mxu0 %v1221
          %1281 = vmatprep.subr.bf16.mxu0 %v1220
          %1282 = vmatpush2.bf16.msra.mxu0 %v1219
          %1283 = vmatprep.subr.bf16.mxu0 %v1218
          %1284 = vmatpush2.bf16.msra.mxu0 %v1217
          %1285 = vmatprep.subr.bf16.mxu0 %v1216
          %1286 = vmatpush2.bf16.msra.mxu0 %v1215
          %1287 = vmatprep.subr.bf16.mxu0 %v1214
          %1288 = vmatpush2.bf16.msra.mxu0 %v1213
          %1289 = vmatprep.subr.bf16.mxu0 %v1212
          %1290 = vmatpush2.bf16.msra.mxu0 %v1211
          %1291 = vmatprep.mubr.bf16.mxu0 %v1080
          %1292 = vmatmul.mubr.bf16.gmra.mxu0 %v1079
          %v1293 = vpop.f32.mrf.mxu0
          %v1294 = vadd.f32 %v1045, %v1293
          %v1295 = vpop.f32.mrf.mxu0
          %v1296 = vadd.f32 %v1049, %v1295
          %v1297 = vpop.f32.mrf.mxu0
          %v1298 = vadd.f32 %v1045, %v1297
          %v1299 = vpop.f32.mrf.mxu0
          %v1300 = vadd.f32 %v1049, %v1299
          %1301 = vmatprep.mubr.bf16.mxu0 %v1082
          %1302 = vmatmul.mubr.bf16.gmra.mxu0 %v1081
          %v1303 = vpop.f32.mrf.mxu0
          %v1304 = vadd.f32 %v1045, %v1303
          %v1305 = vpop.f32.mrf.mxu0
          %v1306 = vadd.f32 %v1049, %v1305
          %v1307 = vpop.f32.mrf.mxu0
          %v1308 = vadd.f32 %v1045, %v1307
          %v1309 = vpop.f32.mrf.mxu0
          %v1310 = vadd.f32 %v1049, %v1309
          %1311 = vmatprep.mubr.bf16.mxu0 %v1084
          %1312 = vmatmul.mubr.bf16.gmra.mxu0 %v1083
          %v1313 = vpop.f32.mrf.mxu0
          %v1314 = vadd.f32 %v1045, %v1313
          %v1315 = vpop.f32.mrf.mxu0
          %v1316 = vadd.f32 %v1049, %v1315
          %v1317 = vpop.f32.mrf.mxu0
          %v1318 = vadd.f32 %v1045, %v1317
          %v1319 = vpop.f32.mrf.mxu0
          %v1320 = vadd.f32 %v1049, %v1319
          %1321 = vmatprep.mubr.bf16.mxu0 %v1086
          %1322 = vmatmul.mubr.bf16.gmra.mxu0 %v1085
          %v1323 = vpop.f32.mrf.mxu0
          %v1324 = vadd.f32 %v1045, %v1323
          %v1325 = vpop.f32.mrf.mxu0
          %v1326 = vadd.f32 %v1049, %v1325
          %v1327 = vpop.f32.mrf.mxu0
          %v1328 = vadd.f32 %v1045, %v1327
          %v1329 = vpop.f32.mrf.mxu0
          %v1330 = vadd.f32 %v1049, %v1329
          %1331 = vmatprep.mubr.bf16.mxu0 %v1088
          %1332 = vmatmul.mubr.bf16.gmra.mxu0 %v1087
          %v1333 = vpop.f32.mrf.mxu0
          %v1334 = vadd.f32 %v1045, %v1333
          %v1335 = vpop.f32.mrf.mxu0
          %v1336 = vadd.f32 %v1049, %v1335
          %v1337 = vpop.f32.mrf.mxu0
          %v1338 = vpop.f32.mrf.mxu0
          %1339 = vdwg.mxu0
          %1340 = vst [vmem:[#allocation2] sm:$0xff] %v1294
          %1341 = vst [vmem:[#allocation2 + $0x8] sm:$0xff] %v1296
          %1342 = vst [vmem:[#allocation2 + $0x10] sm:$0xff] %v1298
          %1343 = vst [vmem:[#allocation2 + $0x18] sm:$0xff] %v1300
          %1344 = vst [vmem:[#allocation2 + $0x20] sm:$0xff] %v1304
          %1345 = vst [vmem:[#allocation2 + $0x28] sm:$0xff] %v1306
          %1346 = vst [vmem:[#allocation2 + $0x30] sm:$0xff] %v1308
          %1347 = vst [vmem:[#allocation2 + $0x38] sm:$0xff] %v1310
          %1348 = vst [vmem:[#allocation2 + $0x40] sm:$0xff] %v1314
          %1349 = vst [vmem:[#allocation2 + $0x48] sm:$0xff] %v1316
          %1350 = vst [vmem:[#allocation2 + $0x50] sm:$0xff] %v1318
          %1351 = vst [vmem:[#allocation2 + $0x58] sm:$0xff] %v1320
          %1352 = vst [vmem:[#allocation2 + $0x60] sm:$0xff] %v1324
          %1353 = vst [vmem:[#allocation2 + $0x68] sm:$0xff] %v1326
          %1354 = vst [vmem:[#allocation2 + $0x70] sm:$0xff] %v1328
          %1355 = vst [vmem:[#allocation2 + $0x78] sm:$0xff] %v1330
          %1356 = vst [vmem:[#allocation2 + $0x80] sm:$0xf] %v1334
          %1357 = vst [vmem:[#allocation2 + $0x88] sm:$0xf] %v1336
        $region124: #{cbramod_text_classifier_forward.1} parent=103 // pred_fallthru
          _
        %v1358 = vld [vmem:[#allocation2] sm:$0xff]
        %v1359 = vld [vmem:[#allocation2 + $0x8] sm:$0xff]
        %v1360 = vld [vmem:[#allocation2 + $0x10] sm:$0xff]
        %v1361 = vld [vmem:[#allocation2 + $0x18] sm:$0xff]
        %v1362 = vld [vmem:[#allocation2 + $0x20] sm:$0xff]
        %v1363 = vld [vmem:[#allocation2 + $0x28] sm:$0xff]
        %v1364 = vld [vmem:[#allocation2 + $0x30] sm:$0xff]
        %v1365 = vld [vmem:[#allocation2 + $0x38] sm:$0xff]
        %v1366 = vld [vmem:[#allocation2 + $0x40] sm:$0xff]
        %v1367 = vld [vmem:[#allocation2 + $0x48] sm:$0xff]
        %v1368 = vld [vmem:[#allocation2 + $0x50] sm:$0xff]
        %v1369 = vld [vmem:[#allocation2 + $0x58] sm:$0xff]
        %v1370 = vld [vmem:[#allocation2 + $0x60] sm:$0xff]
        %v1371 = vld [vmem:[#allocation2 + $0x68] sm:$0xff]
        %v1372 = vld [vmem:[#allocation2 + $0x70] sm:$0xff]
        %v1373 = vld [vmem:[#allocation2 + $0x78] sm:$0xff]
        %v1374 = vld [vmem:[#allocation2 + $0x80] sm:$0xf]
        %v1375 = vld [vmem:[#allocation2 + $0x88] sm:$0xf]
        %v1376 = vlaneseq
        %v1377 = vand.u32 %v1376, 127
        %v1378 = vadd.s32 %v1377, 128
        %vm1379 = vcmp.lt.s32.totalorder %v1377, 200
        %vm1380 = vcmp.lt.s32.totalorder %v1378, 200
        %v1381 = vsel %vm1379, 1, 0
        %v1382 = vsel %vm1380, 1, 0
        %v1383 = vcvt.s32.f32 %v1381
        %v1384 = vcvt.s32.f32 %v1382
        %v1385 = vpack.c.bf16 %v1360, %v1358
        %v1386 = vpack.c.bf16 %v1361, %v1359
        %v1387 = vpack.c.bf16 %v1364, %v1362
        %v1388 = vpack.c.bf16 %v1365, %v1363
        %v1389 = vpack.c.bf16 %v1368, %v1366
        %v1390 = vpack.c.bf16 %v1369, %v1367
        %v1391 = vpack.c.bf16 %v1372, %v1370
        %v1392 = vpack.c.bf16 %v1373, %v1371
        %v1393 = vpack.c.bf16 %v1374, %v1374
        %v1394 = vpack.c.bf16 %v1375, %v1375
        %v1395 = vld [vmem:[%s808] sm:$0xff]
        %v1396 = vld [vmem:[%s808 + $0x8] sm:$0xff]
        %v1397 = vld [vmem:[%s808 + $0x10] sm:$0xff]
        %v1398 = vld [vmem:[%s808 + $0x18] sm:$0xff]
        %v1399 = vld [vmem:[%s808 + $0x20] sm:$0xff]
        %v1400 = vld [vmem:[%s808 + $0x28] sm:$0xff]
        %v1401 = vld [vmem:[%s808 + $0x30] sm:$0xff]
        %v1402 = vld [vmem:[%s808 + $0x38] sm:$0xff]
        %v1403 = vld [vmem:[%s808 + $0x40] sm:$0xff]
        %v1404 = vld [vmem:[%s808 + $0x48] sm:$0xff]
        %v1405 = vld [vmem:[%s808 + $0x50] sm:$0xff]
        %v1406 = vld [vmem:[%s808 + $0x58] sm:$0xff]
        %v1407 = vld [vmem:[%s808 + $0x60] sm:$0xff]
        %v1408 = vld [vmem:[%s808 + $0x68] sm:$0xff]
        %v1409 = vld [vmem:[%s808 + $0x70] sm:$0xff]
        %v1410 = vld [vmem:[%s808 + $0x78] sm:$0xff]
        %v1411 = vld [vmem:[%s808 + $0x80] sm:$0xff]
        %v1412 = vld [vmem:[%s808 + $0x88] sm:$0xff]
        %v1413 = vld [vmem:[%s808 + $0x90] sm:$0xff]
        %v1414 = vld [vmem:[%s808 + $0x98] sm:$0xff]
        %v1415 = vld [vmem:[%s808 + $0xa0] sm:$0xff]
        %v1416 = vld [vmem:[%s808 + $0xa8] sm:$0xff]
        %v1417 = vld [vmem:[%s808 + $0xb0] sm:$0xff]
        %v1418 = vld [vmem:[%s808 + $0xb8] sm:$0xff]
        %v1419 = vld [vmem:[%s808 + $0xc0] sm:$0xff]
        %v1420 = vld [vmem:[%s808 + $0xc8] sm:$0xff]
        %v1421 = vld [vmem:[%s808 + $0xd0] sm:$0xff]
        %v1422 = vld [vmem:[%s808 + $0xd8] sm:$0xff]
        %v1423 = vld [vmem:[%s808 + $0xe0] sm:$0xff]
        %v1424 = vld [vmem:[%s808 + $0xe8] sm:$0xff]
        %v1425 = vld [vmem:[%s808 + $0xf0] sm:$0xff]
        %v1426 = vld [vmem:[%s808 + $0xf8] sm:$0xff]
        %v1427 = vld [vmem:[%s808 + $0x100] sm:$0xff]
        %v1428 = vld [vmem:[%s808 + $0x108] sm:$0xff]
        %v1429 = vld [vmem:[%s808 + $0x110] sm:$0xff]
        %v1430 = vld [vmem:[%s808 + $0x118] sm:$0xff]
        %v1431 = vld [vmem:[%s808 + $0x120] sm:$0xff]
        %v1432 = vld [vmem:[%s808 + $0x128] sm:$0xff]
        %v1433 = vld [vmem:[%s808 + $0x130] sm:$0xff]
        %v1434 = vld [vmem:[%s808 + $0x138] sm:$0xff]
        %v1435 = vld [vmem:[%s808 + $0x140] sm:$0xff]
        %v1436 = vld [vmem:[%s808 + $0x148] sm:$0xff]
        %v1437 = vld [vmem:[%s808 + $0x150] sm:$0xff]
        %v1438 = vld [vmem:[%s808 + $0x158] sm:$0xff]
        %v1439 = vld [vmem:[%s808 + $0x160] sm:$0xff]
        %v1440 = vld [vmem:[%s808 + $0x168] sm:$0xff]
        %v1441 = vld [vmem:[%s808 + $0x170] sm:$0xff]
        %v1442 = vld [vmem:[%s808 + $0x178] sm:$0xff]
        %v1443 = vld [vmem:[%s808 + $0x180] sm:$0xff]
        %v1444 = vld [vmem:[%s808 + $0x188] sm:$0xff]
        %v1445 = vld [vmem:[%s808 + $0x190] sm:$0xff]
        %v1446 = vld [vmem:[%s808 + $0x198] sm:$0xff]
        %v1447 = vld [vmem:[%s808 + $0x1a0] sm:$0xff]
        %v1448 = vld [vmem:[%s808 + $0x1a8] sm:$0xff]
        %v1449 = vld [vmem:[%s808 + $0x1b0] sm:$0xff]
        %v1450 = vld [vmem:[%s808 + $0x1b8] sm:$0xff]
        %v1451 = vld [vmem:[%s808 + $0x1c0] sm:$0xff]
        %v1452 = vld [vmem:[%s808 + $0x1c8] sm:$0xff]
        %v1453 = vld [vmem:[%s808 + $0x1d0] sm:$0xff]
        %v1454 = vld [vmem:[%s808 + $0x1d8] sm:$0xff]
        %v1455 = vld [vmem:[%s808 + $0x1e0] sm:$0xff]
        %v1456 = vld [vmem:[%s808 + $0x1e8] sm:$0xff]
        %v1457 = vld [vmem:[%s808 + $0x1f0] sm:$0xff]
        %v1458 = vld [vmem:[%s808 + $0x1f8] sm:$0xff]
        %v1459 = vld [vmem:[%s808 + $0x200] sm:$0xff]
        %v1460 = vld [vmem:[%s808 + $0x208] sm:$0xff]
        %v1461 = vld [vmem:[%s808 + $0x210] sm:$0xff]
        %v1462 = vld [vmem:[%s808 + $0x218] sm:$0xff]
        %v1463 = vld [vmem:[%s808 + $0x220] sm:$0xff]
        %v1464 = vld [vmem:[%s808 + $0x228] sm:$0xff]
        %v1465 = vld [vmem:[%s808 + $0x230] sm:$0xff]
        %v1466 = vld [vmem:[%s808 + $0x238] sm:$0xff]
        %v1467 = vld [vmem:[%s808 + $0x240] sm:$0xff]
        %v1468 = vld [vmem:[%s808 + $0x248] sm:$0xff]
        %v1469 = vld [vmem:[%s808 + $0x250] sm:$0xff]
        %v1470 = vld [vmem:[%s808 + $0x258] sm:$0xff]
        %v1471 = vld [vmem:[%s808 + $0x260] sm:$0xff]
        %v1472 = vld [vmem:[%s808 + $0x268] sm:$0xff]
        %v1473 = vld [vmem:[%s808 + $0x270] sm:$0xff]
        %v1474 = vld [vmem:[%s808 + $0x278] sm:$0xff]
        %v1475 = vld [vmem:[%s808 + $0x280] sm:$0xff]
        %v1476 = vld [vmem:[%s808 + $0x288] sm:$0xff]
        %v1477 = vld [vmem:[%s808 + $0x290] sm:$0xff]
        %v1478 = vld [vmem:[%s808 + $0x298] sm:$0xff]
        %v1479 = vld [vmem:[%s808 + $0x2a0] sm:$0xff]
        %v1480 = vld [vmem:[%s808 + $0x2a8] sm:$0xff]
        %v1481 = vld [vmem:[%s808 + $0x2b0] sm:$0xff]
        %v1482 = vld [vmem:[%s808 + $0x2b8] sm:$0xff]
        %v1483 = vld [vmem:[%s808 + $0x2c0] sm:$0xff]
        %v1484 = vld [vmem:[%s808 + $0x2c8] sm:$0xff]
        %v1485 = vld [vmem:[%s808 + $0x2d0] sm:$0xff]
        %v1486 = vld [vmem:[%s808 + $0x2d8] sm:$0xff]
        %v1487 = vld [vmem:[%s808 + $0x2e0] sm:$0xff]
        %v1488 = vld [vmem:[%s808 + $0x2e8] sm:$0xff]
        %v1489 = vld [vmem:[%s808 + $0x2f0] sm:$0xff]
        %v1490 = vld [vmem:[%s808 + $0x2f8] sm:$0xff]
        %v1491 = vld [vmem:[%s955] sm:$0x3f]
        %v1493 = vlaneseq
        %v1494 = vshrl.u32 %v1493, 7
        %v1495 = vsub.s32 0, %v1494
        %v1496 = vrot.slane %v1491, %v1495
        %v1497 = vlaneseq
        %v1498 = vshrl.u32 %v1497, 7
        %v1499 = vsub.s32 1, %v1498
        %v1500 = vrot.slane %v1491, %v1499
        %v1501 = vlaneseq
        %v1502 = vshrl.u32 %v1501, 7
        %v1503 = vsub.s32 2, %v1502
        %v1504 = vrot.slane %v1491, %v1503
        %v1505 = vlaneseq
        %v1506 = vshrl.u32 %v1505, 7
        %v1507 = vsub.s32 3, %v1506
        %v1508 = vrot.slane %v1491, %v1507
        %v1509 = vlaneseq
        %v1510 = vshrl.u32 %v1509, 7
        %v1511 = vsub.s32 4, %v1510
        %v1512 = vrot.slane %v1491, %v1511
        %v1513 = vlaneseq
        %v1514 = vshrl.u32 %v1513, 7
        %v1515 = vsub.s32 5, %v1514
        %v1516 = vrot.slane %v1491, %v1515
        %v1619 = vunpack.c.l.b16 %v1395
        %v1620 = vunpack.c.h.b16 %v1395
        %v1621 = vunpack.c.l.b16 %v1396
        %v1622 = vunpack.c.h.b16 %v1396
        %v1623 = vunpack.c.l.b16 %v1397
        %v1624 = vunpack.c.h.b16 %v1397
        %v1625 = vunpack.c.l.b16 %v1398
        %v1626 = vunpack.c.h.b16 %v1398
        %v1627 = vunpack.c.l.b16 %v1399
        %v1628 = vunpack.c.h.b16 %v1399
        %v1629 = vunpack.c.l.b16 %v1400
        %v1630 = vunpack.c.h.b16 %v1400
        %v1631 = vunpack.c.l.b16 %v1401
        %v1632 = vunpack.c.h.b16 %v1401
        %v1633 = vunpack.c.l.b16 %v1402
        %v1634 = vunpack.c.h.b16 %v1402
        %v1635 = vunpack.c.l.b16 %v1403
        %v1636 = vunpack.c.h.b16 %v1403
        %v1637 = vunpack.c.l.b16 %v1404
        %v1638 = vunpack.c.h.b16 %v1404
        %v1639 = vunpack.c.l.b16 %v1405
        %v1640 = vunpack.c.h.b16 %v1405
        %v1641 = vunpack.c.l.b16 %v1406
        %v1642 = vunpack.c.h.b16 %v1406
        %v1643 = vunpack.c.l.b16 %v1407
        %v1644 = vunpack.c.h.b16 %v1407
        %v1645 = vunpack.c.l.b16 %v1408
        %v1646 = vunpack.c.h.b16 %v1408
        %v1647 = vunpack.c.l.b16 %v1409
        %v1648 = vunpack.c.h.b16 %v1409
        %v1649 = vunpack.c.l.b16 %v1410
        %v1650 = vunpack.c.h.b16 %v1410
        %v1651 = vunpack.c.l.b16 %v1411
        %v1652 = vunpack.c.h.b16 %v1411
        %v1653 = vunpack.c.l.b16 %v1412
        %v1654 = vunpack.c.h.b16 %v1412
        %v1655 = vunpack.c.l.b16 %v1413
        %v1656 = vunpack.c.h.b16 %v1413
        %v1657 = vunpack.c.l.b16 %v1414
        %v1658 = vunpack.c.h.b16 %v1414
        %v1659 = vunpack.c.l.b16 %v1415
        %v1660 = vunpack.c.h.b16 %v1415
        %v1661 = vunpack.c.l.b16 %v1416
        %v1662 = vunpack.c.h.b16 %v1416
        %v1663 = vunpack.c.l.b16 %v1417
        %v1664 = vunpack.c.h.b16 %v1417
        %v1665 = vunpack.c.l.b16 %v1418
        %v1666 = vunpack.c.h.b16 %v1418
        %v1667 = vunpack.c.l.b16 %v1419
        %v1668 = vunpack.c.h.b16 %v1419
        %v1669 = vunpack.c.l.b16 %v1420
        %v1670 = vunpack.c.h.b16 %v1420
        %v1671 = vunpack.c.l.b16 %v1421
        %v1672 = vunpack.c.h.b16 %v1421
        %v1673 = vunpack.c.l.b16 %v1422
        %v1674 = vunpack.c.h.b16 %v1422
        %v1675 = vunpack.c.l.b16 %v1423
        %v1676 = vunpack.c.h.b16 %v1423
        %v1677 = vunpack.c.l.b16 %v1424
        %v1678 = vunpack.c.h.b16 %v1424
        %v1679 = vunpack.c.l.b16 %v1425
        %v1680 = vunpack.c.h.b16 %v1425
        %v1681 = vunpack.c.l.b16 %v1426
        %v1682 = vunpack.c.h.b16 %v1426
        %v1683 = vunpack.c.l.b16 %v1427
        %v1684 = vunpack.c.h.b16 %v1427
        %v1685 = vunpack.c.l.b16 %v1428
        %v1686 = vunpack.c.h.b16 %v1428
        %v1687 = vunpack.c.l.b16 %v1429
        %v1688 = vunpack.c.h.b16 %v1429
        %v1689 = vunpack.c.l.b16 %v1430
        %v1690 = vunpack.c.h.b16 %v1430
        %v1691 = vunpack.c.l.b16 %v1431
        %v1692 = vunpack.c.h.b16 %v1431
        %v1693 = vunpack.c.l.b16 %v1432
        %v1694 = vunpack.c.h.b16 %v1432
        %v1695 = vunpack.c.l.b16 %v1433
        %v1696 = vunpack.c.h.b16 %v1433
        %v1697 = vunpack.c.l.b16 %v1434
        %v1698 = vunpack.c.h.b16 %v1434
        %v1699 = vunpack.c.l.b16 %v1435
        %v1700 = vunpack.c.h.b16 %v1435
        %v1701 = vunpack.c.l.b16 %v1436
        %v1702 = vunpack.c.h.b16 %v1436
        %v1703 = vunpack.c.l.b16 %v1437
        %v1704 = vunpack.c.h.b16 %v1437
        %v1705 = vunpack.c.l.b16 %v1438
        %v1706 = vunpack.c.h.b16 %v1438
        %v1707 = vunpack.c.l.b16 %v1439
        %v1708 = vunpack.c.h.b16 %v1439
        %v1709 = vunpack.c.l.b16 %v1440
        %v1710 = vunpack.c.h.b16 %v1440
        %v1711 = vunpack.c.l.b16 %v1441
        %v1712 = vunpack.c.h.b16 %v1441
        %v1713 = vunpack.c.l.b16 %v1442
        %v1714 = vunpack.c.h.b16 %v1442
        %v1715 = vunpack.c.l.b16 %v1443
        %v1716 = vunpack.c.h.b16 %v1443
        %v1717 = vunpack.c.l.b16 %v1444
        %v1718 = vunpack.c.h.b16 %v1444
        %v1719 = vunpack.c.l.b16 %v1445
        %v1720 = vunpack.c.h.b16 %v1445
        %v1721 = vunpack.c.l.b16 %v1446
        %v1722 = vunpack.c.h.b16 %v1446
        %v1723 = vunpack.c.l.b16 %v1447
        %v1724 = vunpack.c.h.b16 %v1447
        %v1725 = vunpack.c.l.b16 %v1448
        %v1726 = vunpack.c.h.b16 %v1448
        %v1727 = vunpack.c.l.b16 %v1449
        %v1728 = vunpack.c.h.b16 %v1449
        %v1729 = vunpack.c.l.b16 %v1450
        %v1730 = vunpack.c.h.b16 %v1450
        %v1731 = vunpack.c.l.b16 %v1451
        %v1732 = vunpack.c.h.b16 %v1451
        %v1733 = vunpack.c.l.b16 %v1452
        %v1734 = vunpack.c.h.b16 %v1452
        %v1735 = vunpack.c.l.b16 %v1453
        %v1736 = vunpack.c.h.b16 %v1453
        %v1737 = vunpack.c.l.b16 %v1454
        %v1738 = vunpack.c.h.b16 %v1454
        %v1739 = vunpack.c.l.b16 %v1455
        %v1740 = vunpack.c.h.b16 %v1455
        %v1741 = vunpack.c.l.b16 %v1456
        %v1742 = vunpack.c.h.b16 %v1456
        %v1743 = vunpack.c.l.b16 %v1457
        %v1744 = vunpack.c.h.b16 %v1457
        %v1745 = vunpack.c.l.b16 %v1458
        %v1746 = vunpack.c.h.b16 %v1458
        %v1747 = vunpack.c.l.b16 %v1459
        %v1748 = vunpack.c.h.b16 %v1459
        %v1749 = vunpack.c.l.b16 %v1460
        %v1750 = vunpack.c.h.b16 %v1460
        %v1751 = vunpack.c.l.b16 %v1461
        %v1752 = vunpack.c.h.b16 %v1461
        %v1753 = vunpack.c.l.b16 %v1462
        %v1754 = vunpack.c.h.b16 %v1462
        %v1755 = vunpack.c.l.b16 %v1463
        %v1756 = vunpack.c.h.b16 %v1463
        %v1757 = vunpack.c.l.b16 %v1464
        %v1758 = vunpack.c.h.b16 %v1464
        %v1759 = vunpack.c.l.b16 %v1465
        %v1760 = vunpack.c.h.b16 %v1465
        %v1761 = vunpack.c.l.b16 %v1466
        %v1762 = vunpack.c.h.b16 %v1466
        %v1763 = vunpack.c.l.b16 %v1467
        %v1764 = vunpack.c.h.b16 %v1467
        %v1765 = vunpack.c.l.b16 %v1468
        %v1766 = vunpack.c.h.b16 %v1468
        %v1767 = vunpack.c.l.b16 %v1469
        %v1768 = vunpack.c.h.b16 %v1469
        %v1769 = vunpack.c.l.b16 %v1470
        %v1770 = vunpack.c.h.b16 %v1470
        %v1771 = vunpack.c.l.b16 %v1471
        %v1772 = vunpack.c.h.b16 %v1471
        %v1773 = vunpack.c.l.b16 %v1472
        %v1774 = vunpack.c.h.b16 %v1472
        %v1775 = vunpack.c.l.b16 %v1473
        %v1776 = vunpack.c.h.b16 %v1473
        %v1777 = vunpack.c.l.b16 %v1474
        %v1778 = vunpack.c.h.b16 %v1474
        %v1779 = vunpack.c.l.b16 %v1475
        %v1780 = vunpack.c.h.b16 %v1475
        %v1781 = vunpack.c.l.b16 %v1476
        %v1782 = vunpack.c.h.b16 %v1476
        %v1783 = vunpack.c.l.b16 %v1477
        %v1784 = vunpack.c.h.b16 %v1477
        %v1785 = vunpack.c.l.b16 %v1478
        %v1786 = vunpack.c.h.b16 %v1478
        %v1787 = vunpack.c.l.b16 %v1479
        %v1788 = vunpack.c.h.b16 %v1479
        %v1789 = vunpack.c.l.b16 %v1480
        %v1790 = vunpack.c.h.b16 %v1480
        %v1791 = vunpack.c.l.b16 %v1481
        %v1792 = vunpack.c.h.b16 %v1481
        %v1793 = vunpack.c.l.b16 %v1482
        %v1794 = vunpack.c.h.b16 %v1482
        %v1795 = vunpack.c.l.b16 %v1483
        %v1796 = vunpack.c.h.b16 %v1483
        %v1797 = vunpack.c.l.b16 %v1484
        %v1798 = vunpack.c.h.b16 %v1484
        %v1799 = vunpack.c.l.b16 %v1485
        %v1800 = vunpack.c.h.b16 %v1485
        %v1801 = vunpack.c.l.b16 %v1486
        %v1802 = vunpack.c.h.b16 %v1486
        %v1803 = vunpack.c.l.b16 %v1487
        %v1804 = vunpack.c.h.b16 %v1487
        %v1805 = vunpack.c.l.b16 %v1488
        %v1806 = vunpack.c.h.b16 %v1488
        %v1807 = vunpack.c.l.b16 %v1489
        %v1808 = vunpack.c.h.b16 %v1489
        %v1809 = vunpack.c.l.b16 %v1490
        %v1810 = vunpack.c.h.b16 %v1490
        %v1811 = vpack.c.b16 %v1625, %v1619
        %v1812 = vpack.c.b16 %v1626, %v1620
        %v1813 = vpack.c.b16 %v1627, %v1621
        %v1814 = vpack.c.b16 %v1628, %v1622
        %v1815 = vpack.c.b16 %v1629, %v1623
        %v1816 = vpack.c.b16 %v1630, %v1624
        %v1817 = vpack.c.b16 %v1637, %v1631
        %v1818 = vpack.c.b16 %v1638, %v1632
        %v1819 = vpack.c.b16 %v1639, %v1633
        %v1820 = vpack.c.b16 %v1640, %v1634
        %v1821 = vpack.c.b16 %v1641, %v1635
        %v1822 = vpack.c.b16 %v1642, %v1636
        %v1823 = vpack.c.b16 %v1649, %v1643
        %v1824 = vpack.c.b16 %v1650, %v1644
        %v1825 = vpack.c.b16 %v1651, %v1645
        %v1826 = vpack.c.b16 %v1652, %v1646
        %v1827 = vpack.c.b16 %v1653, %v1647
        %v1828 = vpack.c.b16 %v1654, %v1648
        %v1829 = vpack.c.b16 %v1661, %v1655
        %v1830 = vpack.c.b16 %v1662, %v1656
        %v1831 = vpack.c.b16 %v1663, %v1657
        %v1832 = vpack.c.b16 %v1664, %v1658
        %v1833 = vpack.c.b16 %v1665, %v1659
        %v1834 = vpack.c.b16 %v1666, %v1660
        %v1835 = vpack.c.b16 %v1673, %v1667
        %v1836 = vpack.c.b16 %v1674, %v1668
        %v1837 = vpack.c.b16 %v1675, %v1669
        %v1838 = vpack.c.b16 %v1676, %v1670
        %v1839 = vpack.c.b16 %v1677, %v1671
        %v1840 = vpack.c.b16 %v1678, %v1672
        %v1841 = vpack.c.b16 %v1685, %v1679
        %v1842 = vpack.c.b16 %v1686, %v1680
        %v1843 = vpack.c.b16 %v1687, %v1681
        %v1844 = vpack.c.b16 %v1688, %v1682
        %v1845 = vpack.c.b16 %v1689, %v1683
        %v1846 = vpack.c.b16 %v1690, %v1684
        %v1847 = vpack.c.b16 %v1697, %v1691
        %v1848 = vpack.c.b16 %v1698, %v1692
        %v1849 = vpack.c.b16 %v1699, %v1693
        %v1850 = vpack.c.b16 %v1700, %v1694
        %v1851 = vpack.c.b16 %v1701, %v1695
        %v1852 = vpack.c.b16 %v1702, %v1696
        %v1853 = vpack.c.b16 %v1709, %v1703
        %v1854 = vpack.c.b16 %v1710, %v1704
        %v1855 = vpack.c.b16 %v1711, %v1705
        %v1856 = vpack.c.b16 %v1712, %v1706
        %v1857 = vpack.c.b16 %v1713, %v1707
        %v1858 = vpack.c.b16 %v1714, %v1708
        %v1859 = vpack.c.b16 %v1721, %v1715
        %v1860 = vpack.c.b16 %v1722, %v1716
        %v1861 = vpack.c.b16 %v1723, %v1717
        %v1862 = vpack.c.b16 %v1724, %v1718
        %v1863 = vpack.c.b16 %v1725, %v1719
        %v1864 = vpack.c.b16 %v1726, %v1720
        %v1865 = vpack.c.b16 %v1733, %v1727
        %v1866 = vpack.c.b16 %v1734, %v1728
        %v1867 = vpack.c.b16 %v1735, %v1729
        %v1868 = vpack.c.b16 %v1736, %v1730
        %v1869 = vpack.c.b16 %v1737, %v1731
        %v1870 = vpack.c.b16 %v1738, %v1732
        %v1871 = vpack.c.b16 %v1745, %v1739
        %v1872 = vpack.c.b16 %v1746, %v1740
        %v1873 = vpack.c.b16 %v1747, %v1741
        %v1874 = vpack.c.b16 %v1748, %v1742
        %v1875 = vpack.c.b16 %v1749, %v1743
        %v1876 = vpack.c.b16 %v1750, %v1744
        %v1877 = vpack.c.b16 %v1757, %v1751
        %v1878 = vpack.c.b16 %v1758, %v1752
        %v1879 = vpack.c.b16 %v1759, %v1753
        %v1880 = vpack.c.b16 %v1760, %v1754
        %v1881 = vpack.c.b16 %v1761, %v1755
        %v1882 = vpack.c.b16 %v1762, %v1756
        %v1883 = vpack.c.b16 %v1769, %v1763
        %v1884 = vpack.c.b16 %v1770, %v1764
        %v1885 = vpack.c.b16 %v1771, %v1765
        %v1886 = vpack.c.b16 %v1772, %v1766
        %v1887 = vpack.c.b16 %v1773, %v1767
        %v1888 = vpack.c.b16 %v1774, %v1768
        %v1889 = vpack.c.b16 %v1781, %v1775
        %v1890 = vpack.c.b16 %v1782, %v1776
        %v1891 = vpack.c.b16 %v1783, %v1777
        %v1892 = vpack.c.b16 %v1784, %v1778
        %v1893 = vpack.c.b16 %v1785, %v1779
        %v1894 = vpack.c.b16 %v1786, %v1780
        %v1895 = vpack.c.b16 %v1793, %v1787
        %v1896 = vpack.c.b16 %v1794, %v1788
        %v1897 = vpack.c.b16 %v1795, %v1789
        %v1898 = vpack.c.b16 %v1796, %v1790
        %v1899 = vpack.c.b16 %v1797, %v1791
        %v1900 = vpack.c.b16 %v1798, %v1792
        %v1901 = vpack.c.b16 %v1805, %v1799
        %v1902 = vpack.c.b16 %v1806, %v1800
        %v1903 = vpack.c.b16 %v1807, %v1801
        %v1904 = vpack.c.b16 %v1808, %v1802
        %v1905 = vpack.c.b16 %v1809, %v1803
        %v1906 = vpack.c.b16 %v1810, %v1804
        %2003 = vmatprep.subr.bf16.mxu0 %v1854
        %2004 = vmatpush1.bf16.msra.mxu0 %v1853
        %2005 = vmatprep.subr.bf16.mxu0 %v1848
        %2006 = vmatpush1.bf16.msra.mxu0 %v1847
        %2007 = vmatprep.subr.bf16.mxu0 %v1842
        %2008 = vmatpush1.bf16.msra.mxu0 %v1841
        %2009 = vmatprep.subr.bf16.mxu0 %v1836
        %2010 = vmatpush1.bf16.msra.mxu0 %v1835
        %2011 = vmatprep.subr.bf16.mxu0 %v1830
        %2012 = vmatpush1.bf16.msra.mxu0 %v1829
        %2013 = vmatprep.subr.bf16.mxu0 %v1824
        %2014 = vmatpush1.bf16.msra.mxu0 %v1823
        %2015 = vmatprep.subr.bf16.mxu0 %v1818
        %2016 = vmatpush1.bf16.msra.mxu0 %v1817
        %2017 = vmatprep.subr.bf16.mxu0 %v1812
        %2018 = vmatpush1.bf16.msra.mxu0 %v1811
        %2019 = vmatprep.subr.bf16.mxu0 %v1902
        %2020 = vmatpush2.bf16.msra.mxu0 %v1901
        %2021 = vmatprep.subr.bf16.mxu0 %v1896
        %2022 = vmatpush2.bf16.msra.mxu0 %v1895
        %2023 = vmatprep.subr.bf16.mxu0 %v1890
        %2024 = vmatpush2.bf16.msra.mxu0 %v1889
        %2025 = vmatprep.subr.bf16.mxu0 %v1884
        %2026 = vmatpush2.bf16.msra.mxu0 %v1883
        %2027 = vmatprep.subr.bf16.mxu0 %v1878
        %2028 = vmatpush2.bf16.msra.mxu0 %v1877
        %2029 = vmatprep.subr.bf16.mxu0 %v1872
        %2030 = vmatpush2.bf16.msra.mxu0 %v1871
        %2031 = vmatprep.subr.bf16.mxu0 %v1866
        %2032 = vmatpush2.bf16.msra.mxu0 %v1865
        %2033 = vmatprep.subr.bf16.mxu0 %v1860
        %2034 = vmatpush2.bf16.msra.mxu0 %v1859
        %2035 = vmatprep.mubr.bf16.mxu0 %v1386
        %2036 = vmatmul.mubr.bf16.gmra.mxu0 %v1385
        %v2037 = vpop.f32.mrf.mxu0
        %v2038 = vadd.f32 %v1496, %v2037
        %v2039 = vpop.f32.mrf.mxu0
        %v2040 = vadd.f32 %v1500, %v2039
        %v2041 = vpop.f32.mrf.mxu0
        %v2042 = vadd.f32 %v1496, %v2041
        %v2043 = vpop.f32.mrf.mxu0
        %v2044 = vadd.f32 %v1500, %v2043
        %2045 = vmatprep.mubr.bf16.mxu0 %v1388
        %2046 = vmatmul.mubr.bf16.gmra.mxu0 %v1387
        %v2047 = vpop.f32.mrf.mxu0
        %v2048 = vadd.f32 %v1496, %v2047
        %v2049 = vpop.f32.mrf.mxu0
        %v2050 = vadd.f32 %v1500, %v2049
        %v2051 = vpop.f32.mrf.mxu0
        %v2052 = vadd.f32 %v1496, %v2051
        %v2053 = vpop.f32.mrf.mxu0
        %v2054 = vadd.f32 %v1500, %v2053
        %2055 = vmatprep.mubr.bf16.mxu0 %v1390
        %2056 = vmatmul.mubr.bf16.gmra.mxu0 %v1389
        %v2057 = vpop.f32.mrf.mxu0
        %v2058 = vadd.f32 %v1496, %v2057
        %v2059 = vpop.f32.mrf.mxu0
        %v2060 = vadd.f32 %v1500, %v2059
        %v2061 = vpop.f32.mrf.mxu0
        %v2062 = vadd.f32 %v1496, %v2061
        %v2063 = vpop.f32.mrf.mxu0
        %v2064 = vadd.f32 %v1500, %v2063
        %2065 = vmatprep.mubr.bf16.mxu0 %v1392
        %2066 = vmatmul.mubr.bf16.gmra.mxu0 %v1391
        %v2067 = vpop.f32.mrf.mxu0
        %v2068 = vadd.f32 %v1496, %v2067
        %v2069 = vpop.f32.mrf.mxu0
        %v2070 = vadd.f32 %v1500, %v2069
        %v2071 = vpop.f32.mrf.mxu0
        %v2072 = vadd.f32 %v1496, %v2071
        %v2073 = vpop.f32.mrf.mxu0
        %v2074 = vadd.f32 %v1500, %v2073
        %2075 = vmatprep.mubr.bf16.mxu0 %v1394
        %2076 = vmatmul.mubr.bf16.gmra.mxu0 %v1393
        %v2077 = vpop.f32.mrf.mxu0
        %v2078 = vadd.f32 %v1496, %v2077
        %v2079 = vpop.f32.mrf.mxu0
        %v2080 = vadd.f32 %v1500, %v2079
        %v2081 = vpop.f32.mrf.mxu0
        %v2082 = vpop.f32.mrf.mxu0
        %2083 = vdwg.mxu0
        %2084 = vmatprep.subr.bf16.mxu0 %v1856
        %2085 = vmatpush1.bf16.msra.mxu0 %v1855
        %2086 = vmatprep.subr.bf16.mxu0 %v1850
        %2087 = vmatpush1.bf16.msra.mxu0 %v1849
        %2088 = vmatprep.subr.bf16.mxu0 %v1844
        %2089 = vmatpush1.bf16.msra.mxu0 %v1843
        %2090 = vmatprep.subr.bf16.mxu0 %v1838
        %2091 = vmatpush1.bf16.msra.mxu0 %v1837
        %2092 = vmatprep.subr.bf16.mxu0 %v1832
        %2093 = vmatpush1.bf16.msra.mxu0 %v1831
        %2094 = vmatprep.subr.bf16.mxu0 %v1826
        %2095 = vmatpush1.bf16.msra.mxu0 %v1825
        %2096 = vmatprep.subr.bf16.mxu0 %v1820
        %2097 = vmatpush1.bf16.msra.mxu0 %v1819
        %2098 = vmatprep.subr.bf16.mxu0 %v1814
        %2099 = vmatpush1.bf16.msra.mxu0 %v1813
        %2100 = vmatprep.subr.bf16.mxu0 %v1904
        %2101 = vmatpush2.bf16.msra.mxu0 %v1903
        %2102 = vmatprep.subr.bf16.mxu0 %v1898
        %2103 = vmatpush2.bf16.msra.mxu0 %v1897
        %2104 = vmatprep.subr.bf16.mxu0 %v1892
        %2105 = vmatpush2.bf16.msra.mxu0 %v1891
        %2106 = vmatprep.subr.bf16.mxu0 %v1886
        %2107 = vmatpush2.bf16.msra.mxu0 %v1885
        %2108 = vmatprep.subr.bf16.mxu0 %v1880
        %2109 = vmatpush2.bf16.msra.mxu0 %v1879
        %2110 = vmatprep.subr.bf16.mxu0 %v1874
        %2111 = vmatpush2.bf16.msra.mxu0 %v1873
        %2112 = vmatprep.subr.bf16.mxu0 %v1868
        %2113 = vmatpush2.bf16.msra.mxu0 %v1867
        %2114 = vmatprep.subr.bf16.mxu0 %v1862
        %2115 = vmatpush2.bf16.msra.mxu0 %v1861
        %2116 = vmatprep.mubr.bf16.mxu0 %v1386
        %2117 = vmatmul.mubr.bf16.gmra.mxu0 %v1385
        %v2118 = vpop.f32.mrf.mxu0
        %v2119 = vadd.f32 %v1504, %v2118
        %v2120 = vpop.f32.mrf.mxu0
        %v2121 = vadd.f32 %v1508, %v2120
        %v2122 = vpop.f32.mrf.mxu0
        %v2123 = vadd.f32 %v1504, %v2122
        %v2124 = vpop.f32.mrf.mxu0
        %v2125 = vadd.f32 %v1508, %v2124
        %2126 = vmatprep.mubr.bf16.mxu0 %v1388
        %2127 = vmatmul.mubr.bf16.gmra.mxu0 %v1387
        %v2128 = vpop.f32.mrf.mxu0
        %v2129 = vadd.f32 %v1504, %v2128
        %v2130 = vpop.f32.mrf.mxu0
        %v2131 = vadd.f32 %v1508, %v2130
        %v2132 = vpop.f32.mrf.mxu0
        %v2133 = vadd.f32 %v1504, %v2132
        %v2134 = vpop.f32.mrf.mxu0
        %v2135 = vadd.f32 %v1508, %v2134
        %2136 = vmatprep.mubr.bf16.mxu0 %v1390
        %2137 = vmatmul.mubr.bf16.gmra.mxu0 %v1389
        %v2138 = vpop.f32.mrf.mxu0
        %v2139 = vadd.f32 %v1504, %v2138
        %v2140 = vpop.f32.mrf.mxu0
        %v2141 = vadd.f32 %v1508, %v2140
        %v2142 = vpop.f32.mrf.mxu0
        %v2143 = vadd.f32 %v1504, %v2142
        %v2144 = vpop.f32.mrf.mxu0
        %v2145 = vadd.f32 %v1508, %v2144
        %2146 = vmatprep.mubr.bf16.mxu0 %v1392
        %2147 = vmatmul.mubr.bf16.gmra.mxu0 %v1391
        %v2148 = vpop.f32.mrf.mxu0
        %v2149 = vadd.f32 %v1504, %v2148
        %v2150 = vpop.f32.mrf.mxu0
        %v2151 = vadd.f32 %v1508, %v2150
        %v2152 = vpop.f32.mrf.mxu0
        %v2153 = vadd.f32 %v1504, %v2152
        %v2154 = vpop.f32.mrf.mxu0
        %v2155 = vadd.f32 %v1508, %v2154
        %2156 = vmatprep.mubr.bf16.mxu0 %v1394
        %2157 = vmatmul.mubr.bf16.gmra.mxu0 %v1393
        %v2158 = vpop.f32.mrf.mxu0
        %v2159 = vadd.f32 %v1504, %v2158
        %v2160 = vpop.f32.mrf.mxu0
        %v2161 = vadd.f32 %v1508, %v2160
        %v2162 = vpop.f32.mrf.mxu0
        %v2163 = vpop.f32.mrf.mxu0
        %2164 = vdwg.mxu0
        %2165 = vmatprep.subr.bf16.mxu0 %v1858
        %2166 = vmatpush1.bf16.msra.mxu0 %v1857
        %2167 = vmatprep.subr.bf16.mxu0 %v1852
        %2168 = vmatpush1.bf16.msra.mxu0 %v1851
        %2169 = vmatprep.subr.bf16.mxu0 %v1846
        %2170 = vmatpush1.bf16.msra.mxu0 %v1845
        %2171 = vmatprep.subr.bf16.mxu0 %v1840
        %2172 = vmatpush1.bf16.msra.mxu0 %v1839
        %2173 = vmatprep.subr.bf16.mxu0 %v1834
        %2174 = vmatpush1.bf16.msra.mxu0 %v1833
        %2175 = vmatprep.subr.bf16.mxu0 %v1828
        %2176 = vmatpush1.bf16.msra.mxu0 %v1827
        %2177 = vmatprep.subr.bf16.mxu0 %v1822
        %2178 = vmatpush1.bf16.msra.mxu0 %v1821
        %2179 = vmatprep.subr.bf16.mxu0 %v1816
        %2180 = vmatpush1.bf16.msra.mxu0 %v1815
        %2181 = vmatprep.subr.bf16.mxu0 %v1906
        %2182 = vmatpush2.bf16.msra.mxu0 %v1905
        %2183 = vmatprep.subr.bf16.mxu0 %v1900
        %2184 = vmatpush2.bf16.msra.mxu0 %v1899
        %2185 = vmatprep.subr.bf16.mxu0 %v1894
        %2186 = vmatpush2.bf16.msra.mxu0 %v1893
        %2187 = vmatprep.subr.bf16.mxu0 %v1888
        %2188 = vmatpush2.bf16.msra.mxu0 %v1887
        %2189 = vmatprep.subr.bf16.mxu0 %v1882
        %2190 = vmatpush2.bf16.msra.mxu0 %v1881
        %2191 = vmatprep.subr.bf16.mxu0 %v1876
        %2192 = vmatpush2.bf16.msra.mxu0 %v1875
        %2193 = vmatprep.subr.bf16.mxu0 %v1870
        %2194 = vmatpush2.bf16.msra.mxu0 %v1869
        %2195 = vmatprep.subr.bf16.mxu0 %v1864
        %2196 = vmatpush2.bf16.msra.mxu0 %v1863
        %2197 = vmatprep.mubr.bf16.mxu0 %v1386
        %2198 = vmatmul.mubr.bf16.gmra.mxu0 %v1385
        %v2199 = vpop.f32.mrf.mxu0
        %v2200 = vadd.f32 %v1512, %v2199
        %v2201 = vpop.f32.mrf.mxu0
        %v2202 = vadd.f32 %v1516, %v2201
        %v2203 = vpop.f32.mrf.mxu0
        %v2204 = vadd.f32 %v1512, %v2203
        %v2205 = vpop.f32.mrf.mxu0
        %v2206 = vadd.f32 %v1516, %v2205
        %2207 = vmatprep.mubr.bf16.mxu0 %v1388
        %2208 = vmatmul.mubr.bf16.gmra.mxu0 %v1387
        %v2209 = vpop.f32.mrf.mxu0
        %v2210 = vadd.f32 %v1512, %v2209
        %v2211 = vpop.f32.mrf.mxu0
        %v2212 = vadd.f32 %v1516, %v2211
        %v2213 = vpop.f32.mrf.mxu0
        %v2214 = vadd.f32 %v1512, %v2213
        %v2215 = vpop.f32.mrf.mxu0
        %v2216 = vadd.f32 %v1516, %v2215
        %2217 = vmatprep.mubr.bf16.mxu0 %v1390
        %2218 = vmatmul.mubr.bf16.gmra.mxu0 %v1389
        %v2219 = vpop.f32.mrf.mxu0
        %v2220 = vadd.f32 %v1512, %v2219
        %v2221 = vpop.f32.mrf.mxu0
        %v2222 = vadd.f32 %v1516, %v2221
        %v2223 = vpop.f32.mrf.mxu0
        %v2224 = vadd.f32 %v1512, %v2223
        %v2225 = vpop.f32.mrf.mxu0
        %v2226 = vadd.f32 %v1516, %v2225
        %2227 = vmatprep.mubr.bf16.mxu0 %v1392
        %2228 = vmatmul.mubr.bf16.gmra.mxu0 %v1391
        %v2229 = vpop.f32.mrf.mxu0
        %v2230 = vadd.f32 %v1512, %v2229
        %v2231 = vpop.f32.mrf.mxu0
        %v2232 = vadd.f32 %v1516, %v2231
        %v2233 = vpop.f32.mrf.mxu0
        %v2234 = vadd.f32 %v1512, %v2233
        %v2235 = vpop.f32.mrf.mxu0
        %v2236 = vadd.f32 %v1516, %v2235
        %2237 = vmatprep.mubr.bf16.mxu0 %v1394
        %2238 = vmatmul.mubr.bf16.gmra.mxu0 %v1393
        %v2239 = vpop.f32.mrf.mxu0
        %v2240 = vadd.f32 %v1512, %v2239
        %v2241 = vpop.f32.mrf.mxu0
        %v2242 = vadd.f32 %v1516, %v2241
        %v2243 = vpop.f32.mrf.mxu0
        %v2244 = vpop.f32.mrf.mxu0
        %2245 = vdwg.mxu0
        %v2246 = vpack.c.bf16 %v2123, %v2119
        %v2247 = vpack.c.bf16 %v2133, %v2129
        %v2248 = vpack.c.bf16 %v2143, %v2139
        %v2249 = vpack.c.bf16 %v2153, %v2149
        %v2250 = vpack.c.bf16 %v2159, %v2159
        %vm2251 = vcmp.ge.s32.totalorder %v1377, 0
        %vm2252 = vcmp.lt.s32.totalorder %v1377, 32
        %vm2253 = vmand %vm2251, %vm2252
        %v2254 = vsel %vm2253, 1, 0
        %v2255 = vcvt.s32.f32 %v2254
        %v2256 = vmul.f32 %v2038, %v2255
        %v2257 = vmul.f32 %v2042, %v2255
        %v2258 = vmul.f32 %v2048, %v2255
        %v2259 = vmul.f32 %v2052, %v2255
        %v2260 = vmul.f32 %v2058, %v2255
        %v2261 = vmul.f32 %v2062, %v2255
        %v2262 = vmul.f32 %v2068, %v2255
        %v2263 = vmul.f32 %v2072, %v2255
        %v2264 = vmul.f32 %v2078, %v2255
        %v2265 = vpack.c.bf16 %v2257, %v2256
        %v2266 = vpack.c.bf16 %v2259, %v2258
        %v2267 = vpack.c.bf16 %v2261, %v2260
        %v2268 = vpack.c.bf16 %v2263, %v2262
        %v2269 = vpack.c.bf16 %v2264, %v2264
        %2270 = vmatprep.subr.bf16.mxu0 0
        %2271 = vmatpush1.bf16.xpose.msra.mxu0 0
        %2272 = vmatprep.subr.bf16.mxu0 0
        %2273 = vmatpush1.bf16.xpose.msra.mxu0 0
        %2274 = vmatprep.subr.bf16.mxu0 0
        %2275 = vmatpush1.bf16.xpose.msra.mxu0 0
        %2276 = vmatprep.subr.bf16.mxu0 0
        %2277 = vmatpush1.bf16.xpose.msra.mxu0 %v2250
        %2278 = vmatprep.subr.bf16.mxu0 0
        %2279 = vmatpush1.bf16.xpose.msra.mxu0 %v2249
        %2280 = vmatprep.subr.bf16.mxu0 0
        %2281 = vmatpush1.bf16.xpose.msra.mxu0 %v2248
        %2282 = vmatprep.subr.bf16.mxu0 0
        %2283 = vmatpush1.bf16.xpose.msra.mxu0 %v2247
        %2284 = vmatprep.subr.bf16.mxu0 0
        %2285 = vmatpush1.bf16.xpose.msra.mxu0 %v2246
        %2286 = vmatprep.subr.bf16.mxu0 0
        %2287 = vmatpush2.bf16.xpose.msra.mxu0 0
        %2288 = vmatprep.subr.bf16.mxu0 0
        %2289 = vmatpush2.bf16.xpose.msra.mxu0 0
        %2290 = vmatprep.subr.bf16.mxu0 0
        %2291 = vmatpush2.bf16.xpose.msra.mxu0 0
        %2292 = vmatprep.subr.bf16.mxu0 0
        %2293 = vmatpush2.bf16.xpose.msra.mxu0 0
        %2294 = vmatprep.subr.bf16.mxu0 0
        %2295 = vmatpush2.bf16.xpose.msra.mxu0 0
        %2296 = vmatprep.subr.bf16.mxu0 0
        %2297 = vmatpush2.bf16.xpose.msra.mxu0 0
        %2298 = vmatprep.subr.bf16.mxu0 0
        %2299 = vmatpush2.bf16.xpose.msra.mxu0 0
        %2300 = vmatprep.subr.bf16.mxu0 0
        %2301 = vmatpush2.bf16.xpose.msra.mxu0 0
        %2302 = vmatprep.mubr.bf16.mxu0 0
        %2303 = vmatmul.mubr.bf16.gmra.mxu0 %v2265
        %v2304 = vpop.f32.mrf.mxu0
        %v2305 = vadd.f32 0.0, %v2304
        %v2306 = vpop.f32.mrf.mxu0
        %v2307 = vpop.f32.mrf.mxu0
        %v2308 = vadd.f32 0.0, %v2307
        %v2309 = vpop.f32.mrf.mxu0
        %2310 = vmatprep.mubr.bf16.mxu0 0
        %2311 = vmatmul.mubr.bf16.gmra.mxu0 %v2266
        %v2312 = vpop.f32.mrf.mxu0
        %v2313 = vadd.f32 0.0, %v2312
        %v2314 = vpop.f32.mrf.mxu0
        %v2315 = vpop.f32.mrf.mxu0
        %v2316 = vadd.f32 0.0, %v2315
        %v2317 = vpop.f32.mrf.mxu0
        %2318 = vmatprep.mubr.bf16.mxu0 0
        %2319 = vmatmul.mubr.bf16.gmra.mxu0 %v2267
        %v2320 = vpop.f32.mrf.mxu0
        %v2321 = vadd.f32 0.0, %v2320
        %v2322 = vpop.f32.mrf.mxu0
        %v2323 = vpop.f32.mrf.mxu0
        %v2324 = vadd.f32 0.0, %v2323
        %v2325 = vpop.f32.mrf.mxu0
        %2326 = vmatprep.mubr.bf16.mxu0 0
        %2327 = vmatmul.mubr.bf16.gmra.mxu0 %v2268
        %v2328 = vpop.f32.mrf.mxu0
        %v2329 = vadd.f32 0.0, %v2328
        %v2330 = vpop.f32.mrf.mxu0
        %v2331 = vpop.f32.mrf.mxu0
        %v2332 = vadd.f32 0.0, %v2331
        %v2333 = vpop.f32.mrf.mxu0
        %2334 = vmatprep.mubr.bf16.mxu0 0
        %2335 = vmatmul.mubr.bf16.gmra.mxu0 %v2269
        %v2336 = vpop.f32.mrf.mxu0
        %v2337 = vadd.f32 0.0, %v2336
        %v2338 = vpop.f32.mrf.mxu0
        %v2339 = vpop.f32.mrf.mxu0
        %v2340 = vpop.f32.mrf.mxu0
        %2341 = vdwg.mxu0
        %v2342 = vmul.f32 %v2305, 0.2
        %v2343 = vmul.f32 %v2308, 0.2
        %v2344 = vmul.f32 %v2313, 0.2
        %v2345 = vmul.f32 %v2316, 0.2
        %v2346 = vmul.f32 %v2321, 0.2
        %v2347 = vmul.f32 %v2324, 0.2
        %v2348 = vmul.f32 %v2329, 0.2
        %v2349 = vmul.f32 %v2332, 0.2
        %v2350 = vmul.f32 %v2337, 0.2
        %vm2351 = vcmask 556032
        %v2352 = vsel %vm2351, %v2342, -inf
        %2353 = vmax.xlane.f32.xlu0 %v2352
        %v2354 = vpop.xlane.xlu0 %2353
        %v2355 = vsel %vm2351, %v2343, -inf
        %2356 = vmax.xlane.f32.xlu0 %v2355
        %v2357 = vpop.xlane.xlu0 %2356
        %v2358 = vsel %vm2351, %v2344, -inf
        %2359 = vmax.xlane.f32.xlu0 %v2358
        %v2360 = vpop.xlane.xlu0 %2359
        %v2361 = vsel %vm2351, %v2345, -inf
        %2362 = vmax.xlane.f32.xlu0 %v2361
        %v2363 = vpop.xlane.xlu0 %2362
        %v2364 = vsel %vm2351, %v2346, -inf
        %2365 = vmax.xlane.f32.xlu0 %v2364
        %v2366 = vpop.xlane.xlu0 %2365
        %v2367 = vsel %vm2351, %v2347, -inf
        %2368 = vmax.xlane.f32.xlu0 %v2367
        %v2369 = vpop.xlane.xlu0 %2368
        %v2370 = vsel %vm2351, %v2348, -inf
        %2371 = vmax.xlane.f32.xlu0 %v2370
        %v2372 = vpop.xlane.xlu0 %2371
        %v2373 = vsel %vm2351, %v2349, -inf
        %2374 = vmax.xlane.f32.xlu0 %v2373
        %v2375 = vpop.xlane.xlu0 %2374
        %vm2376 = vcmask 551936
        %v2377 = vsel %vm2376, %v2350, -inf
        %2378 = vmax.xlane.f32.xlu0 %v2377
        %v2379 = vpop.xlane.xlu0 %2378
        %v2380 = vsub.f32 %v2342, %v2354
        %v2381 = vsub.f32 %v2343, %v2357
        %v2382 = vsub.f32 %v2344, %v2360
        %v2383 = vsub.f32 %v2345, %v2363
        %v2384 = vsub.f32 %v2346, %v2366
        %v2385 = vsub.f32 %v2347, %v2369
        %v2386 = vsub.f32 %v2348, %v2372
        %v2387 = vsub.f32 %v2349, %v2375
        %v2388 = vsub.f32 %v2350, %v2379
        %v2389 = vmul.f32 %v2380, 1.442695
        %v2390 = vpow.pop %v2389
        %v2391 = vmul.f32 %v2381, 1.442695
        %v2392 = vpow.pop %v2391
        %v2393 = vmul.f32 %v2382, 1.442695
        %v2394 = vpow.pop %v2393
        %v2395 = vmul.f32 %v2383, 1.442695
        %v2396 = vpow.pop %v2395
        %v2397 = vmul.f32 %v2384, 1.442695
        %v2398 = vpow.pop %v2397
        %v2399 = vmul.f32 %v2385, 1.442695
        %v2400 = vpow.pop %v2399
        %v2401 = vmul.f32 %v2386, 1.442695
        %v2402 = vpow.pop %v2401
        %v2403 = vmul.f32 %v2387, 1.442695
        %v2404 = vpow.pop %v2403
        %v2405 = vmul.f32 %v2388, 1.442695
        %v2406 = vpow.pop %v2405
        %v2407 = vsel %vm2351, %v2390, 0.0
        %2408 = vadd.xlane.f32.xlu0 %v2407
        %v2409 = vpop.xlane.xlu0 %2408
        %v2410 = vsel %vm2351, %v2392, 0.0
        %2411 = vadd.xlane.f32.xlu0 %v2410
        %v2412 = vpop.xlane.xlu0 %2411
        %v2413 = vsel %vm2351, %v2394, 0.0
        %2414 = vadd.xlane.f32.xlu0 %v2413
        %v2415 = vpop.xlane.xlu0 %2414
        %v2416 = vsel %vm2351, %v2396, 0.0
        %2417 = vadd.xlane.f32.xlu0 %v2416
        %v2418 = vpop.xlane.xlu0 %2417
        %v2419 = vsel %vm2351, %v2398, 0.0
        %2420 = vadd.xlane.f32.xlu0 %v2419
        %v2421 = vpop.xlane.xlu0 %2420
        %v2422 = vsel %vm2351, %v2400, 0.0
        %2423 = vadd.xlane.f32.xlu0 %v2422
        %v2424 = vpop.xlane.xlu0 %2423
        %v2425 = vsel %vm2351, %v2402, 0.0
        %2426 = vadd.xlane.f32.xlu0 %v2425
        %v2427 = vpop.xlane.xlu0 %2426
        %v2428 = vsel %vm2351, %v2404, 0.0
        %2429 = vadd.xlane.f32.xlu0 %v2428
        %v2430 = vpop.xlane.xlu0 %2429
        %v2431 = vsel %vm2376, %v2406, 0.0
        %2432 = vadd.xlane.f32.xlu0 %v2431
        %v2433 = vpop.xlane.xlu0 %2432
        %v2434 = vrcp.pop %v2409
        %v2435 = vmul.f32 1.0, %v2434
        %v2436 = vrcp.pop %v2412
        %v2437 = vmul.f32 1.0, %v2436
        %v2438 = vrcp.pop %v2415
        %v2439 = vmul.f32 1.0, %v2438
        %v2440 = vrcp.pop %v2418
        %v2441 = vmul.f32 1.0, %v2440
        %v2442 = vrcp.pop %v2421
        %v2443 = vmul.f32 1.0, %v2442
        %v2444 = vrcp.pop %v2424
        %v2445 = vmul.f32 1.0, %v2444
        %v2446 = vrcp.pop %v2427
        %v2447 = vmul.f32 1.0, %v2446
        %v2448 = vrcp.pop %v2430
        %v2449 = vmul.f32 1.0, %v2448
        %v2450 = vrcp.pop %v2433
        %v2451 = vmul.f32 1.0, %v2450
        %v2452 = vmul.f32 %v2390, %v2435
        %v2453 = vmul.f32 %v2392, %v2437
        %v2454 = vmul.f32 %v2394, %v2439
        %v2455 = vmul.f32 %v2396, %v2441
        %v2456 = vmul.f32 %v2398, %v2443
        %v2457 = vmul.f32 %v2400, %v2445
        %v2458 = vmul.f32 %v2402, %v2447
        %v2459 = vmul.f32 %v2404, %v2449
        %v2460 = vmul.f32 %v2406, %v2451
        %v2461 = vpack.c.bf16 %v2453, %v2452
        %v2462 = vpack.c.bf16 %v2455, %v2454
        %v2463 = vpack.c.bf16 %v2457, %v2456
        %v2464 = vpack.c.bf16 %v2459, %v2458
        %v2465 = vpack.c.bf16 %v2460, %v2460
        %v2466 = vmul.f32 %v2200, %v2255
        %v2467 = vmul.f32 %v2204, %v2255
        %v2468 = vmul.f32 %v2210, %v2255
        %v2469 = vmul.f32 %v2214, %v2255
        %v2470 = vmul.f32 %v2220, %v2255
        %v2471 = vmul.f32 %v2224, %v2255
        %v2472 = vmul.f32 %v2230, %v2255
        %v2473 = vmul.f32 %v2234, %v2255
        %v2474 = vmul.f32 %v2240, %v2255
        %v2475 = vpack.c.bf16 %v2467, %v2466
        %v2476 = vpack.c.bf16 %v2469, %v2468
        %v2477 = vpack.c.bf16 %v2471, %v2470
        %v2478 = vpack.c.bf16 %v2473, %v2472
        %v2479 = vpack.c.bf16 %v2474, %v2474
        %vm2480 = vcmp.ge.s32.totalorder %v1377, 32
        %vm2481 = vcmp.lt.s32.totalorder %v1377, 64
        %vm2482 = vmand %vm2480, %vm2481
        %v2483 = vsel %vm2482, 1, 0
        %v2484 = vcvt.s32.f32 %v2483
        %v2485 = vmul.f32 %v2038, %v2484
        %v2486 = vmul.f32 %v2042, %v2484
        %v2487 = vmul.f32 %v2048, %v2484
        %v2488 = vmul.f32 %v2052, %v2484
        %v2489 = vmul.f32 %v2058, %v2484
        %v2490 = vmul.f32 %v2062, %v2484
        %v2491 = vmul.f32 %v2068, %v2484
        %v2492 = vmul.f32 %v2072, %v2484
        %v2493 = vmul.f32 %v2078, %v2484
        %v2494 = vpack.c.bf16 %v2486, %v2485
        %v2495 = vpack.c.bf16 %v2488, %v2487
        %v2496 = vpack.c.bf16 %v2490, %v2489
        %v2497 = vpack.c.bf16 %v2492, %v2491
        %v2498 = vpack.c.bf16 %v2493, %v2493
        %2499 = vmatprep.subr.bf16.mxu0 0
        %2500 = vmatpush1.bf16.xpose.msra.mxu0 0
        %2501 = vmatprep.subr.bf16.mxu0 0
        %2502 = vmatpush1.bf16.xpose.msra.mxu0 0
        %2503 = vmatprep.subr.bf16.mxu0 0
        %2504 = vmatpush1.bf16.xpose.msra.mxu0 0
        %2505 = vmatprep.subr.bf16.mxu0 0
        %2506 = vmatpush1.bf16.xpose.msra.mxu0 %v2250
        %2507 = vmatprep.subr.bf16.mxu0 0
        %2508 = vmatpush1.bf16.xpose.msra.mxu0 %v2249
        %2509 = vmatprep.subr.bf16.mxu0 0
        %2510 = vmatpush1.bf16.xpose.msra.mxu0 %v2248
        %2511 = vmatprep.subr.bf16.mxu0 0
        %2512 = vmatpush1.bf16.xpose.msra.mxu0 %v2247
        %2513 = vmatprep.subr.bf16.mxu0 0
        %2514 = vmatpush1.bf16.xpose.msra.mxu0 %v2246
        %2515 = vmatprep.subr.bf16.mxu0 0
        %2516 = vmatpush2.bf16.xpose.msra.mxu0 0
        %2517 = vmatprep.subr.bf16.mxu0 0
        %2518 = vmatpush2.bf16.xpose.msra.mxu0 0
        %2519 = vmatprep.subr.bf16.mxu0 0
        %2520 = vmatpush2.bf16.xpose.msra.mxu0 0
        %2521 = vmatprep.subr.bf16.mxu0 0
        %2522 = vmatpush2.bf16.xpose.msra.mxu0 0
        %2523 = vmatprep.subr.bf16.mxu0 0
        %2524 = vmatpush2.bf16.xpose.msra.mxu0 0
        %2525 = vmatprep.subr.bf16.mxu0 0
        %2526 = vmatpush2.bf16.xpose.msra.mxu0 0
        %2527 = vmatprep.subr.bf16.mxu0 0
        %2528 = vmatpush2.bf16.xpose.msra.mxu0 0
        %2529 = vmatprep.subr.bf16.mxu0 0
        %2530 = vmatpush2.bf16.xpose.msra.mxu0 0
        %2531 = vmatprep.mubr.bf16.mxu0 0
        %2532 = vmatmul.mubr.bf16.gmra.mxu0 %v2494
        %v2533 = vpop.f32.mrf.mxu0
        %v2534 = vadd.f32 0.0, %v2533
        %v2535 = vpop.f32.mrf.mxu0
        %v2536 = vpop.f32.mrf.mxu0
        %v2537 = vadd.f32 0.0, %v2536
        %v2538 = vpop.f32.mrf.mxu0
        %2539 = vmatprep.mubr.bf16.mxu0 0
        %2540 = vmatmul.mubr.bf16.gmra.mxu0 %v2495
        %v2541 = vpop.f32.mrf.mxu0
        %v2542 = vadd.f32 0.0, %v2541
        %v2543 = vpop.f32.mrf.mxu0
        %v2544 = vpop.f32.mrf.mxu0
        %v2545 = vadd.f32 0.0, %v2544
        %v2546 = vpop.f32.mrf.mxu0
        %2547 = vmatprep.mubr.bf16.mxu0 0
        %2548 = vmatmul.mubr.bf16.gmra.mxu0 %v2496
        %v2549 = vpop.f32.mrf.mxu0
        %v2550 = vadd.f32 0.0, %v2549
        %v2551 = vpop.f32.mrf.mxu0
        %v2552 = vpop.f32.mrf.mxu0
        %v2553 = vadd.f32 0.0, %v2552
        %v2554 = vpop.f32.mrf.mxu0
        %2555 = vmatprep.mubr.bf16.mxu0 0
        %2556 = vmatmul.mubr.bf16.gmra.mxu0 %v2497
        %v2557 = vpop.f32.mrf.mxu0
        %v2558 = vadd.f32 0.0, %v2557
        %v2559 = vpop.f32.mrf.mxu0
        %v2560 = vpop.f32.mrf.mxu0
        %v2561 = vadd.f32 0.0, %v2560
        %v2562 = vpop.f32.mrf.mxu0
        %2563 = vmatprep.mubr.bf16.mxu0 0
        %2564 = vmatmul.mubr.bf16.gmra.mxu0 %v2498
        %v2565 = vpop.f32.mrf.mxu0
        %v2566 = vadd.f32 0.0, %v2565
        %v2567 = vpop.f32.mrf.mxu0
        %v2568 = vpop.f32.mrf.mxu0
        %v2569 = vpop.f32.mrf.mxu0
        %2570 = vdwg.mxu0
        %v2571 = vmul.f32 %v2534, 0.2
        %v2572 = vmul.f32 %v2537, 0.2
        %v2573 = vmul.f32 %v2542, 0.2
        %v2574 = vmul.f32 %v2545, 0.2
        %v2575 = vmul.f32 %v2550, 0.2
        %v2576 = vmul.f32 %v2553, 0.2
        %v2577 = vmul.f32 %v2558, 0.2
        %v2578 = vmul.f32 %v2561, 0.2
        %v2579 = vmul.f32 %v2566, 0.2
        %v2580 = vsel %vm2351, %v2571, -inf
        %2581 = vmax.xlane.f32.xlu0 %v2580
        %v2582 = vpop.xlane.xlu0 %2581
        %v2583 = vsel %vm2351, %v2572, -inf
        %2584 = vmax.xlane.f32.xlu0 %v2583
        %v2585 = vpop.xlane.xlu0 %2584
        %v2586 = vsel %vm2351, %v2573, -inf
        %2587 = vmax.xlane.f32.xlu0 %v2586
        %v2588 = vpop.xlane.xlu0 %2587
        %v2589 = vsel %vm2351, %v2574, -inf
        %2590 = vmax.xlane.f32.xlu0 %v2589
        %v2591 = vpop.xlane.xlu0 %2590
        %v2592 = vsel %vm2351, %v2575, -inf
        %2593 = vmax.xlane.f32.xlu0 %v2592
        %v2594 = vpop.xlane.xlu0 %2593
        %v2595 = vsel %vm2351, %v2576, -inf
        %2596 = vmax.xlane.f32.xlu0 %v2595
        %v2597 = vpop.xlane.xlu0 %2596
        %v2598 = vsel %vm2351, %v2577, -inf
        %2599 = vmax.xlane.f32.xlu0 %v2598
        %v2600 = vpop.xlane.xlu0 %2599
        %v2601 = vsel %vm2351, %v2578, -inf
        %2602 = vmax.xlane.f32.xlu0 %v2601
        %v2603 = vpop.xlane.xlu0 %2602
        %v2604 = vsel %vm2376, %v2579, -inf
        %2605 = vmax.xlane.f32.xlu0 %v2604
        %v2606 = vpop.xlane.xlu0 %2605
        %v2607 = vsub.f32 %v2571, %v2582
        %v2608 = vsub.f32 %v2572, %v2585
        %v2609 = vsub.f32 %v2573, %v2588
        %v2610 = vsub.f32 %v2574, %v2591
        %v2611 = vsub.f32 %v2575, %v2594
        %v2612 = vsub.f32 %v2576, %v2597
        %v2613 = vsub.f32 %v2577, %v2600
        %v2614 = vsub.f32 %v2578, %v2603
        %v2615 = vsub.f32 %v2579, %v2606
        %v2616 = vmul.f32 %v2607, 1.442695
        %v2617 = vpow.pop %v2616
        %v2618 = vmul.f32 %v2608, 1.442695
        %v2619 = vpow.pop %v2618
        %v2620 = vmul.f32 %v2609, 1.442695
        %v2621 = vpow.pop %v2620
        %v2622 = vmul.f32 %v2610, 1.442695
        %v2623 = vpow.pop %v2622
        %v2624 = vmul.f32 %v2611, 1.442695
        %v2625 = vpow.pop %v2624
        %v2626 = vmul.f32 %v2612, 1.442695
        %v2627 = vpow.pop %v2626
        %v2628 = vmul.f32 %v2613, 1.442695
        %v2629 = vpow.pop %v2628
        %v2630 = vmul.f32 %v2614, 1.442695
        %v2631 = vpow.pop %v2630
        %v2632 = vmul.f32 %v2615, 1.442695
        %v2633 = vpow.pop %v2632
        %v2634 = vsel %vm2351, %v2617, 0.0
        %2635 = vadd.xlane.f32.xlu0 %v2634
        %v2636 = vpop.xlane.xlu0 %2635
        %v2637 = vsel %vm2351, %v2619, 0.0
        %2638 = vadd.xlane.f32.xlu0 %v2637
        %v2639 = vpop.xlane.xlu0 %2638
        %v2640 = vsel %vm2351, %v2621, 0.0
        %2641 = vadd.xlane.f32.xlu0 %v2640
        %v2642 = vpop.xlane.xlu0 %2641
        %v2643 = vsel %vm2351, %v2623, 0.0
        %2644 = vadd.xlane.f32.xlu0 %v2643
        %v2645 = vpop.xlane.xlu0 %2644
        %v2646 = vsel %vm2351, %v2625, 0.0
        %2647 = vadd.xlane.f32.xlu0 %v2646
        %v2648 = vpop.xlane.xlu0 %2647
        %v2649 = vsel %vm2351, %v2627, 0.0
        %2650 = vadd.xlane.f32.xlu0 %v2649
        %v2651 = vpop.xlane.xlu0 %2650
        %v2652 = vsel %vm2351, %v2629, 0.0
        %2653 = vadd.xlane.f32.xlu0 %v2652
        %v2654 = vpop.xlane.xlu0 %2653
        %v2655 = vsel %vm2351, %v2631, 0.0
        %2656 = vadd.xlane.f32.xlu0 %v2655
        %v2657 = vpop.xlane.xlu0 %2656
        %v2658 = vsel %vm2376, %v2633, 0.0
        %2659 = vadd.xlane.f32.xlu0 %v2658
        %v2660 = vpop.xlane.xlu0 %2659
        %v2661 = vrcp.pop %v2636
        %v2662 = vmul.f32 1.0, %v2661
        %v2663 = vrcp.pop %v2639
        %v2664 = vmul.f32 1.0, %v2663
        %v2665 = vrcp.pop %v2642
        %v2666 = vmul.f32 1.0, %v2665
        %v2667 = vrcp.pop %v2645
        %v2668 = vmul.f32 1.0, %v2667
        %v2669 = vrcp.pop %v2648
        %v2670 = vmul.f32 1.0, %v2669
        %v2671 = vrcp.pop %v2651
        %v2672 = vmul.f32 1.0, %v2671
        %v2673 = vrcp.pop %v2654
        %v2674 = vmul.f32 1.0, %v2673
        %v2675 = vrcp.pop %v2657
        %v2676 = vmul.f32 1.0, %v2675
        %v2677 = vrcp.pop %v2660
        %v2678 = vmul.f32 1.0, %v2677
        %v2679 = vmul.f32 %v2617, %v2662
        %v2680 = vmul.f32 %v2619, %v2664
        %v2681 = vmul.f32 %v2621, %v2666
        %v2682 = vmul.f32 %v2623, %v2668
        %v2683 = vmul.f32 %v2625, %v2670
        %v2684 = vmul.f32 %v2627, %v2672
        %v2685 = vmul.f32 %v2629, %v2674
        %v2686 = vmul.f32 %v2631, %v2676
        %v2687 = vmul.f32 %v2633, %v2678
        %v2688 = vpack.c.bf16 %v2680, %v2679
        %v2689 = vpack.c.bf16 %v2682, %v2681
        %v2690 = vpack.c.bf16 %v2684, %v2683
        %v2691 = vpack.c.bf16 %v2686, %v2685
        %v2692 = vpack.c.bf16 %v2687, %v2687
        %v2693 = vmul.f32 %v2200, %v2484
        %v2694 = vmul.f32 %v2204, %v2484
        %v2695 = vmul.f32 %v2210, %v2484
        %v2696 = vmul.f32 %v2214, %v2484
        %v2697 = vmul.f32 %v2220, %v2484
        %v2698 = vmul.f32 %v2224, %v2484
        %v2699 = vmul.f32 %v2230, %v2484
        %v2700 = vmul.f32 %v2234, %v2484
        %v2701 = vmul.f32 %v2240, %v2484
        %v2702 = vpack.c.bf16 %v2694, %v2693
        %v2703 = vpack.c.bf16 %v2696, %v2695
        %v2704 = vpack.c.bf16 %v2698, %v2697
        %v2705 = vpack.c.bf16 %v2700, %v2699
        %v2706 = vpack.c.bf16 %v2701, %v2701
        %v2708 = vsel %vm2351, %v2688, 0
        %v2711 = vsel %vm2351, %v2689, 0
        %v2714 = vsel %vm2351, %v2690, 0
        %v2717 = vsel %vm2351, %v2691, 0
        %v2720 = vsel %vm2351, %v2692, 0
        %vm2722 = vcmask 1041408
        %v2724 = vsel %vm2722, %v2706, 0
        %2726 = vmatprep.subr.bf16.mxu0 0
        %2727 = vmatpush1.bf16.msra.mxu0 0
        %2728 = vmatprep.subr.bf16.mxu0 0
        %2729 = vmatpush1.bf16.msra.mxu0 0
        %2730 = vmatprep.subr.bf16.mxu0 0
        %2731 = vmatpush1.bf16.msra.mxu0 0
        %2732 = vmatprep.subr.bf16.mxu0 0
        %2733 = vmatpush1.bf16.msra.mxu0 %v2724
        %2734 = vmatprep.subr.bf16.mxu0 0
        %2735 = vmatpush1.bf16.msra.mxu0 %v2705
        %2736 = vmatprep.subr.bf16.mxu0 0
        %2737 = vmatpush1.bf16.msra.mxu0 %v2704
        %2738 = vmatprep.subr.bf16.mxu0 0
        %2739 = vmatpush1.bf16.msra.mxu0 %v2703
        %2740 = vmatprep.subr.bf16.mxu0 0
        %2741 = vmatpush1.bf16.msra.mxu0 %v2702
        %2742 = vmatprep.subr.bf16.mxu0 0
        %2743 = vmatpush2.bf16.msra.mxu0 0
        %2744 = vmatprep.subr.bf16.mxu0 0
        %2745 = vmatpush2.bf16.msra.mxu0 0
        %2746 = vmatprep.subr.bf16.mxu0 0
        %2747 = vmatpush2.bf16.msra.mxu0 0
        %2748 = vmatprep.subr.bf16.mxu0 0
        %2749 = vmatpush2.bf16.msra.mxu0 0
        %2750 = vmatprep.subr.bf16.mxu0 0
        %2751 = vmatpush2.bf16.msra.mxu0 0
        %2752 = vmatprep.subr.bf16.mxu0 0
        %2753 = vmatpush2.bf16.msra.mxu0 0
        %2754 = vmatprep.subr.bf16.mxu0 0
        %2755 = vmatpush2.bf16.msra.mxu0 0
        %2756 = vmatprep.subr.bf16.mxu0 0
        %2757 = vmatpush2.bf16.msra.mxu0 0
        %2758 = vmatprep.mubr.bf16.mxu0 0
        %2759 = vmatmul.mubr.bf16.gmra.mxu0 %v2708
        %v2760 = vpop.f32.mrf.mxu0
        %v2761 = vadd.f32 0.0, %v2760
        %v2762 = vpop.f32.mrf.mxu0
        %v2763 = vpop.f32.mrf.mxu0
        %v2764 = vadd.f32 0.0, %v2763
        %v2765 = vpop.f32.mrf.mxu0
        %2766 = vmatprep.mubr.bf16.mxu0 0
        %2767 = vmatmul.mubr.bf16.gmra.mxu0 %v2711
        %v2768 = vpop.f32.mrf.mxu0
        %v2769 = vadd.f32 0.0, %v2768
        %v2770 = vpop.f32.mrf.mxu0
        %v2771 = vpop.f32.mrf.mxu0
        %v2772 = vadd.f32 0.0, %v2771
        %v2773 = vpop.f32.mrf.mxu0
        %2774 = vmatprep.mubr.bf16.mxu0 0
        %2775 = vmatmul.mubr.bf16.gmra.mxu0 %v2714
        %v2776 = vpop.f32.mrf.mxu0
        %v2777 = vadd.f32 0.0, %v2776
        %v2778 = vpop.f32.mrf.mxu0
        %v2779 = vpop.f32.mrf.mxu0
        %v2780 = vadd.f32 0.0, %v2779
        %v2781 = vpop.f32.mrf.mxu0
        %2782 = vmatprep.mubr.bf16.mxu0 0
        %2783 = vmatmul.mubr.bf16.gmra.mxu0 %v2717
        %v2784 = vpop.f32.mrf.mxu0
        %v2785 = vadd.f32 0.0, %v2784
        %v2786 = vpop.f32.mrf.mxu0
        %v2787 = vpop.f32.mrf.mxu0
        %v2788 = vadd.f32 0.0, %v2787
        %v2789 = vpop.f32.mrf.mxu0
        %2790 = vmatprep.mubr.bf16.mxu0 0
        %2791 = vmatmul.mubr.bf16.gmra.mxu0 %v2720
        %v2792 = vpop.f32.mrf.mxu0
        %v2793 = vadd.f32 0.0, %v2792
        %v2794 = vpop.f32.mrf.mxu0
        %v2795 = vpop.f32.mrf.mxu0
        %v2796 = vpop.f32.mrf.mxu0
        %2797 = vdwg.mxu0
        %v2799 = vsel %vm2351, %v2461, 0
        %v2802 = vsel %vm2351, %v2462, 0
        %v2805 = vsel %vm2351, %v2463, 0
        %v2808 = vsel %vm2351, %v2464, 0
        %v2811 = vsel %vm2351, %v2465, 0
        %v2814 = vsel %vm2722, %v2479, 0
        %2816 = vmatprep.subr.bf16.mxu0 0
        %2817 = vmatpush1.bf16.msra.mxu0 0
        %2818 = vmatprep.subr.bf16.mxu0 0
        %2819 = vmatpush1.bf16.msra.mxu0 0
        %2820 = vmatprep.subr.bf16.mxu0 0
        %2821 = vmatpush1.bf16.msra.mxu0 0
        %2822 = vmatprep.subr.bf16.mxu0 0
        %2823 = vmatpush1.bf16.msra.mxu0 %v2814
        %2824 = vmatprep.subr.bf16.mxu0 0
        %2825 = vmatpush1.bf16.msra.mxu0 %v2478
        %2826 = vmatprep.subr.bf16.mxu0 0
        %2827 = vmatpush1.bf16.msra.mxu0 %v2477
        %2828 = vmatprep.subr.bf16.mxu0 0
        %2829 = vmatpush1.bf16.msra.mxu0 %v2476
        %2830 = vmatprep.subr.bf16.mxu0 0
        %2831 = vmatpush1.bf16.msra.mxu0 %v2475
        %2832 = vmatprep.subr.bf16.mxu0 0
        %2833 = vmatpush2.bf16.msra.mxu0 0
        %2834 = vmatprep.subr.bf16.mxu0 0
        %2835 = vmatpush2.bf16.msra.mxu0 0
        %2836 = vmatprep.subr.bf16.mxu0 0
        %2837 = vmatpush2.bf16.msra.mxu0 0
        %2838 = vmatprep.subr.bf16.mxu0 0
        %2839 = vmatpush2.bf16.msra.mxu0 0
        %2840 = vmatprep.subr.bf16.mxu0 0
        %2841 = vmatpush2.bf16.msra.mxu0 0
        %2842 = vmatprep.subr.bf16.mxu0 0
        %2843 = vmatpush2.bf16.msra.mxu0 0
        %2844 = vmatprep.subr.bf16.mxu0 0
        %2845 = vmatpush2.bf16.msra.mxu0 0
        %2846 = vmatprep.subr.bf16.mxu0 0
        %2847 = vmatpush2.bf16.msra.mxu0 0
        %2848 = vmatprep.mubr.bf16.mxu0 0
        %2849 = vmatmul.mubr.bf16.gmra.mxu0 %v2799
        %v2850 = vpop.f32.mrf.mxu0
        %v2851 = vadd.f32 %v2761, %v2850
        %v2852 = vpop.f32.mrf.mxu0
        %v2853 = vpop.f32.mrf.mxu0
        %v2854 = vadd.f32 %v2764, %v2853
        %v2855 = vpop.f32.mrf.mxu0
        %2856 = vmatprep.mubr.bf16.mxu0 0
        %2857 = vmatmul.mubr.bf16.gmra.mxu0 %v2802
        %v2858 = vpop.f32.mrf.mxu0
        %v2859 = vadd.f32 %v2769, %v2858
        %v2860 = vpop.f32.mrf.mxu0
        %v2861 = vpop.f32.mrf.mxu0
        %v2862 = vadd.f32 %v2772, %v2861
        %v2863 = vpop.f32.mrf.mxu0
        %2864 = vmatprep.mubr.bf16.mxu0 0
        %2865 = vmatmul.mubr.bf16.gmra.mxu0 %v2805
        %v2866 = vpop.f32.mrf.mxu0
        %v2867 = vadd.f32 %v2777, %v2866
        %v2868 = vpop.f32.mrf.mxu0
        %v2869 = vpop.f32.mrf.mxu0
        %v2870 = vadd.f32 %v2780, %v2869
        %v2871 = vpop.f32.mrf.mxu0
        %2872 = vmatprep.mubr.bf16.mxu0 0
        %2873 = vmatmul.mubr.bf16.gmra.mxu0 %v2808
        %v2874 = vpop.f32.mrf.mxu0
        %v2875 = vadd.f32 %v2785, %v2874
        %v2876 = vpop.f32.mrf.mxu0
        %v2877 = vpop.f32.mrf.mxu0
        %v2878 = vadd.f32 %v2788, %v2877
        %v2879 = vpop.f32.mrf.mxu0
        %2880 = vmatprep.mubr.bf16.mxu0 0
        %2881 = vmatmul.mubr.bf16.gmra.mxu0 %v2811
        %v2882 = vpop.f32.mrf.mxu0
        %v2883 = vadd.f32 %v2793, %v2882
        %v2884 = vpop.f32.mrf.mxu0
        %v2885 = vpop.f32.mrf.mxu0
        %v2886 = vpop.f32.mrf.mxu0
        %2887 = vdwg.mxu0
        %vm2888 = vcmp.ge.s32.totalorder %v1377, 64
        %vm2889 = vcmp.lt.s32.totalorder %v1377, 96
        %vm2890 = vmand %vm2888, %vm2889
        %v2891 = vsel %vm2890, 1, 0
        %v2892 = vcvt.s32.f32 %v2891
        %v2893 = vmul.f32 %v2038, %v2892
        %v2894 = vmul.f32 %v2042, %v2892
        %v2895 = vmul.f32 %v2048, %v2892
        %v2896 = vmul.f32 %v2052, %v2892
        %v2897 = vmul.f32 %v2058, %v2892
        %v2898 = vmul.f32 %v2062, %v2892
        %v2899 = vmul.f32 %v2068, %v2892
        %v2900 = vmul.f32 %v2072, %v2892
        %v2901 = vmul.f32 %v2078, %v2892
        %v2902 = vpack.c.bf16 %v2894, %v2893
        %v2903 = vpack.c.bf16 %v2896, %v2895
        %v2904 = vpack.c.bf16 %v2898, %v2897
        %v2905 = vpack.c.bf16 %v2900, %v2899
        %v2906 = vpack.c.bf16 %v2901, %v2901
        %2907 = vmatprep.subr.bf16.mxu0 0
        %2908 = vmatpush1.bf16.xpose.msra.mxu0 0
        %2909 = vmatprep.subr.bf16.mxu0 0
        %2910 = vmatpush1.bf16.xpose.msra.mxu0 0
        %2911 = vmatprep.subr.bf16.mxu0 0
        %2912 = vmatpush1.bf16.xpose.msra.mxu0 0
        %2913 = vmatprep.subr.bf16.mxu0 0
        %2914 = vmatpush1.bf16.xpose.msra.mxu0 %v2250
        %2915 = vmatprep.subr.bf16.mxu0 0
        %2916 = vmatpush1.bf16.xpose.msra.mxu0 %v2249
        %2917 = vmatprep.subr.bf16.mxu0 0
        %2918 = vmatpush1.bf16.xpose.msra.mxu0 %v2248
        %2919 = vmatprep.subr.bf16.mxu0 0
        %2920 = vmatpush1.bf16.xpose.msra.mxu0 %v2247
        %2921 = vmatprep.subr.bf16.mxu0 0
        %2922 = vmatpush1.bf16.xpose.msra.mxu0 %v2246
        %2923 = vmatprep.subr.bf16.mxu0 0
        %2924 = vmatpush2.bf16.xpose.msra.mxu0 0
        %2925 = vmatprep.subr.bf16.mxu0 0
        %2926 = vmatpush2.bf16.xpose.msra.mxu0 0
        %2927 = vmatprep.subr.bf16.mxu0 0
        %2928 = vmatpush2.bf16.xpose.msra.mxu0 0
        %2929 = vmatprep.subr.bf16.mxu0 0
        %2930 = vmatpush2.bf16.xpose.msra.mxu0 0
        %2931 = vmatprep.subr.bf16.mxu0 0
        %2932 = vmatpush2.bf16.xpose.msra.mxu0 0
        %2933 = vmatprep.subr.bf16.mxu0 0
        %2934 = vmatpush2.bf16.xpose.msra.mxu0 0
        %2935 = vmatprep.subr.bf16.mxu0 0
        %2936 = vmatpush2.bf16.xpose.msra.mxu0 0
        %2937 = vmatprep.subr.bf16.mxu0 0
        %2938 = vmatpush2.bf16.xpose.msra.mxu0 0
        %2939 = vmatprep.mubr.bf16.mxu0 0
        %2940 = vmatmul.mubr.bf16.gmra.mxu0 %v2902
        %v2941 = vpop.f32.mrf.mxu0
        %v2942 = vadd.f32 0.0, %v2941
        %v2943 = vpop.f32.mrf.mxu0
        %v2944 = vpop.f32.mrf.mxu0
        %v2945 = vadd.f32 0.0, %v2944
        %v2946 = vpop.f32.mrf.mxu0
        %2947 = vmatprep.mubr.bf16.mxu0 0
        %2948 = vmatmul.mubr.bf16.gmra.mxu0 %v2903
        %v2949 = vpop.f32.mrf.mxu0
        %v2950 = vadd.f32 0.0, %v2949
        %v2951 = vpop.f32.mrf.mxu0
        %v2952 = vpop.f32.mrf.mxu0
        %v2953 = vadd.f32 0.0, %v2952
        %v2954 = vpop.f32.mrf.mxu0
        %2955 = vmatprep.mubr.bf16.mxu0 0
        %2956 = vmatmul.mubr.bf16.gmra.mxu0 %v2904
        %v2957 = vpop.f32.mrf.mxu0
        %v2958 = vadd.f32 0.0, %v2957
        %v2959 = vpop.f32.mrf.mxu0
        %v2960 = vpop.f32.mrf.mxu0
        %v2961 = vadd.f32 0.0, %v2960
        %v2962 = vpop.f32.mrf.mxu0
        %2963 = vmatprep.mubr.bf16.mxu0 0
        %2964 = vmatmul.mubr.bf16.gmra.mxu0 %v2905
        %v2965 = vpop.f32.mrf.mxu0
        %v2966 = vadd.f32 0.0, %v2965
        %v2967 = vpop.f32.mrf.mxu0
        %v2968 = vpop.f32.mrf.mxu0
        %v2969 = vadd.f32 0.0, %v2968
        %v2970 = vpop.f32.mrf.mxu0
        %2971 = vmatprep.mubr.bf16.mxu0 0
        %2972 = vmatmul.mubr.bf16.gmra.mxu0 %v2906
        %v2973 = vpop.f32.mrf.mxu0
        %v2974 = vadd.f32 0.0, %v2973
        %v2975 = vpop.f32.mrf.mxu0
        %v2976 = vpop.f32.mrf.mxu0
        %v2977 = vpop.f32.mrf.mxu0
        %2978 = vdwg.mxu0
        %v2979 = vmul.f32 %v2942, 0.2
        %v2980 = vmul.f32 %v2945, 0.2
        %v2981 = vmul.f32 %v2950, 0.2
        %v2982 = vmul.f32 %v2953, 0.2
        %v2983 = vmul.f32 %v2958, 0.2
        %v2984 = vmul.f32 %v2961, 0.2
        %v2985 = vmul.f32 %v2966, 0.2
        %v2986 = vmul.f32 %v2969, 0.2
        %v2987 = vmul.f32 %v2974, 0.2
        %v2988 = vsel %vm2351, %v2979, -inf
        %2989 = vmax.xlane.f32.xlu0 %v2988
        %v2990 = vpop.xlane.xlu0 %2989
        %v2991 = vsel %vm2351, %v2980, -inf
        %2992 = vmax.xlane.f32.xlu0 %v2991
        %v2993 = vpop.xlane.xlu0 %2992
        %v2994 = vsel %vm2351, %v2981, -inf
        %2995 = vmax.xlane.f32.xlu0 %v2994
        %v2996 = vpop.xlane.xlu0 %2995
        %v2997 = vsel %vm2351, %v2982, -inf
        %2998 = vmax.xlane.f32.xlu0 %v2997
        %v2999 = vpop.xlane.xlu0 %2998
        %v3000 = vsel %vm2351, %v2983, -inf
        %3001 = vmax.xlane.f32.xlu0 %v3000
        %v3002 = vpop.xlane.xlu0 %3001
        %v3003 = vsel %vm2351, %v2984, -inf
        %3004 = vmax.xlane.f32.xlu0 %v3003
        %v3005 = vpop.xlane.xlu0 %3004
        %v3006 = vsel %vm2351, %v2985, -inf
        %3007 = vmax.xlane.f32.xlu0 %v3006
        %v3008 = vpop.xlane.xlu0 %3007
        %v3009 = vsel %vm2351, %v2986, -inf
        %3010 = vmax.xlane.f32.xlu0 %v3009
        %v3011 = vpop.xlane.xlu0 %3010
        %v3012 = vsel %vm2376, %v2987, -inf
        %3013 = vmax.xlane.f32.xlu0 %v3012
        %v3014 = vpop.xlane.xlu0 %3013
        %v3015 = vsub.f32 %v2979, %v2990
        %v3016 = vsub.f32 %v2980, %v2993
        %v3017 = vsub.f32 %v2981, %v2996
        %v3018 = vsub.f32 %v2982, %v2999
        %v3019 = vsub.f32 %v2983, %v3002
        %v3020 = vsub.f32 %v2984, %v3005
        %v3021 = vsub.f32 %v2985, %v3008
        %v3022 = vsub.f32 %v2986, %v3011
        %v3023 = vsub.f32 %v2987, %v3014
        %v3024 = vmul.f32 %v3015, 1.442695
        %v3025 = vpow.pop %v3024
        %v3026 = vmul.f32 %v3016, 1.442695
        %v3027 = vpow.pop %v3026
        %v3028 = vmul.f32 %v3017, 1.442695
        %v3029 = vpow.pop %v3028
        %v3030 = vmul.f32 %v3018, 1.442695
        %v3031 = vpow.pop %v3030
        %v3032 = vmul.f32 %v3019, 1.442695
        %v3033 = vpow.pop %v3032
        %v3034 = vmul.f32 %v3020, 1.442695
        %v3035 = vpow.pop %v3034
        %v3036 = vmul.f32 %v3021, 1.442695
        %v3037 = vpow.pop %v3036
        %v3038 = vmul.f32 %v3022, 1.442695
        %v3039 = vpow.pop %v3038
        %v3040 = vmul.f32 %v3023, 1.442695
        %v3041 = vpow.pop %v3040
        %v3042 = vsel %vm2351, %v3025, 0.0
        %3043 = vadd.xlane.f32.xlu0 %v3042
        %v3044 = vpop.xlane.xlu0 %3043
        %v3045 = vsel %vm2351, %v3027, 0.0
        %3046 = vadd.xlane.f32.xlu0 %v3045
        %v3047 = vpop.xlane.xlu0 %3046
        %v3048 = vsel %vm2351, %v3029, 0.0
        %3049 = vadd.xlane.f32.xlu0 %v3048
        %v3050 = vpop.xlane.xlu0 %3049
        %v3051 = vsel %vm2351, %v3031, 0.0
        %3052 = vadd.xlane.f32.xlu0 %v3051
        %v3053 = vpop.xlane.xlu0 %3052
        %v3054 = vsel %vm2351, %v3033, 0.0
        %3055 = vadd.xlane.f32.xlu0 %v3054
        %v3056 = vpop.xlane.xlu0 %3055
        %v3057 = vsel %vm2351, %v3035, 0.0
        %3058 = vadd.xlane.f32.xlu0 %v3057
        %v3059 = vpop.xlane.xlu0 %3058
        %v3060 = vsel %vm2351, %v3037, 0.0
        %3061 = vadd.xlane.f32.xlu0 %v3060
        %v3062 = vpop.xlane.xlu0 %3061
        %v3063 = vsel %vm2351, %v3039, 0.0
        %3064 = vadd.xlane.f32.xlu0 %v3063
        %v3065 = vpop.xlane.xlu0 %3064
        %v3066 = vsel %vm2376, %v3041, 0.0
        %3067 = vadd.xlane.f32.xlu0 %v3066
        %v3068 = vpop.xlane.xlu0 %3067
        %v3069 = vrcp.pop %v3044
        %v3070 = vmul.f32 1.0, %v3069
        %v3071 = vrcp.pop %v3047
        %v3072 = vmul.f32 1.0, %v3071
        %v3073 = vrcp.pop %v3050
        %v3074 = vmul.f32 1.0, %v3073
        %v3075 = vrcp.pop %v3053
        %v3076 = vmul.f32 1.0, %v3075
        %v3077 = vrcp.pop %v3056
        %v3078 = vmul.f32 1.0, %v3077
        %v3079 = vrcp.pop %v3059
        %v3080 = vmul.f32 1.0, %v3079
        %v3081 = vrcp.pop %v3062
        %v3082 = vmul.f32 1.0, %v3081
        %v3083 = vrcp.pop %v3065
        %v3084 = vmul.f32 1.0, %v3083
        %v3085 = vrcp.pop %v3068
        %v3086 = vmul.f32 1.0, %v3085
        %v3087 = vmul.f32 %v3025, %v3070
        %v3088 = vmul.f32 %v3027, %v3072
        %v3089 = vmul.f32 %v3029, %v3074
        %v3090 = vmul.f32 %v3031, %v3076
        %v3091 = vmul.f32 %v3033, %v3078
        %v3092 = vmul.f32 %v3035, %v3080
        %v3093 = vmul.f32 %v3037, %v3082
        %v3094 = vmul.f32 %v3039, %v3084
        %v3095 = vmul.f32 %v3041, %v3086
        %v3096 = vpack.c.bf16 %v3088, %v3087
        %v3097 = vpack.c.bf16 %v3090, %v3089
        %v3098 = vpack.c.bf16 %v3092, %v3091
        %v3099 = vpack.c.bf16 %v3094, %v3093
        %v3100 = vpack.c.bf16 %v3095, %v3095
        %v3101 = vmul.f32 %v2200, %v2892
        %v3102 = vmul.f32 %v2204, %v2892
        %v3103 = vmul.f32 %v2210, %v2892
        %v3104 = vmul.f32 %v2214, %v2892
        %v3105 = vmul.f32 %v2220, %v2892
        %v3106 = vmul.f32 %v2224, %v2892
        %v3107 = vmul.f32 %v2230, %v2892
        %v3108 = vmul.f32 %v2234, %v2892
        %v3109 = vmul.f32 %v2240, %v2892
        %v3110 = vpack.c.bf16 %v3102, %v3101
        %v3111 = vpack.c.bf16 %v3104, %v3103
        %v3112 = vpack.c.bf16 %v3106, %v3105
        %v3113 = vpack.c.bf16 %v3108, %v3107
        %v3114 = vpack.c.bf16 %v3109, %v3109
        %v3116 = vsel %vm2351, %v3096, 0
        %v3119 = vsel %vm2351, %v3097, 0
        %v3122 = vsel %vm2351, %v3098, 0
        %v3125 = vsel %vm2351, %v3099, 0
        %v3128 = vsel %vm2351, %v3100, 0
        %v3131 = vsel %vm2722, %v3114, 0
        %3133 = vmatprep.subr.bf16.mxu0 0
        %3134 = vmatpush1.bf16.msra.mxu0 0
        %3135 = vmatprep.subr.bf16.mxu0 0
        %3136 = vmatpush1.bf16.msra.mxu0 0
        %3137 = vmatprep.subr.bf16.mxu0 0
        %3138 = vmatpush1.bf16.msra.mxu0 0
        %3139 = vmatprep.subr.bf16.mxu0 0
        %3140 = vmatpush1.bf16.msra.mxu0 %v3131
        %3141 = vmatprep.subr.bf16.mxu0 0
        %3142 = vmatpush1.bf16.msra.mxu0 %v3113
        %3143 = vmatprep.subr.bf16.mxu0 0
        %3144 = vmatpush1.bf16.msra.mxu0 %v3112
        %3145 = vmatprep.subr.bf16.mxu0 0
        %3146 = vmatpush1.bf16.msra.mxu0 %v3111
        %3147 = vmatprep.subr.bf16.mxu0 0
        %3148 = vmatpush1.bf16.msra.mxu0 %v3110
        %3149 = vmatprep.subr.bf16.mxu0 0
        %3150 = vmatpush2.bf16.msra.mxu0 0
        %3151 = vmatprep.subr.bf16.mxu0 0
        %3152 = vmatpush2.bf16.msra.mxu0 0
        %3153 = vmatprep.subr.bf16.mxu0 0
        %3154 = vmatpush2.bf16.msra.mxu0 0
        %3155 = vmatprep.subr.bf16.mxu0 0
        %3156 = vmatpush2.bf16.msra.mxu0 0
        %3157 = vmatprep.subr.bf16.mxu0 0
        %3158 = vmatpush2.bf16.msra.mxu0 0
        %3159 = vmatprep.subr.bf16.mxu0 0
        %3160 = vmatpush2.bf16.msra.mxu0 0
        %3161 = vmatprep.subr.bf16.mxu0 0
        %3162 = vmatpush2.bf16.msra.mxu0 0
        %3163 = vmatprep.subr.bf16.mxu0 0
        %3164 = vmatpush2.bf16.msra.mxu0 0
        %3165 = vmatprep.mubr.bf16.mxu0 0
        %3166 = vmatmul.mubr.bf16.gmra.mxu0 %v3116
        %v3167 = vpop.f32.mrf.mxu0
        %v3168 = vadd.f32 0.0, %v3167
        %v3169 = vpop.f32.mrf.mxu0
        %v3170 = vpop.f32.mrf.mxu0
        %v3171 = vadd.f32 0.0, %v3170
        %v3172 = vpop.f32.mrf.mxu0
        %3173 = vmatprep.mubr.bf16.mxu0 0
        %3174 = vmatmul.mubr.bf16.gmra.mxu0 %v3119
        %v3175 = vpop.f32.mrf.mxu0
        %v3176 = vadd.f32 0.0, %v3175
        %v3177 = vpop.f32.mrf.mxu0
        %v3178 = vpop.f32.mrf.mxu0
        %v3179 = vadd.f32 0.0, %v3178
        %v3180 = vpop.f32.mrf.mxu0
        %3181 = vmatprep.mubr.bf16.mxu0 0
        %3182 = vmatmul.mubr.bf16.gmra.mxu0 %v3122
        %v3183 = vpop.f32.mrf.mxu0
        %v3184 = vadd.f32 0.0, %v3183
        %v3185 = vpop.f32.mrf.mxu0
        %v3186 = vpop.f32.mrf.mxu0
        %v3187 = vadd.f32 0.0, %v3186
        %v3188 = vpop.f32.mrf.mxu0
        %3189 = vmatprep.mubr.bf16.mxu0 0
        %3190 = vmatmul.mubr.bf16.gmra.mxu0 %v3125
        %v3191 = vpop.f32.mrf.mxu0
        %v3192 = vadd.f32 0.0, %v3191
        %v3193 = vpop.f32.mrf.mxu0
        %v3194 = vpop.f32.mrf.mxu0
        %v3195 = vadd.f32 0.0, %v3194
        %v3196 = vpop.f32.mrf.mxu0
        %3197 = vmatprep.mubr.bf16.mxu0 0
        %3198 = vmatmul.mubr.bf16.gmra.mxu0 %v3128
        %v3199 = vpop.f32.mrf.mxu0
        %v3200 = vadd.f32 0.0, %v3199
        %v3201 = vpop.f32.mrf.mxu0
        %v3202 = vpop.f32.mrf.mxu0
        %v3203 = vpop.f32.mrf.mxu0
        %3204 = vdwg.mxu0
        %v3205 = vadd.f32 %v2851, %v3168
        %v3206 = vadd.f32 %v2854, %v3171
        %v3207 = vadd.f32 %v2859, %v3176
        %v3208 = vadd.f32 %v2862, %v3179
        %v3209 = vadd.f32 %v2867, %v3184
        %v3210 = vadd.f32 %v2870, %v3187
        %v3211 = vadd.f32 %v2875, %v3192
        %v3212 = vadd.f32 %v2878, %v3195
        %v3213 = vadd.f32 %v2883, %v3200
        %vm3214 = vcmp.ge.s32.totalorder %v1377, 96
        %vm3215 = vcmp.lt.s32.totalorder %v1377, 128
        %vm3216 = vmand %vm3214, %vm3215
        %v3217 = vsel %vm3216, 1, 0
        %v3218 = vcvt.s32.f32 %v3217
        %v3219 = vmul.f32 %v2038, %v3218
        %v3220 = vmul.f32 %v2042, %v3218
        %v3221 = vmul.f32 %v2048, %v3218
        %v3222 = vmul.f32 %v2052, %v3218
        %v3223 = vmul.f32 %v2058, %v3218
        %v3224 = vmul.f32 %v2062, %v3218
        %v3225 = vmul.f32 %v2068, %v3218
        %v3226 = vmul.f32 %v2072, %v3218
        %v3227 = vmul.f32 %v2078, %v3218
        %v3228 = vpack.c.bf16 %v3220, %v3219
        %v3229 = vpack.c.bf16 %v3222, %v3221
        %v3230 = vpack.c.bf16 %v3224, %v3223
        %v3231 = vpack.c.bf16 %v3226, %v3225
        %v3232 = vpack.c.bf16 %v3227, %v3227
        %3233 = vmatprep.subr.bf16.mxu0 0
        %3234 = vmatpush1.bf16.xpose.msra.mxu0 0
        %3235 = vmatprep.subr.bf16.mxu0 0
        %3236 = vmatpush1.bf16.xpose.msra.mxu0 0
        %3237 = vmatprep.subr.bf16.mxu0 0
        %3238 = vmatpush1.bf16.xpose.msra.mxu0 0
        %3239 = vmatprep.subr.bf16.mxu0 0
        %3240 = vmatpush1.bf16.xpose.msra.mxu0 %v2250
        %3241 = vmatprep.subr.bf16.mxu0 0
        %3242 = vmatpush1.bf16.xpose.msra.mxu0 %v2249
        %3243 = vmatprep.subr.bf16.mxu0 0
        %3244 = vmatpush1.bf16.xpose.msra.mxu0 %v2248
        %3245 = vmatprep.subr.bf16.mxu0 0
        %3246 = vmatpush1.bf16.xpose.msra.mxu0 %v2247
        %3247 = vmatprep.subr.bf16.mxu0 0
        %3248 = vmatpush1.bf16.xpose.msra.mxu0 %v2246
        %3249 = vmatprep.subr.bf16.mxu0 0
        %3250 = vmatpush2.bf16.xpose.msra.mxu0 0
        %3251 = vmatprep.subr.bf16.mxu0 0
        %3252 = vmatpush2.bf16.xpose.msra.mxu0 0
        %3253 = vmatprep.subr.bf16.mxu0 0
        %3254 = vmatpush2.bf16.xpose.msra.mxu0 0
        %3255 = vmatprep.subr.bf16.mxu0 0
        %3256 = vmatpush2.bf16.xpose.msra.mxu0 0
        %3257 = vmatprep.subr.bf16.mxu0 0
        %3258 = vmatpush2.bf16.xpose.msra.mxu0 0
        %3259 = vmatprep.subr.bf16.mxu0 0
        %3260 = vmatpush2.bf16.xpose.msra.mxu0 0
        %3261 = vmatprep.subr.bf16.mxu0 0
        %3262 = vmatpush2.bf16.xpose.msra.mxu0 0
        %3263 = vmatprep.subr.bf16.mxu0 0
        %3264 = vmatpush2.bf16.xpose.msra.mxu0 0
        %3265 = vmatprep.mubr.bf16.mxu0 0
        %3266 = vmatmul.mubr.bf16.gmra.mxu0 %v3228
        %v3267 = vpop.f32.mrf.mxu0
        %v3268 = vadd.f32 0.0, %v3267
        %v3269 = vpop.f32.mrf.mxu0
        %v3270 = vpop.f32.mrf.mxu0
        %v3271 = vadd.f32 0.0, %v3270
        %v3272 = vpop.f32.mrf.mxu0
        %3273 = vmatprep.mubr.bf16.mxu0 0
        %3274 = vmatmul.mubr.bf16.gmra.mxu0 %v3229
        %v3275 = vpop.f32.mrf.mxu0
        %v3276 = vadd.f32 0.0, %v3275
        %v3277 = vpop.f32.mrf.mxu0
        %v3278 = vpop.f32.mrf.mxu0
        %v3279 = vadd.f32 0.0, %v3278
        %v3280 = vpop.f32.mrf.mxu0
        %3281 = vmatprep.mubr.bf16.mxu0 0
        %3282 = vmatmul.mubr.bf16.gmra.mxu0 %v3230
        %v3283 = vpop.f32.mrf.mxu0
        %v3284 = vadd.f32 0.0, %v3283
        %v3285 = vpop.f32.mrf.mxu0
        %v3286 = vpop.f32.mrf.mxu0
        %v3287 = vadd.f32 0.0, %v3286
        %v3288 = vpop.f32.mrf.mxu0
        %3289 = vmatprep.mubr.bf16.mxu0 0
        %3290 = vmatmul.mubr.bf16.gmra.mxu0 %v3231
        %v3291 = vpop.f32.mrf.mxu0
        %v3292 = vadd.f32 0.0, %v3291
        %v3293 = vpop.f32.mrf.mxu0
        %v3294 = vpop.f32.mrf.mxu0
        %v3295 = vadd.f32 0.0, %v3294
        %v3296 = vpop.f32.mrf.mxu0
        %3297 = vmatprep.mubr.bf16.mxu0 0
        %3298 = vmatmul.mubr.bf16.gmra.mxu0 %v3232
        %v3299 = vpop.f32.mrf.mxu0
        %v3300 = vadd.f32 0.0, %v3299
        %v3301 = vpop.f32.mrf.mxu0
        %v3302 = vpop.f32.mrf.mxu0
        %v3303 = vpop.f32.mrf.mxu0
        %3304 = vdwg.mxu0
        %v3305 = vmul.f32 %v3268, 0.2
        %v3306 = vmul.f32 %v3271, 0.2
        %v3307 = vmul.f32 %v3276, 0.2
        %v3308 = vmul.f32 %v3279, 0.2
        %v3309 = vmul.f32 %v3284, 0.2
        %v3310 = vmul.f32 %v3287, 0.2
        %v3311 = vmul.f32 %v3292, 0.2
        %v3312 = vmul.f32 %v3295, 0.2
        %v3313 = vmul.f32 %v3300, 0.2
        %v3314 = vsel %vm2351, %v3305, -inf
        %3315 = vmax.xlane.f32.xlu0 %v3314
        %v3316 = vpop.xlane.xlu0 %3315
        %v3317 = vsel %vm2351, %v3306, -inf
        %3318 = vmax.xlane.f32.xlu0 %v3317
        %v3319 = vpop.xlane.xlu0 %3318
        %v3320 = vsel %vm2351, %v3307, -inf
        %3321 = vmax.xlane.f32.xlu0 %v3320
        %v3322 = vpop.xlane.xlu0 %3321
        %v3323 = vsel %vm2351, %v3308, -inf
        %3324 = vmax.xlane.f32.xlu0 %v3323
        %v3325 = vpop.xlane.xlu0 %3324
        %v3326 = vsel %vm2351, %v3309, -inf
        %3327 = vmax.xlane.f32.xlu0 %v3326
        %v3328 = vpop.xlane.xlu0 %3327
        %v3329 = vsel %vm2351, %v3310, -inf
        %3330 = vmax.xlane.f32.xlu0 %v3329
        %v3331 = vpop.xlane.xlu0 %3330
        %v3332 = vsel %vm2351, %v3311, -inf
        %3333 = vmax.xlane.f32.xlu0 %v3332
        %v3334 = vpop.xlane.xlu0 %3333
        %v3335 = vsel %vm2351, %v3312, -inf
        %3336 = vmax.xlane.f32.xlu0 %v3335
        %v3337 = vpop.xlane.xlu0 %3336
        %v3338 = vsel %vm2376, %v3313, -inf
        %3339 = vmax.xlane.f32.xlu0 %v3338
        %v3340 = vpop.xlane.xlu0 %3339
        %v3341 = vsub.f32 %v3305, %v3316
        %v3342 = vsub.f32 %v3306, %v3319
        %v3343 = vsub.f32 %v3307, %v3322
        %v3344 = vsub.f32 %v3308, %v3325
        %v3345 = vsub.f32 %v3309, %v3328
        %v3346 = vsub.f32 %v3310, %v3331
        %v3347 = vsub.f32 %v3311, %v3334
        %v3348 = vsub.f32 %v3312, %v3337
        %v3349 = vsub.f32 %v3313, %v3340
        %v3350 = vmul.f32 %v3341, 1.442695
        %v3351 = vpow.pop %v3350
        %v3352 = vmul.f32 %v3342, 1.442695
        %v3353 = vpow.pop %v3352
        %v3354 = vmul.f32 %v3343, 1.442695
        %v3355 = vpow.pop %v3354
        %v3356 = vmul.f32 %v3344, 1.442695
        %v3357 = vpow.pop %v3356
        %v3358 = vmul.f32 %v3345, 1.442695
        %v3359 = vpow.pop %v3358
        %v3360 = vmul.f32 %v3346, 1.442695
        %v3361 = vpow.pop %v3360
        %v3362 = vmul.f32 %v3347, 1.442695
        %v3363 = vpow.pop %v3362
        %v3364 = vmul.f32 %v3348, 1.442695
        %v3365 = vpow.pop %v3364
        %v3366 = vmul.f32 %v3349, 1.442695
        %v3367 = vpow.pop %v3366
        %v3368 = vsel %vm2351, %v3351, 0.0
        %3369 = vadd.xlane.f32.xlu0 %v3368
        %v3370 = vpop.xlane.xlu0 %3369
        %v3371 = vsel %vm2351, %v3353, 0.0
        %3372 = vadd.xlane.f32.xlu0 %v3371
        %v3373 = vpop.xlane.xlu0 %3372
        %v3374 = vsel %vm2351, %v3355, 0.0
        %3375 = vadd.xlane.f32.xlu0 %v3374
        %v3376 = vpop.xlane.xlu0 %3375
        %v3377 = vsel %vm2351, %v3357, 0.0
        %3378 = vadd.xlane.f32.xlu0 %v3377
        %v3379 = vpop.xlane.xlu0 %3378
        %v3380 = vsel %vm2351, %v3359, 0.0
        %3381 = vadd.xlane.f32.xlu0 %v3380
        %v3382 = vpop.xlane.xlu0 %3381
        %v3383 = vsel %vm2351, %v3361, 0.0
        %3384 = vadd.xlane.f32.xlu0 %v3383
        %v3385 = vpop.xlane.xlu0 %3384
        %v3386 = vsel %vm2351, %v3363, 0.0
        %3387 = vadd.xlane.f32.xlu0 %v3386
        %v3388 = vpop.xlane.xlu0 %3387
        %v3389 = vsel %vm2351, %v3365, 0.0
        %3390 = vadd.xlane.f32.xlu0 %v3389
        %v3391 = vpop.xlane.xlu0 %3390
        %v3392 = vsel %vm2376, %v3367, 0.0
        %3393 = vadd.xlane.f32.xlu0 %v3392
        %v3394 = vpop.xlane.xlu0 %3393
        %v3395 = vrcp.pop %v3370
        %v3396 = vmul.f32 1.0, %v3395
        %v3397 = vrcp.pop %v3373
        %v3398 = vmul.f32 1.0, %v3397
        %v3399 = vrcp.pop %v3376
        %v3400 = vmul.f32 1.0, %v3399
        %v3401 = vrcp.pop %v3379
        %v3402 = vmul.f32 1.0, %v3401
        %v3403 = vrcp.pop %v3382
        %v3404 = vmul.f32 1.0, %v3403
        %v3405 = vrcp.pop %v3385
        %v3406 = vmul.f32 1.0, %v3405
        %v3407 = vrcp.pop %v3388
        %v3408 = vmul.f32 1.0, %v3407
        %v3409 = vrcp.pop %v3391
        %v3410 = vmul.f32 1.0, %v3409
        %v3411 = vrcp.pop %v3394
        %v3412 = vmul.f32 1.0, %v3411
        %v3413 = vmul.f32 %v3351, %v3396
        %v3414 = vmul.f32 %v3353, %v3398
        %v3415 = vmul.f32 %v3355, %v3400
        %v3416 = vmul.f32 %v3357, %v3402
        %v3417 = vmul.f32 %v3359, %v3404
        %v3418 = vmul.f32 %v3361, %v3406
        %v3419 = vmul.f32 %v3363, %v3408
        %v3420 = vmul.f32 %v3365, %v3410
        %v3421 = vmul.f32 %v3367, %v3412
        %v3422 = vpack.c.bf16 %v3414, %v3413
        %v3423 = vpack.c.bf16 %v3416, %v3415
        %v3424 = vpack.c.bf16 %v3418, %v3417
        %v3425 = vpack.c.bf16 %v3420, %v3419
        %v3426 = vpack.c.bf16 %v3421, %v3421
        %v3427 = vmul.f32 %v2200, %v3218
        %v3428 = vmul.f32 %v2204, %v3218
        %v3429 = vmul.f32 %v2210, %v3218
        %v3430 = vmul.f32 %v2214, %v3218
        %v3431 = vmul.f32 %v2220, %v3218
        %v3432 = vmul.f32 %v2224, %v3218
        %v3433 = vmul.f32 %v2230, %v3218
        %v3434 = vmul.f32 %v2234, %v3218
        %v3435 = vmul.f32 %v2240, %v3218
        %v3436 = vpack.c.bf16 %v3428, %v3427
        %v3437 = vpack.c.bf16 %v3430, %v3429
        %v3438 = vpack.c.bf16 %v3432, %v3431
        %v3439 = vpack.c.bf16 %v3434, %v3433
        %v3440 = vpack.c.bf16 %v3435, %v3435
        %v3442 = vsel %vm2351, %v3422, 0
        %v3445 = vsel %vm2351, %v3423, 0
        %v3448 = vsel %vm2351, %v3424, 0
        %v3451 = vsel %vm2351, %v3425, 0
        %v3454 = vsel %vm2351, %v3426, 0
        %v3457 = vsel %vm2722, %v3440, 0
        %3459 = vmatprep.subr.bf16.mxu0 0
        %3460 = vmatpush1.bf16.msra.mxu0 0
        %3461 = vmatprep.subr.bf16.mxu0 0
        %3462 = vmatpush1.bf16.msra.mxu0 0
        %3463 = vmatprep.subr.bf16.mxu0 0
        %3464 = vmatpush1.bf16.msra.mxu0 0
        %3465 = vmatprep.subr.bf16.mxu0 0
        %3466 = vmatpush1.bf16.msra.mxu0 %v3457
        %3467 = vmatprep.subr.bf16.mxu0 0
        %3468 = vmatpush1.bf16.msra.mxu0 %v3439
        %3469 = vmatprep.subr.bf16.mxu0 0
        %3470 = vmatpush1.bf16.msra.mxu0 %v3438
        %3471 = vmatprep.subr.bf16.mxu0 0
        %3472 = vmatpush1.bf16.msra.mxu0 %v3437
        %3473 = vmatprep.subr.bf16.mxu0 0
        %3474 = vmatpush1.bf16.msra.mxu0 %v3436
        %3475 = vmatprep.subr.bf16.mxu0 0
        %3476 = vmatpush2.bf16.msra.mxu0 0
        %3477 = vmatprep.subr.bf16.mxu0 0
        %3478 = vmatpush2.bf16.msra.mxu0 0
        %3479 = vmatprep.subr.bf16.mxu0 0
        %3480 = vmatpush2.bf16.msra.mxu0 0
        %3481 = vmatprep.subr.bf16.mxu0 0
        %3482 = vmatpush2.bf16.msra.mxu0 0
        %3483 = vmatprep.subr.bf16.mxu0 0
        %3484 = vmatpush2.bf16.msra.mxu0 0
        %3485 = vmatprep.subr.bf16.mxu0 0
        %3486 = vmatpush2.bf16.msra.mxu0 0
        %3487 = vmatprep.subr.bf16.mxu0 0
        %3488 = vmatpush2.bf16.msra.mxu0 0
        %3489 = vmatprep.subr.bf16.mxu0 0
        %3490 = vmatpush2.bf16.msra.mxu0 0
        %3491 = vmatprep.mubr.bf16.mxu0 0
        %3492 = vmatmul.mubr.bf16.gmra.mxu0 %v3442
        %v3493 = vpop.f32.mrf.mxu0
        %v3494 = vadd.f32 0.0, %v3493
        %v3495 = vpop.f32.mrf.mxu0
        %v3496 = vpop.f32.mrf.mxu0
        %v3497 = vadd.f32 0.0, %v3496
        %v3498 = vpop.f32.mrf.mxu0
        %3499 = vmatprep.mubr.bf16.mxu0 0
        %3500 = vmatmul.mubr.bf16.gmra.mxu0 %v3445
        %v3501 = vpop.f32.mrf.mxu0
        %v3502 = vadd.f32 0.0, %v3501
        %v3503 = vpop.f32.mrf.mxu0
        %v3504 = vpop.f32.mrf.mxu0
        %v3505 = vadd.f32 0.0, %v3504
        %v3506 = vpop.f32.mrf.mxu0
        %3507 = vmatprep.mubr.bf16.mxu0 0
        %3508 = vmatmul.mubr.bf16.gmra.mxu0 %v3448
        %v3509 = vpop.f32.mrf.mxu0
        %v3510 = vadd.f32 0.0, %v3509
        %v3511 = vpop.f32.mrf.mxu0
        %v3512 = vpop.f32.mrf.mxu0
        %v3513 = vadd.f32 0.0, %v3512
        %v3514 = vpop.f32.mrf.mxu0
        %3515 = vmatprep.mubr.bf16.mxu0 0
        %3516 = vmatmul.mubr.bf16.gmra.mxu0 %v3451
        %v3517 = vpop.f32.mrf.mxu0
        %v3518 = vadd.f32 0.0, %v3517
        %v3519 = vpop.f32.mrf.mxu0
        %v3520 = vpop.f32.mrf.mxu0
        %v3521 = vadd.f32 0.0, %v3520
        %v3522 = vpop.f32.mrf.mxu0
        %3523 = vmatprep.mubr.bf16.mxu0 0
        %3524 = vmatmul.mubr.bf16.gmra.mxu0 %v3454
        %v3525 = vpop.f32.mrf.mxu0
        %v3526 = vadd.f32 0.0, %v3525
        %v3527 = vpop.f32.mrf.mxu0
        %v3528 = vpop.f32.mrf.mxu0
        %v3529 = vpop.f32.mrf.mxu0
        %3530 = vdwg.mxu0
        %v3531 = vadd.f32 %v3205, %v3494
        %v3532 = vadd.f32 %v3206, %v3497
        %v3533 = vadd.f32 %v3207, %v3502
        %v3534 = vadd.f32 %v3208, %v3505
        %v3535 = vadd.f32 %v3209, %v3510
        %v3536 = vadd.f32 %v3210, %v3513
        %v3537 = vadd.f32 %v3211, %v3518
        %v3538 = vadd.f32 %v3212, %v3521
        %v3539 = vadd.f32 %v3213, %v3526
        %v3540 = vpack.c.bf16 %v2125, %v2121
        %v3541 = vpack.c.bf16 %v2135, %v2131
        %v3542 = vpack.c.bf16 %v2145, %v2141
        %v3543 = vpack.c.bf16 %v2155, %v2151
        %v3544 = vpack.c.bf16 %v2161, %v2161
        %v3545 = vmul.f32 %v2040, %v2255
        %v3546 = vmul.f32 %v2044, %v2255
        %v3547 = vmul.f32 %v2050, %v2255
        %v3548 = vmul.f32 %v2054, %v2255
        %v3549 = vmul.f32 %v2060, %v2255
        %v3550 = vmul.f32 %v2064, %v2255
        %v3551 = vmul.f32 %v2070, %v2255
        %v3552 = vmul.f32 %v2074, %v2255
        %v3553 = vmul.f32 %v2080, %v2255
        %v3554 = vpack.c.bf16 %v3546, %v3545
        %v3555 = vpack.c.bf16 %v3548, %v3547
        %v3556 = vpack.c.bf16 %v3550, %v3549
        %v3557 = vpack.c.bf16 %v3552, %v3551
        %v3558 = vpack.c.bf16 %v3553, %v3553
        %3559 = vmatprep.subr.bf16.mxu0 0
        %3560 = vmatpush1.bf16.xpose.msra.mxu0 0
        %3561 = vmatprep.subr.bf16.mxu0 0
        %3562 = vmatpush1.bf16.xpose.msra.mxu0 0
        %3563 = vmatprep.subr.bf16.mxu0 0
        %3564 = vmatpush1.bf16.xpose.msra.mxu0 0
        %3565 = vmatprep.subr.bf16.mxu0 0
        %3566 = vmatpush1.bf16.xpose.msra.mxu0 %v3544
        %3567 = vmatprep.subr.bf16.mxu0 0
        %3568 = vmatpush1.bf16.xpose.msra.mxu0 %v3543
        %3569 = vmatprep.subr.bf16.mxu0 0
        %3570 = vmatpush1.bf16.xpose.msra.mxu0 %v3542
        %3571 = vmatprep.subr.bf16.mxu0 0
        %3572 = vmatpush1.bf16.xpose.msra.mxu0 %v3541
        %3573 = vmatprep.subr.bf16.mxu0 0
        %3574 = vmatpush1.bf16.xpose.msra.mxu0 %v3540
        %3575 = vmatprep.subr.bf16.mxu0 0
        %3576 = vmatpush2.bf16.xpose.msra.mxu0 0
        %3577 = vmatprep.subr.bf16.mxu0 0
        %3578 = vmatpush2.bf16.xpose.msra.mxu0 0
        %3579 = vmatprep.subr.bf16.mxu0 0
        %3580 = vmatpush2.bf16.xpose.msra.mxu0 0
        %3581 = vmatprep.subr.bf16.mxu0 0
        %3582 = vmatpush2.bf16.xpose.msra.mxu0 0
        %3583 = vmatprep.subr.bf16.mxu0 0
        %3584 = vmatpush2.bf16.xpose.msra.mxu0 0
        %3585 = vmatprep.subr.bf16.mxu0 0
        %3586 = vmatpush2.bf16.xpose.msra.mxu0 0
        %3587 = vmatprep.subr.bf16.mxu0 0
        %3588 = vmatpush2.bf16.xpose.msra.mxu0 0
        %3589 = vmatprep.subr.bf16.mxu0 0
        %3590 = vmatpush2.bf16.xpose.msra.mxu0 0
        %3591 = vmatprep.mubr.bf16.mxu0 0
        %3592 = vmatmul.mubr.bf16.gmra.mxu0 %v3554
        %v3593 = vpop.f32.mrf.mxu0
        %v3594 = vadd.f32 0.0, %v3593
        %v3595 = vpop.f32.mrf.mxu0
        %v3596 = vpop.f32.mrf.mxu0
        %v3597 = vadd.f32 0.0, %v3596
        %v3598 = vpop.f32.mrf.mxu0
        %3599 = vmatprep.mubr.bf16.mxu0 0
        %3600 = vmatmul.mubr.bf16.gmra.mxu0 %v3555
        %v3601 = vpop.f32.mrf.mxu0
        %v3602 = vadd.f32 0.0, %v3601
        %v3603 = vpop.f32.mrf.mxu0
        %v3604 = vpop.f32.mrf.mxu0
        %v3605 = vadd.f32 0.0, %v3604
        %v3606 = vpop.f32.mrf.mxu0
        %3607 = vmatprep.mubr.bf16.mxu0 0
        %3608 = vmatmul.mubr.bf16.gmra.mxu0 %v3556
        %v3609 = vpop.f32.mrf.mxu0
        %v3610 = vadd.f32 0.0, %v3609
        %v3611 = vpop.f32.mrf.mxu0
        %v3612 = vpop.f32.mrf.mxu0
        %v3613 = vadd.f32 0.0, %v3612
        %v3614 = vpop.f32.mrf.mxu0
        %3615 = vmatprep.mubr.bf16.mxu0 0
        %3616 = vmatmul.mubr.bf16.gmra.mxu0 %v3557
        %v3617 = vpop.f32.mrf.mxu0
        %v3618 = vadd.f32 0.0, %v3617
        %v3619 = vpop.f32.mrf.mxu0
        %v3620 = vpop.f32.mrf.mxu0
        %v3621 = vadd.f32 0.0, %v3620
        %v3622 = vpop.f32.mrf.mxu0
        %3623 = vmatprep.mubr.bf16.mxu0 0
        %3624 = vmatmul.mubr.bf16.gmra.mxu0 %v3558
        %v3625 = vpop.f32.mrf.mxu0
        %v3626 = vadd.f32 0.0, %v3625
        %v3627 = vpop.f32.mrf.mxu0
        %v3628 = vpop.f32.mrf.mxu0
        %v3629 = vpop.f32.mrf.mxu0
        %3630 = vdwg.mxu0
        %v3631 = vmul.f32 %v3594, 0.2
        %v3632 = vmul.f32 %v3597, 0.2
        %v3633 = vmul.f32 %v3602, 0.2
        %v3634 = vmul.f32 %v3605, 0.2
        %v3635 = vmul.f32 %v3610, 0.2
        %v3636 = vmul.f32 %v3613, 0.2
        %v3637 = vmul.f32 %v3618, 0.2
        %v3638 = vmul.f32 %v3621, 0.2
        %v3639 = vmul.f32 %v3626, 0.2
        %v3640 = vsel %vm2351, %v3631, -inf
        %3641 = vmax.xlane.f32.xlu0 %v3640
        %v3642 = vpop.xlane.xlu0 %3641
        %v3643 = vsel %vm2351, %v3632, -inf
        %3644 = vmax.xlane.f32.xlu0 %v3643
        %v3645 = vpop.xlane.xlu0 %3644
        %v3646 = vsel %vm2351, %v3633, -inf
        %3647 = vmax.xlane.f32.xlu0 %v3646
        %v3648 = vpop.xlane.xlu0 %3647
        %v3649 = vsel %vm2351, %v3634, -inf
        %3650 = vmax.xlane.f32.xlu0 %v3649
        %v3651 = vpop.xlane.xlu0 %3650
        %v3652 = vsel %vm2351, %v3635, -inf
        %3653 = vmax.xlane.f32.xlu0 %v3652
        %v3654 = vpop.xlane.xlu0 %3653
        %v3655 = vsel %vm2351, %v3636, -inf
        %3656 = vmax.xlane.f32.xlu0 %v3655
        %v3657 = vpop.xlane.xlu0 %3656
        %v3658 = vsel %vm2351, %v3637, -inf
        %3659 = vmax.xlane.f32.xlu0 %v3658
        %v3660 = vpop.xlane.xlu0 %3659
        %v3661 = vsel %vm2351, %v3638, -inf
        %3662 = vmax.xlane.f32.xlu0 %v3661
        %v3663 = vpop.xlane.xlu0 %3662
        %v3664 = vsel %vm2376, %v3639, -inf
        %3665 = vmax.xlane.f32.xlu0 %v3664
        %v3666 = vpop.xlane.xlu0 %3665
        %v3667 = vsub.f32 %v3631, %v3642
        %v3668 = vsub.f32 %v3632, %v3645
        %v3669 = vsub.f32 %v3633, %v3648
        %v3670 = vsub.f32 %v3634, %v3651
        %v3671 = vsub.f32 %v3635, %v3654
        %v3672 = vsub.f32 %v3636, %v3657
        %v3673 = vsub.f32 %v3637, %v3660
        %v3674 = vsub.f32 %v3638, %v3663
        %v3675 = vsub.f32 %v3639, %v3666
        %v3676 = vmul.f32 %v3667, 1.442695
        %v3677 = vpow.pop %v3676
        %v3678 = vmul.f32 %v3668, 1.442695
        %v3679 = vpow.pop %v3678
        %v3680 = vmul.f32 %v3669, 1.442695
        %v3681 = vpow.pop %v3680
        %v3682 = vmul.f32 %v3670, 1.442695
        %v3683 = vpow.pop %v3682
        %v3684 = vmul.f32 %v3671, 1.442695
        %v3685 = vpow.pop %v3684
        %v3686 = vmul.f32 %v3672, 1.442695
        %v3687 = vpow.pop %v3686
        %v3688 = vmul.f32 %v3673, 1.442695
        %v3689 = vpow.pop %v3688
        %v3690 = vmul.f32 %v3674, 1.442695
        %v3691 = vpow.pop %v3690
        %v3692 = vmul.f32 %v3675, 1.442695
        %v3693 = vpow.pop %v3692
        %v3694 = vsel %vm2351, %v3677, 0.0
        %3695 = vadd.xlane.f32.xlu0 %v3694
        %v3696 = vpop.xlane.xlu0 %3695
        %v3697 = vsel %vm2351, %v3679, 0.0
        %3698 = vadd.xlane.f32.xlu0 %v3697
        %v3699 = vpop.xlane.xlu0 %3698
        %v3700 = vsel %vm2351, %v3681, 0.0
        %3701 = vadd.xlane.f32.xlu0 %v3700
        %v3702 = vpop.xlane.xlu0 %3701
        %v3703 = vsel %vm2351, %v3683, 0.0
        %3704 = vadd.xlane.f32.xlu0 %v3703
        %v3705 = vpop.xlane.xlu0 %3704
        %v3706 = vsel %vm2351, %v3685, 0.0
        %3707 = vadd.xlane.f32.xlu0 %v3706
        %v3708 = vpop.xlane.xlu0 %3707
        %v3709 = vsel %vm2351, %v3687, 0.0
        %3710 = vadd.xlane.f32.xlu0 %v3709
        %v3711 = vpop.xlane.xlu0 %3710
        %v3712 = vsel %vm2351, %v3689, 0.0
        %3713 = vadd.xlane.f32.xlu0 %v3712
        %v3714 = vpop.xlane.xlu0 %3713
        %v3715 = vsel %vm2351, %v3691, 0.0
        %3716 = vadd.xlane.f32.xlu0 %v3715
        %v3717 = vpop.xlane.xlu0 %3716
        %v3718 = vsel %vm2376, %v3693, 0.0
        %3719 = vadd.xlane.f32.xlu0 %v3718
        %v3720 = vpop.xlane.xlu0 %3719
        %v3721 = vrcp.pop %v3696
        %v3722 = vmul.f32 1.0, %v3721
        %v3723 = vrcp.pop %v3699
        %v3724 = vmul.f32 1.0, %v3723
        %v3725 = vrcp.pop %v3702
        %v3726 = vmul.f32 1.0, %v3725
        %v3727 = vrcp.pop %v3705
        %v3728 = vmul.f32 1.0, %v3727
        %v3729 = vrcp.pop %v3708
        %v3730 = vmul.f32 1.0, %v3729
        %v3731 = vrcp.pop %v3711
        %v3732 = vmul.f32 1.0, %v3731
        %v3733 = vrcp.pop %v3714
        %v3734 = vmul.f32 1.0, %v3733
        %v3735 = vrcp.pop %v3717
        %v3736 = vmul.f32 1.0, %v3735
        %v3737 = vrcp.pop %v3720
        %v3738 = vmul.f32 1.0, %v3737
        %v3739 = vmul.f32 %v3677, %v3722
        %v3740 = vmul.f32 %v3679, %v3724
        %v3741 = vmul.f32 %v3681, %v3726
        %v3742 = vmul.f32 %v3683, %v3728
        %v3743 = vmul.f32 %v3685, %v3730
        %v3744 = vmul.f32 %v3687, %v3732
        %v3745 = vmul.f32 %v3689, %v3734
        %v3746 = vmul.f32 %v3691, %v3736
        %v3747 = vmul.f32 %v3693, %v3738
        %v3748 = vpack.c.bf16 %v3740, %v3739
        %v3749 = vpack.c.bf16 %v3742, %v3741
        %v3750 = vpack.c.bf16 %v3744, %v3743
        %v3751 = vpack.c.bf16 %v3746, %v3745
        %v3752 = vpack.c.bf16 %v3747, %v3747
        %v3753 = vmul.f32 %v2202, %v2255
        %v3754 = vmul.f32 %v2206, %v2255
        %v3755 = vmul.f32 %v2212, %v2255
        %v3756 = vmul.f32 %v2216, %v2255
        %v3757 = vmul.f32 %v2222, %v2255
        %v3758 = vmul.f32 %v2226, %v2255
        %v3759 = vmul.f32 %v2232, %v2255
        %v3760 = vmul.f32 %v2236, %v2255
        %v3761 = vmul.f32 %v2242, %v2255
        %v3762 = vpack.c.bf16 %v3754, %v3753
        %v3763 = vpack.c.bf16 %v3756, %v3755
        %v3764 = vpack.c.bf16 %v3758, %v3757
        %v3765 = vpack.c.bf16 %v3760, %v3759
        %v3766 = vpack.c.bf16 %v3761, %v3761
        %v3767 = vmul.f32 %v2040, %v2484
        %v3768 = vmul.f32 %v2044, %v2484
        %v3769 = vmul.f32 %v2050, %v2484
        %v3770 = vmul.f32 %v2054, %v2484
        %v3771 = vmul.f32 %v2060, %v2484
        %v3772 = vmul.f32 %v2064, %v2484
        %v3773 = vmul.f32 %v2070, %v2484
        %v3774 = vmul.f32 %v2074, %v2484
        %v3775 = vmul.f32 %v2080, %v2484
        %v3776 = vpack.c.bf16 %v3768, %v3767
        %v3777 = vpack.c.bf16 %v3770, %v3769
        %v3778 = vpack.c.bf16 %v3772, %v3771
        %v3779 = vpack.c.bf16 %v3774, %v3773
        %v3780 = vpack.c.bf16 %v3775, %v3775
        %3781 = vmatprep.subr.bf16.mxu0 0
        %3782 = vmatpush1.bf16.xpose.msra.mxu0 0
        %3783 = vmatprep.subr.bf16.mxu0 0
        %3784 = vmatpush1.bf16.xpose.msra.mxu0 0
        %3785 = vmatprep.subr.bf16.mxu0 0
        %3786 = vmatpush1.bf16.xpose.msra.mxu0 0
        %3787 = vmatprep.subr.bf16.mxu0 0
        %3788 = vmatpush1.bf16.xpose.msra.mxu0 %v3544
        %3789 = vmatprep.subr.bf16.mxu0 0
        %3790 = vmatpush1.bf16.xpose.msra.mxu0 %v3543
        %3791 = vmatprep.subr.bf16.mxu0 0
        %3792 = vmatpush1.bf16.xpose.msra.mxu0 %v3542
        %3793 = vmatprep.subr.bf16.mxu0 0
        %3794 = vmatpush1.bf16.xpose.msra.mxu0 %v3541
        %3795 = vmatprep.subr.bf16.mxu0 0
        %3796 = vmatpush1.bf16.xpose.msra.mxu0 %v3540
        %3797 = vmatprep.subr.bf16.mxu0 0
        %3798 = vmatpush2.bf16.xpose.msra.mxu0 0
        %3799 = vmatprep.subr.bf16.mxu0 0
        %3800 = vmatpush2.bf16.xpose.msra.mxu0 0
        %3801 = vmatprep.subr.bf16.mxu0 0
        %3802 = vmatpush2.bf16.xpose.msra.mxu0 0
        %3803 = vmatprep.subr.bf16.mxu0 0
        %3804 = vmatpush2.bf16.xpose.msra.mxu0 0
        %3805 = vmatprep.subr.bf16.mxu0 0
        %3806 = vmatpush2.bf16.xpose.msra.mxu0 0
        %3807 = vmatprep.subr.bf16.mxu0 0
        %3808 = vmatpush2.bf16.xpose.msra.mxu0 0
        %3809 = vmatprep.subr.bf16.mxu0 0
        %3810 = vmatpush2.bf16.xpose.msra.mxu0 0
        %3811 = vmatprep.subr.bf16.mxu0 0
        %3812 = vmatpush2.bf16.xpose.msra.mxu0 0
        %3813 = vmatprep.mubr.bf16.mxu0 0
        %3814 = vmatmul.mubr.bf16.gmra.mxu0 %v3776
        %v3815 = vpop.f32.mrf.mxu0
        %v3816 = vadd.f32 0.0, %v3815
        %v3817 = vpop.f32.mrf.mxu0
        %v3818 = vpop.f32.mrf.mxu0
        %v3819 = vadd.f32 0.0, %v3818
        %v3820 = vpop.f32.mrf.mxu0
        %3821 = vmatprep.mubr.bf16.mxu0 0
        %3822 = vmatmul.mubr.bf16.gmra.mxu0 %v3777
        %v3823 = vpop.f32.mrf.mxu0
        %v3824 = vadd.f32 0.0, %v3823
        %v3825 = vpop.f32.mrf.mxu0
        %v3826 = vpop.f32.mrf.mxu0
        %v3827 = vadd.f32 0.0, %v3826
        %v3828 = vpop.f32.mrf.mxu0
        %3829 = vmatprep.mubr.bf16.mxu0 0
        %3830 = vmatmul.mubr.bf16.gmra.mxu0 %v3778
        %v3831 = vpop.f32.mrf.mxu0
        %v3832 = vadd.f32 0.0, %v3831
        %v3833 = vpop.f32.mrf.mxu0
        %v3834 = vpop.f32.mrf.mxu0
        %v3835 = vadd.f32 0.0, %v3834
        %v3836 = vpop.f32.mrf.mxu0
        %3837 = vmatprep.mubr.bf16.mxu0 0
        %3838 = vmatmul.mubr.bf16.gmra.mxu0 %v3779
        %v3839 = vpop.f32.mrf.mxu0
        %v3840 = vadd.f32 0.0, %v3839
        %v3841 = vpop.f32.mrf.mxu0
        %v3842 = vpop.f32.mrf.mxu0
        %v3843 = vadd.f32 0.0, %v3842
        %v3844 = vpop.f32.mrf.mxu0
        %3845 = vmatprep.mubr.bf16.mxu0 0
        %3846 = vmatmul.mubr.bf16.gmra.mxu0 %v3780
        %v3847 = vpop.f32.mrf.mxu0
        %v3848 = vadd.f32 0.0, %v3847
        %v3849 = vpop.f32.mrf.mxu0
        %v3850 = vpop.f32.mrf.mxu0
        %v3851 = vpop.f32.mrf.mxu0
        %3852 = vdwg.mxu0
        %v3853 = vmul.f32 %v3816, 0.2
        %v3854 = vmul.f32 %v3819, 0.2
        %v3855 = vmul.f32 %v3824, 0.2
        %v3856 = vmul.f32 %v3827, 0.2
        %v3857 = vmul.f32 %v3832, 0.2
        %v3858 = vmul.f32 %v3835, 0.2
        %v3859 = vmul.f32 %v3840, 0.2
        %v3860 = vmul.f32 %v3843, 0.2
        %v3861 = vmul.f32 %v3848, 0.2
        %v3862 = vsel %vm2351, %v3853, -inf
        %3863 = vmax.xlane.f32.xlu0 %v3862
        %v3864 = vpop.xlane.xlu0 %3863
        %v3865 = vsel %vm2351, %v3854, -inf
        %3866 = vmax.xlane.f32.xlu0 %v3865
        %v3867 = vpop.xlane.xlu0 %3866
        %v3868 = vsel %vm2351, %v3855, -inf
        %3869 = vmax.xlane.f32.xlu0 %v3868
        %v3870 = vpop.xlane.xlu0 %3869
        %v3871 = vsel %vm2351, %v3856, -inf
        %3872 = vmax.xlane.f32.xlu0 %v3871
        %v3873 = vpop.xlane.xlu0 %3872
        %v3874 = vsel %vm2351, %v3857, -inf
        %3875 = vmax.xlane.f32.xlu0 %v3874
        %v3876 = vpop.xlane.xlu0 %3875
        %v3877 = vsel %vm2351, %v3858, -inf
        %3878 = vmax.xlane.f32.xlu0 %v3877
        %v3879 = vpop.xlane.xlu0 %3878
        %v3880 = vsel %vm2351, %v3859, -inf
        %3881 = vmax.xlane.f32.xlu0 %v3880
        %v3882 = vpop.xlane.xlu0 %3881
        %v3883 = vsel %vm2351, %v3860, -inf
        %3884 = vmax.xlane.f32.xlu0 %v3883
        %v3885 = vpop.xlane.xlu0 %3884
        %v3886 = vsel %vm2376, %v3861, -inf
        %3887 = vmax.xlane.f32.xlu0 %v3886
        %v3888 = vpop.xlane.xlu0 %3887
        %v3889 = vsub.f32 %v3853, %v3864
        %v3890 = vsub.f32 %v3854, %v3867
        %v3891 = vsub.f32 %v3855, %v3870
        %v3892 = vsub.f32 %v3856, %v3873
        %v3893 = vsub.f32 %v3857, %v3876
        %v3894 = vsub.f32 %v3858, %v3879
        %v3895 = vsub.f32 %v3859, %v3882
        %v3896 = vsub.f32 %v3860, %v3885
        %v3897 = vsub.f32 %v3861, %v3888
        %v3898 = vmul.f32 %v3889, 1.442695
        %v3899 = vpow.pop %v3898
        %v3900 = vmul.f32 %v3890, 1.442695
        %v3901 = vpow.pop %v3900
        %v3902 = vmul.f32 %v3891, 1.442695
        %v3903 = vpow.pop %v3902
        %v3904 = vmul.f32 %v3892, 1.442695
        %v3905 = vpow.pop %v3904
        %v3906 = vmul.f32 %v3893, 1.442695
        %v3907 = vpow.pop %v3906
        %v3908 = vmul.f32 %v3894, 1.442695
        %v3909 = vpow.pop %v3908
        %v3910 = vmul.f32 %v3895, 1.442695
        %v3911 = vpow.pop %v3910
        %v3912 = vmul.f32 %v3896, 1.442695
        %v3913 = vpow.pop %v3912
        %v3914 = vmul.f32 %v3897, 1.442695
        %v3915 = vpow.pop %v3914
        %v3916 = vsel %vm2351, %v3899, 0.0
        %3917 = vadd.xlane.f32.xlu0 %v3916
        %v3918 = vpop.xlane.xlu0 %3917
        %v3919 = vsel %vm2351, %v3901, 0.0
        %3920 = vadd.xlane.f32.xlu0 %v3919
        %v3921 = vpop.xlane.xlu0 %3920
        %v3922 = vsel %vm2351, %v3903, 0.0
        %3923 = vadd.xlane.f32.xlu0 %v3922
        %v3924 = vpop.xlane.xlu0 %3923
        %v3925 = vsel %vm2351, %v3905, 0.0
        %3926 = vadd.xlane.f32.xlu0 %v3925
        %v3927 = vpop.xlane.xlu0 %3926
        %v3928 = vsel %vm2351, %v3907, 0.0
        %3929 = vadd.xlane.f32.xlu0 %v3928
        %v3930 = vpop.xlane.xlu0 %3929
        %v3931 = vsel %vm2351, %v3909, 0.0
        %3932 = vadd.xlane.f32.xlu0 %v3931
        %v3933 = vpop.xlane.xlu0 %3932
        %v3934 = vsel %vm2351, %v3911, 0.0
        %3935 = vadd.xlane.f32.xlu0 %v3934
        %v3936 = vpop.xlane.xlu0 %3935
        %v3937 = vsel %vm2351, %v3913, 0.0
        %3938 = vadd.xlane.f32.xlu0 %v3937
        %v3939 = vpop.xlane.xlu0 %3938
        %v3940 = vsel %vm2376, %v3915, 0.0
        %3941 = vadd.xlane.f32.xlu0 %v3940
        %v3942 = vpop.xlane.xlu0 %3941
        %v3943 = vrcp.pop %v3918
        %v3944 = vmul.f32 1.0, %v3943
        %v3945 = vrcp.pop %v3921
        %v3946 = vmul.f32 1.0, %v3945
        %v3947 = vrcp.pop %v3924
        %v3948 = vmul.f32 1.0, %v3947
        %v3949 = vrcp.pop %v3927
        %v3950 = vmul.f32 1.0, %v3949
        %v3951 = vrcp.pop %v3930
        %v3952 = vmul.f32 1.0, %v3951
        %v3953 = vrcp.pop %v3933
        %v3954 = vmul.f32 1.0, %v3953
        %v3955 = vrcp.pop %v3936
        %v3956 = vmul.f32 1.0, %v3955
        %v3957 = vrcp.pop %v3939
        %v3958 = vmul.f32 1.0, %v3957
        %v3959 = vrcp.pop %v3942
        %v3960 = vmul.f32 1.0, %v3959
        %v3961 = vmul.f32 %v3899, %v3944
        %v3962 = vmul.f32 %v3901, %v3946
        %v3963 = vmul.f32 %v3903, %v3948
        %v3964 = vmul.f32 %v3905, %v3950
        %v3965 = vmul.f32 %v3907, %v3952
        %v3966 = vmul.f32 %v3909, %v3954
        %v3967 = vmul.f32 %v3911, %v3956
        %v3968 = vmul.f32 %v3913, %v3958
        %v3969 = vmul.f32 %v3915, %v3960
        %v3970 = vpack.c.bf16 %v3962, %v3961
        %v3971 = vpack.c.bf16 %v3964, %v3963
        %v3972 = vpack.c.bf16 %v3966, %v3965
        %v3973 = vpack.c.bf16 %v3968, %v3967
        %v3974 = vpack.c.bf16 %v3969, %v3969
        %v3975 = vmul.f32 %v2202, %v2484
        %v3976 = vmul.f32 %v2206, %v2484
        %v3977 = vmul.f32 %v2212, %v2484
        %v3978 = vmul.f32 %v2216, %v2484
        %v3979 = vmul.f32 %v2222, %v2484
        %v3980 = vmul.f32 %v2226, %v2484
        %v3981 = vmul.f32 %v2232, %v2484
        %v3982 = vmul.f32 %v2236, %v2484
        %v3983 = vmul.f32 %v2242, %v2484
        %v3984 = vpack.c.bf16 %v3976, %v3975
        %v3985 = vpack.c.bf16 %v3978, %v3977
        %v3986 = vpack.c.bf16 %v3980, %v3979
        %v3987 = vpack.c.bf16 %v3982, %v3981
        %v3988 = vpack.c.bf16 %v3983, %v3983
        %v3990 = vsel %vm2351, %v3970, 0
        %v3993 = vsel %vm2351, %v3971, 0
        %v3996 = vsel %vm2351, %v3972, 0
        %v3999 = vsel %vm2351, %v3973, 0
        %v4002 = vsel %vm2351, %v3974, 0
        %v4005 = vsel %vm2722, %v3988, 0
        %4007 = vmatprep.subr.bf16.mxu0 0
        %4008 = vmatpush1.bf16.msra.mxu0 0
        %4009 = vmatprep.subr.bf16.mxu0 0
        %4010 = vmatpush1.bf16.msra.mxu0 0
        %4011 = vmatprep.subr.bf16.mxu0 0
        %4012 = vmatpush1.bf16.msra.mxu0 0
        %4013 = vmatprep.subr.bf16.mxu0 0
        %4014 = vmatpush1.bf16.msra.mxu0 %v4005
        %4015 = vmatprep.subr.bf16.mxu0 0
        %4016 = vmatpush1.bf16.msra.mxu0 %v3987
        %4017 = vmatprep.subr.bf16.mxu0 0
        %4018 = vmatpush1.bf16.msra.mxu0 %v3986
        %4019 = vmatprep.subr.bf16.mxu0 0
        %4020 = vmatpush1.bf16.msra.mxu0 %v3985
        %4021 = vmatprep.subr.bf16.mxu0 0
        %4022 = vmatpush1.bf16.msra.mxu0 %v3984
        %4023 = vmatprep.subr.bf16.mxu0 0
        %4024 = vmatpush2.bf16.msra.mxu0 0
        %4025 = vmatprep.subr.bf16.mxu0 0
        %4026 = vmatpush2.bf16.msra.mxu0 0
        %4027 = vmatprep.subr.bf16.mxu0 0
        %4028 = vmatpush2.bf16.msra.mxu0 0
        %4029 = vmatprep.subr.bf16.mxu0 0
        %4030 = vmatpush2.bf16.msra.mxu0 0
        %4031 = vmatprep.subr.bf16.mxu0 0
        %4032 = vmatpush2.bf16.msra.mxu0 0
        %4033 = vmatprep.subr.bf16.mxu0 0
        %4034 = vmatpush2.bf16.msra.mxu0 0
        %4035 = vmatprep.subr.bf16.mxu0 0
        %4036 = vmatpush2.bf16.msra.mxu0 0
        %4037 = vmatprep.subr.bf16.mxu0 0
        %4038 = vmatpush2.bf16.msra.mxu0 0
        %4039 = vmatprep.mubr.bf16.mxu0 0
        %4040 = vmatmul.mubr.bf16.gmra.mxu0 %v3990
        %v4041 = vpop.f32.mrf.mxu0
        %v4042 = vadd.f32 0.0, %v4041
        %v4043 = vpop.f32.mrf.mxu0
        %v4044 = vpop.f32.mrf.mxu0
        %v4045 = vadd.f32 0.0, %v4044
        %v4046 = vpop.f32.mrf.mxu0
        %4047 = vmatprep.mubr.bf16.mxu0 0
        %4048 = vmatmul.mubr.bf16.gmra.mxu0 %v3993
        %v4049 = vpop.f32.mrf.mxu0
        %v4050 = vadd.f32 0.0, %v4049
        %v4051 = vpop.f32.mrf.mxu0
        %v4052 = vpop.f32.mrf.mxu0
        %v4053 = vadd.f32 0.0, %v4052
        %v4054 = vpop.f32.mrf.mxu0
        %4055 = vmatprep.mubr.bf16.mxu0 0
        %4056 = vmatmul.mubr.bf16.gmra.mxu0 %v3996
        %v4057 = vpop.f32.mrf.mxu0
        %v4058 = vadd.f32 0.0, %v4057
        %v4059 = vpop.f32.mrf.mxu0
        %v4060 = vpop.f32.mrf.mxu0
        %v4061 = vadd.f32 0.0, %v4060
        %v4062 = vpop.f32.mrf.mxu0
        %4063 = vmatprep.mubr.bf16.mxu0 0
        %4064 = vmatmul.mubr.bf16.gmra.mxu0 %v3999
        %v4065 = vpop.f32.mrf.mxu0
        %v4066 = vadd.f32 0.0, %v4065
        %v4067 = vpop.f32.mrf.mxu0
        %v4068 = vpop.f32.mrf.mxu0
        %v4069 = vadd.f32 0.0, %v4068
        %v4070 = vpop.f32.mrf.mxu0
        %4071 = vmatprep.mubr.bf16.mxu0 0
        %4072 = vmatmul.mubr.bf16.gmra.mxu0 %v4002
        %v4073 = vpop.f32.mrf.mxu0
        %v4074 = vadd.f32 0.0, %v4073
        %v4075 = vpop.f32.mrf.mxu0
        %v4076 = vpop.f32.mrf.mxu0
        %v4077 = vpop.f32.mrf.mxu0
        %4078 = vdwg.mxu0
        %v4080 = vsel %vm2351, %v3748, 0
        %v4083 = vsel %vm2351, %v3749, 0
        %v4086 = vsel %vm2351, %v3750, 0
        %v4089 = vsel %vm2351, %v3751, 0
        %v4092 = vsel %vm2351, %v3752, 0
        %v4095 = vsel %vm2722, %v3766, 0
        %4097 = vmatprep.subr.bf16.mxu0 0
        %4098 = vmatpush1.bf16.msra.mxu0 0
        %4099 = vmatprep.subr.bf16.mxu0 0
        %4100 = vmatpush1.bf16.msra.mxu0 0
        %4101 = vmatprep.subr.bf16.mxu0 0
        %4102 = vmatpush1.bf16.msra.mxu0 0
        %4103 = vmatprep.subr.bf16.mxu0 0
        %4104 = vmatpush1.bf16.msra.mxu0 %v4095
        %4105 = vmatprep.subr.bf16.mxu0 0
        %4106 = vmatpush1.bf16.msra.mxu0 %v3765
        %4107 = vmatprep.subr.bf16.mxu0 0
        %4108 = vmatpush1.bf16.msra.mxu0 %v3764
        %4109 = vmatprep.subr.bf16.mxu0 0
        %4110 = vmatpush1.bf16.msra.mxu0 %v3763
        %4111 = vmatprep.subr.bf16.mxu0 0
        %4112 = vmatpush1.bf16.msra.mxu0 %v3762
        %4113 = vmatprep.subr.bf16.mxu0 0
        %4114 = vmatpush2.bf16.msra.mxu0 0
        %4115 = vmatprep.subr.bf16.mxu0 0
        %4116 = vmatpush2.bf16.msra.mxu0 0
        %4117 = vmatprep.subr.bf16.mxu0 0
        %4118 = vmatpush2.bf16.msra.mxu0 0
        %4119 = vmatprep.subr.bf16.mxu0 0
        %4120 = vmatpush2.bf16.msra.mxu0 0
        %4121 = vmatprep.subr.bf16.mxu0 0
        %4122 = vmatpush2.bf16.msra.mxu0 0
        %4123 = vmatprep.subr.bf16.mxu0 0
        %4124 = vmatpush2.bf16.msra.mxu0 0
        %4125 = vmatprep.subr.bf16.mxu0 0
        %4126 = vmatpush2.bf16.msra.mxu0 0
        %4127 = vmatprep.subr.bf16.mxu0 0
        %4128 = vmatpush2.bf16.msra.mxu0 0
        %4129 = vmatprep.mubr.bf16.mxu0 0
        %4130 = vmatmul.mubr.bf16.gmra.mxu0 %v4080
        %v4131 = vpop.f32.mrf.mxu0
        %v4132 = vadd.f32 %v4042, %v4131
        %v4133 = vpop.f32.mrf.mxu0
        %v4134 = vpop.f32.mrf.mxu0
        %v4135 = vadd.f32 %v4045, %v4134
        %v4136 = vpop.f32.mrf.mxu0
        %4137 = vmatprep.mubr.bf16.mxu0 0
        %4138 = vmatmul.mubr.bf16.gmra.mxu0 %v4083
        %v4139 = vpop.f32.mrf.mxu0
        %v4140 = vadd.f32 %v4050, %v4139
        %v4141 = vpop.f32.mrf.mxu0
        %v4142 = vpop.f32.mrf.mxu0
        %v4143 = vadd.f32 %v4053, %v4142
        %v4144 = vpop.f32.mrf.mxu0
        %4145 = vmatprep.mubr.bf16.mxu0 0
        %4146 = vmatmul.mubr.bf16.gmra.mxu0 %v4086
        %v4147 = vpop.f32.mrf.mxu0
        %v4148 = vadd.f32 %v4058, %v4147
        %v4149 = vpop.f32.mrf.mxu0
        %v4150 = vpop.f32.mrf.mxu0
        %v4151 = vadd.f32 %v4061, %v4150
        %v4152 = vpop.f32.mrf.mxu0
        %4153 = vmatprep.mubr.bf16.mxu0 0
        %4154 = vmatmul.mubr.bf16.gmra.mxu0 %v4089
        %v4155 = vpop.f32.mrf.mxu0
        %v4156 = vadd.f32 %v4066, %v4155
        %v4157 = vpop.f32.mrf.mxu0
        %v4158 = vpop.f32.mrf.mxu0
        %v4159 = vadd.f32 %v4069, %v4158
        %v4160 = vpop.f32.mrf.mxu0
        %4161 = vmatprep.mubr.bf16.mxu0 0
        %4162 = vmatmul.mubr.bf16.gmra.mxu0 %v4092
        %v4163 = vpop.f32.mrf.mxu0
        %v4164 = vadd.f32 %v4074, %v4163
        %v4165 = vpop.f32.mrf.mxu0
        %v4166 = vpop.f32.mrf.mxu0
        %v4167 = vpop.f32.mrf.mxu0
        %4168 = vdwg.mxu0
        %v4169 = vmul.f32 %v2040, %v2892
        %v4170 = vmul.f32 %v2044, %v2892
        %v4171 = vmul.f32 %v2050, %v2892
        %v4172 = vmul.f32 %v2054, %v2892
        %v4173 = vmul.f32 %v2060, %v2892
        %v4174 = vmul.f32 %v2064, %v2892
        %v4175 = vmul.f32 %v2070, %v2892
        %v4176 = vmul.f32 %v2074, %v2892
        %v4177 = vmul.f32 %v2080, %v2892
        %v4178 = vpack.c.bf16 %v4170, %v4169
        %v4179 = vpack.c.bf16 %v4172, %v4171
        %v4180 = vpack.c.bf16 %v4174, %v4173
        %v4181 = vpack.c.bf16 %v4176, %v4175
        %v4182 = vpack.c.bf16 %v4177, %v4177
        %4183 = vmatprep.subr.bf16.mxu0 0
        %4184 = vmatpush1.bf16.xpose.msra.mxu0 0
        %4185 = vmatprep.subr.bf16.mxu0 0
        %4186 = vmatpush1.bf16.xpose.msra.mxu0 0
        %4187 = vmatprep.subr.bf16.mxu0 0
        %4188 = vmatpush1.bf16.xpose.msra.mxu0 0
        %4189 = vmatprep.subr.bf16.mxu0 0
        %4190 = vmatpush1.bf16.xpose.msra.mxu0 %v3544
        %4191 = vmatprep.subr.bf16.mxu0 0
        %4192 = vmatpush1.bf16.xpose.msra.mxu0 %v3543
        %4193 = vmatprep.subr.bf16.mxu0 0
        %4194 = vmatpush1.bf16.xpose.msra.mxu0 %v3542
        %4195 = vmatprep.subr.bf16.mxu0 0
        %4196 = vmatpush1.bf16.xpose.msra.mxu0 %v3541
        %4197 = vmatprep.subr.bf16.mxu0 0
        %4198 = vmatpush1.bf16.xpose.msra.mxu0 %v3540
        %4199 = vmatprep.subr.bf16.mxu0 0
        %4200 = vmatpush2.bf16.xpose.msra.mxu0 0
        %4201 = vmatprep.subr.bf16.mxu0 0
        %4202 = vmatpush2.bf16.xpose.msra.mxu0 0
        %4203 = vmatprep.subr.bf16.mxu0 0
        %4204 = vmatpush2.bf16.xpose.msra.mxu0 0
        %4205 = vmatprep.subr.bf16.mxu0 0
        %4206 = vmatpush2.bf16.xpose.msra.mxu0 0
        %4207 = vmatprep.subr.bf16.mxu0 0
        %4208 = vmatpush2.bf16.xpose.msra.mxu0 0
        %4209 = vmatprep.subr.bf16.mxu0 0
        %4210 = vmatpush2.bf16.xpose.msra.mxu0 0
        %4211 = vmatprep.subr.bf16.mxu0 0
        %4212 = vmatpush2.bf16.xpose.msra.mxu0 0
        %4213 = vmatprep.subr.bf16.mxu0 0
        %4214 = vmatpush2.bf16.xpose.msra.mxu0 0
        %4215 = vmatprep.mubr.bf16.mxu0 0
        %4216 = vmatmul.mubr.bf16.gmra.mxu0 %v4178
        %v4217 = vpop.f32.mrf.mxu0
        %v4218 = vadd.f32 0.0, %v4217
        %v4219 = vpop.f32.mrf.mxu0
        %v4220 = vpop.f32.mrf.mxu0
        %v4221 = vadd.f32 0.0, %v4220
        %v4222 = vpop.f32.mrf.mxu0
        %4223 = vmatprep.mubr.bf16.mxu0 0
        %4224 = vmatmul.mubr.bf16.gmra.mxu0 %v4179
        %v4225 = vpop.f32.mrf.mxu0
        %v4226 = vadd.f32 0.0, %v4225
        %v4227 = vpop.f32.mrf.mxu0
        %v4228 = vpop.f32.mrf.mxu0
        %v4229 = vadd.f32 0.0, %v4228
        %v4230 = vpop.f32.mrf.mxu0
        %4231 = vmatprep.mubr.bf16.mxu0 0
        %4232 = vmatmul.mubr.bf16.gmra.mxu0 %v4180
        %v4233 = vpop.f32.mrf.mxu0
        %v4234 = vadd.f32 0.0, %v4233
        %v4235 = vpop.f32.mrf.mxu0
        %v4236 = vpop.f32.mrf.mxu0
        %v4237 = vadd.f32 0.0, %v4236
        %v4238 = vpop.f32.mrf.mxu0
        %4239 = vmatprep.mubr.bf16.mxu0 0
        %4240 = vmatmul.mubr.bf16.gmra.mxu0 %v4181
        %v4241 = vpop.f32.mrf.mxu0
        %v4242 = vadd.f32 0.0, %v4241
        %v4243 = vpop.f32.mrf.mxu0
        %v4244 = vpop.f32.mrf.mxu0
        %v4245 = vadd.f32 0.0, %v4244
        %v4246 = vpop.f32.mrf.mxu0
        %4247 = vmatprep.mubr.bf16.mxu0 0
        %4248 = vmatmul.mubr.bf16.gmra.mxu0 %v4182
        %v4249 = vpop.f32.mrf.mxu0
        %v4250 = vadd.f32 0.0, %v4249
        %v4251 = vpop.f32.mrf.mxu0
        %v4252 = vpop.f32.mrf.mxu0
        %v4253 = vpop.f32.mrf.mxu0
        %4254 = vdwg.mxu0
        %v4255 = vmul.f32 %v4218, 0.2
        %v4256 = vmul.f32 %v4221, 0.2
        %v4257 = vmul.f32 %v4226, 0.2
        %v4258 = vmul.f32 %v4229, 0.2
        %v4259 = vmul.f32 %v4234, 0.2
        %v4260 = vmul.f32 %v4237, 0.2
        %v4261 = vmul.f32 %v4242, 0.2
        %v4262 = vmul.f32 %v4245, 0.2
        %v4263 = vmul.f32 %v4250, 0.2
        %v4264 = vsel %vm2351, %v4255, -inf
        %4265 = vmax.xlane.f32.xlu0 %v4264
        %v4266 = vpop.xlane.xlu0 %4265
        %v4267 = vsel %vm2351, %v4256, -inf
        %4268 = vmax.xlane.f32.xlu0 %v4267
        %v4269 = vpop.xlane.xlu0 %4268
        %v4270 = vsel %vm2351, %v4257, -inf
        %4271 = vmax.xlane.f32.xlu0 %v4270
        %v4272 = vpop.xlane.xlu0 %4271
        %v4273 = vsel %vm2351, %v4258, -inf
        %4274 = vmax.xlane.f32.xlu0 %v4273
        %v4275 = vpop.xlane.xlu0 %4274
        %v4276 = vsel %vm2351, %v4259, -inf
        %4277 = vmax.xlane.f32.xlu0 %v4276
        %v4278 = vpop.xlane.xlu0 %4277
        %v4279 = vsel %vm2351, %v4260, -inf
        %4280 = vmax.xlane.f32.xlu0 %v4279
        %v4281 = vpop.xlane.xlu0 %4280
        %v4282 = vsel %vm2351, %v4261, -inf
        %4283 = vmax.xlane.f32.xlu0 %v4282
        %v4284 = vpop.xlane.xlu0 %4283
        %v4285 = vsel %vm2351, %v4262, -inf
        %4286 = vmax.xlane.f32.xlu0 %v4285
        %v4287 = vpop.xlane.xlu0 %4286
        %v4288 = vsel %vm2376, %v4263, -inf
        %4289 = vmax.xlane.f32.xlu0 %v4288
        %v4290 = vpop.xlane.xlu0 %4289
        %v4291 = vsub.f32 %v4255, %v4266
        %v4292 = vsub.f32 %v4256, %v4269
        %v4293 = vsub.f32 %v4257, %v4272
        %v4294 = vsub.f32 %v4258, %v4275
        %v4295 = vsub.f32 %v4259, %v4278
        %v4296 = vsub.f32 %v4260, %v4281
        %v4297 = vsub.f32 %v4261, %v4284
        %v4298 = vsub.f32 %v4262, %v4287
        %v4299 = vsub.f32 %v4263, %v4290
        %v4300 = vmul.f32 %v4291, 1.442695
        %v4301 = vpow.pop %v4300
        %v4302 = vmul.f32 %v4292, 1.442695
        %v4303 = vpow.pop %v4302
        %v4304 = vmul.f32 %v4293, 1.442695
        %v4305 = vpow.pop %v4304
        %v4306 = vmul.f32 %v4294, 1.442695
        %v4307 = vpow.pop %v4306
        %v4308 = vmul.f32 %v4295, 1.442695
        %v4309 = vpow.pop %v4308
        %v4310 = vmul.f32 %v4296, 1.442695
        %v4311 = vpow.pop %v4310
        %v4312 = vmul.f32 %v4297, 1.442695
        %v4313 = vpow.pop %v4312
        %v4314 = vmul.f32 %v4298, 1.442695
        %v4315 = vpow.pop %v4314
        %v4316 = vmul.f32 %v4299, 1.442695
        %v4317 = vpow.pop %v4316
        %v4318 = vsel %vm2351, %v4301, 0.0
        %4319 = vadd.xlane.f32.xlu0 %v4318
        %v4320 = vpop.xlane.xlu0 %4319
        %v4321 = vsel %vm2351, %v4303, 0.0
        %4322 = vadd.xlane.f32.xlu0 %v4321
        %v4323 = vpop.xlane.xlu0 %4322
        %v4324 = vsel %vm2351, %v4305, 0.0
        %4325 = vadd.xlane.f32.xlu0 %v4324
        %v4326 = vpop.xlane.xlu0 %4325
        %v4327 = vsel %vm2351, %v4307, 0.0
        %4328 = vadd.xlane.f32.xlu0 %v4327
        %v4329 = vpop.xlane.xlu0 %4328
        %v4330 = vsel %vm2351, %v4309, 0.0
        %4331 = vadd.xlane.f32.xlu0 %v4330
        %v4332 = vpop.xlane.xlu0 %4331
        %v4333 = vsel %vm2351, %v4311, 0.0
        %4334 = vadd.xlane.f32.xlu0 %v4333
        %v4335 = vpop.xlane.xlu0 %4334
        %v4336 = vsel %vm2351, %v4313, 0.0
        %4337 = vadd.xlane.f32.xlu0 %v4336
        %v4338 = vpop.xlane.xlu0 %4337
        %v4339 = vsel %vm2351, %v4315, 0.0
        %4340 = vadd.xlane.f32.xlu0 %v4339
        %v4341 = vpop.xlane.xlu0 %4340
        %v4342 = vsel %vm2376, %v4317, 0.0
        %4343 = vadd.xlane.f32.xlu0 %v4342
        %v4344 = vpop.xlane.xlu0 %4343
        %v4345 = vrcp.pop %v4320
        %v4346 = vmul.f32 1.0, %v4345
        %v4347 = vrcp.pop %v4323
        %v4348 = vmul.f32 1.0, %v4347
        %v4349 = vrcp.pop %v4326
        %v4350 = vmul.f32 1.0, %v4349
        %v4351 = vrcp.pop %v4329
        %v4352 = vmul.f32 1.0, %v4351
        %v4353 = vrcp.pop %v4332
        %v4354 = vmul.f32 1.0, %v4353
        %v4355 = vrcp.pop %v4335
        %v4356 = vmul.f32 1.0, %v4355
        %v4357 = vrcp.pop %v4338
        %v4358 = vmul.f32 1.0, %v4357
        %v4359 = vrcp.pop %v4341
        %v4360 = vmul.f32 1.0, %v4359
        %v4361 = vrcp.pop %v4344
        %v4362 = vmul.f32 1.0, %v4361
        %v4363 = vmul.f32 %v4301, %v4346
        %v4364 = vmul.f32 %v4303, %v4348
        %v4365 = vmul.f32 %v4305, %v4350
        %v4366 = vmul.f32 %v4307, %v4352
        %v4367 = vmul.f32 %v4309, %v4354
        %v4368 = vmul.f32 %v4311, %v4356
        %v4369 = vmul.f32 %v4313, %v4358
        %v4370 = vmul.f32 %v4315, %v4360
        %v4371 = vmul.f32 %v4317, %v4362
        %v4372 = vpack.c.bf16 %v4364, %v4363
        %v4373 = vpack.c.bf16 %v4366, %v4365
        %v4374 = vpack.c.bf16 %v4368, %v4367
        %v4375 = vpack.c.bf16 %v4370, %v4369
        %v4376 = vpack.c.bf16 %v4371, %v4371
        %v4377 = vmul.f32 %v2202, %v2892
        %v4378 = vmul.f32 %v2206, %v2892
        %v4379 = vmul.f32 %v2212, %v2892
        %v4380 = vmul.f32 %v2216, %v2892
        %v4381 = vmul.f32 %v2222, %v2892
        %v4382 = vmul.f32 %v2226, %v2892
        %v4383 = vmul.f32 %v2232, %v2892
        %v4384 = vmul.f32 %v2236, %v2892
        %v4385 = vmul.f32 %v2242, %v2892
        %v4386 = vpack.c.bf16 %v4378, %v4377
        %v4387 = vpack.c.bf16 %v4380, %v4379
        %v4388 = vpack.c.bf16 %v4382, %v4381
        %v4389 = vpack.c.bf16 %v4384, %v4383
        %v4390 = vpack.c.bf16 %v4385, %v4385
        %v4392 = vsel %vm2351, %v4372, 0
        %v4395 = vsel %vm2351, %v4373, 0
        %v4398 = vsel %vm2351, %v4374, 0
        %v4401 = vsel %vm2351, %v4375, 0
        %v4404 = vsel %vm2351, %v4376, 0
        %v4407 = vsel %vm2722, %v4390, 0
        %4409 = vmatprep.subr.bf16.mxu0 0
        %4410 = vmatpush1.bf16.msra.mxu0 0
        %4411 = vmatprep.subr.bf16.mxu0 0
        %4412 = vmatpush1.bf16.msra.mxu0 0
        %4413 = vmatprep.subr.bf16.mxu0 0
        %4414 = vmatpush1.bf16.msra.mxu0 0
        %4415 = vmatprep.subr.bf16.mxu0 0
        %4416 = vmatpush1.bf16.msra.mxu0 %v4407
        %4417 = vmatprep.subr.bf16.mxu0 0
        %4418 = vmatpush1.bf16.msra.mxu0 %v4389
        %4419 = vmatprep.subr.bf16.mxu0 0
        %4420 = vmatpush1.bf16.msra.mxu0 %v4388
        %4421 = vmatprep.subr.bf16.mxu0 0
        %4422 = vmatpush1.bf16.msra.mxu0 %v4387
        %4423 = vmatprep.subr.bf16.mxu0 0
        %4424 = vmatpush1.bf16.msra.mxu0 %v4386
        %4425 = vmatprep.subr.bf16.mxu0 0
        %4426 = vmatpush2.bf16.msra.mxu0 0
        %4427 = vmatprep.subr.bf16.mxu0 0
        %4428 = vmatpush2.bf16.msra.mxu0 0
        %4429 = vmatprep.subr.bf16.mxu0 0
        %4430 = vmatpush2.bf16.msra.mxu0 0
        %4431 = vmatprep.subr.bf16.mxu0 0
        %4432 = vmatpush2.bf16.msra.mxu0 0
        %4433 = vmatprep.subr.bf16.mxu0 0
        %4434 = vmatpush2.bf16.msra.mxu0 0
        %4435 = vmatprep.subr.bf16.mxu0 0
        %4436 = vmatpush2.bf16.msra.mxu0 0
        %4437 = vmatprep.subr.bf16.mxu0 0
        %4438 = vmatpush2.bf16.msra.mxu0 0
        %4439 = vmatprep.subr.bf16.mxu0 0
        %4440 = vmatpush2.bf16.msra.mxu0 0
        %4441 = vmatprep.mubr.bf16.mxu0 0
        %4442 = vmatmul.mubr.bf16.gmra.mxu0 %v4392
        %v4443 = vpop.f32.mrf.mxu0
        %v4444 = vadd.f32 0.0, %v4443
        %v4445 = vpop.f32.mrf.mxu0
        %v4446 = vpop.f32.mrf.mxu0
        %v4447 = vadd.f32 0.0, %v4446
        %v4448 = vpop.f32.mrf.mxu0
        %4449 = vmatprep.mubr.bf16.mxu0 0
        %4450 = vmatmul.mubr.bf16.gmra.mxu0 %v4395
        %v4451 = vpop.f32.mrf.mxu0
        %v4452 = vadd.f32 0.0, %v4451
        %v4453 = vpop.f32.mrf.mxu0
        %v4454 = vpop.f32.mrf.mxu0
        %v4455 = vadd.f32 0.0, %v4454
        %v4456 = vpop.f32.mrf.mxu0
        %4457 = vmatprep.mubr.bf16.mxu0 0
        %4458 = vmatmul.mubr.bf16.gmra.mxu0 %v4398
        %v4459 = vpop.f32.mrf.mxu0
        %v4460 = vadd.f32 0.0, %v4459
        %v4461 = vpop.f32.mrf.mxu0
        %v4462 = vpop.f32.mrf.mxu0
        %v4463 = vadd.f32 0.0, %v4462
        %v4464 = vpop.f32.mrf.mxu0
        %4465 = vmatprep.mubr.bf16.mxu0 0
        %4466 = vmatmul.mubr.bf16.gmra.mxu0 %v4401
        %v4467 = vpop.f32.mrf.mxu0
        %v4468 = vadd.f32 0.0, %v4467
        %v4469 = vpop.f32.mrf.mxu0
        %v4470 = vpop.f32.mrf.mxu0
        %v4471 = vadd.f32 0.0, %v4470
        %v4472 = vpop.f32.mrf.mxu0
        %4473 = vmatprep.mubr.bf16.mxu0 0
        %4474 = vmatmul.mubr.bf16.gmra.mxu0 %v4404
        %v4475 = vpop.f32.mrf.mxu0
        %v4476 = vadd.f32 0.0, %v4475
        %v4477 = vpop.f32.mrf.mxu0
        %v4478 = vpop.f32.mrf.mxu0
        %v4479 = vpop.f32.mrf.mxu0
        %4480 = vdwg.mxu0
        %v4481 = vadd.f32 %v4132, %v4444
        %v4482 = vadd.f32 %v4135, %v4447
        %v4483 = vadd.f32 %v4140, %v4452
        %v4484 = vadd.f32 %v4143, %v4455
        %v4485 = vadd.f32 %v4148, %v4460
        %v4486 = vadd.f32 %v4151, %v4463
        %v4487 = vadd.f32 %v4156, %v4468
        %v4488 = vadd.f32 %v4159, %v4471
        %v4489 = vadd.f32 %v4164, %v4476
        %v4490 = vmul.f32 %v2040, %v3218
        %v4491 = vmul.f32 %v2044, %v3218
        %v4492 = vmul.f32 %v2050, %v3218
        %v4493 = vmul.f32 %v2054, %v3218
        %v4494 = vmul.f32 %v2060, %v3218
        %v4495 = vmul.f32 %v2064, %v3218
        %v4496 = vmul.f32 %v2070, %v3218
        %v4497 = vmul.f32 %v2074, %v3218
        %v4498 = vmul.f32 %v2080, %v3218
        %v4499 = vpack.c.bf16 %v4491, %v4490
        %v4500 = vpack.c.bf16 %v4493, %v4492
        %v4501 = vpack.c.bf16 %v4495, %v4494
        %v4502 = vpack.c.bf16 %v4497, %v4496
        %v4503 = vpack.c.bf16 %v4498, %v4498
        %4504 = vmatprep.subr.bf16.mxu0 0
        %4505 = vmatpush1.bf16.xpose.msra.mxu0 0
        %4506 = vmatprep.subr.bf16.mxu0 0
        %4507 = vmatpush1.bf16.xpose.msra.mxu0 0
        %4508 = vmatprep.subr.bf16.mxu0 0
        %4509 = vmatpush1.bf16.xpose.msra.mxu0 0
        %4510 = vmatprep.subr.bf16.mxu0 0
        %4511 = vmatpush1.bf16.xpose.msra.mxu0 %v3544
        %4512 = vmatprep.subr.bf16.mxu0 0
        %4513 = vmatpush1.bf16.xpose.msra.mxu0 %v3543
        %4514 = vmatprep.subr.bf16.mxu0 0
        %4515 = vmatpush1.bf16.xpose.msra.mxu0 %v3542
        %4516 = vmatprep.subr.bf16.mxu0 0
        %4517 = vmatpush1.bf16.xpose.msra.mxu0 %v3541
        %4518 = vmatprep.subr.bf16.mxu0 0
        %4519 = vmatpush1.bf16.xpose.msra.mxu0 %v3540
        %4520 = vmatprep.subr.bf16.mxu0 0
        %4521 = vmatpush2.bf16.xpose.msra.mxu0 0
        %4522 = vmatprep.subr.bf16.mxu0 0
        %4523 = vmatpush2.bf16.xpose.msra.mxu0 0
        %4524 = vmatprep.subr.bf16.mxu0 0
        %4525 = vmatpush2.bf16.xpose.msra.mxu0 0
        %4526 = vmatprep.subr.bf16.mxu0 0
        %4527 = vmatpush2.bf16.xpose.msra.mxu0 0
        %4528 = vmatprep.subr.bf16.mxu0 0
        %4529 = vmatpush2.bf16.xpose.msra.mxu0 0
        %4530 = vmatprep.subr.bf16.mxu0 0
        %4531 = vmatpush2.bf16.xpose.msra.mxu0 0
        %4532 = vmatprep.subr.bf16.mxu0 0
        %4533 = vmatpush2.bf16.xpose.msra.mxu0 0
        %4534 = vmatprep.subr.bf16.mxu0 0
        %4535 = vmatpush2.bf16.xpose.msra.mxu0 0
        %4536 = vmatprep.mubr.bf16.mxu0 0
        %4537 = vmatmul.mubr.bf16.gmra.mxu0 %v4499
        %v4538 = vpop.f32.mrf.mxu0
        %v4539 = vadd.f32 0.0, %v4538
        %v4540 = vpop.f32.mrf.mxu0
        %v4541 = vpop.f32.mrf.mxu0
        %v4542 = vadd.f32 0.0, %v4541
        %v4543 = vpop.f32.mrf.mxu0
        %4544 = vmatprep.mubr.bf16.mxu0 0
        %4545 = vmatmul.mubr.bf16.gmra.mxu0 %v4500
        %v4546 = vpop.f32.mrf.mxu0
        %v4547 = vadd.f32 0.0, %v4546
        %v4548 = vpop.f32.mrf.mxu0
        %v4549 = vpop.f32.mrf.mxu0
        %v4550 = vadd.f32 0.0, %v4549
        %v4551 = vpop.f32.mrf.mxu0
        %4552 = vmatprep.mubr.bf16.mxu0 0
        %4553 = vmatmul.mubr.bf16.gmra.mxu0 %v4501
        %v4554 = vpop.f32.mrf.mxu0
        %v4555 = vadd.f32 0.0, %v4554
        %v4556 = vpop.f32.mrf.mxu0
        %v4557 = vpop.f32.mrf.mxu0
        %v4558 = vadd.f32 0.0, %v4557
        %v4559 = vpop.f32.mrf.mxu0
        %4560 = vmatprep.mubr.bf16.mxu0 0
        %4561 = vmatmul.mubr.bf16.gmra.mxu0 %v4502
        %v4562 = vpop.f32.mrf.mxu0
        %v4563 = vadd.f32 0.0, %v4562
        %v4564 = vpop.f32.mrf.mxu0
        %v4565 = vpop.f32.mrf.mxu0
        %v4566 = vadd.f32 0.0, %v4565
        %v4567 = vpop.f32.mrf.mxu0
        %4568 = vmatprep.mubr.bf16.mxu0 0
        %4569 = vmatmul.mubr.bf16.gmra.mxu0 %v4503
        %v4570 = vpop.f32.mrf.mxu0
        %v4571 = vadd.f32 0.0, %v4570
        %v4572 = vpop.f32.mrf.mxu0
        %v4573 = vpop.f32.mrf.mxu0
        %v4574 = vpop.f32.mrf.mxu0
        %4575 = vdwg.mxu0
        %v4576 = vmul.f32 %v4539, 0.2
        %v4577 = vmul.f32 %v4542, 0.2
        %v4578 = vmul.f32 %v4547, 0.2
        %v4579 = vmul.f32 %v4550, 0.2
        %v4580 = vmul.f32 %v4555, 0.2
        %v4581 = vmul.f32 %v4558, 0.2
        %v4582 = vmul.f32 %v4563, 0.2
        %v4583 = vmul.f32 %v4566, 0.2
        %v4584 = vmul.f32 %v4571, 0.2
        %v4585 = vsel %vm2351, %v4576, -inf
        %4586 = vmax.xlane.f32.xlu0 %v4585
        %v4587 = vpop.xlane.xlu0 %4586
        %v4588 = vsel %vm2351, %v4577, -inf
        %4589 = vmax.xlane.f32.xlu0 %v4588
        %v4590 = vpop.xlane.xlu0 %4589
        %v4591 = vsel %vm2351, %v4578, -inf
        %4592 = vmax.xlane.f32.xlu0 %v4591
        %v4593 = vpop.xlane.xlu0 %4592
        %v4594 = vsel %vm2351, %v4579, -inf
        %4595 = vmax.xlane.f32.xlu0 %v4594
        %v4596 = vpop.xlane.xlu0 %4595
        %v4597 = vsel %vm2351, %v4580, -inf
        %4598 = vmax.xlane.f32.xlu0 %v4597
        %v4599 = vpop.xlane.xlu0 %4598
        %v4600 = vsel %vm2351, %v4581, -inf
        %4601 = vmax.xlane.f32.xlu0 %v4600
        %v4602 = vpop.xlane.xlu0 %4601
        %v4603 = vsel %vm2351, %v4582, -inf
        %4604 = vmax.xlane.f32.xlu0 %v4603
        %v4605 = vpop.xlane.xlu0 %4604
        %v4606 = vsel %vm2351, %v4583, -inf
        %4607 = vmax.xlane.f32.xlu0 %v4606
        %v4608 = vpop.xlane.xlu0 %4607
        %v4609 = vsel %vm2376, %v4584, -inf
        %4610 = vmax.xlane.f32.xlu0 %v4609
        %v4611 = vpop.xlane.xlu0 %4610
        %v4612 = vsub.f32 %v4576, %v4587
        %v4613 = vsub.f32 %v4577, %v4590
        %v4614 = vsub.f32 %v4578, %v4593
        %v4615 = vsub.f32 %v4579, %v4596
        %v4616 = vsub.f32 %v4580, %v4599
        %v4617 = vsub.f32 %v4581, %v4602
        %v4618 = vsub.f32 %v4582, %v4605
        %v4619 = vsub.f32 %v4583, %v4608
        %v4620 = vsub.f32 %v4584, %v4611
        %v4621 = vmul.f32 %v4612, 1.442695
        %v4622 = vpow.pop %v4621
        %v4623 = vmul.f32 %v4613, 1.442695
        %v4624 = vpow.pop %v4623
        %v4625 = vmul.f32 %v4614, 1.442695
        %v4626 = vpow.pop %v4625
        %v4627 = vmul.f32 %v4615, 1.442695
        %v4628 = vpow.pop %v4627
        %v4629 = vmul.f32 %v4616, 1.442695
        %v4630 = vpow.pop %v4629
        %v4631 = vmul.f32 %v4617, 1.442695
        %v4632 = vpow.pop %v4631
        %v4633 = vmul.f32 %v4618, 1.442695
        %v4634 = vpow.pop %v4633
        %v4635 = vmul.f32 %v4619, 1.442695
        %v4636 = vpow.pop %v4635
        %v4637 = vmul.f32 %v4620, 1.442695
        %v4638 = vpow.pop %v4637
        %v4639 = vsel %vm2351, %v4622, 0.0
        %4640 = vadd.xlane.f32.xlu0 %v4639
        %v4641 = vpop.xlane.xlu0 %4640
        %v4642 = vsel %vm2351, %v4624, 0.0
        %4643 = vadd.xlane.f32.xlu0 %v4642
        %v4644 = vpop.xlane.xlu0 %4643
        %v4645 = vsel %vm2351, %v4626, 0.0
        %4646 = vadd.xlane.f32.xlu0 %v4645
        %v4647 = vpop.xlane.xlu0 %4646
        %v4648 = vsel %vm2351, %v4628, 0.0
        %4649 = vadd.xlane.f32.xlu0 %v4648
        %v4650 = vpop.xlane.xlu0 %4649
        %v4651 = vsel %vm2351, %v4630, 0.0
        %4652 = vadd.xlane.f32.xlu0 %v4651
        %v4653 = vpop.xlane.xlu0 %4652
        %v4654 = vsel %vm2351, %v4632, 0.0
        %4655 = vadd.xlane.f32.xlu0 %v4654
        %v4656 = vpop.xlane.xlu0 %4655
        %v4657 = vsel %vm2351, %v4634, 0.0
        %4658 = vadd.xlane.f32.xlu0 %v4657
        %v4659 = vpop.xlane.xlu0 %4658
        %v4660 = vsel %vm2351, %v4636, 0.0
        %4661 = vadd.xlane.f32.xlu0 %v4660
        %v4662 = vpop.xlane.xlu0 %4661
        %v4663 = vsel %vm2376, %v4638, 0.0
        %4664 = vadd.xlane.f32.xlu0 %v4663
        %v4665 = vpop.xlane.xlu0 %4664
        %v4666 = vrcp.pop %v4641
        %v4667 = vmul.f32 1.0, %v4666
        %v4668 = vrcp.pop %v4644
        %v4669 = vmul.f32 1.0, %v4668
        %v4670 = vrcp.pop %v4647
        %v4671 = vmul.f32 1.0, %v4670
        %v4672 = vrcp.pop %v4650
        %v4673 = vmul.f32 1.0, %v4672
        %v4674 = vrcp.pop %v4653
        %v4675 = vmul.f32 1.0, %v4674
        %v4676 = vrcp.pop %v4656
        %v4677 = vmul.f32 1.0, %v4676
        %v4678 = vrcp.pop %v4659
        %v4679 = vmul.f32 1.0, %v4678
        %v4680 = vrcp.pop %v4662
        %v4681 = vmul.f32 1.0, %v4680
        %v4682 = vrcp.pop %v4665
        %v4683 = vmul.f32 1.0, %v4682
        %v4684 = vmul.f32 %v4622, %v4667
        %v4685 = vmul.f32 %v4624, %v4669
        %v4686 = vmul.f32 %v4626, %v4671
        %v4687 = vmul.f32 %v4628, %v4673
        %v4688 = vmul.f32 %v4630, %v4675
        %v4689 = vmul.f32 %v4632, %v4677
        %v4690 = vmul.f32 %v4634, %v4679
        %v4691 = vmul.f32 %v4636, %v4681
        %v4692 = vmul.f32 %v4638, %v4683
        %v4693 = vpack.c.bf16 %v4685, %v4684
        %v4694 = vpack.c.bf16 %v4687, %v4686
        %v4695 = vpack.c.bf16 %v4689, %v4688
        %v4696 = vpack.c.bf16 %v4691, %v4690
        %v4697 = vpack.c.bf16 %v4692, %v4692
        %v4698 = vmul.f32 %v2202, %v3218
        %v4699 = vmul.f32 %v2206, %v3218
        %v4700 = vmul.f32 %v2212, %v3218
        %v4701 = vmul.f32 %v2216, %v3218
        %v4702 = vmul.f32 %v2222, %v3218
        %v4703 = vmul.f32 %v2226, %v3218
        %v4704 = vmul.f32 %v2232, %v3218
        %v4705 = vmul.f32 %v2236, %v3218
        %v4706 = vmul.f32 %v2242, %v3218
        %v4707 = vpack.c.bf16 %v4699, %v4698
        %v4708 = vpack.c.bf16 %v4701, %v4700
        %v4709 = vpack.c.bf16 %v4703, %v4702
        %v4710 = vpack.c.bf16 %v4705, %v4704
        %v4711 = vpack.c.bf16 %v4706, %v4706
        %v4713 = vsel %vm2351, %v4693, 0
        %v4716 = vsel %vm2351, %v4694, 0
        %v4719 = vsel %vm2351, %v4695, 0
        %v4722 = vsel %vm2351, %v4696, 0
        %v4725 = vsel %vm2351, %v4697, 0
        %v4728 = vsel %vm2722, %v4711, 0
        %4730 = vmatprep.subr.bf16.mxu0 0
        %4731 = vmatpush1.bf16.msra.mxu0 0
        %4732 = vmatprep.subr.bf16.mxu0 0
        %4733 = vmatpush1.bf16.msra.mxu0 0
        %4734 = vmatprep.subr.bf16.mxu0 0
        %4735 = vmatpush1.bf16.msra.mxu0 0
        %4736 = vmatprep.subr.bf16.mxu0 0
        %4737 = vmatpush1.bf16.msra.mxu0 %v4728
        %4738 = vmatprep.subr.bf16.mxu0 0
        %4739 = vmatpush1.bf16.msra.mxu0 %v4710
        %4740 = vmatprep.subr.bf16.mxu0 0
        %4741 = vmatpush1.bf16.msra.mxu0 %v4709
        %4742 = vmatprep.subr.bf16.mxu0 0
        %4743 = vmatpush1.bf16.msra.mxu0 %v4708
        %4744 = vmatprep.subr.bf16.mxu0 0
        %4745 = vmatpush1.bf16.msra.mxu0 %v4707
        %4746 = vmatprep.subr.bf16.mxu0 0
        %4747 = vmatpush2.bf16.msra.mxu0 0
        %4748 = vmatprep.subr.bf16.mxu0 0
        %4749 = vmatpush2.bf16.msra.mxu0 0
        %4750 = vmatprep.subr.bf16.mxu0 0
        %4751 = vmatpush2.bf16.msra.mxu0 0
        %4752 = vmatprep.subr.bf16.mxu0 0
        %4753 = vmatpush2.bf16.msra.mxu0 0
        %4754 = vmatprep.subr.bf16.mxu0 0
        %4755 = vmatpush2.bf16.msra.mxu0 0
        %4756 = vmatprep.subr.bf16.mxu0 0
        %4757 = vmatpush2.bf16.msra.mxu0 0
        %4758 = vmatprep.subr.bf16.mxu0 0
        %4759 = vmatpush2.bf16.msra.mxu0 0
        %4760 = vmatprep.subr.bf16.mxu0 0
        %4761 = vmatpush2.bf16.msra.mxu0 0
        %4762 = vmatprep.mubr.bf16.mxu0 0
        %4763 = vmatmul.mubr.bf16.gmra.mxu0 %v4713
        %v4764 = vpop.f32.mrf.mxu0
        %v4765 = vadd.f32 0.0, %v4764
        %v4766 = vpop.f32.mrf.mxu0
        %v4767 = vpop.f32.mrf.mxu0
        %v4768 = vadd.f32 0.0, %v4767
        %v4769 = vpop.f32.mrf.mxu0
        %4770 = vmatprep.mubr.bf16.mxu0 0
        %4771 = vmatmul.mubr.bf16.gmra.mxu0 %v4716
        %v4772 = vpop.f32.mrf.mxu0
        %v4773 = vadd.f32 0.0, %v4772
        %v4774 = vpop.f32.mrf.mxu0
        %v4775 = vpop.f32.mrf.mxu0
        %v4776 = vadd.f32 0.0, %v4775
        %v4777 = vpop.f32.mrf.mxu0
        %4778 = vmatprep.mubr.bf16.mxu0 0
        %4779 = vmatmul.mubr.bf16.gmra.mxu0 %v4719
        %v4780 = vpop.f32.mrf.mxu0
        %v4781 = vadd.f32 0.0, %v4780
        %v4782 = vpop.f32.mrf.mxu0
        %v4783 = vpop.f32.mrf.mxu0
        %v4784 = vadd.f32 0.0, %v4783
        %v4785 = vpop.f32.mrf.mxu0
        %4786 = vmatprep.mubr.bf16.mxu0 0
        %4787 = vmatmul.mubr.bf16.gmra.mxu0 %v4722
        %v4788 = vpop.f32.mrf.mxu0
        %v4789 = vadd.f32 0.0, %v4788
        %v4790 = vpop.f32.mrf.mxu0
        %v4791 = vpop.f32.mrf.mxu0
        %v4792 = vadd.f32 0.0, %v4791
        %v4793 = vpop.f32.mrf.mxu0
        %4794 = vmatprep.mubr.bf16.mxu0 0
        %4795 = vmatmul.mubr.bf16.gmra.mxu0 %v4725
        %v4796 = vpop.f32.mrf.mxu0
        %v4797 = vadd.f32 0.0, %v4796
        %v4798 = vpop.f32.mrf.mxu0
        %v4799 = vpop.f32.mrf.mxu0
        %v4800 = vpop.f32.mrf.mxu0
        %4801 = vdwg.mxu0
        %v4802 = vadd.f32 %v4481, %v4765
        %v4803 = vadd.f32 %v4482, %v4768
        %v4804 = vadd.f32 %v4483, %v4773
        %v4805 = vadd.f32 %v4484, %v4776
        %v4806 = vadd.f32 %v4485, %v4781
        %v4807 = vadd.f32 %v4486, %v4784
        %v4808 = vadd.f32 %v4487, %v4789
        %v4809 = vadd.f32 %v4488, %v4792
        %v4810 = vadd.f32 %v4489, %v4797
        %v4811 = vpack.c.bf16 %v3532, %v3531
        %v4812 = vpack.c.bf16 %v4803, %v4802
        %v4813 = vpack.c.bf16 %v3534, %v3533
        %v4814 = vpack.c.bf16 %v4805, %v4804
        %v4815 = vpack.c.bf16 %v3536, %v3535
        %v4816 = vpack.c.bf16 %v4807, %v4806
        %v4817 = vpack.c.bf16 %v3538, %v3537
        %v4818 = vpack.c.bf16 %v4809, %v4808
        %v4819 = vpack.c.bf16 %v3539, %v3539
        %v4820 = vpack.c.bf16 %v4810, %v4810
        %v4821 = vld [vmem:[%s960] sm:$0xff]
        %v4822 = vld [vmem:[%s960 + $0x8] sm:$0xff]
        %v4823 = vld [vmem:[%s960 + $0x10] sm:$0xff]
        %v4824 = vld [vmem:[%s960 + $0x18] sm:$0xff]
        %v4825 = vld [vmem:[%s960 + $0x20] sm:$0xff]
        %v4826 = vld [vmem:[%s960 + $0x28] sm:$0xff]
        %v4827 = vld [vmem:[%s960 + $0x30] sm:$0xff]
        %v4828 = vld [vmem:[%s960 + $0x38] sm:$0xff]
        %v4829 = vld [vmem:[%s960 + $0x40] sm:$0xff]
        %v4830 = vld [vmem:[%s960 + $0x48] sm:$0xff]
        %v4831 = vld [vmem:[%s960 + $0x50] sm:$0xff]
        %v4832 = vld [vmem:[%s960 + $0x58] sm:$0xff]
        %v4833 = vld [vmem:[%s960 + $0x60] sm:$0xff]
        %v4834 = vld [vmem:[%s960 + $0x68] sm:$0xff]
        %v4835 = vld [vmem:[%s960 + $0x70] sm:$0xff]
        %v4836 = vld [vmem:[%s960 + $0x78] sm:$0xff]
        %v4837 = vld [vmem:[%s960 + $0x80] sm:$0xff]
        %v4838 = vld [vmem:[%s960 + $0x88] sm:$0xff]
        %v4839 = vld [vmem:[%s960 + $0x90] sm:$0xff]
        %v4840 = vld [vmem:[%s960 + $0x98] sm:$0xff]
        %v4841 = vld [vmem:[%s960 + $0xa0] sm:$0xff]
        %v4842 = vld [vmem:[%s960 + $0xa8] sm:$0xff]
        %v4843 = vld [vmem:[%s960 + $0xb0] sm:$0xff]
        %v4844 = vld [vmem:[%s960 + $0xb8] sm:$0xff]
        %v4845 = vld [vmem:[%s960 + $0xc0] sm:$0xff]
        %v4846 = vld [vmem:[%s960 + $0xc8] sm:$0xff]
        %v4847 = vld [vmem:[%s960 + $0xd0] sm:$0xff]
        %v4848 = vld [vmem:[%s960 + $0xd8] sm:$0xff]
        %v4849 = vld [vmem:[%s960 + $0xe0] sm:$0xff]
        %v4850 = vld [vmem:[%s960 + $0xe8] sm:$0xff]
        %v4851 = vld [vmem:[%s960 + $0xf0] sm:$0xff]
        %v4852 = vld [vmem:[%s960 + $0xf8] sm:$0xff]
        %v4853 = vld [vmem:[%s964] sm:$0x3]
        %v4855 = vlaneseq
        %v4856 = vshrl.u32 %v4855, 7
        %v4857 = vsub.s32 0, %v4856
        %v4858 = vrot.slane %v4853, %v4857
        %v4859 = vlaneseq
        %v4860 = vshrl.u32 %v4859, 7
        %v4861 = vsub.s32 1, %v4860
        %v4862 = vrot.slane %v4853, %v4861
        %v4897 = vunpack.c.l.b16 %v4821
        %v4898 = vunpack.c.h.b16 %v4821
        %v4899 = vunpack.c.l.b16 %v4822
        %v4900 = vunpack.c.h.b16 %v4822
        %v4901 = vunpack.c.l.b16 %v4823
        %v4902 = vunpack.c.h.b16 %v4823
        %v4903 = vunpack.c.l.b16 %v4824
        %v4904 = vunpack.c.h.b16 %v4824
        %v4905 = vunpack.c.l.b16 %v4825
        %v4906 = vunpack.c.h.b16 %v4825
        %v4907 = vunpack.c.l.b16 %v4826
        %v4908 = vunpack.c.h.b16 %v4826
        %v4909 = vunpack.c.l.b16 %v4827
        %v4910 = vunpack.c.h.b16 %v4827
        %v4911 = vunpack.c.l.b16 %v4828
        %v4912 = vunpack.c.h.b16 %v4828
        %v4913 = vunpack.c.l.b16 %v4829
        %v4914 = vunpack.c.h.b16 %v4829
        %v4915 = vunpack.c.l.b16 %v4830
        %v4916 = vunpack.c.h.b16 %v4830
        %v4917 = vunpack.c.l.b16 %v4831
        %v4918 = vunpack.c.h.b16 %v4831
        %v4919 = vunpack.c.l.b16 %v4832
        %v4920 = vunpack.c.h.b16 %v4832
        %v4921 = vunpack.c.l.b16 %v4833
        %v4922 = vunpack.c.h.b16 %v4833
        %v4923 = vunpack.c.l.b16 %v4834
        %v4924 = vunpack.c.h.b16 %v4834
        %v4925 = vunpack.c.l.b16 %v4835
        %v4926 = vunpack.c.h.b16 %v4835
        %v4927 = vunpack.c.l.b16 %v4836
        %v4928 = vunpack.c.h.b16 %v4836
        %v4929 = vunpack.c.l.b16 %v4837
        %v4930 = vunpack.c.h.b16 %v4837
        %v4931 = vunpack.c.l.b16 %v4838
        %v4932 = vunpack.c.h.b16 %v4838
        %v4933 = vunpack.c.l.b16 %v4839
        %v4934 = vunpack.c.h.b16 %v4839
        %v4935 = vunpack.c.l.b16 %v4840
        %v4936 = vunpack.c.h.b16 %v4840
        %v4937 = vunpack.c.l.b16 %v4841
        %v4938 = vunpack.c.h.b16 %v4841
        %v4939 = vunpack.c.l.b16 %v4842
        %v4940 = vunpack.c.h.b16 %v4842
        %v4941 = vunpack.c.l.b16 %v4843
        %v4942 = vunpack.c.h.b16 %v4843
        %v4943 = vunpack.c.l.b16 %v4844
        %v4944 = vunpack.c.h.b16 %v4844
        %v4945 = vunpack.c.l.b16 %v4845
        %v4946 = vunpack.c.h.b16 %v4845
        %v4947 = vunpack.c.l.b16 %v4846
        %v4948 = vunpack.c.h.b16 %v4846
        %v4949 = vunpack.c.l.b16 %v4847
        %v4950 = vunpack.c.h.b16 %v4847
        %v4951 = vunpack.c.l.b16 %v4848
        %v4952 = vunpack.c.h.b16 %v4848
        %v4953 = vunpack.c.l.b16 %v4849
        %v4954 = vunpack.c.h.b16 %v4849
        %v4955 = vunpack.c.l.b16 %v4850
        %v4956 = vunpack.c.h.b16 %v4850
        %v4957 = vunpack.c.l.b16 %v4851
        %v4958 = vunpack.c.h.b16 %v4851
        %v4959 = vunpack.c.l.b16 %v4852
        %v4960 = vunpack.c.h.b16 %v4852
        %v4961 = vpack.c.b16 %v4899, %v4897
        %v4962 = vpack.c.b16 %v4900, %v4898
        %v4963 = vpack.c.b16 %v4903, %v4901
        %v4964 = vpack.c.b16 %v4904, %v4902
        %v4965 = vpack.c.b16 %v4907, %v4905
        %v4966 = vpack.c.b16 %v4908, %v4906
        %v4967 = vpack.c.b16 %v4911, %v4909
        %v4968 = vpack.c.b16 %v4912, %v4910
        %v4969 = vpack.c.b16 %v4915, %v4913
        %v4970 = vpack.c.b16 %v4916, %v4914
        %v4971 = vpack.c.b16 %v4919, %v4917
        %v4972 = vpack.c.b16 %v4920, %v4918
        %v4973 = vpack.c.b16 %v4923, %v4921
        %v4974 = vpack.c.b16 %v4924, %v4922
        %v4975 = vpack.c.b16 %v4927, %v4925
        %v4976 = vpack.c.b16 %v4928, %v4926
        %v4977 = vpack.c.b16 %v4931, %v4929
        %v4978 = vpack.c.b16 %v4932, %v4930
        %v4979 = vpack.c.b16 %v4935, %v4933
        %v4980 = vpack.c.b16 %v4936, %v4934
        %v4981 = vpack.c.b16 %v4939, %v4937
        %v4982 = vpack.c.b16 %v4940, %v4938
        %v4983 = vpack.c.b16 %v4943, %v4941
        %v4984 = vpack.c.b16 %v4944, %v4942
        %v4985 = vpack.c.b16 %v4947, %v4945
        %v4986 = vpack.c.b16 %v4948, %v4946
        %v4987 = vpack.c.b16 %v4951, %v4949
        %v4988 = vpack.c.b16 %v4952, %v4950
        %v4989 = vpack.c.b16 %v4955, %v4953
        %v4990 = vpack.c.b16 %v4956, %v4954
        %v4991 = vpack.c.b16 %v4959, %v4957
        %v4992 = vpack.c.b16 %v4960, %v4958
        %5025 = vmatprep.subr.bf16.mxu0 %v4976
        %5026 = vmatpush1.bf16.msra.mxu0 %v4975
        %5027 = vmatprep.subr.bf16.mxu0 %v4974
        %5028 = vmatpush1.bf16.msra.mxu0 %v4973
        %5029 = vmatprep.subr.bf16.mxu0 %v4972
        %5030 = vmatpush1.bf16.msra.mxu0 %v4971
        %5031 = vmatprep.subr.bf16.mxu0 %v4970
        %5032 = vmatpush1.bf16.msra.mxu0 %v4969
        %5033 = vmatprep.subr.bf16.mxu0 %v4968
        %5034 = vmatpush1.bf16.msra.mxu0 %v4967
        %5035 = vmatprep.subr.bf16.mxu0 %v4966
        %5036 = vmatpush1.bf16.msra.mxu0 %v4965
        %5037 = vmatprep.subr.bf16.mxu0 %v4964
        %5038 = vmatpush1.bf16.msra.mxu0 %v4963
        %5039 = vmatprep.subr.bf16.mxu0 %v4962
        %5040 = vmatpush1.bf16.msra.mxu0 %v4961
        %5041 = vmatprep.subr.bf16.mxu0 %v4992
        %5042 = vmatpush2.bf16.msra.mxu0 %v4991
        %5043 = vmatprep.subr.bf16.mxu0 %v4990
        %5044 = vmatpush2.bf16.msra.mxu0 %v4989
        %5045 = vmatprep.subr.bf16.mxu0 %v4988
        %5046 = vmatpush2.bf16.msra.mxu0 %v4987
        %5047 = vmatprep.subr.bf16.mxu0 %v4986
        %5048 = vmatpush2.bf16.msra.mxu0 %v4985
        %5049 = vmatprep.subr.bf16.mxu0 %v4984
        %5050 = vmatpush2.bf16.msra.mxu0 %v4983
        %5051 = vmatprep.subr.bf16.mxu0 %v4982
        %5052 = vmatpush2.bf16.msra.mxu0 %v4981
        %5053 = vmatprep.subr.bf16.mxu0 %v4980
        %5054 = vmatpush2.bf16.msra.mxu0 %v4979
        %5055 = vmatprep.subr.bf16.mxu0 %v4978
        %5056 = vmatpush2.bf16.msra.mxu0 %v4977
        %5057 = vmatprep.mubr.bf16.mxu0 %v4812
        %5058 = vmatmul.mubr.bf16.gmra.mxu0 %v4811
        %v5059 = vpop.f32.mrf.mxu0
        %v5060 = vadd.f32 %v4858, %v5059
        %v5061 = vpop.f32.mrf.mxu0
        %v5062 = vadd.f32 %v4862, %v5061
        %v5063 = vpop.f32.mrf.mxu0
        %v5064 = vadd.f32 %v4858, %v5063
        %v5065 = vpop.f32.mrf.mxu0
        %v5066 = vadd.f32 %v4862, %v5065
        %5067 = vmatprep.mubr.bf16.mxu0 %v4814
        %5068 = vmatmul.mubr.bf16.gmra.mxu0 %v4813
        %v5069 = vpop.f32.mrf.mxu0
        %v5070 = vadd.f32 %v4858, %v5069
        %v5071 = vpop.f32.mrf.mxu0
        %v5072 = vadd.f32 %v4862, %v5071
        %v5073 = vpop.f32.mrf.mxu0
        %v5074 = vadd.f32 %v4858, %v5073
        %v5075 = vpop.f32.mrf.mxu0
        %v5076 = vadd.f32 %v4862, %v5075
        %5077 = vmatprep.mubr.bf16.mxu0 %v4816
        %5078 = vmatmul.mubr.bf16.gmra.mxu0 %v4815
        %v5079 = vpop.f32.mrf.mxu0
        %v5080 = vadd.f32 %v4858, %v5079
        %v5081 = vpop.f32.mrf.mxu0
        %v5082 = vadd.f32 %v4862, %v5081
        %v5083 = vpop.f32.mrf.mxu0
        %v5084 = vadd.f32 %v4858, %v5083
        %v5085 = vpop.f32.mrf.mxu0
        %v5086 = vadd.f32 %v4862, %v5085
        %5087 = vmatprep.mubr.bf16.mxu0 %v4818
        %5088 = vmatmul.mubr.bf16.gmra.mxu0 %v4817
        %v5089 = vpop.f32.mrf.mxu0
        %v5090 = vadd.f32 %v4858, %v5089
        %v5091 = vpop.f32.mrf.mxu0
        %v5092 = vadd.f32 %v4862, %v5091
        %v5093 = vpop.f32.mrf.mxu0
        %v5094 = vadd.f32 %v4858, %v5093
        %v5095 = vpop.f32.mrf.mxu0
        %v5096 = vadd.f32 %v4862, %v5095
        %5097 = vmatprep.mubr.bf16.mxu0 %v4820
        %5098 = vmatmul.mubr.bf16.gmra.mxu0 %v4819
        %v5099 = vpop.f32.mrf.mxu0
        %v5100 = vadd.f32 %v4858, %v5099
        %v5101 = vpop.f32.mrf.mxu0
        %v5102 = vadd.f32 %v4862, %v5101
        %v5103 = vpop.f32.mrf.mxu0
        %v5104 = vpop.f32.mrf.mxu0
        %5105 = vdwg.mxu0
        %v5106 = vadd.f32 %v1358, %v5060
        %v5107 = vadd.f32 %v1359, %v5062
        %v5108 = vadd.f32 %v1360, %v5064
        %v5109 = vadd.f32 %v1361, %v5066
        %v5110 = vadd.f32 %v1362, %v5070
        %v5111 = vadd.f32 %v1363, %v5072
        %v5112 = vadd.f32 %v1364, %v5074
        %v5113 = vadd.f32 %v1365, %v5076
        %v5114 = vadd.f32 %v1366, %v5080
        %v5115 = vadd.f32 %v1367, %v5082
        %v5116 = vadd.f32 %v1368, %v5084
        %v5117 = vadd.f32 %v1369, %v5086
        %v5118 = vadd.f32 %v1370, %v5090
        %v5119 = vadd.f32 %v1371, %v5092
        %v5120 = vadd.f32 %v1372, %v5094
        %v5121 = vadd.f32 %v1373, %v5096
        %v5122 = vadd.f32 %v1374, %v5100
        %v5123 = vadd.f32 %v1375, %v5102
        %v5124 = vld [vmem:[%s968] sm:$0x3]
        %v5125 = vld [vmem:[%s972] sm:$0x3]
        %v5126 = vadd.f32 %v5106, %v5107
        %5127 = vadd.xlane.f32.xlu0 %v5126
        %v5128 = vpop.xlane.xlu0 %5127
        %v5129 = vadd.f32 %v5108, %v5109
        %5130 = vadd.xlane.f32.xlu0 %v5129
        %v5131 = vpop.xlane.xlu0 %5130
        %v5132 = vadd.f32 %v5110, %v5111
        %5133 = vadd.xlane.f32.xlu0 %v5132
        %v5134 = vpop.xlane.xlu0 %5133
        %v5135 = vadd.f32 %v5112, %v5113
        %5136 = vadd.xlane.f32.xlu0 %v5135
        %v5137 = vpop.xlane.xlu0 %5136
        %v5138 = vadd.f32 %v5114, %v5115
        %5139 = vadd.xlane.f32.xlu0 %v5138
        %v5140 = vpop.xlane.xlu0 %5139
        %v5141 = vadd.f32 %v5116, %v5117
        %5142 = vadd.xlane.f32.xlu0 %v5141
        %v5143 = vpop.xlane.xlu0 %5142
        %v5144 = vadd.f32 %v5118, %v5119
        %5145 = vadd.xlane.f32.xlu0 %v5144
        %v5146 = vpop.xlane.xlu0 %5145
        %v5147 = vadd.f32 %v5120, %v5121
        %5148 = vadd.xlane.f32.xlu0 %v5147
        %v5149 = vpop.xlane.xlu0 %5148
        %vm5150 = vcmask 1043456
        %v5151 = vsel %vm5150, %v5122, 0.0
        %v5152 = vsel %vm5150, %v5123, 0.0
        %v5153 = vadd.f32 %v5151, %v5152
        %5154 = vadd.xlane.f32.xlu0 %v5153
        %v5155 = vpop.xlane.xlu0 %5154
        %v5156 = vmul.f32 %v5128, 0.005
        %v5157 = vmul.f32 %v5131, 0.005
        %v5158 = vmul.f32 %v5134, 0.005
        %v5159 = vmul.f32 %v5137, 0.005
        %v5160 = vmul.f32 %v5140, 0.005
        %v5161 = vmul.f32 %v5143, 0.005
        %v5162 = vmul.f32 %v5146, 0.005
        %v5163 = vmul.f32 %v5149, 0.005
        %v5164 = vmul.f32 %v5155, 0.005
        %v5165 = vsub.f32 %v5106, %v5156
        %v5166 = vsub.f32 %v5107, %v5156
        %v5167 = vsub.f32 %v5108, %v5157
        %v5168 = vsub.f32 %v5109, %v5157
        %v5169 = vsub.f32 %v5110, %v5158
        %v5170 = vsub.f32 %v5111, %v5158
        %v5171 = vsub.f32 %v5112, %v5159
        %v5172 = vsub.f32 %v5113, %v5159
        %v5173 = vsub.f32 %v5114, %v5160
        %v5174 = vsub.f32 %v5115, %v5160
        %v5175 = vsub.f32 %v5116, %v5161
        %v5176 = vsub.f32 %v5117, %v5161
        %v5177 = vsub.f32 %v5118, %v5162
        %v5178 = vsub.f32 %v5119, %v5162
        %v5179 = vsub.f32 %v5120, %v5163
        %v5180 = vsub.f32 %v5121, %v5163
        %v5181 = vsub.f32 %v5122, %v5164
        %v5182 = vsub.f32 %v5123, %v5164
        %v5183 = vmul.f32 %v5165, %v1383
        %v5184 = vmul.f32 %v5166, %v1384
        %v5185 = vmul.f32 %v5167, %v1383
        %v5186 = vmul.f32 %v5168, %v1384
        %v5187 = vmul.f32 %v5169, %v1383
        %v5188 = vmul.f32 %v5170, %v1384
        %v5189 = vmul.f32 %v5171, %v1383
        %v5190 = vmul.f32 %v5172, %v1384
        %v5191 = vmul.f32 %v5173, %v1383
        %v5192 = vmul.f32 %v5174, %v1384
        %v5193 = vmul.f32 %v5175, %v1383
        %v5194 = vmul.f32 %v5176, %v1384
        %v5195 = vmul.f32 %v5177, %v1383
        %v5196 = vmul.f32 %v5178, %v1384
        %v5197 = vmul.f32 %v5179, %v1383
        %v5198 = vmul.f32 %v5180, %v1384
        %v5199 = vmul.f32 %v5181, %v1383
        %v5200 = vmul.f32 %v5182, %v1384
        %v5201 = vmul.f32 %v5183, %v5183
        %v5202 = vmul.f32 %v5184, %v5184
        %v5203 = vmul.f32 %v5185, %v5185
        %v5204 = vmul.f32 %v5186, %v5186
        %v5205 = vmul.f32 %v5187, %v5187
        %v5206 = vmul.f32 %v5188, %v5188
        %v5207 = vmul.f32 %v5189, %v5189
        %v5208 = vmul.f32 %v5190, %v5190
        %v5209 = vmul.f32 %v5191, %v5191
        %v5210 = vmul.f32 %v5192, %v5192
        %v5211 = vmul.f32 %v5193, %v5193
        %v5212 = vmul.f32 %v5194, %v5194
        %v5213 = vmul.f32 %v5195, %v5195
        %v5214 = vmul.f32 %v5196, %v5196
        %v5215 = vmul.f32 %v5197, %v5197
        %v5216 = vmul.f32 %v5198, %v5198
        %v5217 = vmul.f32 %v5199, %v5199
        %v5218 = vmul.f32 %v5200, %v5200
        %v5219 = vadd.f32 %v5201, %v5202
        %5220 = vadd.xlane.f32.xlu0 %v5219
        %v5221 = vpop.xlane.xlu0 %5220
        %v5222 = vadd.f32 %v5203, %v5204
        %5223 = vadd.xlane.f32.xlu0 %v5222
        %v5224 = vpop.xlane.xlu0 %5223
        %v5225 = vadd.f32 %v5205, %v5206
        %5226 = vadd.xlane.f32.xlu0 %v5225
        %v5227 = vpop.xlane.xlu0 %5226
        %v5228 = vadd.f32 %v5207, %v5208
        %5229 = vadd.xlane.f32.xlu0 %v5228
        %v5230 = vpop.xlane.xlu0 %5229
        %v5231 = vadd.f32 %v5209, %v5210
        %5232 = vadd.xlane.f32.xlu0 %v5231
        %v5233 = vpop.xlane.xlu0 %5232
        %v5234 = vadd.f32 %v5211, %v5212
        %5235 = vadd.xlane.f32.xlu0 %v5234
        %v5236 = vpop.xlane.xlu0 %5235
        %v5237 = vadd.f32 %v5213, %v5214
        %5238 = vadd.xlane.f32.xlu0 %v5237
        %v5239 = vpop.xlane.xlu0 %5238
        %v5240 = vadd.f32 %v5215, %v5216
        %5241 = vadd.xlane.f32.xlu0 %v5240
        %v5242 = vpop.xlane.xlu0 %5241
        %v5243 = vsel %vm5150, %v5217, 0.0
        %v5244 = vsel %vm5150, %v5218, 0.0
        %v5245 = vadd.f32 %v5243, %v5244
        %5246 = vadd.xlane.f32.xlu0 %v5245
        %v5247 = vpop.xlane.xlu0 %5246
        %v5248 = vmul.f32 %v5221, 0.005
        %v5249 = vmul.f32 %v5224, 0.005
        %v5250 = vmul.f32 %v5227, 0.005
        %v5251 = vmul.f32 %v5230, 0.005
        %v5252 = vmul.f32 %v5233, 0.005
        %v5253 = vmul.f32 %v5236, 0.005
        %v5254 = vmul.f32 %v5239, 0.005
        %v5255 = vmul.f32 %v5242, 0.005
        %v5256 = vmul.f32 %v5247, 0.005
        %v5257 = vadd.f32 %v5248, 1e-05
        %v5258 = vadd.f32 %v5249, 1e-05
        %v5259 = vadd.f32 %v5250, 1e-05
        %v5260 = vadd.f32 %v5251, 1e-05
        %v5261 = vadd.f32 %v5252, 1e-05
        %v5262 = vadd.f32 %v5253, 1e-05
        %v5263 = vadd.f32 %v5254, 1e-05
        %v5264 = vadd.f32 %v5255, 1e-05
        %v5265 = vadd.f32 %v5256, 1e-05
        %v5266 = vrsqrt.pop %v5257
        %v5267 = vrsqrt.pop %v5258
        %v5268 = vrsqrt.pop %v5259
        %v5269 = vrsqrt.pop %v5260
        %v5270 = vrsqrt.pop %v5261
        %v5271 = vrsqrt.pop %v5262
        %v5272 = vrsqrt.pop %v5263
        %v5273 = vrsqrt.pop %v5264
        %v5274 = vrsqrt.pop %v5265
        %v5275 = vmul.f32 %v5183, %v5266
        %v5276 = vmul.f32 %v5184, %v5266
        %v5277 = vmul.f32 %v5185, %v5267
        %v5278 = vmul.f32 %v5186, %v5267
        %v5279 = vmul.f32 %v5187, %v5268
        %v5280 = vmul.f32 %v5188, %v5268
        %v5281 = vmul.f32 %v5189, %v5269
        %v5282 = vmul.f32 %v5190, %v5269
        %v5283 = vmul.f32 %v5191, %v5270
        %v5284 = vmul.f32 %v5192, %v5270
        %v5285 = vmul.f32 %v5193, %v5271
        %v5286 = vmul.f32 %v5194, %v5271
        %v5287 = vmul.f32 %v5195, %v5272
        %v5288 = vmul.f32 %v5196, %v5272
        %v5289 = vmul.f32 %v5197, %v5273
        %v5290 = vmul.f32 %v5198, %v5273
        %v5291 = vmul.f32 %v5199, %v5274
        %v5292 = vmul.f32 %v5200, %v5274
        %v5294 = vlaneseq
        %v5295 = vshrl.u32 %v5294, 7
        %v5296 = vsub.s32 0, %v5295
        %v5297 = vrot.slane %v5124, %v5296
        %v5298 = vlaneseq
        %v5299 = vshrl.u32 %v5298, 7
        %v5300 = vsub.s32 1, %v5299
        %v5301 = vrot.slane %v5124, %v5300
        %v5304 = vmul.f32 %v5275, %v5297
        %v5305 = vmul.f32 %v5276, %v5301
        %v5306 = vmul.f32 %v5277, %v5297
        %v5307 = vmul.f32 %v5278, %v5301
        %v5308 = vmul.f32 %v5279, %v5297
        %v5309 = vmul.f32 %v5280, %v5301
        %v5310 = vmul.f32 %v5281, %v5297
        %v5311 = vmul.f32 %v5282, %v5301
        %v5312 = vmul.f32 %v5283, %v5297
        %v5313 = vmul.f32 %v5284, %v5301
        %v5314 = vmul.f32 %v5285, %v5297
        %v5315 = vmul.f32 %v5286, %v5301
        %v5316 = vmul.f32 %v5287, %v5297
        %v5317 = vmul.f32 %v5288, %v5301
        %v5318 = vmul.f32 %v5289, %v5297
        %v5319 = vmul.f32 %v5290, %v5301
        %v5320 = vmul.f32 %v5291, %v5297
        %v5321 = vmul.f32 %v5292, %v5301
        %v5323 = vlaneseq
        %v5324 = vshrl.u32 %v5323, 7
        %v5325 = vsub.s32 0, %v5324
        %v5326 = vrot.slane %v5125, %v5325
        %v5327 = vlaneseq
        %v5328 = vshrl.u32 %v5327, 7
        %v5329 = vsub.s32 1, %v5328
        %v5330 = vrot.slane %v5125, %v5329
        %v5333 = vadd.f32 %v5304, %v5326
        %v5334 = vadd.f32 %v5305, %v5330
        %v5335 = vadd.f32 %v5306, %v5326
        %v5336 = vadd.f32 %v5307, %v5330
        %v5337 = vadd.f32 %v5308, %v5326
        %v5338 = vadd.f32 %v5309, %v5330
        %v5339 = vadd.f32 %v5310, %v5326
        %v5340 = vadd.f32 %v5311, %v5330
        %v5341 = vadd.f32 %v5312, %v5326
        %v5342 = vadd.f32 %v5313, %v5330
        %v5343 = vadd.f32 %v5314, %v5326
        %v5344 = vadd.f32 %v5315, %v5330
        %v5345 = vadd.f32 %v5316, %v5326
        %v5346 = vadd.f32 %v5317, %v5330
        %v5347 = vadd.f32 %v5318, %v5326
        %v5348 = vadd.f32 %v5319, %v5330
        %v5349 = vadd.f32 %v5320, %v5326
        %v5350 = vadd.f32 %v5321, %v5330
        %v5351 = vpack.c.bf16 %v5335, %v5333
        %v5352 = vpack.c.bf16 %v5336, %v5334
        %v5353 = vpack.c.bf16 %v5339, %v5337
        %v5354 = vpack.c.bf16 %v5340, %v5338
        %v5355 = vpack.c.bf16 %v5343, %v5341
        %v5356 = vpack.c.bf16 %v5344, %v5342
        %v5357 = vpack.c.bf16 %v5347, %v5345
        %v5358 = vpack.c.bf16 %v5348, %v5346
        %v5359 = vpack.c.bf16 %v5349, %v5349
        %v5360 = vpack.c.bf16 %v5350, %v5350
        %v5361 = vld [vmem:[%s817] sm:$0xff]
        %v5362 = vld [vmem:[%s817 + $0x8] sm:$0xff]
        %v5363 = vld [vmem:[%s817 + $0x10] sm:$0xff]
        %v5364 = vld [vmem:[%s817 + $0x18] sm:$0xf]
        %v5365 = vld [vmem:[%s817 + $0x1c] sm:$0xff]
        %v5366 = vld [vmem:[%s817 + $0x24] sm:$0xff]
        %v5367 = vld [vmem:[%s817 + $0x2c] sm:$0xff]
        %v5368 = vld [vmem:[%s817 + $0x34] sm:$0xf]
        %v5369 = vld [vmem:[%s817 + $0x38] sm:$0xff]
        %v5370 = vld [vmem:[%s817 + $0x40] sm:$0xff]
        %v5371 = vld [vmem:[%s817 + $0x48] sm:$0xff]
        %v5372 = vld [vmem:[%s817 + $0x50] sm:$0xf]
        %v5373 = vld [vmem:[%s817 + $0x54] sm:$0xff]
        %v5374 = vld [vmem:[%s817 + $0x5c] sm:$0xff]
        %v5375 = vld [vmem:[%s817 + $0x64] sm:$0xff]
        %v5376 = vld [vmem:[%s817 + $0x6c] sm:$0xf]
        %v5377 = vld [vmem:[%s817 + $0x70] sm:$0xff]
        %v5378 = vld [vmem:[%s817 + $0x78] sm:$0xff]
        %v5379 = vld [vmem:[%s817 + $0x80] sm:$0xff]
        %v5380 = vld [vmem:[%s817 + $0x88] sm:$0xf]
        %v5381 = vld [vmem:[%s817 + $0x8c] sm:$0xff]
        %v5382 = vld [vmem:[%s817 + $0x94] sm:$0xff]
        %v5383 = vld [vmem:[%s817 + $0x9c] sm:$0xff]
        %v5384 = vld [vmem:[%s817 + $0xa4] sm:$0xf]
        %v5385 = vld [vmem:[%s817 + $0xa8] sm:$0xff]
        %v5386 = vld [vmem:[%s817 + $0xb0] sm:$0xff]
        %v5387 = vld [vmem:[%s817 + $0xb8] sm:$0xff]
        %v5388 = vld [vmem:[%s817 + $0xc0] sm:$0xf]
        %v5389 = vld [vmem:[%s817 + $0xc4] sm:$0xff]
        %v5390 = vld [vmem:[%s817 + $0xcc] sm:$0xff]
        %v5391 = vld [vmem:[%s817 + $0xd4] sm:$0xff]
        %v5392 = vld [vmem:[%s817 + $0xdc] sm:$0xf]
        %v5393 = vld [vmem:[%s817 + $0xe0] sm:$0xff]
        %v5394 = vld [vmem:[%s817 + $0xe8] sm:$0xff]
        %v5395 = vld [vmem:[%s817 + $0xf0] sm:$0xff]
        %v5396 = vld [vmem:[%s817 + $0xf8] sm:$0xf]
        %v5397 = vld [vmem:[%s817 + $0xfc] sm:$0xff]
        %v5398 = vld [vmem:[%s817 + $0x104] sm:$0xff]
        %v5399 = vld [vmem:[%s817 + $0x10c] sm:$0xff]
        %v5400 = vld [vmem:[%s817 + $0x114] sm:$0xf]
        %v5401 = vld [vmem:[%s817 + $0x118] sm:$0xff]
        %v5402 = vld [vmem:[%s817 + $0x120] sm:$0xff]
        %v5403 = vld [vmem:[%s817 + $0x128] sm:$0xff]
        %v5404 = vld [vmem:[%s817 + $0x130] sm:$0xf]
        %v5405 = vld [vmem:[%s817 + $0x134] sm:$0xff]
        %v5406 = vld [vmem:[%s817 + $0x13c] sm:$0xff]
        %v5407 = vld [vmem:[%s817 + $0x144] sm:$0xff]
        %v5408 = vld [vmem:[%s817 + $0x14c] sm:$0xf]
        %v5409 = vld [vmem:[%s817 + $0x150] sm:$0xff]
        %v5410 = vld [vmem:[%s817 + $0x158] sm:$0xff]
        %v5411 = vld [vmem:[%s817 + $0x160] sm:$0xff]
        %v5412 = vld [vmem:[%s817 + $0x168] sm:$0xf]
        %v5413 = vld [vmem:[%s817 + $0x16c] sm:$0xff]
        %v5414 = vld [vmem:[%s817 + $0x174] sm:$0xff]
        %v5415 = vld [vmem:[%s817 + $0x17c] sm:$0xff]
        %v5416 = vld [vmem:[%s817 + $0x184] sm:$0xf]
        %v5417 = vld [vmem:[%s817 + $0x188] sm:$0xff]
        %v5418 = vld [vmem:[%s817 + $0x190] sm:$0xff]
        %v5419 = vld [vmem:[%s817 + $0x198] sm:$0xff]
        %v5420 = vld [vmem:[%s817 + $0x1a0] sm:$0xf]
        %v5421 = vld [vmem:[%s817 + $0x1a4] sm:$0xff]
        %v5422 = vld [vmem:[%s817 + $0x1ac] sm:$0xff]
        %v5423 = vld [vmem:[%s817 + $0x1b4] sm:$0xff]
        %v5424 = vld [vmem:[%s817 + $0x1bc] sm:$0xf]
        %v5425 = vld [vmem:[%s817 + $0x1c0] sm:$0xff]
        %v5426 = vld [vmem:[%s817 + $0x1c8] sm:$0xff]
        %v5427 = vld [vmem:[%s817 + $0x1d0] sm:$0xff]
        %v5428 = vld [vmem:[%s817 + $0x1d8] sm:$0xf]
        %v5429 = vld [vmem:[%s817 + $0x1dc] sm:$0xff]
        %v5430 = vld [vmem:[%s817 + $0x1e4] sm:$0xff]
        %v5431 = vld [vmem:[%s817 + $0x1ec] sm:$0xff]
        %v5432 = vld [vmem:[%s817 + $0x1f4] sm:$0xf]
        %v5433 = vld [vmem:[%s817 + $0x1f8] sm:$0xff]
        %v5434 = vld [vmem:[%s817 + $0x200] sm:$0xff]
        %v5435 = vld [vmem:[%s817 + $0x208] sm:$0xff]
        %v5436 = vld [vmem:[%s817 + $0x210] sm:$0xf]
        %v5437 = vld [vmem:[%s817 + $0x214] sm:$0xff]
        %v5438 = vld [vmem:[%s817 + $0x21c] sm:$0xff]
        %v5439 = vld [vmem:[%s817 + $0x224] sm:$0xff]
        %v5440 = vld [vmem:[%s817 + $0x22c] sm:$0xf]
        %v5441 = vld [vmem:[%s817 + $0x230] sm:$0xff]
        %v5442 = vld [vmem:[%s817 + $0x238] sm:$0xff]
        %v5443 = vld [vmem:[%s817 + $0x240] sm:$0xff]
        %v5444 = vld [vmem:[%s817 + $0x248] sm:$0xf]
        %v5445 = vld [vmem:[%s817 + $0x24c] sm:$0xff]
        %v5446 = vld [vmem:[%s817 + $0x254] sm:$0xff]
        %v5447 = vld [vmem:[%s817 + $0x25c] sm:$0xff]
        %v5448 = vld [vmem:[%s817 + $0x264] sm:$0xf]
        %v5449 = vld [vmem:[%s817 + $0x268] sm:$0xff]
        %v5450 = vld [vmem:[%s817 + $0x270] sm:$0xff]
        %v5451 = vld [vmem:[%s817 + $0x278] sm:$0xff]
        %v5452 = vld [vmem:[%s817 + $0x280] sm:$0xf]
        %v5453 = vld [vmem:[%s817 + $0x284] sm:$0xff]
        %v5454 = vld [vmem:[%s817 + $0x28c] sm:$0xff]
        %v5455 = vld [vmem:[%s817 + $0x294] sm:$0xff]
        %v5456 = vld [vmem:[%s817 + $0x29c] sm:$0xf]
        %v5457 = vld [vmem:[%s817 + $0x2a0] sm:$0xff]
        %v5458 = vld [vmem:[%s817 + $0x2a8] sm:$0xff]
        %v5459 = vld [vmem:[%s817 + $0x2b0] sm:$0xff]
        %v5460 = vld [vmem:[%s817 + $0x2b8] sm:$0xf]
        %v5461 = vld [vmem:[%s817 + $0x2bc] sm:$0xff]
        %v5462 = vld [vmem:[%s817 + $0x2c4] sm:$0xff]
        %v5463 = vld [vmem:[%s817 + $0x2cc] sm:$0xff]
        %v5464 = vld [vmem:[%s817 + $0x2d4] sm:$0xf]
        %v5465 = vld [vmem:[%s817 + $0x2d8] sm:$0xff]
        %v5466 = vld [vmem:[%s817 + $0x2e0] sm:$0xff]
        %v5467 = vld [vmem:[%s817 + $0x2e8] sm:$0xff]
        %v5468 = vld [vmem:[%s817 + $0x2f0] sm:$0xf]
        %v5469 = vld [vmem:[%s817 + $0x2f4] sm:$0xff]
        %v5470 = vld [vmem:[%s817 + $0x2fc] sm:$0xff]
        %v5471 = vld [vmem:[%s817 + $0x304] sm:$0xff]
        %v5472 = vld [vmem:[%s817 + $0x30c] sm:$0xf]
        %v5473 = vld [vmem:[%s817 + $0x310] sm:$0xff]
        %v5474 = vld [vmem:[%s817 + $0x318] sm:$0xff]
        %v5475 = vld [vmem:[%s817 + $0x320] sm:$0xff]
        %v5476 = vld [vmem:[%s817 + $0x328] sm:$0xf]
        %v5477 = vld [vmem:[%s817 + $0x32c] sm:$0xff]
        %v5478 = vld [vmem:[%s817 + $0x334] sm:$0xff]
        %v5479 = vld [vmem:[%s817 + $0x33c] sm:$0xff]
        %v5480 = vld [vmem:[%s817 + $0x344] sm:$0xf]
        %v5481 = vld [vmem:[%s817 + $0x348] sm:$0xff]
        %v5482 = vld [vmem:[%s817 + $0x350] sm:$0xff]
        %v5483 = vld [vmem:[%s817 + $0x358] sm:$0xff]
        %v5484 = vld [vmem:[%s817 + $0x360] sm:$0xf]
        %v5485 = vld [vmem:[%s817 + $0x364] sm:$0xff]
        %v5486 = vld [vmem:[%s817 + $0x36c] sm:$0xff]
        %v5487 = vld [vmem:[%s817 + $0x374] sm:$0xff]
        %v5488 = vld [vmem:[%s817 + $0x37c] sm:$0xf]
        %v5489 = vld [vmem:[%s976] sm:$0xff]
        %v5491 = vlaneseq
        %v5492 = vshrl.u32 %v5491, 7
        %v5493 = vsub.s32 0, %v5492
        %v5494 = vrot.slane %v5489, %v5493
        %v5495 = vlaneseq
        %v5496 = vshrl.u32 %v5495, 7
        %v5497 = vsub.s32 1, %v5496
        %v5498 = vrot.slane %v5489, %v5497
        %v5499 = vlaneseq
        %v5500 = vshrl.u32 %v5499, 7
        %v5501 = vsub.s32 2, %v5500
        %v5502 = vrot.slane %v5489, %v5501
        %v5503 = vlaneseq
        %v5504 = vshrl.u32 %v5503, 7
        %v5505 = vsub.s32 3, %v5504
        %v5506 = vrot.slane %v5489, %v5505
        %v5507 = vlaneseq
        %v5508 = vshrl.u32 %v5507, 7
        %v5509 = vsub.s32 4, %v5508
        %v5510 = vrot.slane %v5489, %v5509
        %v5511 = vlaneseq
        %v5512 = vshrl.u32 %v5511, 7
        %v5513 = vsub.s32 5, %v5512
        %v5514 = vrot.slane %v5489, %v5513
        %v5515 = vlaneseq
        %v5516 = vshrl.u32 %v5515, 7
        %v5517 = vsub.s32 6, %v5516
        %v5518 = vrot.slane %v5489, %v5517
        %v5654 = vunpack.c.l.b16 %v5361
        %v5655 = vunpack.c.h.b16 %v5361
        %v5656 = vunpack.c.l.b16 %v5362
        %v5657 = vunpack.c.h.b16 %v5362
        %v5658 = vunpack.c.l.b16 %v5363
        %v5659 = vunpack.c.h.b16 %v5363
        %v5660 = vunpack.c.l.b16 %v5364
        %v5661 = vunpack.c.l.b16 %v5365
        %v5662 = vunpack.c.h.b16 %v5365
        %v5663 = vunpack.c.l.b16 %v5366
        %v5664 = vunpack.c.h.b16 %v5366
        %v5665 = vunpack.c.l.b16 %v5367
        %v5666 = vunpack.c.h.b16 %v5367
        %v5667 = vunpack.c.l.b16 %v5368
        %v5668 = vunpack.c.l.b16 %v5369
        %v5669 = vunpack.c.h.b16 %v5369
        %v5670 = vunpack.c.l.b16 %v5370
        %v5671 = vunpack.c.h.b16 %v5370
        %v5672 = vunpack.c.l.b16 %v5371
        %v5673 = vunpack.c.h.b16 %v5371
        %v5674 = vunpack.c.l.b16 %v5372
        %v5675 = vunpack.c.l.b16 %v5373
        %v5676 = vunpack.c.h.b16 %v5373
        %v5677 = vunpack.c.l.b16 %v5374
        %v5678 = vunpack.c.h.b16 %v5374
        %v5679 = vunpack.c.l.b16 %v5375
        %v5680 = vunpack.c.h.b16 %v5375
        %v5681 = vunpack.c.l.b16 %v5376
        %v5682 = vunpack.c.l.b16 %v5377
        %v5683 = vunpack.c.h.b16 %v5377
        %v5684 = vunpack.c.l.b16 %v5378
        %v5685 = vunpack.c.h.b16 %v5378
        %v5686 = vunpack.c.l.b16 %v5379
        %v5687 = vunpack.c.h.b16 %v5379
        %v5688 = vunpack.c.l.b16 %v5380
        %v5689 = vunpack.c.l.b16 %v5381
        %v5690 = vunpack.c.h.b16 %v5381
        %v5691 = vunpack.c.l.b16 %v5382
        %v5692 = vunpack.c.h.b16 %v5382
        %v5693 = vunpack.c.l.b16 %v5383
        %v5694 = vunpack.c.h.b16 %v5383
        %v5695 = vunpack.c.l.b16 %v5384
        %v5696 = vunpack.c.l.b16 %v5385
        %v5697 = vunpack.c.h.b16 %v5385
        %v5698 = vunpack.c.l.b16 %v5386
        %v5699 = vunpack.c.h.b16 %v5386
        %v5700 = vunpack.c.l.b16 %v5387
        %v5701 = vunpack.c.h.b16 %v5387
        %v5702 = vunpack.c.l.b16 %v5388
        %v5703 = vunpack.c.l.b16 %v5389
        %v5704 = vunpack.c.h.b16 %v5389
        %v5705 = vunpack.c.l.b16 %v5390
        %v5706 = vunpack.c.h.b16 %v5390
        %v5707 = vunpack.c.l.b16 %v5391
        %v5708 = vunpack.c.h.b16 %v5391
        %v5709 = vunpack.c.l.b16 %v5392
        %v5710 = vunpack.c.l.b16 %v5393
        %v5711 = vunpack.c.h.b16 %v5393
        %v5712 = vunpack.c.l.b16 %v5394
        %v5713 = vunpack.c.h.b16 %v5394
        %v5714 = vunpack.c.l.b16 %v5395
        %v5715 = vunpack.c.h.b16 %v5395
        %v5716 = vunpack.c.l.b16 %v5396
        %v5717 = vunpack.c.l.b16 %v5397
        %v5718 = vunpack.c.h.b16 %v5397
        %v5719 = vunpack.c.l.b16 %v5398
        %v5720 = vunpack.c.h.b16 %v5398
        %v5721 = vunpack.c.l.b16 %v5399
        %v5722 = vunpack.c.h.b16 %v5399
        %v5723 = vunpack.c.l.b16 %v5400
        %v5724 = vunpack.c.l.b16 %v5401
        %v5725 = vunpack.c.h.b16 %v5401
        %v5726 = vunpack.c.l.b16 %v5402
        %v5727 = vunpack.c.h.b16 %v5402
        %v5728 = vunpack.c.l.b16 %v5403
        %v5729 = vunpack.c.h.b16 %v5403
        %v5730 = vunpack.c.l.b16 %v5404
        %v5731 = vunpack.c.l.b16 %v5405
        %v5732 = vunpack.c.h.b16 %v5405
        %v5733 = vunpack.c.l.b16 %v5406
        %v5734 = vunpack.c.h.b16 %v5406
        %v5735 = vunpack.c.l.b16 %v5407
        %v5736 = vunpack.c.h.b16 %v5407
        %v5737 = vunpack.c.l.b16 %v5408
        %v5738 = vunpack.c.l.b16 %v5409
        %v5739 = vunpack.c.h.b16 %v5409
        %v5740 = vunpack.c.l.b16 %v5410
        %v5741 = vunpack.c.h.b16 %v5410
        %v5742 = vunpack.c.l.b16 %v5411
        %v5743 = vunpack.c.h.b16 %v5411
        %v5744 = vunpack.c.l.b16 %v5412
        %v5745 = vunpack.c.l.b16 %v5413
        %v5746 = vunpack.c.h.b16 %v5413
        %v5747 = vunpack.c.l.b16 %v5414
        %v5748 = vunpack.c.h.b16 %v5414
        %v5749 = vunpack.c.l.b16 %v5415
        %v5750 = vunpack.c.h.b16 %v5415
        %v5751 = vunpack.c.l.b16 %v5416
        %v5752 = vunpack.c.l.b16 %v5417
        %v5753 = vunpack.c.h.b16 %v5417
        %v5754 = vunpack.c.l.b16 %v5418
        %v5755 = vunpack.c.h.b16 %v5418
        %v5756 = vunpack.c.l.b16 %v5419
        %v5757 = vunpack.c.h.b16 %v5419
        %v5758 = vunpack.c.l.b16 %v5420
        %v5759 = vunpack.c.l.b16 %v5421
        %v5760 = vunpack.c.h.b16 %v5421
        %v5761 = vunpack.c.l.b16 %v5422
        %v5762 = vunpack.c.h.b16 %v5422
        %v5763 = vunpack.c.l.b16 %v5423
        %v5764 = vunpack.c.h.b16 %v5423
        %v5765 = vunpack.c.l.b16 %v5424
        %v5766 = vunpack.c.l.b16 %v5425
        %v5767 = vunpack.c.h.b16 %v5425
        %v5768 = vunpack.c.l.b16 %v5426
        %v5769 = vunpack.c.h.b16 %v5426
        %v5770 = vunpack.c.l.b16 %v5427
        %v5771 = vunpack.c.h.b16 %v5427
        %v5772 = vunpack.c.l.b16 %v5428
        %v5773 = vunpack.c.l.b16 %v5429
        %v5774 = vunpack.c.h.b16 %v5429
        %v5775 = vunpack.c.l.b16 %v5430
        %v5776 = vunpack.c.h.b16 %v5430
        %v5777 = vunpack.c.l.b16 %v5431
        %v5778 = vunpack.c.h.b16 %v5431
        %v5779 = vunpack.c.l.b16 %v5432
        %v5780 = vunpack.c.l.b16 %v5433
        %v5781 = vunpack.c.h.b16 %v5433
        %v5782 = vunpack.c.l.b16 %v5434
        %v5783 = vunpack.c.h.b16 %v5434
        %v5784 = vunpack.c.l.b16 %v5435
        %v5785 = vunpack.c.h.b16 %v5435
        %v5786 = vunpack.c.l.b16 %v5436
        %v5787 = vunpack.c.l.b16 %v5437
        %v5788 = vunpack.c.h.b16 %v5437
        %v5789 = vunpack.c.l.b16 %v5438
        %v5790 = vunpack.c.h.b16 %v5438
        %v5791 = vunpack.c.l.b16 %v5439
        %v5792 = vunpack.c.h.b16 %v5439
        %v5793 = vunpack.c.l.b16 %v5440
        %v5794 = vunpack.c.l.b16 %v5441
        %v5795 = vunpack.c.h.b16 %v5441
        %v5796 = vunpack.c.l.b16 %v5442
        %v5797 = vunpack.c.h.b16 %v5442
        %v5798 = vunpack.c.l.b16 %v5443
        %v5799 = vunpack.c.h.b16 %v5443
        %v5800 = vunpack.c.l.b16 %v5444
        %v5801 = vunpack.c.l.b16 %v5445
        %v5802 = vunpack.c.h.b16 %v5445
        %v5803 = vunpack.c.l.b16 %v5446
        %v5804 = vunpack.c.h.b16 %v5446
        %v5805 = vunpack.c.l.b16 %v5447
        %v5806 = vunpack.c.h.b16 %v5447
        %v5807 = vunpack.c.l.b16 %v5448
        %v5808 = vunpack.c.l.b16 %v5449
        %v5809 = vunpack.c.h.b16 %v5449
        %v5810 = vunpack.c.l.b16 %v5450
        %v5811 = vunpack.c.h.b16 %v5450
        %v5812 = vunpack.c.l.b16 %v5451
        %v5813 = vunpack.c.h.b16 %v5451
        %v5814 = vunpack.c.l.b16 %v5452
        %v5815 = vunpack.c.l.b16 %v5453
        %v5816 = vunpack.c.h.b16 %v5453
        %v5817 = vunpack.c.l.b16 %v5454
        %v5818 = vunpack.c.h.b16 %v5454
        %v5819 = vunpack.c.l.b16 %v5455
        %v5820 = vunpack.c.h.b16 %v5455
        %v5821 = vunpack.c.l.b16 %v5456
        %v5822 = vunpack.c.l.b16 %v5457
        %v5823 = vunpack.c.h.b16 %v5457
        %v5824 = vunpack.c.l.b16 %v5458
        %v5825 = vunpack.c.h.b16 %v5458
        %v5826 = vunpack.c.l.b16 %v5459
        %v5827 = vunpack.c.h.b16 %v5459
        %v5828 = vunpack.c.l.b16 %v5460
        %v5829 = vunpack.c.l.b16 %v5461
        %v5830 = vunpack.c.h.b16 %v5461
        %v5831 = vunpack.c.l.b16 %v5462
        %v5832 = vunpack.c.h.b16 %v5462
        %v5833 = vunpack.c.l.b16 %v5463
        %v5834 = vunpack.c.h.b16 %v5463
        %v5835 = vunpack.c.l.b16 %v5464
        %v5836 = vunpack.c.l.b16 %v5465
        %v5837 = vunpack.c.h.b16 %v5465
        %v5838 = vunpack.c.l.b16 %v5466
        %v5839 = vunpack.c.h.b16 %v5466
        %v5840 = vunpack.c.l.b16 %v5467
        %v5841 = vunpack.c.h.b16 %v5467
        %v5842 = vunpack.c.l.b16 %v5468
        %v5843 = vunpack.c.l.b16 %v5469
        %v5844 = vunpack.c.h.b16 %v5469
        %v5845 = vunpack.c.l.b16 %v5470
        %v5846 = vunpack.c.h.b16 %v5470
        %v5847 = vunpack.c.l.b16 %v5471
        %v5848 = vunpack.c.h.b16 %v5471
        %v5849 = vunpack.c.l.b16 %v5472
        %v5850 = vunpack.c.l.b16 %v5473
        %v5851 = vunpack.c.h.b16 %v5473
        %v5852 = vunpack.c.l.b16 %v5474
        %v5853 = vunpack.c.h.b16 %v5474
        %v5854 = vunpack.c.l.b16 %v5475
        %v5855 = vunpack.c.h.b16 %v5475
        %v5856 = vunpack.c.l.b16 %v5476
        %v5857 = vunpack.c.l.b16 %v5477
        %v5858 = vunpack.c.h.b16 %v5477
        %v5859 = vunpack.c.l.b16 %v5478
        %v5860 = vunpack.c.h.b16 %v5478
        %v5861 = vunpack.c.l.b16 %v5479
        %v5862 = vunpack.c.h.b16 %v5479
        %v5863 = vunpack.c.l.b16 %v5480
        %v5864 = vunpack.c.l.b16 %v5481
        %v5865 = vunpack.c.h.b16 %v5481
        %v5866 = vunpack.c.l.b16 %v5482
        %v5867 = vunpack.c.h.b16 %v5482
        %v5868 = vunpack.c.l.b16 %v5483
        %v5869 = vunpack.c.h.b16 %v5483
        %v5870 = vunpack.c.l.b16 %v5484
        %v5871 = vunpack.c.l.b16 %v5485
        %v5872 = vunpack.c.h.b16 %v5485
        %v5873 = vunpack.c.l.b16 %v5486
        %v5874 = vunpack.c.h.b16 %v5486
        %v5875 = vunpack.c.l.b16 %v5487
        %v5876 = vunpack.c.h.b16 %v5487
        %v5877 = vunpack.c.l.b16 %v5488
        %v5878 = vpack.c.b16 %v5661, %v5654
        %v5879 = vpack.c.b16 %v5662, %v5655
        %v5880 = vpack.c.b16 %v5663, %v5656
        %v5881 = vpack.c.b16 %v5664, %v5657
        %v5882 = vpack.c.b16 %v5665, %v5658
        %v5883 = vpack.c.b16 %v5666, %v5659
        %v5884 = vpack.c.b16 %v5667, %v5660
        %v5885 = vpack.c.b16 %v5675, %v5668
        %v5886 = vpack.c.b16 %v5676, %v5669
        %v5887 = vpack.c.b16 %v5677, %v5670
        %v5888 = vpack.c.b16 %v5678, %v5671
        %v5889 = vpack.c.b16 %v5679, %v5672
        %v5890 = vpack.c.b16 %v5680, %v5673
        %v5891 = vpack.c.b16 %v5681, %v5674
        %v5892 = vpack.c.b16 %v5689, %v5682
        %v5893 = vpack.c.b16 %v5690, %v5683
        %v5894 = vpack.c.b16 %v5691, %v5684
        %v5895 = vpack.c.b16 %v5692, %v5685
        %v5896 = vpack.c.b16 %v5693, %v5686
        %v5897 = vpack.c.b16 %v5694, %v5687
        %v5898 = vpack.c.b16 %v5695, %v5688
        %v5899 = vpack.c.b16 %v5703, %v5696
        %v5900 = vpack.c.b16 %v5704, %v5697
        %v5901 = vpack.c.b16 %v5705, %v5698
        %v5902 = vpack.c.b16 %v5706, %v5699
        %v5903 = vpack.c.b16 %v5707, %v5700
        %v5904 = vpack.c.b16 %v5708, %v5701
        %v5905 = vpack.c.b16 %v5709, %v5702
        %v5906 = vpack.c.b16 %v5717, %v5710
        %v5907 = vpack.c.b16 %v5718, %v5711
        %v5908 = vpack.c.b16 %v5719, %v5712
        %v5909 = vpack.c.b16 %v5720, %v5713
        %v5910 = vpack.c.b16 %v5721, %v5714
        %v5911 = vpack.c.b16 %v5722, %v5715
        %v5912 = vpack.c.b16 %v5723, %v5716
        %v5913 = vpack.c.b16 %v5731, %v5724
        %v5914 = vpack.c.b16 %v5732, %v5725
        %v5915 = vpack.c.b16 %v5733, %v5726
        %v5916 = vpack.c.b16 %v5734, %v5727
        %v5917 = vpack.c.b16 %v5735, %v5728
        %v5918 = vpack.c.b16 %v5736, %v5729
        %v5919 = vpack.c.b16 %v5737, %v5730
        %v5920 = vpack.c.b16 %v5745, %v5738
        %v5921 = vpack.c.b16 %v5746, %v5739
        %v5922 = vpack.c.b16 %v5747, %v5740
        %v5923 = vpack.c.b16 %v5748, %v5741
        %v5924 = vpack.c.b16 %v5749, %v5742
        %v5925 = vpack.c.b16 %v5750, %v5743
        %v5926 = vpack.c.b16 %v5751, %v5744
        %v5927 = vpack.c.b16 %v5759, %v5752
        %v5928 = vpack.c.b16 %v5760, %v5753
        %v5929 = vpack.c.b16 %v5761, %v5754
        %v5930 = vpack.c.b16 %v5762, %v5755
        %v5931 = vpack.c.b16 %v5763, %v5756
        %v5932 = vpack.c.b16 %v5764, %v5757
        %v5933 = vpack.c.b16 %v5765, %v5758
        %v5934 = vpack.c.b16 %v5773, %v5766
        %v5935 = vpack.c.b16 %v5774, %v5767
        %v5936 = vpack.c.b16 %v5775, %v5768
        %v5937 = vpack.c.b16 %v5776, %v5769
        %v5938 = vpack.c.b16 %v5777, %v5770
        %v5939 = vpack.c.b16 %v5778, %v5771
        %v5940 = vpack.c.b16 %v5779, %v5772
        %v5941 = vpack.c.b16 %v5787, %v5780
        %v5942 = vpack.c.b16 %v5788, %v5781
        %v5943 = vpack.c.b16 %v5789, %v5782
        %v5944 = vpack.c.b16 %v5790, %v5783
        %v5945 = vpack.c.b16 %v5791, %v5784
        %v5946 = vpack.c.b16 %v5792, %v5785
        %v5947 = vpack.c.b16 %v5793, %v5786
        %v5948 = vpack.c.b16 %v5801, %v5794
        %v5949 = vpack.c.b16 %v5802, %v5795
        %v5950 = vpack.c.b16 %v5803, %v5796
        %v5951 = vpack.c.b16 %v5804, %v5797
        %v5952 = vpack.c.b16 %v5805, %v5798
        %v5953 = vpack.c.b16 %v5806, %v5799
        %v5954 = vpack.c.b16 %v5807, %v5800
        %v5955 = vpack.c.b16 %v5815, %v5808
        %v5956 = vpack.c.b16 %v5816, %v5809
        %v5957 = vpack.c.b16 %v5817, %v5810
        %v5958 = vpack.c.b16 %v5818, %v5811
        %v5959 = vpack.c.b16 %v5819, %v5812
        %v5960 = vpack.c.b16 %v5820, %v5813
        %v5961 = vpack.c.b16 %v5821, %v5814
        %v5962 = vpack.c.b16 %v5829, %v5822
        %v5963 = vpack.c.b16 %v5830, %v5823
        %v5964 = vpack.c.b16 %v5831, %v5824
        %v5965 = vpack.c.b16 %v5832, %v5825
        %v5966 = vpack.c.b16 %v5833, %v5826
        %v5967 = vpack.c.b16 %v5834, %v5827
        %v5968 = vpack.c.b16 %v5835, %v5828
        %v5969 = vpack.c.b16 %v5843, %v5836
        %v5970 = vpack.c.b16 %v5844, %v5837
        %v5971 = vpack.c.b16 %v5845, %v5838
        %v5972 = vpack.c.b16 %v5846, %v5839
        %v5973 = vpack.c.b16 %v5847, %v5840
        %v5974 = vpack.c.b16 %v5848, %v5841
        %v5975 = vpack.c.b16 %v5849, %v5842
        %v5976 = vpack.c.b16 %v5857, %v5850
        %v5977 = vpack.c.b16 %v5858, %v5851
        %v5978 = vpack.c.b16 %v5859, %v5852
        %v5979 = vpack.c.b16 %v5860, %v5853
        %v5980 = vpack.c.b16 %v5861, %v5854
        %v5981 = vpack.c.b16 %v5862, %v5855
        %v5982 = vpack.c.b16 %v5863, %v5856
        %v5983 = vpack.c.b16 %v5871, %v5864
        %v5984 = vpack.c.b16 %v5872, %v5865
        %v5985 = vpack.c.b16 %v5873, %v5866
        %v5986 = vpack.c.b16 %v5874, %v5867
        %v5987 = vpack.c.b16 %v5875, %v5868
        %v5988 = vpack.c.b16 %v5876, %v5869
        %v5989 = vpack.c.b16 %v5877, %v5870
        %6102 = vmatprep.subr.bf16.mxu0 %v5928
        %6103 = vmatpush1.bf16.msra.mxu0 %v5927
        %6104 = vmatprep.subr.bf16.mxu0 %v5921
        %6105 = vmatpush1.bf16.msra.mxu0 %v5920
        %6106 = vmatprep.subr.bf16.mxu0 %v5914
        %6107 = vmatpush1.bf16.msra.mxu0 %v5913
        %6108 = vmatprep.subr.bf16.mxu0 %v5907
        %6109 = vmatpush1.bf16.msra.mxu0 %v5906
        %6110 = vmatprep.subr.bf16.mxu0 %v5900
        %6111 = vmatpush1.bf16.msra.mxu0 %v5899
        %6112 = vmatprep.subr.bf16.mxu0 %v5893
        %6113 = vmatpush1.bf16.msra.mxu0 %v5892
        %6114 = vmatprep.subr.bf16.mxu0 %v5886
        %6115 = vmatpush1.bf16.msra.mxu0 %v5885
        %6116 = vmatprep.subr.bf16.mxu0 %v5879
        %6117 = vmatpush1.bf16.msra.mxu0 %v5878
        %6118 = vmatprep.subr.bf16.mxu0 %v5984
        %6119 = vmatpush2.bf16.msra.mxu0 %v5983
        %6120 = vmatprep.subr.bf16.mxu0 %v5977
        %6121 = vmatpush2.bf16.msra.mxu0 %v5976
        %6122 = vmatprep.subr.bf16.mxu0 %v5970
        %6123 = vmatpush2.bf16.msra.mxu0 %v5969
        %6124 = vmatprep.subr.bf16.mxu0 %v5963
        %6125 = vmatpush2.bf16.msra.mxu0 %v5962
        %6126 = vmatprep.subr.bf16.mxu0 %v5956
        %6127 = vmatpush2.bf16.msra.mxu0 %v5955
        %6128 = vmatprep.subr.bf16.mxu0 %v5949
        %6129 = vmatpush2.bf16.msra.mxu0 %v5948
        %6130 = vmatprep.subr.bf16.mxu0 %v5942
        %6131 = vmatpush2.bf16.msra.mxu0 %v5941
        %6132 = vmatprep.subr.bf16.mxu0 %v5935
        %6133 = vmatpush2.bf16.msra.mxu0 %v5934
        %6134 = vmatprep.mubr.bf16.mxu0 %v5352
        %6135 = vmatmul.mubr.bf16.gmra.mxu0 %v5351
        %v6136 = vpop.f32.mrf.mxu0
        %v6137 = vadd.f32 %v5494, %v6136
        %v6138 = vpop.f32.mrf.mxu0
        %v6139 = vadd.f32 %v5498, %v6138
        %v6140 = vpop.f32.mrf.mxu0
        %v6141 = vadd.f32 %v5494, %v6140
        %v6142 = vpop.f32.mrf.mxu0
        %v6143 = vadd.f32 %v5498, %v6142
        %6144 = vmatprep.mubr.bf16.mxu0 %v5354
        %6145 = vmatmul.mubr.bf16.gmra.mxu0 %v5353
        %v6146 = vpop.f32.mrf.mxu0
        %v6147 = vadd.f32 %v5494, %v6146
        %v6148 = vpop.f32.mrf.mxu0
        %v6149 = vadd.f32 %v5498, %v6148
        %v6150 = vpop.f32.mrf.mxu0
        %v6151 = vadd.f32 %v5494, %v6150
        %v6152 = vpop.f32.mrf.mxu0
        %v6153 = vadd.f32 %v5498, %v6152
        %6154 = vmatprep.mubr.bf16.mxu0 %v5356
        %6155 = vmatmul.mubr.bf16.gmra.mxu0 %v5355
        %v6156 = vpop.f32.mrf.mxu0
        %v6157 = vadd.f32 %v5494, %v6156
        %v6158 = vpop.f32.mrf.mxu0
        %v6159 = vadd.f32 %v5498, %v6158
        %v6160 = vpop.f32.mrf.mxu0
        %v6161 = vadd.f32 %v5494, %v6160
        %v6162 = vpop.f32.mrf.mxu0
        %v6163 = vadd.f32 %v5498, %v6162
        %6164 = vmatprep.mubr.bf16.mxu0 %v5358
        %6165 = vmatmul.mubr.bf16.gmra.mxu0 %v5357
        %v6166 = vpop.f32.mrf.mxu0
        %v6167 = vadd.f32 %v5494, %v6166
        %v6168 = vpop.f32.mrf.mxu0
        %v6169 = vadd.f32 %v5498, %v6168
        %v6170 = vpop.f32.mrf.mxu0
        %v6171 = vadd.f32 %v5494, %v6170
        %v6172 = vpop.f32.mrf.mxu0
        %v6173 = vadd.f32 %v5498, %v6172
        %6174 = vmatprep.mubr.bf16.mxu0 %v5360
        %6175 = vmatmul.mubr.bf16.gmra.mxu0 %v5359
        %v6176 = vpop.f32.mrf.mxu0
        %v6177 = vadd.f32 %v5494, %v6176
        %v6178 = vpop.f32.mrf.mxu0
        %v6179 = vadd.f32 %v5498, %v6178
        %v6180 = vpop.f32.mrf.mxu0
        %v6181 = vpop.f32.mrf.mxu0
        %6182 = vdwg.mxu0
        %6183 = vmatprep.subr.bf16.mxu0 %v5930
        %6184 = vmatpush1.bf16.msra.mxu0 %v5929
        %6185 = vmatprep.subr.bf16.mxu0 %v5923
        %6186 = vmatpush1.bf16.msra.mxu0 %v5922
        %6187 = vmatprep.subr.bf16.mxu0 %v5916
        %6188 = vmatpush1.bf16.msra.mxu0 %v5915
        %6189 = vmatprep.subr.bf16.mxu0 %v5909
        %6190 = vmatpush1.bf16.msra.mxu0 %v5908
        %6191 = vmatprep.subr.bf16.mxu0 %v5902
        %6192 = vmatpush1.bf16.msra.mxu0 %v5901
        %6193 = vmatprep.subr.bf16.mxu0 %v5895
        %6194 = vmatpush1.bf16.msra.mxu0 %v5894
        %6195 = vmatprep.subr.bf16.mxu0 %v5888
        %6196 = vmatpush1.bf16.msra.mxu0 %v5887
        %6197 = vmatprep.subr.bf16.mxu0 %v5881
        %6198 = vmatpush1.bf16.msra.mxu0 %v5880
        %6199 = vmatprep.subr.bf16.mxu0 %v5986
        %6200 = vmatpush2.bf16.msra.mxu0 %v5985
        %6201 = vmatprep.subr.bf16.mxu0 %v5979
        %6202 = vmatpush2.bf16.msra.mxu0 %v5978
        %6203 = vmatprep.subr.bf16.mxu0 %v5972
        %6204 = vmatpush2.bf16.msra.mxu0 %v5971
        %6205 = vmatprep.subr.bf16.mxu0 %v5965
        %6206 = vmatpush2.bf16.msra.mxu0 %v5964
        %6207 = vmatprep.subr.bf16.mxu0 %v5958
        %6208 = vmatpush2.bf16.msra.mxu0 %v5957
        %6209 = vmatprep.subr.bf16.mxu0 %v5951
        %6210 = vmatpush2.bf16.msra.mxu0 %v5950
        %6211 = vmatprep.subr.bf16.mxu0 %v5944
        %6212 = vmatpush2.bf16.msra.mxu0 %v5943
        %6213 = vmatprep.subr.bf16.mxu0 %v5937
        %6214 = vmatpush2.bf16.msra.mxu0 %v5936
        %6215 = vmatprep.mubr.bf16.mxu0 %v5352
        %6216 = vmatmul.mubr.bf16.gmra.mxu0 %v5351
        %v6217 = vpop.f32.mrf.mxu0
        %v6218 = vadd.f32 %v5502, %v6217
        %v6219 = vpop.f32.mrf.mxu0
        %v6220 = vadd.f32 %v5506, %v6219
        %v6221 = vpop.f32.mrf.mxu0
        %v6222 = vadd.f32 %v5502, %v6221
        %v6223 = vpop.f32.mrf.mxu0
        %v6224 = vadd.f32 %v5506, %v6223
        %6225 = vmatprep.mubr.bf16.mxu0 %v5354
        %6226 = vmatmul.mubr.bf16.gmra.mxu0 %v5353
        %v6227 = vpop.f32.mrf.mxu0
        %v6228 = vadd.f32 %v5502, %v6227
        %v6229 = vpop.f32.mrf.mxu0
        %v6230 = vadd.f32 %v5506, %v6229
        %v6231 = vpop.f32.mrf.mxu0
        %v6232 = vadd.f32 %v5502, %v6231
        %v6233 = vpop.f32.mrf.mxu0
        %v6234 = vadd.f32 %v5506, %v6233
        %6235 = vmatprep.mubr.bf16.mxu0 %v5356
        %6236 = vmatmul.mubr.bf16.gmra.mxu0 %v5355
        %v6237 = vpop.f32.mrf.mxu0
        %v6238 = vadd.f32 %v5502, %v6237
        %v6239 = vpop.f32.mrf.mxu0
        %v6240 = vadd.f32 %v5506, %v6239
        %v6241 = vpop.f32.mrf.mxu0
        %v6242 = vadd.f32 %v5502, %v6241
        %v6243 = vpop.f32.mrf.mxu0
        %v6244 = vadd.f32 %v5506, %v6243
        %6245 = vmatprep.mubr.bf16.mxu0 %v5358
        %6246 = vmatmul.mubr.bf16.gmra.mxu0 %v5357
        %v6247 = vpop.f32.mrf.mxu0
        %v6248 = vadd.f32 %v5502, %v6247
        %v6249 = vpop.f32.mrf.mxu0
        %v6250 = vadd.f32 %v5506, %v6249
        %v6251 = vpop.f32.mrf.mxu0
        %v6252 = vadd.f32 %v5502, %v6251
        %v6253 = vpop.f32.mrf.mxu0
        %v6254 = vadd.f32 %v5506, %v6253
        %6255 = vmatprep.mubr.bf16.mxu0 %v5360
        %6256 = vmatmul.mubr.bf16.gmra.mxu0 %v5359
        %v6257 = vpop.f32.mrf.mxu0
        %v6258 = vadd.f32 %v5502, %v6257
        %v6259 = vpop.f32.mrf.mxu0
        %v6260 = vadd.f32 %v5506, %v6259
        %v6261 = vpop.f32.mrf.mxu0
        %v6262 = vpop.f32.mrf.mxu0
        %6263 = vdwg.mxu0
        %6264 = vmatprep.subr.bf16.mxu0 %v5932
        %6265 = vmatpush1.bf16.msra.mxu0 %v5931
        %6266 = vmatprep.subr.bf16.mxu0 %v5925
        %6267 = vmatpush1.bf16.msra.mxu0 %v5924
        %6268 = vmatprep.subr.bf16.mxu0 %v5918
        %6269 = vmatpush1.bf16.msra.mxu0 %v5917
        %6270 = vmatprep.subr.bf16.mxu0 %v5911
        %6271 = vmatpush1.bf16.msra.mxu0 %v5910
        %6272 = vmatprep.subr.bf16.mxu0 %v5904
        %6273 = vmatpush1.bf16.msra.mxu0 %v5903
        %6274 = vmatprep.subr.bf16.mxu0 %v5897
        %6275 = vmatpush1.bf16.msra.mxu0 %v5896
        %6276 = vmatprep.subr.bf16.mxu0 %v5890
        %6277 = vmatpush1.bf16.msra.mxu0 %v5889
        %6278 = vmatprep.subr.bf16.mxu0 %v5883
        %6279 = vmatpush1.bf16.msra.mxu0 %v5882
        %6280 = vmatprep.subr.bf16.mxu0 %v5988
        %6281 = vmatpush2.bf16.msra.mxu0 %v5987
        %6282 = vmatprep.subr.bf16.mxu0 %v5981
        %6283 = vmatpush2.bf16.msra.mxu0 %v5980
        %6284 = vmatprep.subr.bf16.mxu0 %v5974
        %6285 = vmatpush2.bf16.msra.mxu0 %v5973
        %6286 = vmatprep.subr.bf16.mxu0 %v5967
        %6287 = vmatpush2.bf16.msra.mxu0 %v5966
        %6288 = vmatprep.subr.bf16.mxu0 %v5960
        %6289 = vmatpush2.bf16.msra.mxu0 %v5959
        %6290 = vmatprep.subr.bf16.mxu0 %v5953
        %6291 = vmatpush2.bf16.msra.mxu0 %v5952
        %6292 = vmatprep.subr.bf16.mxu0 %v5946
        %6293 = vmatpush2.bf16.msra.mxu0 %v5945
        %6294 = vmatprep.subr.bf16.mxu0 %v5939
        %6295 = vmatpush2.bf16.msra.mxu0 %v5938
        %6296 = vmatprep.mubr.bf16.mxu0 %v5352
        %6297 = vmatmul.mubr.bf16.gmra.mxu0 %v5351
        %v6298 = vpop.f32.mrf.mxu0
        %v6299 = vadd.f32 %v5510, %v6298
        %v6300 = vpop.f32.mrf.mxu0
        %v6301 = vadd.f32 %v5514, %v6300
        %v6302 = vpop.f32.mrf.mxu0
        %v6303 = vadd.f32 %v5510, %v6302
        %v6304 = vpop.f32.mrf.mxu0
        %v6305 = vadd.f32 %v5514, %v6304
        %6306 = vmatprep.mubr.bf16.mxu0 %v5354
        %6307 = vmatmul.mubr.bf16.gmra.mxu0 %v5353
        %v6308 = vpop.f32.mrf.mxu0
        %v6309 = vadd.f32 %v5510, %v6308
        %v6310 = vpop.f32.mrf.mxu0
        %v6311 = vadd.f32 %v5514, %v6310
        %v6312 = vpop.f32.mrf.mxu0
        %v6313 = vadd.f32 %v5510, %v6312
        %v6314 = vpop.f32.mrf.mxu0
        %v6315 = vadd.f32 %v5514, %v6314
        %6316 = vmatprep.mubr.bf16.mxu0 %v5356
        %6317 = vmatmul.mubr.bf16.gmra.mxu0 %v5355
        %v6318 = vpop.f32.mrf.mxu0
        %v6319 = vadd.f32 %v5510, %v6318
        %v6320 = vpop.f32.mrf.mxu0
        %v6321 = vadd.f32 %v5514, %v6320
        %v6322 = vpop.f32.mrf.mxu0
        %v6323 = vadd.f32 %v5510, %v6322
        %v6324 = vpop.f32.mrf.mxu0
        %v6325 = vadd.f32 %v5514, %v6324
        %6326 = vmatprep.mubr.bf16.mxu0 %v5358
        %6327 = vmatmul.mubr.bf16.gmra.mxu0 %v5357
        %v6328 = vpop.f32.mrf.mxu0
        %v6329 = vadd.f32 %v5510, %v6328
        %v6330 = vpop.f32.mrf.mxu0
        %v6331 = vadd.f32 %v5514, %v6330
        %v6332 = vpop.f32.mrf.mxu0
        %v6333 = vadd.f32 %v5510, %v6332
        %v6334 = vpop.f32.mrf.mxu0
        %v6335 = vadd.f32 %v5514, %v6334
        %6336 = vmatprep.mubr.bf16.mxu0 %v5360
        %6337 = vmatmul.mubr.bf16.gmra.mxu0 %v5359
        %v6338 = vpop.f32.mrf.mxu0
        %v6339 = vadd.f32 %v5510, %v6338
        %v6340 = vpop.f32.mrf.mxu0
        %v6341 = vadd.f32 %v5514, %v6340
        %v6342 = vpop.f32.mrf.mxu0
        %v6343 = vpop.f32.mrf.mxu0
        %6344 = vdwg.mxu0
        %6345 = vmatprep.subr.bf16.mxu0 0
        %6346 = vmatpush1.bf16.msra.mxu0 %v5933
        %6347 = vmatprep.subr.bf16.mxu0 0
        %6348 = vmatpush1.bf16.msra.mxu0 %v5926
        %6349 = vmatprep.subr.bf16.mxu0 0
        %6350 = vmatpush1.bf16.msra.mxu0 %v5919
        %6351 = vmatprep.subr.bf16.mxu0 0
        %6352 = vmatpush1.bf16.msra.mxu0 %v5912
        %6353 = vmatprep.subr.bf16.mxu0 0
        %6354 = vmatpush1.bf16.msra.mxu0 %v5905
        %6355 = vmatprep.subr.bf16.mxu0 0
        %6356 = vmatpush1.bf16.msra.mxu0 %v5898
        %6357 = vmatprep.subr.bf16.mxu0 0
        %6358 = vmatpush1.bf16.msra.mxu0 %v5891
        %6359 = vmatprep.subr.bf16.mxu0 0
        %6360 = vmatpush1.bf16.msra.mxu0 %v5884
        %6361 = vmatprep.subr.bf16.mxu0 0
        %6362 = vmatpush2.bf16.msra.mxu0 %v5989
        %6363 = vmatprep.subr.bf16.mxu0 0
        %6364 = vmatpush2.bf16.msra.mxu0 %v5982
        %6365 = vmatprep.subr.bf16.mxu0 0
        %6366 = vmatpush2.bf16.msra.mxu0 %v5975
        %6367 = vmatprep.subr.bf16.mxu0 0
        %6368 = vmatpush2.bf16.msra.mxu0 %v5968
        %6369 = vmatprep.subr.bf16.mxu0 0
        %6370 = vmatpush2.bf16.msra.mxu0 %v5961
        %6371 = vmatprep.subr.bf16.mxu0 0
        %6372 = vmatpush2.bf16.msra.mxu0 %v5954
        %6373 = vmatprep.subr.bf16.mxu0 0
        %6374 = vmatpush2.bf16.msra.mxu0 %v5947
        %6375 = vmatprep.subr.bf16.mxu0 0
        %6376 = vmatpush2.bf16.msra.mxu0 %v5940
        %6377 = vmatprep.mubr.bf16.mxu0 %v5352
        %6378 = vmatmul.mubr.bf16.gmra.mxu0 %v5351
        %v6379 = vpop.f32.mrf.mxu0
        %v6380 = vadd.f32 %v5518, %v6379
        %v6381 = vpop.f32.mrf.mxu0
        %v6382 = vpop.f32.mrf.mxu0
        %v6383 = vadd.f32 %v5518, %v6382
        %v6384 = vpop.f32.mrf.mxu0
        %6385 = vmatprep.mubr.bf16.mxu0 %v5354
        %6386 = vmatmul.mubr.bf16.gmra.mxu0 %v5353
        %v6387 = vpop.f32.mrf.mxu0
        %v6388 = vadd.f32 %v5518, %v6387
        %v6389 = vpop.f32.mrf.mxu0
        %v6390 = vpop.f32.mrf.mxu0
        %v6391 = vadd.f32 %v5518, %v6390
        %v6392 = vpop.f32.mrf.mxu0
        %6393 = vmatprep.mubr.bf16.mxu0 %v5356
        %6394 = vmatmul.mubr.bf16.gmra.mxu0 %v5355
        %v6395 = vpop.f32.mrf.mxu0
        %v6396 = vadd.f32 %v5518, %v6395
        %v6397 = vpop.f32.mrf.mxu0
        %v6398 = vpop.f32.mrf.mxu0
        %v6399 = vadd.f32 %v5518, %v6398
        %v6400 = vpop.f32.mrf.mxu0
        %6401 = vmatprep.mubr.bf16.mxu0 %v5358
        %6402 = vmatmul.mubr.bf16.gmra.mxu0 %v5357
        %v6403 = vpop.f32.mrf.mxu0
        %v6404 = vadd.f32 %v5518, %v6403
        %v6405 = vpop.f32.mrf.mxu0
        %v6406 = vpop.f32.mrf.mxu0
        %v6407 = vadd.f32 %v5518, %v6406
        %v6408 = vpop.f32.mrf.mxu0
        %6409 = vmatprep.mubr.bf16.mxu0 %v5360
        %6410 = vmatmul.mubr.bf16.gmra.mxu0 %v5359
        %v6411 = vpop.f32.mrf.mxu0
        %v6412 = vadd.f32 %v5518, %v6411
        %v6413 = vpop.f32.mrf.mxu0
        %v6414 = vpop.f32.mrf.mxu0
        %v6415 = vpop.f32.mrf.mxu0
        %6416 = vdwg.mxu0
        %v6417 = vmul.f32 %v6137, 0.5
        %v6418 = vmul.f32 %v6139, 0.5
        %v6419 = vmul.f32 %v6218, 0.5
        %v6420 = vmul.f32 %v6220, 0.5
        %v6421 = vmul.f32 %v6299, 0.5
        %v6422 = vmul.f32 %v6301, 0.5
        %v6423 = vmul.f32 %v6380, 0.5
        %v6424 = vmul.f32 %v6141, 0.5
        %v6425 = vmul.f32 %v6143, 0.5
        %v6426 = vmul.f32 %v6222, 0.5
        %v6427 = vmul.f32 %v6224, 0.5
        %v6428 = vmul.f32 %v6303, 0.5
        %v6429 = vmul.f32 %v6305, 0.5
        %v6430 = vmul.f32 %v6383, 0.5
        %v6431 = vmul.f32 %v6147, 0.5
        %v6432 = vmul.f32 %v6149, 0.5
        %v6433 = vmul.f32 %v6228, 0.5
        %v6434 = vmul.f32 %v6230, 0.5
        %v6435 = vmul.f32 %v6309, 0.5
        %v6436 = vmul.f32 %v6311, 0.5
        %v6437 = vmul.f32 %v6388, 0.5
        %v6438 = vmul.f32 %v6151, 0.5
        %v6439 = vmul.f32 %v6153, 0.5
        %v6440 = vmul.f32 %v6232, 0.5
        %v6441 = vmul.f32 %v6234, 0.5
        %v6442 = vmul.f32 %v6313, 0.5
        %v6443 = vmul.f32 %v6315, 0.5
        %v6444 = vmul.f32 %v6391, 0.5
        %v6445 = vmul.f32 %v6157, 0.5
        %v6446 = vmul.f32 %v6159, 0.5
        %v6447 = vmul.f32 %v6238, 0.5
        %v6448 = vmul.f32 %v6240, 0.5
        %v6449 = vmul.f32 %v6319, 0.5
        %v6450 = vmul.f32 %v6321, 0.5
        %v6451 = vmul.f32 %v6396, 0.5
        %v6452 = vmul.f32 %v6161, 0.5
        %v6453 = vmul.f32 %v6163, 0.5
        %v6454 = vmul.f32 %v6242, 0.5
        %v6455 = vmul.f32 %v6244, 0.5
        %v6456 = vmul.f32 %v6323, 0.5
        %v6457 = vmul.f32 %v6325, 0.5
        %v6458 = vmul.f32 %v6399, 0.5
        %v6459 = vmul.f32 %v6167, 0.5
        %v6460 = vmul.f32 %v6169, 0.5
        %v6461 = vmul.f32 %v6248, 0.5
        %v6462 = vmul.f32 %v6250, 0.5
        %v6463 = vmul.f32 %v6329, 0.5
        %v6464 = vmul.f32 %v6331, 0.5
        %v6465 = vmul.f32 %v6404, 0.5
        %v6466 = vmul.f32 %v6171, 0.5
        %v6467 = vmul.f32 %v6173, 0.5
        %v6468 = vmul.f32 %v6252, 0.5
        %v6469 = vmul.f32 %v6254, 0.5
        %v6470 = vmul.f32 %v6333, 0.5
        %v6471 = vmul.f32 %v6335, 0.5
        %v6472 = vmul.f32 %v6407, 0.5
        %v6473 = vmul.f32 %v6177, 0.5
        %v6474 = vmul.f32 %v6179, 0.5
        %v6475 = vmul.f32 %v6258, 0.5
        %v6476 = vmul.f32 %v6260, 0.5
        %v6477 = vmul.f32 %v6339, 0.5
        %v6478 = vmul.f32 %v6341, 0.5
        %v6479 = vmul.f32 %v6412, 0.5
        %v6480 = vmul.f32 %v6137, 0.044715
        %v6481 = vmul.f32 %v6139, 0.044715
        %v6482 = vmul.f32 %v6218, 0.044715
        %v6483 = vmul.f32 %v6220, 0.044715
        %v6484 = vmul.f32 %v6299, 0.044715
        %v6485 = vmul.f32 %v6301, 0.044715
        %v6486 = vmul.f32 %v6380, 0.044715
        %v6487 = vmul.f32 %v6141, 0.044715
        %v6488 = vmul.f32 %v6143, 0.044715
        %v6489 = vmul.f32 %v6222, 0.044715
        %v6490 = vmul.f32 %v6224, 0.044715
        %v6491 = vmul.f32 %v6303, 0.044715
        %v6492 = vmul.f32 %v6305, 0.044715
        %v6493 = vmul.f32 %v6383, 0.044715
        %v6494 = vmul.f32 %v6147, 0.044715
        %v6495 = vmul.f32 %v6149, 0.044715
        %v6496 = vmul.f32 %v6228, 0.044715
        %v6497 = vmul.f32 %v6230, 0.044715
        %v6498 = vmul.f32 %v6309, 0.044715
        %v6499 = vmul.f32 %v6311, 0.044715
        %v6500 = vmul.f32 %v6388, 0.044715
        %v6501 = vmul.f32 %v6151, 0.044715
        %v6502 = vmul.f32 %v6153, 0.044715
        %v6503 = vmul.f32 %v6232, 0.044715
        %v6504 = vmul.f32 %v6234, 0.044715
        %v6505 = vmul.f32 %v6313, 0.044715
        %v6506 = vmul.f32 %v6315, 0.044715
        %v6507 = vmul.f32 %v6391, 0.044715
        %v6508 = vmul.f32 %v6157, 0.044715
        %v6509 = vmul.f32 %v6159, 0.044715
        %v6510 = vmul.f32 %v6238, 0.044715
        %v6511 = vmul.f32 %v6240, 0.044715
        %v6512 = vmul.f32 %v6319, 0.044715
        %v6513 = vmul.f32 %v6321, 0.044715
        %v6514 = vmul.f32 %v6396, 0.044715
        %v6515 = vmul.f32 %v6161, 0.044715
        %v6516 = vmul.f32 %v6163, 0.044715
        %v6517 = vmul.f32 %v6242, 0.044715
        %v6518 = vmul.f32 %v6244, 0.044715
        %v6519 = vmul.f32 %v6323, 0.044715
        %v6520 = vmul.f32 %v6325, 0.044715
        %v6521 = vmul.f32 %v6399, 0.044715
        %v6522 = vmul.f32 %v6167, 0.044715
        %v6523 = vmul.f32 %v6169, 0.044715
        %v6524 = vmul.f32 %v6248, 0.044715
        %v6525 = vmul.f32 %v6250, 0.044715
        %v6526 = vmul.f32 %v6329, 0.044715
        %v6527 = vmul.f32 %v6331, 0.044715
        %v6528 = vmul.f32 %v6404, 0.044715
        %v6529 = vmul.f32 %v6171, 0.044715
        %v6530 = vmul.f32 %v6173, 0.044715
        %v6531 = vmul.f32 %v6252, 0.044715
        %v6532 = vmul.f32 %v6254, 0.044715
        %v6533 = vmul.f32 %v6333, 0.044715
        %v6534 = vmul.f32 %v6335, 0.044715
        %v6535 = vmul.f32 %v6407, 0.044715
        %v6536 = vmul.f32 %v6177, 0.044715
        %v6537 = vmul.f32 %v6179, 0.044715
        %v6538 = vmul.f32 %v6258, 0.044715
        %v6539 = vmul.f32 %v6260, 0.044715
        %v6540 = vmul.f32 %v6339, 0.044715
        %v6541 = vmul.f32 %v6341, 0.044715
        %v6542 = vmul.f32 %v6412, 0.044715
        %v6543 = vmul.f32 %v6480, %v6137
        %v6544 = vmul.f32 %v6481, %v6139
        %v6545 = vmul.f32 %v6482, %v6218
        %v6546 = vmul.f32 %v6483, %v6220
        %v6547 = vmul.f32 %v6484, %v6299
        %v6548 = vmul.f32 %v6485, %v6301
        %v6549 = vmul.f32 %v6486, %v6380
        %v6550 = vmul.f32 %v6487, %v6141
        %v6551 = vmul.f32 %v6488, %v6143
        %v6552 = vmul.f32 %v6489, %v6222
        %v6553 = vmul.f32 %v6490, %v6224
        %v6554 = vmul.f32 %v6491, %v6303
        %v6555 = vmul.f32 %v6492, %v6305
        %v6556 = vmul.f32 %v6493, %v6383
        %v6557 = vmul.f32 %v6494, %v6147
        %v6558 = vmul.f32 %v6495, %v6149
        %v6559 = vmul.f32 %v6496, %v6228
        %v6560 = vmul.f32 %v6497, %v6230
        %v6561 = vmul.f32 %v6498, %v6309
        %v6562 = vmul.f32 %v6499, %v6311
        %v6563 = vmul.f32 %v6500, %v6388
        %v6564 = vmul.f32 %v6501, %v6151
        %v6565 = vmul.f32 %v6502, %v6153
        %v6566 = vmul.f32 %v6503, %v6232
        %v6567 = vmul.f32 %v6504, %v6234
        %v6568 = vmul.f32 %v6505, %v6313
        %v6569 = vmul.f32 %v6506, %v6315
        %v6570 = vmul.f32 %v6507, %v6391
        %v6571 = vmul.f32 %v6508, %v6157
        %v6572 = vmul.f32 %v6509, %v6159
        %v6573 = vmul.f32 %v6510, %v6238
        %v6574 = vmul.f32 %v6511, %v6240
        %v6575 = vmul.f32 %v6512, %v6319
        %v6576 = vmul.f32 %v6513, %v6321
        %v6577 = vmul.f32 %v6514, %v6396
        %v6578 = vmul.f32 %v6515, %v6161
        %v6579 = vmul.f32 %v6516, %v6163
        %v6580 = vmul.f32 %v6517, %v6242
        %v6581 = vmul.f32 %v6518, %v6244
        %v6582 = vmul.f32 %v6519, %v6323
        %v6583 = vmul.f32 %v6520, %v6325
        %v6584 = vmul.f32 %v6521, %v6399
        %v6585 = vmul.f32 %v6522, %v6167
        %v6586 = vmul.f32 %v6523, %v6169
        %v6587 = vmul.f32 %v6524, %v6248
        %v6588 = vmul.f32 %v6525, %v6250
        %v6589 = vmul.f32 %v6526, %v6329
        %v6590 = vmul.f32 %v6527, %v6331
        %v6591 = vmul.f32 %v6528, %v6404
        %v6592 = vmul.f32 %v6529, %v6171
        %v6593 = vmul.f32 %v6530, %v6173
        %v6594 = vmul.f32 %v6531, %v6252
        %v6595 = vmul.f32 %v6532, %v6254
        %v6596 = vmul.f32 %v6533, %v6333
        %v6597 = vmul.f32 %v6534, %v6335
        %v6598 = vmul.f32 %v6535, %v6407
        %v6599 = vmul.f32 %v6536, %v6177
        %v6600 = vmul.f32 %v6537, %v6179
        %v6601 = vmul.f32 %v6538, %v6258
        %v6602 = vmul.f32 %v6539, %v6260
        %v6603 = vmul.f32 %v6540, %v6339
        %v6604 = vmul.f32 %v6541, %v6341
        %v6605 = vmul.f32 %v6542, %v6412
        %v6606 = vmul.f32 %v6543, %v6137
        %v6607 = vmul.f32 %v6544, %v6139
        %v6608 = vmul.f32 %v6545, %v6218
        %v6609 = vmul.f32 %v6546, %v6220
        %v6610 = vmul.f32 %v6547, %v6299
        %v6611 = vmul.f32 %v6548, %v6301
        %v6612 = vmul.f32 %v6549, %v6380
        %v6613 = vmul.f32 %v6550, %v6141
        %v6614 = vmul.f32 %v6551, %v6143
        %v6615 = vmul.f32 %v6552, %v6222
        %v6616 = vmul.f32 %v6553, %v6224
        %v6617 = vmul.f32 %v6554, %v6303
        %v6618 = vmul.f32 %v6555, %v6305
        %v6619 = vmul.f32 %v6556, %v6383
        %v6620 = vmul.f32 %v6557, %v6147
        %v6621 = vmul.f32 %v6558, %v6149
        %v6622 = vmul.f32 %v6559, %v6228
        %v6623 = vmul.f32 %v6560, %v6230
        %v6624 = vmul.f32 %v6561, %v6309
        %v6625 = vmul.f32 %v6562, %v6311
        %v6626 = vmul.f32 %v6563, %v6388
        %v6627 = vmul.f32 %v6564, %v6151
        %v6628 = vmul.f32 %v6565, %v6153
        %v6629 = vmul.f32 %v6566, %v6232
        %v6630 = vmul.f32 %v6567, %v6234
        %v6631 = vmul.f32 %v6568, %v6313
        %v6632 = vmul.f32 %v6569, %v6315
        %v6633 = vmul.f32 %v6570, %v6391
        %v6634 = vmul.f32 %v6571, %v6157
        %v6635 = vmul.f32 %v6572, %v6159
        %v6636 = vmul.f32 %v6573, %v6238
        %v6637 = vmul.f32 %v6574, %v6240
        %v6638 = vmul.f32 %v6575, %v6319
        %v6639 = vmul.f32 %v6576, %v6321
        %v6640 = vmul.f32 %v6577, %v6396
        %v6641 = vmul.f32 %v6578, %v6161
        %v6642 = vmul.f32 %v6579, %v6163
        %v6643 = vmul.f32 %v6580, %v6242
        %v6644 = vmul.f32 %v6581, %v6244
        %v6645 = vmul.f32 %v6582, %v6323
        %v6646 = vmul.f32 %v6583, %v6325
        %v6647 = vmul.f32 %v6584, %v6399
        %v6648 = vmul.f32 %v6585, %v6167
        %v6649 = vmul.f32 %v6586, %v6169
        %v6650 = vmul.f32 %v6587, %v6248
        %v6651 = vmul.f32 %v6588, %v6250
        %v6652 = vmul.f32 %v6589, %v6329
        %v6653 = vmul.f32 %v6590, %v6331
        %v6654 = vmul.f32 %v6591, %v6404
        %v6655 = vmul.f32 %v6592, %v6171
        %v6656 = vmul.f32 %v6593, %v6173
        %v6657 = vmul.f32 %v6594, %v6252
        %v6658 = vmul.f32 %v6595, %v6254
        %v6659 = vmul.f32 %v6596, %v6333
        %v6660 = vmul.f32 %v6597, %v6335
        %v6661 = vmul.f32 %v6598, %v6407
        %v6662 = vmul.f32 %v6599, %v6177
        %v6663 = vmul.f32 %v6600, %v6179
        %v6664 = vmul.f32 %v6601, %v6258
        %v6665 = vmul.f32 %v6602, %v6260
        %v6666 = vmul.f32 %v6603, %v6339
        %v6667 = vmul.f32 %v6604, %v6341
        %v6668 = vmul.f32 %v6605, %v6412
        %v6669 = vadd.f32 %v6137, %v6606
        %v6670 = vadd.f32 %v6139, %v6607
        %v6671 = vadd.f32 %v6218, %v6608
        %v6672 = vadd.f32 %v6220, %v6609
        %v6673 = vadd.f32 %v6299, %v6610
        %v6674 = vadd.f32 %v6301, %v6611
        %v6675 = vadd.f32 %v6380, %v6612
        %v6676 = vadd.f32 %v6141, %v6613
        %v6677 = vadd.f32 %v6143, %v6614
        %v6678 = vadd.f32 %v6222, %v6615
        %v6679 = vadd.f32 %v6224, %v6616
        %v6680 = vadd.f32 %v6303, %v6617
        %v6681 = vadd.f32 %v6305, %v6618
        %v6682 = vadd.f32 %v6383, %v6619
        %v6683 = vadd.f32 %v6147, %v6620
        %v6684 = vadd.f32 %v6149, %v6621
        %v6685 = vadd.f32 %v6228, %v6622
        %v6686 = vadd.f32 %v6230, %v6623
        %v6687 = vadd.f32 %v6309, %v6624
        %v6688 = vadd.f32 %v6311, %v6625
        %v6689 = vadd.f32 %v6388, %v6626
        %v6690 = vadd.f32 %v6151, %v6627
        %v6691 = vadd.f32 %v6153, %v6628
        %v6692 = vadd.f32 %v6232, %v6629
        %v6693 = vadd.f32 %v6234, %v6630
        %v6694 = vadd.f32 %v6313, %v6631
        %v6695 = vadd.f32 %v6315, %v6632
        %v6696 = vadd.f32 %v6391, %v6633
        %v6697 = vadd.f32 %v6157, %v6634
        %v6698 = vadd.f32 %v6159, %v6635
        %v6699 = vadd.f32 %v6238, %v6636
        %v6700 = vadd.f32 %v6240, %v6637
        %v6701 = vadd.f32 %v6319, %v6638
        %v6702 = vadd.f32 %v6321, %v6639
        %v6703 = vadd.f32 %v6396, %v6640
        %v6704 = vadd.f32 %v6161, %v6641
        %v6705 = vadd.f32 %v6163, %v6642
        %v6706 = vadd.f32 %v6242, %v6643
        %v6707 = vadd.f32 %v6244, %v6644
        %v6708 = vadd.f32 %v6323, %v6645
        %v6709 = vadd.f32 %v6325, %v6646
        %v6710 = vadd.f32 %v6399, %v6647
        %v6711 = vadd.f32 %v6167, %v6648
        %v6712 = vadd.f32 %v6169, %v6649
        %v6713 = vadd.f32 %v6248, %v6650
        %v6714 = vadd.f32 %v6250, %v6651
        %v6715 = vadd.f32 %v6329, %v6652
        %v6716 = vadd.f32 %v6331, %v6653
        %v6717 = vadd.f32 %v6404, %v6654
        %v6718 = vadd.f32 %v6171, %v6655
        %v6719 = vadd.f32 %v6173, %v6656
        %v6720 = vadd.f32 %v6252, %v6657
        %v6721 = vadd.f32 %v6254, %v6658
        %v6722 = vadd.f32 %v6333, %v6659
        %v6723 = vadd.f32 %v6335, %v6660
        %v6724 = vadd.f32 %v6407, %v6661
        %v6725 = vadd.f32 %v6177, %v6662
        %v6726 = vadd.f32 %v6179, %v6663
        %v6727 = vadd.f32 %v6258, %v6664
        %v6728 = vadd.f32 %v6260, %v6665
        %v6729 = vadd.f32 %v6339, %v6666
        %v6730 = vadd.f32 %v6341, %v6667
        %v6731 = vadd.f32 %v6412, %v6668
        %v6732 = vmul.f32 %v6669, 0.7978846
        %v6733 = vmul.f32 %v6670, 0.7978846
        %v6734 = vmul.f32 %v6671, 0.7978846
        %v6735 = vmul.f32 %v6672, 0.7978846
        %v6736 = vmul.f32 %v6673, 0.7978846
        %v6737 = vmul.f32 %v6674, 0.7978846
        %v6738 = vmul.f32 %v6675, 0.7978846
        %v6739 = vmul.f32 %v6676, 0.7978846
        %v6740 = vmul.f32 %v6677, 0.7978846
        %v6741 = vmul.f32 %v6678, 0.7978846
        %v6742 = vmul.f32 %v6679, 0.7978846
        %v6743 = vmul.f32 %v6680, 0.7978846
        %v6744 = vmul.f32 %v6681, 0.7978846
        %v6745 = vmul.f32 %v6682, 0.7978846
        %v6746 = vmul.f32 %v6683, 0.7978846
        %v6747 = vmul.f32 %v6684, 0.7978846
        %v6748 = vmul.f32 %v6685, 0.7978846
        %v6749 = vmul.f32 %v6686, 0.7978846
        %v6750 = vmul.f32 %v6687, 0.7978846
        %v6751 = vmul.f32 %v6688, 0.7978846
        %v6752 = vmul.f32 %v6689, 0.7978846
        %v6753 = vmul.f32 %v6690, 0.7978846
        %v6754 = vmul.f32 %v6691, 0.7978846
        %v6755 = vmul.f32 %v6692, 0.7978846
        %v6756 = vmul.f32 %v6693, 0.7978846
        %v6757 = vmul.f32 %v6694, 0.7978846
        %v6758 = vmul.f32 %v6695, 0.7978846
        %v6759 = vmul.f32 %v6696, 0.7978846
        %v6760 = vmul.f32 %v6697, 0.7978846
        %v6761 = vmul.f32 %v6698, 0.7978846
        %v6762 = vmul.f32 %v6699, 0.7978846
        %v6763 = vmul.f32 %v6700, 0.7978846
        %v6764 = vmul.f32 %v6701, 0.7978846
        %v6765 = vmul.f32 %v6702, 0.7978846
        %v6766 = vmul.f32 %v6703, 0.7978846
        %v6767 = vmul.f32 %v6704, 0.7978846
        %v6768 = vmul.f32 %v6705, 0.7978846
        %v6769 = vmul.f32 %v6706, 0.7978846
        %v6770 = vmul.f32 %v6707, 0.7978846
        %v6771 = vmul.f32 %v6708, 0.7978846
        %v6772 = vmul.f32 %v6709, 0.7978846
        %v6773 = vmul.f32 %v6710, 0.7978846
        %v6774 = vmul.f32 %v6711, 0.7978846
        %v6775 = vmul.f32 %v6712, 0.7978846
        %v6776 = vmul.f32 %v6713, 0.7978846
        %v6777 = vmul.f32 %v6714, 0.7978846
        %v6778 = vmul.f32 %v6715, 0.7978846
        %v6779 = vmul.f32 %v6716, 0.7978846
        %v6780 = vmul.f32 %v6717, 0.7978846
        %v6781 = vmul.f32 %v6718, 0.7978846
        %v6782 = vmul.f32 %v6719, 0.7978846
        %v6783 = vmul.f32 %v6720, 0.7978846
        %v6784 = vmul.f32 %v6721, 0.7978846
        %v6785 = vmul.f32 %v6722, 0.7978846
        %v6786 = vmul.f32 %v6723, 0.7978846
        %v6787 = vmul.f32 %v6724, 0.7978846
        %v6788 = vmul.f32 %v6725, 0.7978846
        %v6789 = vmul.f32 %v6726, 0.7978846
        %v6790 = vmul.f32 %v6727, 0.7978846
        %v6791 = vmul.f32 %v6728, 0.7978846
        %v6792 = vmul.f32 %v6729, 0.7978846
        %v6793 = vmul.f32 %v6730, 0.7978846
        %v6794 = vmul.f32 %v6731, 0.7978846
        %v6795 = vtanh.pop %v6732
        %v6796 = vtanh.pop %v6733
        %v6797 = vtanh.pop %v6734
        %v6798 = vtanh.pop %v6735
        %v6799 = vtanh.pop %v6736
        %v6800 = vtanh.pop %v6737
        %v6801 = vtanh.pop %v6738
        %v6802 = vtanh.pop %v6739
        %v6803 = vtanh.pop %v6740
        %v6804 = vtanh.pop %v6741
        %v6805 = vtanh.pop %v6742
        %v6806 = vtanh.pop %v6743
        %v6807 = vtanh.pop %v6744
        %v6808 = vtanh.pop %v6745
        %v6809 = vtanh.pop %v6746
        %v6810 = vtanh.pop %v6747
        %v6811 = vtanh.pop %v6748
        %v6812 = vtanh.pop %v6749
        %v6813 = vtanh.pop %v6750
        %v6814 = vtanh.pop %v6751
        %v6815 = vtanh.pop %v6752
        %v6816 = vtanh.pop %v6753
        %v6817 = vtanh.pop %v6754
        %v6818 = vtanh.pop %v6755
        %v6819 = vtanh.pop %v6756
        %v6820 = vtanh.pop %v6757
        %v6821 = vtanh.pop %v6758
        %v6822 = vtanh.pop %v6759
        %v6823 = vtanh.pop %v6760
        %v6824 = vtanh.pop %v6761
        %v6825 = vtanh.pop %v6762
        %v6826 = vtanh.pop %v6763
        %v6827 = vtanh.pop %v6764
        %v6828 = vtanh.pop %v6765
        %v6829 = vtanh.pop %v6766
        %v6830 = vtanh.pop %v6767
        %v6831 = vtanh.pop %v6768
        %v6832 = vtanh.pop %v6769
        %v6833 = vtanh.pop %v6770
        %v6834 = vtanh.pop %v6771
        %v6835 = vtanh.pop %v6772
        %v6836 = vtanh.pop %v6773
        %v6837 = vtanh.pop %v6774
        %v6838 = vtanh.pop %v6775
        %v6839 = vtanh.pop %v6776
        %v6840 = vtanh.pop %v6777
        %v6841 = vtanh.pop %v6778
        %v6842 = vtanh.pop %v6779
        %v6843 = vtanh.pop %v6780
        %v6844 = vtanh.pop %v6781
        %v6845 = vtanh.pop %v6782
        %v6846 = vtanh.pop %v6783
        %v6847 = vtanh.pop %v6784
        %v6848 = vtanh.pop %v6785
        %v6849 = vtanh.pop %v6786
        %v6850 = vtanh.pop %v6787
        %v6851 = vtanh.pop %v6788
        %v6852 = vtanh.pop %v6789
        %v6853 = vtanh.pop %v6790
        %v6854 = vtanh.pop %v6791
        %v6855 = vtanh.pop %v6792
        %v6856 = vtanh.pop %v6793
        %v6857 = vtanh.pop %v6794
        %v6858 = vadd.f32 %v6795, 1.0
        %v6859 = vadd.f32 %v6796, 1.0
        %v6860 = vadd.f32 %v6797, 1.0
        %v6861 = vadd.f32 %v6798, 1.0
        %v6862 = vadd.f32 %v6799, 1.0
        %v6863 = vadd.f32 %v6800, 1.0
        %v6864 = vadd.f32 %v6801, 1.0
        %v6865 = vadd.f32 %v6802, 1.0
        %v6866 = vadd.f32 %v6803, 1.0
        %v6867 = vadd.f32 %v6804, 1.0
        %v6868 = vadd.f32 %v6805, 1.0
        %v6869 = vadd.f32 %v6806, 1.0
        %v6870 = vadd.f32 %v6807, 1.0
        %v6871 = vadd.f32 %v6808, 1.0
        %v6872 = vadd.f32 %v6809, 1.0
        %v6873 = vadd.f32 %v6810, 1.0
        %v6874 = vadd.f32 %v6811, 1.0
        %v6875 = vadd.f32 %v6812, 1.0
        %v6876 = vadd.f32 %v6813, 1.0
        %v6877 = vadd.f32 %v6814, 1.0
        %v6878 = vadd.f32 %v6815, 1.0
        %v6879 = vadd.f32 %v6816, 1.0
        %v6880 = vadd.f32 %v6817, 1.0
        %v6881 = vadd.f32 %v6818, 1.0
        %v6882 = vadd.f32 %v6819, 1.0
        %v6883 = vadd.f32 %v6820, 1.0
        %v6884 = vadd.f32 %v6821, 1.0
        %v6885 = vadd.f32 %v6822, 1.0
        %v6886 = vadd.f32 %v6823, 1.0
        %v6887 = vadd.f32 %v6824, 1.0
        %v6888 = vadd.f32 %v6825, 1.0
        %v6889 = vadd.f32 %v6826, 1.0
        %v6890 = vadd.f32 %v6827, 1.0
        %v6891 = vadd.f32 %v6828, 1.0
        %v6892 = vadd.f32 %v6829, 1.0
        %v6893 = vadd.f32 %v6830, 1.0
        %v6894 = vadd.f32 %v6831, 1.0
        %v6895 = vadd.f32 %v6832, 1.0
        %v6896 = vadd.f32 %v6833, 1.0
        %v6897 = vadd.f32 %v6834, 1.0
        %v6898 = vadd.f32 %v6835, 1.0
        %v6899 = vadd.f32 %v6836, 1.0
        %v6900 = vadd.f32 %v6837, 1.0
        %v6901 = vadd.f32 %v6838, 1.0
        %v6902 = vadd.f32 %v6839, 1.0
        %v6903 = vadd.f32 %v6840, 1.0
        %v6904 = vadd.f32 %v6841, 1.0
        %v6905 = vadd.f32 %v6842, 1.0
        %v6906 = vadd.f32 %v6843, 1.0
        %v6907 = vadd.f32 %v6844, 1.0
        %v6908 = vadd.f32 %v6845, 1.0
        %v6909 = vadd.f32 %v6846, 1.0
        %v6910 = vadd.f32 %v6847, 1.0
        %v6911 = vadd.f32 %v6848, 1.0
        %v6912 = vadd.f32 %v6849, 1.0
        %v6913 = vadd.f32 %v6850, 1.0
        %v6914 = vadd.f32 %v6851, 1.0
        %v6915 = vadd.f32 %v6852, 1.0
        %v6916 = vadd.f32 %v6853, 1.0
        %v6917 = vadd.f32 %v6854, 1.0
        %v6918 = vadd.f32 %v6855, 1.0
        %v6919 = vadd.f32 %v6856, 1.0
        %v6920 = vadd.f32 %v6857, 1.0
        %v6921 = vmul.f32 %v6417, %v6858
        %v6922 = vmul.f32 %v6418, %v6859
        %v6923 = vmul.f32 %v6419, %v6860
        %v6924 = vmul.f32 %v6420, %v6861
        %v6925 = vmul.f32 %v6421, %v6862
        %v6926 = vmul.f32 %v6422, %v6863
        %v6927 = vmul.f32 %v6423, %v6864
        %v6928 = vmul.f32 %v6424, %v6865
        %v6929 = vmul.f32 %v6425, %v6866
        %v6930 = vmul.f32 %v6426, %v6867
        %v6931 = vmul.f32 %v6427, %v6868
        %v6932 = vmul.f32 %v6428, %v6869
        %v6933 = vmul.f32 %v6429, %v6870
        %v6934 = vmul.f32 %v6430, %v6871
        %v6935 = vmul.f32 %v6431, %v6872
        %v6936 = vmul.f32 %v6432, %v6873
        %v6937 = vmul.f32 %v6433, %v6874
        %v6938 = vmul.f32 %v6434, %v6875
        %v6939 = vmul.f32 %v6435, %v6876
        %v6940 = vmul.f32 %v6436, %v6877
        %v6941 = vmul.f32 %v6437, %v6878
        %v6942 = vmul.f32 %v6438, %v6879
        %v6943 = vmul.f32 %v6439, %v6880
        %v6944 = vmul.f32 %v6440, %v6881
        %v6945 = vmul.f32 %v6441, %v6882
        %v6946 = vmul.f32 %v6442, %v6883
        %v6947 = vmul.f32 %v6443, %v6884
        %v6948 = vmul.f32 %v6444, %v6885
        %v6949 = vmul.f32 %v6445, %v6886
        %v6950 = vmul.f32 %v6446, %v6887
        %v6951 = vmul.f32 %v6447, %v6888
        %v6952 = vmul.f32 %v6448, %v6889
        %v6953 = vmul.f32 %v6449, %v6890
        %v6954 = vmul.f32 %v6450, %v6891
        %v6955 = vmul.f32 %v6451, %v6892
        %v6956 = vmul.f32 %v6452, %v6893
        %v6957 = vmul.f32 %v6453, %v6894
        %v6958 = vmul.f32 %v6454, %v6895
        %v6959 = vmul.f32 %v6455, %v6896
        %v6960 = vmul.f32 %v6456, %v6897
        %v6961 = vmul.f32 %v6457, %v6898
        %v6962 = vmul.f32 %v6458, %v6899
        %v6963 = vmul.f32 %v6459, %v6900
        %v6964 = vmul.f32 %v6460, %v6901
        %v6965 = vmul.f32 %v6461, %v6902
        %v6966 = vmul.f32 %v6462, %v6903
        %v6967 = vmul.f32 %v6463, %v6904
        %v6968 = vmul.f32 %v6464, %v6905
        %v6969 = vmul.f32 %v6465, %v6906
        %v6970 = vmul.f32 %v6466, %v6907
        %v6971 = vmul.f32 %v6467, %v6908
        %v6972 = vmul.f32 %v6468, %v6909
        %v6973 = vmul.f32 %v6469, %v6910
        %v6974 = vmul.f32 %v6470, %v6911
        %v6975 = vmul.f32 %v6471, %v6912
        %v6976 = vmul.f32 %v6472, %v6913
        %v6977 = vmul.f32 %v6473, %v6914
        %v6978 = vmul.f32 %v6474, %v6915
        %v6979 = vmul.f32 %v6475, %v6916
        %v6980 = vmul.f32 %v6476, %v6917
        %v6981 = vmul.f32 %v6477, %v6918
        %v6982 = vmul.f32 %v6478, %v6919
        %v6983 = vmul.f32 %v6479, %v6920
        %v6984 = vpack.c.bf16 %v6928, %v6921
        %v6985 = vpack.c.bf16 %v6929, %v6922
        %v6986 = vpack.c.bf16 %v6930, %v6923
        %v6987 = vpack.c.bf16 %v6931, %v6924
        %v6988 = vpack.c.bf16 %v6932, %v6925
        %v6989 = vpack.c.bf16 %v6933, %v6926
        %v6990 = vpack.c.bf16 %v6934, %v6927
        %v6991 = vpack.c.bf16 %v6942, %v6935
        %v6992 = vpack.c.bf16 %v6943, %v6936
        %v6993 = vpack.c.bf16 %v6944, %v6937
        %v6994 = vpack.c.bf16 %v6945, %v6938
        %v6995 = vpack.c.bf16 %v6946, %v6939
        %v6996 = vpack.c.bf16 %v6947, %v6940
        %v6997 = vpack.c.bf16 %v6948, %v6941
        %v6998 = vpack.c.bf16 %v6956, %v6949
        %v6999 = vpack.c.bf16 %v6957, %v6950
        %v7000 = vpack.c.bf16 %v6958, %v6951
        %v7001 = vpack.c.bf16 %v6959, %v6952
        %v7002 = vpack.c.bf16 %v6960, %v6953
        %v7003 = vpack.c.bf16 %v6961, %v6954
        %v7004 = vpack.c.bf16 %v6962, %v6955
        %v7005 = vpack.c.bf16 %v6970, %v6963
        %v7006 = vpack.c.bf16 %v6971, %v6964
        %v7007 = vpack.c.bf16 %v6972, %v6965
        %v7008 = vpack.c.bf16 %v6973, %v6966
        %v7009 = vpack.c.bf16 %v6974, %v6967
        %v7010 = vpack.c.bf16 %v6975, %v6968
        %v7011 = vpack.c.bf16 %v6976, %v6969
        %v7012 = vpack.c.bf16 %v6977, %v6977
        %v7013 = vpack.c.bf16 %v6978, %v6978
        %v7014 = vpack.c.bf16 %v6979, %v6979
        %v7015 = vpack.c.bf16 %v6980, %v6980
        %v7016 = vpack.c.bf16 %v6981, %v6981
        %v7017 = vpack.c.bf16 %v6982, %v6982
        %v7018 = vpack.c.bf16 %v6983, %v6983
        %v7019 = vld [vmem:[%s826] sm:$0xff]
        %v7020 = vld [vmem:[%s826 + $0x8] sm:$0xff]
        %v7021 = vld [vmem:[%s826 + $0x10] sm:$0xff]
        %v7022 = vld [vmem:[%s826 + $0x18] sm:$0xff]
        %v7023 = vld [vmem:[%s826 + $0x20] sm:$0xff]
        %v7024 = vld [vmem:[%s826 + $0x28] sm:$0xff]
        %v7025 = vld [vmem:[%s826 + $0x30] sm:$0xff]
        %v7026 = vld [vmem:[%s826 + $0x38] sm:$0xff]
        %v7027 = vld [vmem:[%s826 + $0x40] sm:$0xff]
        %v7028 = vld [vmem:[%s826 + $0x48] sm:$0xff]
        %v7029 = vld [vmem:[%s826 + $0x50] sm:$0xff]
        %v7030 = vld [vmem:[%s826 + $0x58] sm:$0xff]
        %v7031 = vld [vmem:[%s826 + $0x60] sm:$0xff]
        %v7032 = vld [vmem:[%s826 + $0x68] sm:$0xff]
        %v7033 = vld [vmem:[%s826 + $0x70] sm:$0xff]
        %v7034 = vld [vmem:[%s826 + $0x78] sm:$0xff]
        %v7035 = vld [vmem:[%s826 + $0x80] sm:$0xff]
        %v7036 = vld [vmem:[%s826 + $0x88] sm:$0xff]
        %v7037 = vld [vmem:[%s826 + $0x90] sm:$0xff]
        %v7038 = vld [vmem:[%s826 + $0x98] sm:$0xff]
        %v7039 = vld [vmem:[%s826 + $0xa0] sm:$0xff]
        %v7040 = vld [vmem:[%s826 + $0xa8] sm:$0xff]
        %v7041 = vld [vmem:[%s826 + $0xb0] sm:$0xff]
        %v7042 = vld [vmem:[%s826 + $0xb8] sm:$0xff]
        %v7043 = vld [vmem:[%s826 + $0xc0] sm:$0xff]
        %v7044 = vld [vmem:[%s826 + $0xc8] sm:$0xff]
        %v7045 = vld [vmem:[%s826 + $0xd0] sm:$0xff]
        %v7046 = vld [vmem:[%s826 + $0xd8] sm:$0xff]
        %v7047 = vld [vmem:[%s826 + $0xe0] sm:$0xff]
        %v7048 = vld [vmem:[%s826 + $0xe8] sm:$0xff]
        %v7049 = vld [vmem:[%s826 + $0xf0] sm:$0xff]
        %v7050 = vld [vmem:[%s826 + $0xf8] sm:$0xff]
        %v7051 = vld [vmem:[%s826 + $0x100] sm:$0xff]
        %v7052 = vld [vmem:[%s826 + $0x108] sm:$0xff]
        %v7053 = vld [vmem:[%s826 + $0x110] sm:$0xff]
        %v7054 = vld [vmem:[%s826 + $0x118] sm:$0xff]
        %v7055 = vld [vmem:[%s826 + $0x120] sm:$0xff]
        %v7056 = vld [vmem:[%s826 + $0x128] sm:$0xff]
        %v7057 = vld [vmem:[%s826 + $0x130] sm:$0xff]
        %v7058 = vld [vmem:[%s826 + $0x138] sm:$0xff]
        %v7059 = vld [vmem:[%s826 + $0x140] sm:$0xff]
        %v7060 = vld [vmem:[%s826 + $0x148] sm:$0xff]
        %v7061 = vld [vmem:[%s826 + $0x150] sm:$0xff]
        %v7062 = vld [vmem:[%s826 + $0x158] sm:$0xff]
        %v7063 = vld [vmem:[%s826 + $0x160] sm:$0xff]
        %v7064 = vld [vmem:[%s826 + $0x168] sm:$0xff]
        %v7065 = vld [vmem:[%s826 + $0x170] sm:$0xff]
        %v7066 = vld [vmem:[%s826 + $0x178] sm:$0xff]
        %v7067 = vld [vmem:[%s826 + $0x180] sm:$0xff]
        %v7068 = vld [vmem:[%s826 + $0x188] sm:$0xff]
        %v7069 = vld [vmem:[%s826 + $0x190] sm:$0xff]
        %v7070 = vld [vmem:[%s826 + $0x198] sm:$0xff]
        %v7071 = vld [vmem:[%s826 + $0x1a0] sm:$0xff]
        %v7072 = vld [vmem:[%s826 + $0x1a8] sm:$0xff]
        %v7073 = vld [vmem:[%s826 + $0x1b0] sm:$0xff]
        %v7074 = vld [vmem:[%s826 + $0x1b8] sm:$0xff]
        %v7075 = vld [vmem:[%s826 + $0x1c0] sm:$0xff]
        %v7076 = vld [vmem:[%s826 + $0x1c8] sm:$0xff]
        %v7077 = vld [vmem:[%s826 + $0x1d0] sm:$0xff]
        %v7078 = vld [vmem:[%s826 + $0x1d8] sm:$0xff]
        %v7079 = vld [vmem:[%s826 + $0x1e0] sm:$0xff]
        %v7080 = vld [vmem:[%s826 + $0x1e8] sm:$0xff]
        %v7081 = vld [vmem:[%s826 + $0x1f0] sm:$0xff]
        %v7082 = vld [vmem:[%s826 + $0x1f8] sm:$0xff]
        %v7083 = vld [vmem:[%s826 + $0x200] sm:$0xff]
        %v7084 = vld [vmem:[%s826 + $0x208] sm:$0xff]
        %v7085 = vld [vmem:[%s826 + $0x210] sm:$0xff]
        %v7086 = vld [vmem:[%s826 + $0x218] sm:$0xff]
        %v7087 = vld [vmem:[%s826 + $0x220] sm:$0xff]
        %v7088 = vld [vmem:[%s826 + $0x228] sm:$0xff]
        %v7089 = vld [vmem:[%s826 + $0x230] sm:$0xff]
        %v7090 = vld [vmem:[%s826 + $0x238] sm:$0xff]
        %v7091 = vld [vmem:[%s826 + $0x240] sm:$0xff]
        %v7092 = vld [vmem:[%s826 + $0x248] sm:$0xff]
        %v7093 = vld [vmem:[%s826 + $0x250] sm:$0xff]
        %v7094 = vld [vmem:[%s826 + $0x258] sm:$0xff]
        %v7095 = vld [vmem:[%s826 + $0x260] sm:$0xff]
        %v7096 = vld [vmem:[%s826 + $0x268] sm:$0xff]
        %v7097 = vld [vmem:[%s826 + $0x270] sm:$0xff]
        %v7098 = vld [vmem:[%s826 + $0x278] sm:$0xff]
        %v7099 = vld [vmem:[%s826 + $0x280] sm:$0xff]
        %v7100 = vld [vmem:[%s826 + $0x288] sm:$0xff]
        %v7101 = vld [vmem:[%s826 + $0x290] sm:$0xff]
        %v7102 = vld [vmem:[%s826 + $0x298] sm:$0xff]
        %v7103 = vld [vmem:[%s826 + $0x2a0] sm:$0xff]
        %v7104 = vld [vmem:[%s826 + $0x2a8] sm:$0xff]
        %v7105 = vld [vmem:[%s826 + $0x2b0] sm:$0xff]
        %v7106 = vld [vmem:[%s826 + $0x2b8] sm:$0xff]
        %v7107 = vld [vmem:[%s826 + $0x2c0] sm:$0xff]
        %v7108 = vld [vmem:[%s826 + $0x2c8] sm:$0xff]
        %v7109 = vld [vmem:[%s826 + $0x2d0] sm:$0xff]
        %v7110 = vld [vmem:[%s826 + $0x2d8] sm:$0xff]
        %v7111 = vld [vmem:[%s826 + $0x2e0] sm:$0xff]
        %v7112 = vld [vmem:[%s826 + $0x2e8] sm:$0xff]
        %v7113 = vld [vmem:[%s826 + $0x2f0] sm:$0xff]
        %v7114 = vld [vmem:[%s826 + $0x2f8] sm:$0xff]
        %v7115 = vld [vmem:[%s826 + $0x300] sm:$0xff]
        %v7116 = vld [vmem:[%s826 + $0x308] sm:$0xff]
        %v7117 = vld [vmem:[%s826 + $0x310] sm:$0xff]
        %v7118 = vld [vmem:[%s826 + $0x318] sm:$0xff]
        %v7119 = vld [vmem:[%s826 + $0x320] sm:$0xff]
        %v7120 = vld [vmem:[%s826 + $0x328] sm:$0xff]
        %v7121 = vld [vmem:[%s826 + $0x330] sm:$0xff]
        %v7122 = vld [vmem:[%s826 + $0x338] sm:$0xff]
        %v7123 = vld [vmem:[%s826 + $0x340] sm:$0xff]
        %v7124 = vld [vmem:[%s826 + $0x348] sm:$0xff]
        %v7125 = vld [vmem:[%s826 + $0x350] sm:$0xff]
        %v7126 = vld [vmem:[%s826 + $0x358] sm:$0xff]
        %v7127 = vld [vmem:[%s826 + $0x360] sm:$0xff]
        %v7128 = vld [vmem:[%s826 + $0x368] sm:$0xff]
        %v7129 = vld [vmem:[%s826 + $0x370] sm:$0xff]
        %v7130 = vld [vmem:[%s826 + $0x378] sm:$0xff]
        %v7131 = vld [vmem:[%s980] sm:$0x3]
        %v7133 = vlaneseq
        %v7134 = vshrl.u32 %v7133, 7
        %v7135 = vsub.s32 0, %v7134
        %v7136 = vrot.slane %v7131, %v7135
        %v7137 = vlaneseq
        %v7138 = vshrl.u32 %v7137, 7
        %v7139 = vsub.s32 1, %v7138
        %v7140 = vrot.slane %v7131, %v7139
        %v7255 = vunpack.c.l.b16 %v7019
        %v7256 = vunpack.c.h.b16 %v7019
        %v7257 = vunpack.c.l.b16 %v7020
        %v7258 = vunpack.c.h.b16 %v7020
        %v7259 = vunpack.c.l.b16 %v7021
        %v7260 = vunpack.c.h.b16 %v7021
        %v7261 = vunpack.c.l.b16 %v7022
        %v7262 = vunpack.c.h.b16 %v7022
        %v7263 = vunpack.c.l.b16 %v7023
        %v7264 = vunpack.c.h.b16 %v7023
        %v7265 = vunpack.c.l.b16 %v7024
        %v7266 = vunpack.c.h.b16 %v7024
        %v7267 = vunpack.c.l.b16 %v7025
        %v7268 = vunpack.c.h.b16 %v7025
        %v7269 = vunpack.c.l.b16 %v7026
        %v7270 = vunpack.c.h.b16 %v7026
        %v7271 = vunpack.c.l.b16 %v7027
        %v7272 = vunpack.c.h.b16 %v7027
        %v7273 = vunpack.c.l.b16 %v7028
        %v7274 = vunpack.c.h.b16 %v7028
        %v7275 = vunpack.c.l.b16 %v7029
        %v7276 = vunpack.c.h.b16 %v7029
        %v7277 = vunpack.c.l.b16 %v7030
        %v7278 = vunpack.c.h.b16 %v7030
        %v7279 = vunpack.c.l.b16 %v7031
        %v7280 = vunpack.c.h.b16 %v7031
        %v7281 = vunpack.c.l.b16 %v7032
        %v7282 = vunpack.c.h.b16 %v7032
        %v7283 = vunpack.c.l.b16 %v7033
        %v7284 = vunpack.c.h.b16 %v7033
        %v7285 = vunpack.c.l.b16 %v7034
        %v7286 = vunpack.c.h.b16 %v7034
        %v7287 = vunpack.c.l.b16 %v7035
        %v7288 = vunpack.c.h.b16 %v7035
        %v7289 = vunpack.c.l.b16 %v7036
        %v7290 = vunpack.c.h.b16 %v7036
        %v7291 = vunpack.c.l.b16 %v7037
        %v7292 = vunpack.c.h.b16 %v7037
        %v7293 = vunpack.c.l.b16 %v7038
        %v7294 = vunpack.c.h.b16 %v7038
        %v7295 = vunpack.c.l.b16 %v7039
        %v7296 = vunpack.c.h.b16 %v7039
        %v7297 = vunpack.c.l.b16 %v7040
        %v7298 = vunpack.c.h.b16 %v7040
        %v7299 = vunpack.c.l.b16 %v7041
        %v7300 = vunpack.c.h.b16 %v7041
        %v7301 = vunpack.c.l.b16 %v7042
        %v7302 = vunpack.c.h.b16 %v7042
        %v7303 = vunpack.c.l.b16 %v7043
        %v7304 = vunpack.c.h.b16 %v7043
        %v7305 = vunpack.c.l.b16 %v7044
        %v7306 = vunpack.c.h.b16 %v7044
        %v7307 = vunpack.c.l.b16 %v7045
        %v7308 = vunpack.c.h.b16 %v7045
        %v7309 = vunpack.c.l.b16 %v7046
        %v7310 = vunpack.c.h.b16 %v7046
        %v7311 = vunpack.c.l.b16 %v7047
        %v7312 = vunpack.c.h.b16 %v7047
        %v7313 = vunpack.c.l.b16 %v7048
        %v7314 = vunpack.c.h.b16 %v7048
        %v7315 = vunpack.c.l.b16 %v7049
        %v7316 = vunpack.c.h.b16 %v7049
        %v7317 = vunpack.c.l.b16 %v7050
        %v7318 = vunpack.c.h.b16 %v7050
        %v7319 = vunpack.c.l.b16 %v7051
        %v7320 = vunpack.c.h.b16 %v7051
        %v7321 = vunpack.c.l.b16 %v7052
        %v7322 = vunpack.c.h.b16 %v7052
        %v7323 = vunpack.c.l.b16 %v7053
        %v7324 = vunpack.c.h.b16 %v7053
        %v7325 = vunpack.c.l.b16 %v7054
        %v7326 = vunpack.c.h.b16 %v7054
        %v7327 = vunpack.c.l.b16 %v7055
        %v7328 = vunpack.c.h.b16 %v7055
        %v7329 = vunpack.c.l.b16 %v7056
        %v7330 = vunpack.c.h.b16 %v7056
        %v7331 = vunpack.c.l.b16 %v7057
        %v7332 = vunpack.c.h.b16 %v7057
        %v7333 = vunpack.c.l.b16 %v7058
        %v7334 = vunpack.c.h.b16 %v7058
        %v7335 = vunpack.c.l.b16 %v7059
        %v7336 = vunpack.c.h.b16 %v7059
        %v7337 = vunpack.c.l.b16 %v7060
        %v7338 = vunpack.c.h.b16 %v7060
        %v7339 = vunpack.c.l.b16 %v7061
        %v7340 = vunpack.c.h.b16 %v7061
        %v7341 = vunpack.c.l.b16 %v7062
        %v7342 = vunpack.c.h.b16 %v7062
        %v7343 = vunpack.c.l.b16 %v7063
        %v7344 = vunpack.c.h.b16 %v7063
        %v7345 = vunpack.c.l.b16 %v7064
        %v7346 = vunpack.c.h.b16 %v7064
        %v7347 = vunpack.c.l.b16 %v7065
        %v7348 = vunpack.c.h.b16 %v7065
        %v7349 = vunpack.c.l.b16 %v7066
        %v7350 = vunpack.c.h.b16 %v7066
        %v7351 = vunpack.c.l.b16 %v7067
        %v7352 = vunpack.c.h.b16 %v7067
        %v7353 = vunpack.c.l.b16 %v7068
        %v7354 = vunpack.c.h.b16 %v7068
        %v7355 = vunpack.c.l.b16 %v7069
        %v7356 = vunpack.c.h.b16 %v7069
        %v7357 = vunpack.c.l.b16 %v7070
        %v7358 = vunpack.c.h.b16 %v7070
        %v7359 = vunpack.c.l.b16 %v7071
        %v7360 = vunpack.c.h.b16 %v7071
        %v7361 = vunpack.c.l.b16 %v7072
        %v7362 = vunpack.c.h.b16 %v7072
        %v7363 = vunpack.c.l.b16 %v7073
        %v7364 = vunpack.c.h.b16 %v7073
        %v7365 = vunpack.c.l.b16 %v7074
        %v7366 = vunpack.c.h.b16 %v7074
        %v7367 = vunpack.c.l.b16 %v7075
        %v7368 = vunpack.c.h.b16 %v7075
        %v7369 = vunpack.c.l.b16 %v7076
        %v7370 = vunpack.c.h.b16 %v7076
        %v7371 = vunpack.c.l.b16 %v7077
        %v7372 = vunpack.c.h.b16 %v7077
        %v7373 = vunpack.c.l.b16 %v7078
        %v7374 = vunpack.c.h.b16 %v7078
        %v7375 = vunpack.c.l.b16 %v7079
        %v7376 = vunpack.c.h.b16 %v7079
        %v7377 = vunpack.c.l.b16 %v7080
        %v7378 = vunpack.c.h.b16 %v7080
        %v7379 = vunpack.c.l.b16 %v7081
        %v7380 = vunpack.c.h.b16 %v7081
        %v7381 = vunpack.c.l.b16 %v7082
        %v7382 = vunpack.c.h.b16 %v7082
        %v7383 = vunpack.c.l.b16 %v7083
        %v7384 = vunpack.c.h.b16 %v7083
        %v7385 = vunpack.c.l.b16 %v7084
        %v7386 = vunpack.c.h.b16 %v7084
        %v7387 = vunpack.c.l.b16 %v7085
        %v7388 = vunpack.c.h.b16 %v7085
        %v7389 = vunpack.c.l.b16 %v7086
        %v7390 = vunpack.c.h.b16 %v7086
        %v7391 = vunpack.c.l.b16 %v7087
        %v7392 = vunpack.c.h.b16 %v7087
        %v7393 = vunpack.c.l.b16 %v7088
        %v7394 = vunpack.c.h.b16 %v7088
        %v7395 = vunpack.c.l.b16 %v7089
        %v7396 = vunpack.c.h.b16 %v7089
        %v7397 = vunpack.c.l.b16 %v7090
        %v7398 = vunpack.c.h.b16 %v7090
        %v7399 = vunpack.c.l.b16 %v7091
        %v7400 = vunpack.c.h.b16 %v7091
        %v7401 = vunpack.c.l.b16 %v7092
        %v7402 = vunpack.c.h.b16 %v7092
        %v7403 = vunpack.c.l.b16 %v7093
        %v7404 = vunpack.c.h.b16 %v7093
        %v7405 = vunpack.c.l.b16 %v7094
        %v7406 = vunpack.c.h.b16 %v7094
        %v7407 = vunpack.c.l.b16 %v7095
        %v7408 = vunpack.c.h.b16 %v7095
        %v7409 = vunpack.c.l.b16 %v7096
        %v7410 = vunpack.c.h.b16 %v7096
        %v7411 = vunpack.c.l.b16 %v7097
        %v7412 = vunpack.c.h.b16 %v7097
        %v7413 = vunpack.c.l.b16 %v7098
        %v7414 = vunpack.c.h.b16 %v7098
        %v7415 = vunpack.c.l.b16 %v7099
        %v7416 = vunpack.c.h.b16 %v7099
        %v7417 = vunpack.c.l.b16 %v7100
        %v7418 = vunpack.c.h.b16 %v7100
        %v7419 = vunpack.c.l.b16 %v7101
        %v7420 = vunpack.c.h.b16 %v7101
        %v7421 = vunpack.c.l.b16 %v7102
        %v7422 = vunpack.c.h.b16 %v7102
        %v7423 = vunpack.c.l.b16 %v7103
        %v7424 = vunpack.c.h.b16 %v7103
        %v7425 = vunpack.c.l.b16 %v7104
        %v7426 = vunpack.c.h.b16 %v7104
        %v7427 = vunpack.c.l.b16 %v7105
        %v7428 = vunpack.c.h.b16 %v7105
        %v7429 = vunpack.c.l.b16 %v7106
        %v7430 = vunpack.c.h.b16 %v7106
        %v7431 = vunpack.c.l.b16 %v7107
        %v7432 = vunpack.c.h.b16 %v7107
        %v7433 = vunpack.c.l.b16 %v7108
        %v7434 = vunpack.c.h.b16 %v7108
        %v7435 = vunpack.c.l.b16 %v7109
        %v7436 = vunpack.c.h.b16 %v7109
        %v7437 = vunpack.c.l.b16 %v7110
        %v7438 = vunpack.c.h.b16 %v7110
        %v7439 = vunpack.c.l.b16 %v7111
        %v7440 = vunpack.c.h.b16 %v7111
        %v7441 = vunpack.c.l.b16 %v7112
        %v7442 = vunpack.c.h.b16 %v7112
        %v7443 = vunpack.c.l.b16 %v7113
        %v7444 = vunpack.c.h.b16 %v7113
        %v7445 = vunpack.c.l.b16 %v7114
        %v7446 = vunpack.c.h.b16 %v7114
        %v7447 = vunpack.c.l.b16 %v7115
        %v7448 = vunpack.c.h.b16 %v7115
        %v7449 = vunpack.c.l.b16 %v7116
        %v7450 = vunpack.c.h.b16 %v7116
        %v7451 = vunpack.c.l.b16 %v7117
        %v7452 = vunpack.c.h.b16 %v7117
        %v7453 = vunpack.c.l.b16 %v7118
        %v7454 = vunpack.c.h.b16 %v7118
        %v7455 = vunpack.c.l.b16 %v7119
        %v7456 = vunpack.c.h.b16 %v7119
        %v7457 = vunpack.c.l.b16 %v7120
        %v7458 = vunpack.c.h.b16 %v7120
        %v7459 = vunpack.c.l.b16 %v7121
        %v7460 = vunpack.c.h.b16 %v7121
        %v7461 = vunpack.c.l.b16 %v7122
        %v7462 = vunpack.c.h.b16 %v7122
        %v7463 = vunpack.c.l.b16 %v7123
        %v7464 = vunpack.c.h.b16 %v7123
        %v7465 = vunpack.c.l.b16 %v7124
        %v7466 = vunpack.c.h.b16 %v7124
        %v7467 = vunpack.c.l.b16 %v7125
        %v7468 = vunpack.c.h.b16 %v7125
        %v7469 = vunpack.c.l.b16 %v7126
        %v7470 = vunpack.c.h.b16 %v7126
        %v7471 = vunpack.c.l.b16 %v7127
        %v7472 = vunpack.c.h.b16 %v7127
        %v7473 = vunpack.c.l.b16 %v7128
        %v7474 = vunpack.c.h.b16 %v7128
        %v7475 = vunpack.c.l.b16 %v7129
        %v7476 = vunpack.c.h.b16 %v7129
        %v7477 = vunpack.c.l.b16 %v7130
        %v7478 = vunpack.c.h.b16 %v7130
        %v7479 = vpack.c.b16 %v7257, %v7255
        %v7480 = vpack.c.b16 %v7258, %v7256
        %v7481 = vpack.c.b16 %v7261, %v7259
        %v7482 = vpack.c.b16 %v7262, %v7260
        %v7483 = vpack.c.b16 %v7265, %v7263
        %v7484 = vpack.c.b16 %v7266, %v7264
        %v7485 = vpack.c.b16 %v7269, %v7267
        %v7486 = vpack.c.b16 %v7270, %v7268
        %v7487 = vpack.c.b16 %v7273, %v7271
        %v7488 = vpack.c.b16 %v7274, %v7272
        %v7489 = vpack.c.b16 %v7277, %v7275
        %v7490 = vpack.c.b16 %v7278, %v7276
        %v7491 = vpack.c.b16 %v7281, %v7279
        %v7492 = vpack.c.b16 %v7282, %v7280
        %v7493 = vpack.c.b16 %v7285, %v7283
        %v7494 = vpack.c.b16 %v7286, %v7284
        %v7495 = vpack.c.b16 %v7289, %v7287
        %v7496 = vpack.c.b16 %v7290, %v7288
        %v7497 = vpack.c.b16 %v7293, %v7291
        %v7498 = vpack.c.b16 %v7294, %v7292
        %v7499 = vpack.c.b16 %v7297, %v7295
        %v7500 = vpack.c.b16 %v7298, %v7296
        %v7501 = vpack.c.b16 %v7301, %v7299
        %v7502 = vpack.c.b16 %v7302, %v7300
        %v7503 = vpack.c.b16 %v7305, %v7303
        %v7504 = vpack.c.b16 %v7306, %v7304
        %v7505 = vpack.c.b16 %v7309, %v7307
        %v7506 = vpack.c.b16 %v7310, %v7308
        %v7507 = vpack.c.b16 %v7313, %v7311
        %v7508 = vpack.c.b16 %v7314, %v7312
        %v7509 = vpack.c.b16 %v7317, %v7315
        %v7510 = vpack.c.b16 %v7318, %v7316
        %v7511 = vpack.c.b16 %v7321, %v7319
        %v7512 = vpack.c.b16 %v7322, %v7320
        %v7513 = vpack.c.b16 %v7325, %v7323
        %v7514 = vpack.c.b16 %v7326, %v7324
        %v7515 = vpack.c.b16 %v7329, %v7327
        %v7516 = vpack.c.b16 %v7330, %v7328
        %v7517 = vpack.c.b16 %v7333, %v7331
        %v7518 = vpack.c.b16 %v7334, %v7332
        %v7519 = vpack.c.b16 %v7337, %v7335
        %v7520 = vpack.c.b16 %v7338, %v7336
        %v7521 = vpack.c.b16 %v7341, %v7339
        %v7522 = vpack.c.b16 %v7342, %v7340
        %v7523 = vpack.c.b16 %v7345, %v7343
        %v7524 = vpack.c.b16 %v7346, %v7344
        %v7525 = vpack.c.b16 %v7349, %v7347
        %v7526 = vpack.c.b16 %v7350, %v7348
        %v7527 = vpack.c.b16 %v7353, %v7351
        %v7528 = vpack.c.b16 %v7354, %v7352
        %v7529 = vpack.c.b16 %v7357, %v7355
        %v7530 = vpack.c.b16 %v7358, %v7356
        %v7531 = vpack.c.b16 %v7361, %v7359
        %v7532 = vpack.c.b16 %v7362, %v7360
        %v7533 = vpack.c.b16 %v7365, %v7363
        %v7534 = vpack.c.b16 %v7366, %v7364
        %v7535 = vpack.c.b16 %v7369, %v7367
        %v7536 = vpack.c.b16 %v7370, %v7368
        %v7537 = vpack.c.b16 %v7373, %v7371
        %v7538 = vpack.c.b16 %v7374, %v7372
        %v7539 = vpack.c.b16 %v7377, %v7375
        %v7540 = vpack.c.b16 %v7378, %v7376
        %v7541 = vpack.c.b16 %v7381, %v7379
        %v7542 = vpack.c.b16 %v7382, %v7380
        %v7543 = vpack.c.b16 %v7385, %v7383
        %v7544 = vpack.c.b16 %v7386, %v7384
        %v7545 = vpack.c.b16 %v7389, %v7387
        %v7546 = vpack.c.b16 %v7390, %v7388
        %v7547 = vpack.c.b16 %v7393, %v7391
        %v7548 = vpack.c.b16 %v7394, %v7392
        %v7549 = vpack.c.b16 %v7397, %v7395
        %v7550 = vpack.c.b16 %v7398, %v7396
        %v7551 = vpack.c.b16 %v7401, %v7399
        %v7552 = vpack.c.b16 %v7402, %v7400
        %v7553 = vpack.c.b16 %v7405, %v7403
        %v7554 = vpack.c.b16 %v7406, %v7404
        %v7555 = vpack.c.b16 %v7409, %v7407
        %v7556 = vpack.c.b16 %v7410, %v7408
        %v7557 = vpack.c.b16 %v7413, %v7411
        %v7558 = vpack.c.b16 %v7414, %v7412
        %v7559 = vpack.c.b16 %v7417, %v7415
        %v7560 = vpack.c.b16 %v7418, %v7416
        %v7561 = vpack.c.b16 %v7421, %v7419
        %v7562 = vpack.c.b16 %v7422, %v7420
        %v7563 = vpack.c.b16 %v7425, %v7423
        %v7564 = vpack.c.b16 %v7426, %v7424
        %v7565 = vpack.c.b16 %v7429, %v7427
        %v7566 = vpack.c.b16 %v7430, %v7428
        %v7567 = vpack.c.b16 %v7433, %v7431
        %v7568 = vpack.c.b16 %v7434, %v7432
        %v7569 = vpack.c.b16 %v7437, %v7435
        %v7570 = vpack.c.b16 %v7438, %v7436
        %v7571 = vpack.c.b16 %v7441, %v7439
        %v7572 = vpack.c.b16 %v7442, %v7440
        %v7573 = vpack.c.b16 %v7445, %v7443
        %v7574 = vpack.c.b16 %v7446, %v7444
        %v7575 = vpack.c.b16 %v7449, %v7447
        %v7576 = vpack.c.b16 %v7450, %v7448
        %v7577 = vpack.c.b16 %v7453, %v7451
        %v7578 = vpack.c.b16 %v7454, %v7452
        %v7579 = vpack.c.b16 %v7457, %v7455
        %v7580 = vpack.c.b16 %v7458, %v7456
        %v7581 = vpack.c.b16 %v7461, %v7459
        %v7582 = vpack.c.b16 %v7462, %v7460
        %v7583 = vpack.c.b16 %v7465, %v7463
        %v7584 = vpack.c.b16 %v7466, %v7464
        %v7585 = vpack.c.b16 %v7469, %v7467
        %v7586 = vpack.c.b16 %v7470, %v7468
        %v7587 = vpack.c.b16 %v7473, %v7471
        %v7588 = vpack.c.b16 %v7474, %v7472
        %v7589 = vpack.c.b16 %v7477, %v7475
        %v7590 = vpack.c.b16 %v7478, %v7476
        %7703 = vmatprep.subr.bf16.mxu0 %v7494
        %7704 = vmatpush1.bf16.msra.mxu0 %v7493
        %7705 = vmatprep.subr.bf16.mxu0 %v7492
        %7706 = vmatpush1.bf16.msra.mxu0 %v7491
        %7707 = vmatprep.subr.bf16.mxu0 %v7490
        %7708 = vmatpush1.bf16.msra.mxu0 %v7489
        %7709 = vmatprep.subr.bf16.mxu0 %v7488
        %7710 = vmatpush1.bf16.msra.mxu0 %v7487
        %7711 = vmatprep.subr.bf16.mxu0 %v7486
        %7712 = vmatpush1.bf16.msra.mxu0 %v7485
        %7713 = vmatprep.subr.bf16.mxu0 %v7484
        %7714 = vmatpush1.bf16.msra.mxu0 %v7483
        %7715 = vmatprep.subr.bf16.mxu0 %v7482
        %7716 = vmatpush1.bf16.msra.mxu0 %v7481
        %7717 = vmatprep.subr.bf16.mxu0 %v7480
        %7718 = vmatpush1.bf16.msra.mxu0 %v7479
        %7719 = vmatprep.subr.bf16.mxu0 %v7510
        %7720 = vmatpush2.bf16.msra.mxu0 %v7509
        %7721 = vmatprep.subr.bf16.mxu0 %v7508
        %7722 = vmatpush2.bf16.msra.mxu0 %v7507
        %7723 = vmatprep.subr.bf16.mxu0 %v7506
        %7724 = vmatpush2.bf16.msra.mxu0 %v7505
        %7725 = vmatprep.subr.bf16.mxu0 %v7504
        %7726 = vmatpush2.bf16.msra.mxu0 %v7503
        %7727 = vmatprep.subr.bf16.mxu0 %v7502
        %7728 = vmatpush2.bf16.msra.mxu0 %v7501
        %7729 = vmatprep.subr.bf16.mxu0 %v7500
        %7730 = vmatpush2.bf16.msra.mxu0 %v7499
        %7731 = vmatprep.subr.bf16.mxu0 %v7498
        %7732 = vmatpush2.bf16.msra.mxu0 %v7497
        %7733 = vmatprep.subr.bf16.mxu0 %v7496
        %7734 = vmatpush2.bf16.msra.mxu0 %v7495
        %7735 = vmatprep.mubr.bf16.mxu0 %v6985
        %7736 = vmatmul.mubr.bf16.gmra.mxu0 %v6984
        %v7737 = vpop.f32.mrf.mxu0
        %v7738 = vadd.f32 %v7136, %v7737
        %v7739 = vpop.f32.mrf.mxu0
        %v7740 = vadd.f32 %v7140, %v7739
        %v7741 = vpop.f32.mrf.mxu0
        %v7742 = vadd.f32 %v7136, %v7741
        %v7743 = vpop.f32.mrf.mxu0
        %v7744 = vadd.f32 %v7140, %v7743
        %7745 = vmatprep.mubr.bf16.mxu0 %v6992
        %7746 = vmatmul.mubr.bf16.gmra.mxu0 %v6991
        %v7747 = vpop.f32.mrf.mxu0
        %v7748 = vadd.f32 %v7136, %v7747
        %v7749 = vpop.f32.mrf.mxu0
        %v7750 = vadd.f32 %v7140, %v7749
        %v7751 = vpop.f32.mrf.mxu0
        %v7752 = vadd.f32 %v7136, %v7751
        %v7753 = vpop.f32.mrf.mxu0
        %v7754 = vadd.f32 %v7140, %v7753
        %7755 = vmatprep.mubr.bf16.mxu0 %v6999
        %7756 = vmatmul.mubr.bf16.gmra.mxu0 %v6998
        %v7757 = vpop.f32.mrf.mxu0
        %v7758 = vadd.f32 %v7136, %v7757
        %v7759 = vpop.f32.mrf.mxu0
        %v7760 = vadd.f32 %v7140, %v7759
        %v7761 = vpop.f32.mrf.mxu0
        %v7762 = vadd.f32 %v7136, %v7761
        %v7763 = vpop.f32.mrf.mxu0
        %v7764 = vadd.f32 %v7140, %v7763
        %7765 = vmatprep.mubr.bf16.mxu0 %v7006
        %7766 = vmatmul.mubr.bf16.gmra.mxu0 %v7005
        %v7767 = vpop.f32.mrf.mxu0
        %v7768 = vadd.f32 %v7136, %v7767
        %v7769 = vpop.f32.mrf.mxu0
        %v7770 = vadd.f32 %v7140, %v7769
        %v7771 = vpop.f32.mrf.mxu0
        %v7772 = vadd.f32 %v7136, %v7771
        %v7773 = vpop.f32.mrf.mxu0
        %v7774 = vadd.f32 %v7140, %v7773
        %7775 = vmatprep.mubr.bf16.mxu0 %v7013
        %7776 = vmatmul.mubr.bf16.gmra.mxu0 %v7012
        %v7777 = vpop.f32.mrf.mxu0
        %v7778 = vadd.f32 %v7136, %v7777
        %v7779 = vpop.f32.mrf.mxu0
        %v7780 = vadd.f32 %v7140, %v7779
        %v7781 = vpop.f32.mrf.mxu0
        %v7782 = vpop.f32.mrf.mxu0
        %7783 = vdwg.mxu0
        %7784 = vmatprep.subr.bf16.mxu0 %v7526
        %7785 = vmatpush1.bf16.msra.mxu0 %v7525
        %7786 = vmatprep.subr.bf16.mxu0 %v7524
        %7787 = vmatpush1.bf16.msra.mxu0 %v7523
        %7788 = vmatprep.subr.bf16.mxu0 %v7522
        %7789 = vmatpush1.bf16.msra.mxu0 %v7521
        %7790 = vmatprep.subr.bf16.mxu0 %v7520
        %7791 = vmatpush1.bf16.msra.mxu0 %v7519
        %7792 = vmatprep.subr.bf16.mxu0 %v7518
        %7793 = vmatpush1.bf16.msra.mxu0 %v7517
        %7794 = vmatprep.subr.bf16.mxu0 %v7516
        %7795 = vmatpush1.bf16.msra.mxu0 %v7515
        %7796 = vmatprep.subr.bf16.mxu0 %v7514
        %7797 = vmatpush1.bf16.msra.mxu0 %v7513
        %7798 = vmatprep.subr.bf16.mxu0 %v7512
        %7799 = vmatpush1.bf16.msra.mxu0 %v7511
        %7800 = vmatprep.subr.bf16.mxu0 %v7542
        %7801 = vmatpush2.bf16.msra.mxu0 %v7541
        %7802 = vmatprep.subr.bf16.mxu0 %v7540
        %7803 = vmatpush2.bf16.msra.mxu0 %v7539
        %7804 = vmatprep.subr.bf16.mxu0 %v7538
        %7805 = vmatpush2.bf16.msra.mxu0 %v7537
        %7806 = vmatprep.subr.bf16.mxu0 %v7536
        %7807 = vmatpush2.bf16.msra.mxu0 %v7535
        %7808 = vmatprep.subr.bf16.mxu0 %v7534
        %7809 = vmatpush2.bf16.msra.mxu0 %v7533
        %7810 = vmatprep.subr.bf16.mxu0 %v7532
        %7811 = vmatpush2.bf16.msra.mxu0 %v7531
        %7812 = vmatprep.subr.bf16.mxu0 %v7530
        %7813 = vmatpush2.bf16.msra.mxu0 %v7529
        %7814 = vmatprep.subr.bf16.mxu0 %v7528
        %7815 = vmatpush2.bf16.msra.mxu0 %v7527
        %7816 = vmatprep.mubr.bf16.mxu0 %v6987
        %7817 = vmatmul.mubr.bf16.gmra.mxu0 %v6986
        %v7818 = vpop.f32.mrf.mxu0
        %v7819 = vadd.f32 %v7738, %v7818
        %v7820 = vpop.f32.mrf.mxu0
        %v7821 = vadd.f32 %v7740, %v7820
        %v7822 = vpop.f32.mrf.mxu0
        %v7823 = vadd.f32 %v7742, %v7822
        %v7824 = vpop.f32.mrf.mxu0
        %v7825 = vadd.f32 %v7744, %v7824
        %7826 = vmatprep.mubr.bf16.mxu0 %v6994
        %7827 = vmatmul.mubr.bf16.gmra.mxu0 %v6993
        %v7828 = vpop.f32.mrf.mxu0
        %v7829 = vadd.f32 %v7748, %v7828
        %v7830 = vpop.f32.mrf.mxu0
        %v7831 = vadd.f32 %v7750, %v7830
        %v7832 = vpop.f32.mrf.mxu0
        %v7833 = vadd.f32 %v7752, %v7832
        %v7834 = vpop.f32.mrf.mxu0
        %v7835 = vadd.f32 %v7754, %v7834
        %7836 = vmatprep.mubr.bf16.mxu0 %v7001
        %7837 = vmatmul.mubr.bf16.gmra.mxu0 %v7000
        %v7838 = vpop.f32.mrf.mxu0
        %v7839 = vadd.f32 %v7758, %v7838
        %v7840 = vpop.f32.mrf.mxu0
        %v7841 = vadd.f32 %v7760, %v7840
        %v7842 = vpop.f32.mrf.mxu0
        %v7843 = vadd.f32 %v7762, %v7842
        %v7844 = vpop.f32.mrf.mxu0
        %v7845 = vadd.f32 %v7764, %v7844
        %7846 = vmatprep.mubr.bf16.mxu0 %v7008
        %7847 = vmatmul.mubr.bf16.gmra.mxu0 %v7007
        %v7848 = vpop.f32.mrf.mxu0
        %v7849 = vadd.f32 %v7768, %v7848
        %v7850 = vpop.f32.mrf.mxu0
        %v7851 = vadd.f32 %v7770, %v7850
        %v7852 = vpop.f32.mrf.mxu0
        %v7853 = vadd.f32 %v7772, %v7852
        %v7854 = vpop.f32.mrf.mxu0
        %v7855 = vadd.f32 %v7774, %v7854
        %7856 = vmatprep.mubr.bf16.mxu0 %v7015
        %7857 = vmatmul.mubr.bf16.gmra.mxu0 %v7014
        %v7858 = vpop.f32.mrf.mxu0
        %v7859 = vadd.f32 %v7778, %v7858
        %v7860 = vpop.f32.mrf.mxu0
        %v7861 = vadd.f32 %v7780, %v7860
        %v7862 = vpop.f32.mrf.mxu0
        %v7863 = vpop.f32.mrf.mxu0
        %7864 = vdwg.mxu0
        %7865 = vmatprep.subr.bf16.mxu0 %v7558
        %7866 = vmatpush1.bf16.msra.mxu0 %v7557
        %7867 = vmatprep.subr.bf16.mxu0 %v7556
        %7868 = vmatpush1.bf16.msra.mxu0 %v7555
        %7869 = vmatprep.subr.bf16.mxu0 %v7554
        %7870 = vmatpush1.bf16.msra.mxu0 %v7553
        %7871 = vmatprep.subr.bf16.mxu0 %v7552
        %7872 = vmatpush1.bf16.msra.mxu0 %v7551
        %7873 = vmatprep.subr.bf16.mxu0 %v7550
        %7874 = vmatpush1.bf16.msra.mxu0 %v7549
        %7875 = vmatprep.subr.bf16.mxu0 %v7548
        %7876 = vmatpush1.bf16.msra.mxu0 %v7547
        %7877 = vmatprep.subr.bf16.mxu0 %v7546
        %7878 = vmatpush1.bf16.msra.mxu0 %v7545
        %7879 = vmatprep.subr.bf16.mxu0 %v7544
        %7880 = vmatpush1.bf16.msra.mxu0 %v7543
        %7881 = vmatprep.subr.bf16.mxu0 %v7574
        %7882 = vmatpush2.bf16.msra.mxu0 %v7573
        %7883 = vmatprep.subr.bf16.mxu0 %v7572
        %7884 = vmatpush2.bf16.msra.mxu0 %v7571
        %7885 = vmatprep.subr.bf16.mxu0 %v7570
        %7886 = vmatpush2.bf16.msra.mxu0 %v7569
        %7887 = vmatprep.subr.bf16.mxu0 %v7568
        %7888 = vmatpush2.bf16.msra.mxu0 %v7567
        %7889 = vmatprep.subr.bf16.mxu0 %v7566
        %7890 = vmatpush2.bf16.msra.mxu0 %v7565
        %7891 = vmatprep.subr.bf16.mxu0 %v7564
        %7892 = vmatpush2.bf16.msra.mxu0 %v7563
        %7893 = vmatprep.subr.bf16.mxu0 %v7562
        %7894 = vmatpush2.bf16.msra.mxu0 %v7561
        %7895 = vmatprep.subr.bf16.mxu0 %v7560
        %7896 = vmatpush2.bf16.msra.mxu0 %v7559
        %7897 = vmatprep.mubr.bf16.mxu0 %v6989
        %7898 = vmatmul.mubr.bf16.gmra.mxu0 %v6988
        %v7899 = vpop.f32.mrf.mxu0
        %v7900 = vadd.f32 %v7819, %v7899
        %v7901 = vpop.f32.mrf.mxu0
        %v7902 = vadd.f32 %v7821, %v7901
        %v7903 = vpop.f32.mrf.mxu0
        %v7904 = vadd.f32 %v7823, %v7903
        %v7905 = vpop.f32.mrf.mxu0
        %v7906 = vadd.f32 %v7825, %v7905
        %7907 = vmatprep.mubr.bf16.mxu0 %v6996
        %7908 = vmatmul.mubr.bf16.gmra.mxu0 %v6995
        %v7909 = vpop.f32.mrf.mxu0
        %v7910 = vadd.f32 %v7829, %v7909
        %v7911 = vpop.f32.mrf.mxu0
        %v7912 = vadd.f32 %v7831, %v7911
        %v7913 = vpop.f32.mrf.mxu0
        %v7914 = vadd.f32 %v7833, %v7913
        %v7915 = vpop.f32.mrf.mxu0
        %v7916 = vadd.f32 %v7835, %v7915
        %7917 = vmatprep.mubr.bf16.mxu0 %v7003
        %7918 = vmatmul.mubr.bf16.gmra.mxu0 %v7002
        %v7919 = vpop.f32.mrf.mxu0
        %v7920 = vadd.f32 %v7839, %v7919
        %v7921 = vpop.f32.mrf.mxu0
        %v7922 = vadd.f32 %v7841, %v7921
        %v7923 = vpop.f32.mrf.mxu0
        %v7924 = vadd.f32 %v7843, %v7923
        %v7925 = vpop.f32.mrf.mxu0
        %v7926 = vadd.f32 %v7845, %v7925
        %7927 = vmatprep.mubr.bf16.mxu0 %v7010
        %7928 = vmatmul.mubr.bf16.gmra.mxu0 %v7009
        %v7929 = vpop.f32.mrf.mxu0
        %v7930 = vadd.f32 %v7849, %v7929
        %v7931 = vpop.f32.mrf.mxu0
        %v7932 = vadd.f32 %v7851, %v7931
        %v7933 = vpop.f32.mrf.mxu0
        %v7934 = vadd.f32 %v7853, %v7933
        %v7935 = vpop.f32.mrf.mxu0
        %v7936 = vadd.f32 %v7855, %v7935
        %7937 = vmatprep.mubr.bf16.mxu0 %v7017
        %7938 = vmatmul.mubr.bf16.gmra.mxu0 %v7016
        %v7939 = vpop.f32.mrf.mxu0
        %v7940 = vadd.f32 %v7859, %v7939
        %v7941 = vpop.f32.mrf.mxu0
        %v7942 = vadd.f32 %v7861, %v7941
        %v7943 = vpop.f32.mrf.mxu0
        %v7944 = vpop.f32.mrf.mxu0
        %7945 = vdwg.mxu0
        %7946 = vmatprep.subr.bf16.mxu0 %v7590
        %7947 = vmatpush1.bf16.msra.mxu0 %v7589
        %7948 = vmatprep.subr.bf16.mxu0 %v7588
        %7949 = vmatpush1.bf16.msra.mxu0 %v7587
        %7950 = vmatprep.subr.bf16.mxu0 %v7586
        %7951 = vmatpush1.bf16.msra.mxu0 %v7585
        %7952 = vmatprep.subr.bf16.mxu0 %v7584
        %7953 = vmatpush1.bf16.msra.mxu0 %v7583
        %7954 = vmatprep.subr.bf16.mxu0 %v7582
        %7955 = vmatpush1.bf16.msra.mxu0 %v7581
        %7956 = vmatprep.subr.bf16.mxu0 %v7580
        %7957 = vmatpush1.bf16.msra.mxu0 %v7579
        %7958 = vmatprep.subr.bf16.mxu0 %v7578
        %7959 = vmatpush1.bf16.msra.mxu0 %v7577
        %7960 = vmatprep.subr.bf16.mxu0 %v7576
        %7961 = vmatpush1.bf16.msra.mxu0 %v7575
        %7962 = vmatprep.subr.bf16.mxu0 0
        %7963 = vmatpush2.bf16.msra.mxu0 0
        %7964 = vmatprep.subr.bf16.mxu0 0
        %7965 = vmatpush2.bf16.msra.mxu0 0
        %7966 = vmatprep.subr.bf16.mxu0 0
        %7967 = vmatpush2.bf16.msra.mxu0 0
        %7968 = vmatprep.subr.bf16.mxu0 0
        %7969 = vmatpush2.bf16.msra.mxu0 0
        %7970 = vmatprep.subr.bf16.mxu0 0
        %7971 = vmatpush2.bf16.msra.mxu0 0
        %7972 = vmatprep.subr.bf16.mxu0 0
        %7973 = vmatpush2.bf16.msra.mxu0 0
        %7974 = vmatprep.subr.bf16.mxu0 0
        %7975 = vmatpush2.bf16.msra.mxu0 0
        %7976 = vmatprep.subr.bf16.mxu0 0
        %7977 = vmatpush2.bf16.msra.mxu0 0
        %7978 = vmatprep.mubr.bf16.mxu0 0
        %7979 = vmatmul.mubr.bf16.gmra.mxu0 %v6990
        %v7980 = vpop.f32.mrf.mxu0
        %v7981 = vadd.f32 %v7900, %v7980
        %v7982 = vpop.f32.mrf.mxu0
        %v7983 = vadd.f32 %v7902, %v7982
        %v7984 = vpop.f32.mrf.mxu0
        %v7985 = vadd.f32 %v7904, %v7984
        %v7986 = vpop.f32.mrf.mxu0
        %v7987 = vadd.f32 %v7906, %v7986
        %7988 = vmatprep.mubr.bf16.mxu0 0
        %7989 = vmatmul.mubr.bf16.gmra.mxu0 %v6997
        %v7990 = vpop.f32.mrf.mxu0
        %v7991 = vadd.f32 %v7910, %v7990
        %v7992 = vpop.f32.mrf.mxu0
        %v7993 = vadd.f32 %v7912, %v7992
        %v7994 = vpop.f32.mrf.mxu0
        %v7995 = vadd.f32 %v7914, %v7994
        %v7996 = vpop.f32.mrf.mxu0
        %v7997 = vadd.f32 %v7916, %v7996
        %7998 = vmatprep.mubr.bf16.mxu0 0
        %7999 = vmatmul.mubr.bf16.gmra.mxu0 %v7004
        %v8000 = vpop.f32.mrf.mxu0
        %v8001 = vadd.f32 %v7920, %v8000
        %v8002 = vpop.f32.mrf.mxu0
        %v8003 = vadd.f32 %v7922, %v8002
        %v8004 = vpop.f32.mrf.mxu0
        %v8005 = vadd.f32 %v7924, %v8004
        %v8006 = vpop.f32.mrf.mxu0
        %v8007 = vadd.f32 %v7926, %v8006
        %8008 = vmatprep.mubr.bf16.mxu0 0
        %8009 = vmatmul.mubr.bf16.gmra.mxu0 %v7011
        %v8010 = vpop.f32.mrf.mxu0
        %v8011 = vadd.f32 %v7930, %v8010
        %v8012 = vpop.f32.mrf.mxu0
        %v8013 = vadd.f32 %v7932, %v8012
        %v8014 = vpop.f32.mrf.mxu0
        %v8015 = vadd.f32 %v7934, %v8014
        %v8016 = vpop.f32.mrf.mxu0
        %v8017 = vadd.f32 %v7936, %v8016
        %8018 = vmatprep.mubr.bf16.mxu0 0
        %8019 = vmatmul.mubr.bf16.gmra.mxu0 %v7018
        %v8020 = vpop.f32.mrf.mxu0
        %v8021 = vadd.f32 %v7940, %v8020
        %v8022 = vpop.f32.mrf.mxu0
        %v8023 = vadd.f32 %v7942, %v8022
        %v8024 = vpop.f32.mrf.mxu0
        %v8025 = vpop.f32.mrf.mxu0
        %8026 = vdwg.mxu0
        %v8027 = vadd.f32 %v5333, %v7981
        %v8028 = vadd.f32 %v5334, %v7983
        %v8029 = vadd.f32 %v5335, %v7985
        %v8030 = vadd.f32 %v5336, %v7987
        %v8031 = vadd.f32 %v5337, %v7991
        %v8032 = vadd.f32 %v5338, %v7993
        %v8033 = vadd.f32 %v5339, %v7995
        %v8034 = vadd.f32 %v5340, %v7997
        %v8035 = vadd.f32 %v5341, %v8001
        %v8036 = vadd.f32 %v5342, %v8003
        %v8037 = vadd.f32 %v5343, %v8005
        %v8038 = vadd.f32 %v5344, %v8007
        %v8039 = vadd.f32 %v5345, %v8011
        %v8040 = vadd.f32 %v5346, %v8013
        %v8041 = vadd.f32 %v5347, %v8015
        %v8042 = vadd.f32 %v5348, %v8017
        %v8043 = vadd.f32 %v5349, %v8021
        %v8044 = vadd.f32 %v5350, %v8023
        %v8045 = vld [vmem:[%s984] sm:$0x3]
        %v8046 = vld [vmem:[%s988] sm:$0x3]
        %v8047 = vadd.f32 %v8027, %v8028
        %8048 = vadd.xlane.f32.xlu0 %v8047
        %v8049 = vpop.xlane.xlu0 %8048
        %v8050 = vadd.f32 %v8029, %v8030
        %8051 = vadd.xlane.f32.xlu0 %v8050
        %v8052 = vpop.xlane.xlu0 %8051
        %v8053 = vadd.f32 %v8031, %v8032
        %8054 = vadd.xlane.f32.xlu0 %v8053
        %v8055 = vpop.xlane.xlu0 %8054
        %v8056 = vadd.f32 %v8033, %v8034
        %8057 = vadd.xlane.f32.xlu0 %v8056
        %v8058 = vpop.xlane.xlu0 %8057
        %v8059 = vadd.f32 %v8035, %v8036
        %8060 = vadd.xlane.f32.xlu0 %v8059
        %v8061 = vpop.xlane.xlu0 %8060
        %v8062 = vadd.f32 %v8037, %v8038
        %8063 = vadd.xlane.f32.xlu0 %v8062
        %v8064 = vpop.xlane.xlu0 %8063
        %v8065 = vadd.f32 %v8039, %v8040
        %8066 = vadd.xlane.f32.xlu0 %v8065
        %v8067 = vpop.xlane.xlu0 %8066
        %v8068 = vadd.f32 %v8041, %v8042
        %8069 = vadd.xlane.f32.xlu0 %v8068
        %v8070 = vpop.xlane.xlu0 %8069
        %v8071 = vsel %vm5150, %v8043, 0.0
        %v8072 = vsel %vm5150, %v8044, 0.0
        %v8073 = vadd.f32 %v8071, %v8072
        %8074 = vadd.xlane.f32.xlu0 %v8073
        %v8075 = vpop.xlane.xlu0 %8074
        %v8076 = vmul.f32 %v8049, 0.005
        %v8077 = vmul.f32 %v8052, 0.005
        %v8078 = vmul.f32 %v8055, 0.005
        %v8079 = vmul.f32 %v8058, 0.005
        %v8080 = vmul.f32 %v8061, 0.005
        %v8081 = vmul.f32 %v8064, 0.005
        %v8082 = vmul.f32 %v8067, 0.005
        %v8083 = vmul.f32 %v8070, 0.005
        %v8084 = vmul.f32 %v8075, 0.005
        %v8085 = vsub.f32 %v8027, %v8076
        %v8086 = vsub.f32 %v8028, %v8076
        %v8087 = vsub.f32 %v8029, %v8077
        %v8088 = vsub.f32 %v8030, %v8077
        %v8089 = vsub.f32 %v8031, %v8078
        %v8090 = vsub.f32 %v8032, %v8078
        %v8091 = vsub.f32 %v8033, %v8079
        %v8092 = vsub.f32 %v8034, %v8079
        %v8093 = vsub.f32 %v8035, %v8080
        %v8094 = vsub.f32 %v8036, %v8080
        %v8095 = vsub.f32 %v8037, %v8081
        %v8096 = vsub.f32 %v8038, %v8081
        %v8097 = vsub.f32 %v8039, %v8082
        %v8098 = vsub.f32 %v8040, %v8082
        %v8099 = vsub.f32 %v8041, %v8083
        %v8100 = vsub.f32 %v8042, %v8083
        %v8101 = vsub.f32 %v8043, %v8084
        %v8102 = vsub.f32 %v8044, %v8084
        %v8103 = vmul.f32 %v8085, %v1383
        %v8104 = vmul.f32 %v8086, %v1384
        %v8105 = vmul.f32 %v8087, %v1383
        %v8106 = vmul.f32 %v8088, %v1384
        %v8107 = vmul.f32 %v8089, %v1383
        %v8108 = vmul.f32 %v8090, %v1384
        %v8109 = vmul.f32 %v8091, %v1383
        %v8110 = vmul.f32 %v8092, %v1384
        %v8111 = vmul.f32 %v8093, %v1383
        %v8112 = vmul.f32 %v8094, %v1384
        %v8113 = vmul.f32 %v8095, %v1383
        %v8114 = vmul.f32 %v8096, %v1384
        %v8115 = vmul.f32 %v8097, %v1383
        %v8116 = vmul.f32 %v8098, %v1384
        %v8117 = vmul.f32 %v8099, %v1383
        %v8118 = vmul.f32 %v8100, %v1384
        %v8119 = vmul.f32 %v8101, %v1383
        %v8120 = vmul.f32 %v8102, %v1384
        %v8121 = vmul.f32 %v8103, %v8103
        %v8122 = vmul.f32 %v8104, %v8104
        %v8123 = vmul.f32 %v8105, %v8105
        %v8124 = vmul.f32 %v8106, %v8106
        %v8125 = vmul.f32 %v8107, %v8107
        %v8126 = vmul.f32 %v8108, %v8108
        %v8127 = vmul.f32 %v8109, %v8109
        %v8128 = vmul.f32 %v8110, %v8110
        %v8129 = vmul.f32 %v8111, %v8111
        %v8130 = vmul.f32 %v8112, %v8112
        %v8131 = vmul.f32 %v8113, %v8113
        %v8132 = vmul.f32 %v8114, %v8114
        %v8133 = vmul.f32 %v8115, %v8115
        %v8134 = vmul.f32 %v8116, %v8116
        %v8135 = vmul.f32 %v8117, %v8117
        %v8136 = vmul.f32 %v8118, %v8118
        %v8137 = vmul.f32 %v8119, %v8119
        %v8138 = vmul.f32 %v8120, %v8120
        %v8139 = vadd.f32 %v8121, %v8122
        %8140 = vadd.xlane.f32.xlu0 %v8139
        %v8141 = vpop.xlane.xlu0 %8140
        %v8142 = vadd.f32 %v8123, %v8124
        %8143 = vadd.xlane.f32.xlu0 %v8142
        %v8144 = vpop.xlane.xlu0 %8143
        %v8145 = vadd.f32 %v8125, %v8126
        %8146 = vadd.xlane.f32.xlu0 %v8145
        %v8147 = vpop.xlane.xlu0 %8146
        %v8148 = vadd.f32 %v8127, %v8128
        %8149 = vadd.xlane.f32.xlu0 %v8148
        %v8150 = vpop.xlane.xlu0 %8149
        %v8151 = vadd.f32 %v8129, %v8130
        %8152 = vadd.xlane.f32.xlu0 %v8151
        %v8153 = vpop.xlane.xlu0 %8152
        %v8154 = vadd.f32 %v8131, %v8132
        %8155 = vadd.xlane.f32.xlu0 %v8154
        %v8156 = vpop.xlane.xlu0 %8155
        %v8157 = vadd.f32 %v8133, %v8134
        %8158 = vadd.xlane.f32.xlu0 %v8157
        %v8159 = vpop.xlane.xlu0 %8158
        %v8160 = vadd.f32 %v8135, %v8136
        %8161 = vadd.xlane.f32.xlu0 %v8160
        %v8162 = vpop.xlane.xlu0 %8161
        %v8163 = vsel %vm5150, %v8137, 0.0
        %v8164 = vsel %vm5150, %v8138, 0.0
        %v8165 = vadd.f32 %v8163, %v8164
        %8166 = vadd.xlane.f32.xlu0 %v8165
        %v8167 = vpop.xlane.xlu0 %8166
        %v8168 = vmul.f32 %v8141, 0.005
        %v8169 = vmul.f32 %v8144, 0.005
        %v8170 = vmul.f32 %v8147, 0.005
        %v8171 = vmul.f32 %v8150, 0.005
        %v8172 = vmul.f32 %v8153, 0.005
        %v8173 = vmul.f32 %v8156, 0.005
        %v8174 = vmul.f32 %v8159, 0.005
        %v8175 = vmul.f32 %v8162, 0.005
        %v8176 = vmul.f32 %v8167, 0.005
        %v8177 = vadd.f32 %v8168, 1e-05
        %v8178 = vadd.f32 %v8169, 1e-05
        %v8179 = vadd.f32 %v8170, 1e-05
        %v8180 = vadd.f32 %v8171, 1e-05
        %v8181 = vadd.f32 %v8172, 1e-05
        %v8182 = vadd.f32 %v8173, 1e-05
        %v8183 = vadd.f32 %v8174, 1e-05
        %v8184 = vadd.f32 %v8175, 1e-05
        %v8185 = vadd.f32 %v8176, 1e-05
        %v8186 = vrsqrt.pop %v8177
        %v8187 = vrsqrt.pop %v8178
        %v8188 = vrsqrt.pop %v8179
        %v8189 = vrsqrt.pop %v8180
        %v8190 = vrsqrt.pop %v8181
        %v8191 = vrsqrt.pop %v8182
        %v8192 = vrsqrt.pop %v8183
        %v8193 = vrsqrt.pop %v8184
        %v8194 = vrsqrt.pop %v8185
        %v8195 = vmul.f32 %v8103, %v8186
        %v8196 = vmul.f32 %v8104, %v8186
        %v8197 = vmul.f32 %v8105, %v8187
        %v8198 = vmul.f32 %v8106, %v8187
        %v8199 = vmul.f32 %v8107, %v8188
        %v8200 = vmul.f32 %v8108, %v8188
        %v8201 = vmul.f32 %v8109, %v8189
        %v8202 = vmul.f32 %v8110, %v8189
        %v8203 = vmul.f32 %v8111, %v8190
        %v8204 = vmul.f32 %v8112, %v8190
        %v8205 = vmul.f32 %v8113, %v8191
        %v8206 = vmul.f32 %v8114, %v8191
        %v8207 = vmul.f32 %v8115, %v8192
        %v8208 = vmul.f32 %v8116, %v8192
        %v8209 = vmul.f32 %v8117, %v8193
        %v8210 = vmul.f32 %v8118, %v8193
        %v8211 = vmul.f32 %v8119, %v8194
        %v8212 = vmul.f32 %v8120, %v8194
        %v8214 = vlaneseq
        %v8215 = vshrl.u32 %v8214, 7
        %v8216 = vsub.s32 0, %v8215
        %v8217 = vrot.slane %v8045, %v8216
        %v8218 = vlaneseq
        %v8219 = vshrl.u32 %v8218, 7
        %v8220 = vsub.s32 1, %v8219
        %v8221 = vrot.slane %v8045, %v8220
        %v8224 = vmul.f32 %v8195, %v8217
        %v8225 = vmul.f32 %v8196, %v8221
        %v8226 = vmul.f32 %v8197, %v8217
        %v8227 = vmul.f32 %v8198, %v8221
        %v8228 = vmul.f32 %v8199, %v8217
        %v8229 = vmul.f32 %v8200, %v8221
        %v8230 = vmul.f32 %v8201, %v8217
        %v8231 = vmul.f32 %v8202, %v8221
        %v8232 = vmul.f32 %v8203, %v8217
        %v8233 = vmul.f32 %v8204, %v8221
        %v8234 = vmul.f32 %v8205, %v8217
        %v8235 = vmul.f32 %v8206, %v8221
        %v8236 = vmul.f32 %v8207, %v8217
        %v8237 = vmul.f32 %v8208, %v8221
        %v8238 = vmul.f32 %v8209, %v8217
        %v8239 = vmul.f32 %v8210, %v8221
        %v8240 = vmul.f32 %v8211, %v8217
        %v8241 = vmul.f32 %v8212, %v8221
        %v8243 = vlaneseq
        %v8244 = vshrl.u32 %v8243, 7
        %v8245 = vsub.s32 0, %v8244
        %v8246 = vrot.slane %v8046, %v8245
        %v8247 = vlaneseq
        %v8248 = vshrl.u32 %v8247, 7
        %v8249 = vsub.s32 1, %v8248
        %v8250 = vrot.slane %v8046, %v8249
        %v8253 = vadd.f32 %v8224, %v8246
        %v8254 = vadd.f32 %v8225, %v8250
        %v8255 = vadd.f32 %v8226, %v8246
        %v8256 = vadd.f32 %v8227, %v8250
        %v8257 = vadd.f32 %v8228, %v8246
        %v8258 = vadd.f32 %v8229, %v8250
        %v8259 = vadd.f32 %v8230, %v8246
        %v8260 = vadd.f32 %v8231, %v8250
        %v8261 = vadd.f32 %v8232, %v8246
        %v8262 = vadd.f32 %v8233, %v8250
        %v8263 = vadd.f32 %v8234, %v8246
        %v8264 = vadd.f32 %v8235, %v8250
        %v8265 = vadd.f32 %v8236, %v8246
        %v8266 = vadd.f32 %v8237, %v8250
        %v8267 = vadd.f32 %v8238, %v8246
        %v8268 = vadd.f32 %v8239, %v8250
        %v8269 = vadd.f32 %v8240, %v8246
        %v8270 = vadd.f32 %v8241, %v8250
        %8271 = vst [vmem:[#allocation2] sm:$0xff] %v8253
        %8272 = vst [vmem:[#allocation2 + $0x8] sm:$0xff] %v8254
        %8273 = vst [vmem:[#allocation2 + $0x10] sm:$0xff] %v8255
        %8274 = vst [vmem:[#allocation2 + $0x18] sm:$0xff] %v8256
        %8275 = vst [vmem:[#allocation2 + $0x20] sm:$0xff] %v8257
        %8276 = vst [vmem:[#allocation2 + $0x28] sm:$0xff] %v8258
        %8277 = vst [vmem:[#allocation2 + $0x30] sm:$0xff] %v8259
        %8278 = vst [vmem:[#allocation2 + $0x38] sm:$0xff] %v8260
        %8279 = vst [vmem:[#allocation2 + $0x40] sm:$0xff] %v8261
        %8280 = vst [vmem:[#allocation2 + $0x48] sm:$0xff] %v8262
        %8281 = vst [vmem:[#allocation2 + $0x50] sm:$0xff] %v8263
        %8282 = vst [vmem:[#allocation2 + $0x58] sm:$0xff] %v8264
        %8283 = vst [vmem:[#allocation2 + $0x60] sm:$0xff] %v8265
        %8284 = vst [vmem:[#allocation2 + $0x68] sm:$0xff] %v8266
        %8285 = vst [vmem:[#allocation2 + $0x70] sm:$0xff] %v8267
        %8286 = vst [vmem:[#allocation2 + $0x78] sm:$0xff] %v8268
        %8287 = vst [vmem:[#allocation2 + $0x80] sm:$0xf] %v8269
        %8288 = vst [vmem:[#allocation2 + $0x88] sm:$0xf] %v8270
        %p8289 = scmp.eq.s32.totalorder %s49, 1
        // Predicated region
        $region125: #{cbramod_text_classifier_forward.1} parent=103 // pred_check
          %p8290 = pneg %p8289
        $region126: #{cbramod_text_classifier_forward.1} parent=103 // pred_check_branch
          %8292 = sbr.rel (%p8290) target = $region128
        $region127: #{cbramod_text_classifier_forward.1} parent=103 // pred_region
          %v8293 = vld [vmem:[%s15] sm:$0xf]
          %v8294 = vpack.c.bf16 %v8293, %v8293
          %v8295 = vpack.c.bf16 %v8255, %v8253
          %v8296 = vpack.c.bf16 %v8256, %v8254
          %v8297 = vpack.c.bf16 %v8259, %v8257
          %v8298 = vpack.c.bf16 %v8260, %v8258
          %v8299 = vpack.c.bf16 %v8263, %v8261
          %v8300 = vpack.c.bf16 %v8264, %v8262
          %v8301 = vpack.c.bf16 %v8267, %v8265
          %v8302 = vpack.c.bf16 %v8268, %v8266
          %v8303 = vpack.c.bf16 %v8269, %v8269
          %v8304 = vpack.c.bf16 %v8270, %v8270
          %v8306 = vsel %vm2351, %v8294, 0
          %v8309 = vsel %vm2722, %v8303, 0
          %v8312 = vsel %vm2722, %v8304, 0
          %8314 = vmatprep.subr.bf16.mxu0 0
          %8315 = vmatpush1.bf16.msra.mxu0 0
          %8316 = vmatprep.subr.bf16.mxu0 0
          %8317 = vmatpush1.bf16.msra.mxu0 0
          %8318 = vmatprep.subr.bf16.mxu0 0
          %8319 = vmatpush1.bf16.msra.mxu0 0
          %8320 = vmatprep.subr.bf16.mxu0 %v8312
          %8321 = vmatpush1.bf16.msra.mxu0 %v8309
          %8322 = vmatprep.subr.bf16.mxu0 %v8302
          %8323 = vmatpush1.bf16.msra.mxu0 %v8301
          %8324 = vmatprep.subr.bf16.mxu0 %v8300
          %8325 = vmatpush1.bf16.msra.mxu0 %v8299
          %8326 = vmatprep.subr.bf16.mxu0 %v8298
          %8327 = vmatpush1.bf16.msra.mxu0 %v8297
          %8328 = vmatprep.subr.bf16.mxu0 %v8296
          %8329 = vmatpush1.bf16.msra.mxu0 %v8295
          %8330 = vmatprep.subr.bf16.mxu0 0
          %8331 = vmatpush2.bf16.msra.mxu0 0
          %8332 = vmatprep.subr.bf16.mxu0 0
          %8333 = vmatpush2.bf16.msra.mxu0 0
          %8334 = vmatprep.subr.bf16.mxu0 0
          %8335 = vmatpush2.bf16.msra.mxu0 0
          %8336 = vmatprep.subr.bf16.mxu0 0
          %8337 = vmatpush2.bf16.msra.mxu0 0
          %8338 = vmatprep.subr.bf16.mxu0 0
          %8339 = vmatpush2.bf16.msra.mxu0 0
          %8340 = vmatprep.subr.bf16.mxu0 0
          %8341 = vmatpush2.bf16.msra.mxu0 0
          %8342 = vmatprep.subr.bf16.mxu0 0
          %8343 = vmatpush2.bf16.msra.mxu0 0
          %8344 = vmatprep.subr.bf16.mxu0 0
          %8345 = vmatpush2.bf16.msra.mxu0 0
          %8346 = vmatprep.mubr.bf16.mxu0 0
          %8347 = vmatmul.mubr.bf16.gmra.mxu0 %v8306
          %v8348 = vpop.f32.mrf.mxu0
          %v8349 = vadd.f32 0.0, %v8348
          %v8350 = vpop.f32.mrf.mxu0
          %v8351 = vadd.f32 0.0, %v8350
          %v8352 = vpop.f32.mrf.mxu0
          %v8353 = vpop.f32.mrf.mxu0
          %8354 = vdwg.mxu0
          %v8355 = vld [vmem:[%s16] sm:$0xf]
          %8357 = vset.pattern.permute.xlu0 0
          %8358 = vperm.xlu0 %8357, %v8355
          %v8359 = vpop.permute.xlu0 %8358
          %v8361 = vmul.f32 %v8349, %v8359
          %v8362 = vmul.f32 %v8351, %v8359
          %v8365 = vcombine.low %v8361, %v8362
          %8367 = vst [vmem:[%s993] sm:$0xff] %v8365
          %v8368 = vld [vmem:[%s18] sm:$0xf]
          %v8369 = vpack.c.bf16 %v8361, %v8361
          %v8370 = vpack.c.bf16 %v8362, %v8362
          %v8371 = vld [vmem:[#allocation9] sm:$0xff]
          %v8372 = vld [vmem:[#allocation9 + $0x8] sm:$0xff]
          %v8373 = vld [vmem:[#allocation9 + $0x10] sm:$0xff]
          %v8374 = vld [vmem:[#allocation9 + $0x18] sm:$0xff]
          %v8375 = vld [vmem:[#allocation9 + $0x20] sm:$0xff]
          %v8376 = vld [vmem:[#allocation9 + $0x28] sm:$0xff]
          %v8377 = vld [vmem:[#allocation9 + $0x30] sm:$0xff]
          %v8378 = vld [vmem:[#allocation9 + $0x38] sm:$0xff]
          %v8379 = vld [vmem:[#allocation9 + $0x40] sm:$0xff]
          %v8380 = vld [vmem:[#allocation9 + $0x48] sm:$0xff]
          %v8381 = vld [vmem:[#allocation9 + $0x50] sm:$0xff]
          %v8382 = vld [vmem:[#allocation9 + $0x58] sm:$0xff]
          %v8383 = vld [vmem:[#allocation9 + $0x60] sm:$0xff]
          %v8384 = vld [vmem:[#allocation9 + $0x68] sm:$0xff]
          %v8385 = vld [vmem:[#allocation9 + $0x70] sm:$0xff]
          %v8386 = vld [vmem:[#allocation9 + $0x78] sm:$0xff]
          %v8387 = vld [vmem:[#allocation9 + $0x80] sm:$0xff]
          %v8388 = vld [vmem:[#allocation9 + $0x88] sm:$0xff]
          %v8389 = vld [vmem:[#allocation9 + $0x90] sm:$0xff]
          %v8390 = vld [vmem:[#allocation9 + $0x98] sm:$0xff]
          %v8391 = vld [vmem:[#allocation9 + $0xa0] sm:$0xff]
          %v8392 = vld [vmem:[#allocation9 + $0xa8] sm:$0xff]
          %v8393 = vld [vmem:[#allocation9 + $0xb0] sm:$0xff]
          %v8394 = vld [vmem:[#allocation9 + $0xb8] sm:$0xff]
          %v8395 = vld [vmem:[#allocation9 + $0xc0] sm:$0xff]
          %v8396 = vld [vmem:[#allocation9 + $0xc8] sm:$0xff]
          %v8397 = vld [vmem:[#allocation9 + $0xd0] sm:$0xff]
          %v8398 = vld [vmem:[#allocation9 + $0xd8] sm:$0xff]
          %v8399 = vld [vmem:[#allocation9 + $0xe0] sm:$0xff]
          %v8400 = vld [vmem:[#allocation9 + $0xe8] sm:$0xff]
          %v8401 = vld [vmem:[#allocation9 + $0xf0] sm:$0xff]
          %v8402 = vld [vmem:[#allocation9 + $0xf8] sm:$0xff]
          %v8403 = vld [vmem:[#allocation9 + $0x100] sm:$0xff]
          %v8404 = vld [vmem:[#allocation9 + $0x108] sm:$0xff]
          %v8405 = vld [vmem:[#allocation9 + $0x110] sm:$0xff]
          %v8406 = vld [vmem:[#allocation9 + $0x118] sm:$0xff]
          %v8407 = vld [vmem:[#allocation9 + $0x120] sm:$0xff]
          %v8408 = vld [vmem:[#allocation9 + $0x128] sm:$0xff]
          %v8409 = vld [vmem:[#allocation9 + $0x130] sm:$0xff]
          %v8410 = vld [vmem:[#allocation9 + $0x138] sm:$0xff]
          %v8411 = vld [vmem:[#allocation9 + $0x140] sm:$0xff]
          %v8412 = vld [vmem:[#allocation9 + $0x148] sm:$0xff]
          %v8413 = vld [vmem:[#allocation9 + $0x150] sm:$0xff]
          %v8414 = vld [vmem:[#allocation9 + $0x158] sm:$0xff]
          %v8415 = vld [vmem:[#allocation9 + $0x160] sm:$0xff]
          %v8416 = vld [vmem:[#allocation9 + $0x168] sm:$0xff]
          %v8417 = vld [vmem:[#allocation9 + $0x170] sm:$0xff]
          %v8418 = vld [vmem:[#allocation9 + $0x178] sm:$0xff]
          %v8419 = vld [vmem:[#allocation9 + $0x180] sm:$0xff]
          %v8420 = vld [vmem:[#allocation9 + $0x188] sm:$0xff]
          %v8421 = vld [vmem:[#allocation9 + $0x190] sm:$0xff]
          %v8422 = vld [vmem:[#allocation9 + $0x198] sm:$0xff]
          %v8423 = vld [vmem:[#allocation9 + $0x1a0] sm:$0xff]
          %v8424 = vld [vmem:[#allocation9 + $0x1a8] sm:$0xff]
          %v8425 = vld [vmem:[#allocation9 + $0x1b0] sm:$0xff]
          %v8426 = vld [vmem:[#allocation9 + $0x1b8] sm:$0xff]
          %v8427 = vld [vmem:[#allocation9 + $0x1c0] sm:$0xff]
          %v8428 = vld [vmem:[#allocation9 + $0x1c8] sm:$0xff]
          %v8429 = vld [vmem:[#allocation9 + $0x1d0] sm:$0xff]
          %v8430 = vld [vmem:[#allocation9 + $0x1d8] sm:$0xff]
          %v8431 = vld [vmem:[#allocation9 + $0x1e0] sm:$0xff]
          %v8432 = vld [vmem:[#allocation9 + $0x1e8] sm:$0xff]
          %v8433 = vld [vmem:[#allocation9 + $0x1f0] sm:$0xff]
          %v8434 = vld [vmem:[#allocation9 + $0x1f8] sm:$0xff]
          %v8499 = vunpack.c.l.b16 %v8371
          %v8500 = vunpack.c.h.b16 %v8371
          %v8501 = vunpack.c.l.b16 %v8372
          %v8502 = vunpack.c.h.b16 %v8372
          %v8503 = vunpack.c.l.b16 %v8373
          %v8504 = vunpack.c.h.b16 %v8373
          %v8505 = vunpack.c.l.b16 %v8374
          %v8506 = vunpack.c.h.b16 %v8374
          %v8507 = vunpack.c.l.b16 %v8375
          %v8508 = vunpack.c.h.b16 %v8375
          %v8509 = vunpack.c.l.b16 %v8376
          %v8510 = vunpack.c.h.b16 %v8376
          %v8511 = vunpack.c.l.b16 %v8377
          %v8512 = vunpack.c.h.b16 %v8377
          %v8513 = vunpack.c.l.b16 %v8378
          %v8514 = vunpack.c.h.b16 %v8378
          %v8515 = vunpack.c.l.b16 %v8379
          %v8516 = vunpack.c.h.b16 %v8379
          %v8517 = vunpack.c.l.b16 %v8380
          %v8518 = vunpack.c.h.b16 %v8380
          %v8519 = vunpack.c.l.b16 %v8381
          %v8520 = vunpack.c.h.b16 %v8381
          %v8521 = vunpack.c.l.b16 %v8382
          %v8522 = vunpack.c.h.b16 %v8382
          %v8523 = vunpack.c.l.b16 %v8383
          %v8524 = vunpack.c.h.b16 %v8383
          %v8525 = vunpack.c.l.b16 %v8384
          %v8526 = vunpack.c.h.b16 %v8384
          %v8527 = vunpack.c.l.b16 %v8385
          %v8528 = vunpack.c.h.b16 %v8385
          %v8529 = vunpack.c.l.b16 %v8386
          %v8530 = vunpack.c.h.b16 %v8386
          %v8531 = vunpack.c.l.b16 %v8387
          %v8532 = vunpack.c.h.b16 %v8387
          %v8533 = vunpack.c.l.b16 %v8388
          %v8534 = vunpack.c.h.b16 %v8388
          %v8535 = vunpack.c.l.b16 %v8389
          %v8536 = vunpack.c.h.b16 %v8389
          %v8537 = vunpack.c.l.b16 %v8390
          %v8538 = vunpack.c.h.b16 %v8390
          %v8539 = vunpack.c.l.b16 %v8391
          %v8540 = vunpack.c.h.b16 %v8391
          %v8541 = vunpack.c.l.b16 %v8392
          %v8542 = vunpack.c.h.b16 %v8392
          %v8543 = vunpack.c.l.b16 %v8393
          %v8544 = vunpack.c.h.b16 %v8393
          %v8545 = vunpack.c.l.b16 %v8394
          %v8546 = vunpack.c.h.b16 %v8394
          %v8547 = vunpack.c.l.b16 %v8395
          %v8548 = vunpack.c.h.b16 %v8395
          %v8549 = vunpack.c.l.b16 %v8396
          %v8550 = vunpack.c.h.b16 %v8396
          %v8551 = vunpack.c.l.b16 %v8397
          %v8552 = vunpack.c.h.b16 %v8397
          %v8553 = vunpack.c.l.b16 %v8398
          %v8554 = vunpack.c.h.b16 %v8398
          %v8555 = vunpack.c.l.b16 %v8399
          %v8556 = vunpack.c.h.b16 %v8399
          %v8557 = vunpack.c.l.b16 %v8400
          %v8558 = vunpack.c.h.b16 %v8400
          %v8559 = vunpack.c.l.b16 %v8401
          %v8560 = vunpack.c.h.b16 %v8401
          %v8561 = vunpack.c.l.b16 %v8402
          %v8562 = vunpack.c.h.b16 %v8402
          %v8563 = vunpack.c.l.b16 %v8403
          %v8564 = vunpack.c.h.b16 %v8403
          %v8565 = vunpack.c.l.b16 %v8404
          %v8566 = vunpack.c.h.b16 %v8404
          %v8567 = vunpack.c.l.b16 %v8405
          %v8568 = vunpack.c.h.b16 %v8405
          %v8569 = vunpack.c.l.b16 %v8406
          %v8570 = vunpack.c.h.b16 %v8406
          %v8571 = vunpack.c.l.b16 %v8407
          %v8572 = vunpack.c.h.b16 %v8407
          %v8573 = vunpack.c.l.b16 %v8408
          %v8574 = vunpack.c.h.b16 %v8408
          %v8575 = vunpack.c.l.b16 %v8409
          %v8576 = vunpack.c.h.b16 %v8409
          %v8577 = vunpack.c.l.b16 %v8410
          %v8578 = vunpack.c.h.b16 %v8410
          %v8579 = vunpack.c.l.b16 %v8411
          %v8580 = vunpack.c.h.b16 %v8411
          %v8581 = vunpack.c.l.b16 %v8412
          %v8582 = vunpack.c.h.b16 %v8412
          %v8583 = vunpack.c.l.b16 %v8413
          %v8584 = vunpack.c.h.b16 %v8413
          %v8585 = vunpack.c.l.b16 %v8414
          %v8586 = vunpack.c.h.b16 %v8414
          %v8587 = vunpack.c.l.b16 %v8415
          %v8588 = vunpack.c.h.b16 %v8415
          %v8589 = vunpack.c.l.b16 %v8416
          %v8590 = vunpack.c.h.b16 %v8416
          %v8591 = vunpack.c.l.b16 %v8417
          %v8592 = vunpack.c.h.b16 %v8417
          %v8593 = vunpack.c.l.b16 %v8418
          %v8594 = vunpack.c.h.b16 %v8418
          %v8595 = vunpack.c.l.b16 %v8419
          %v8596 = vunpack.c.h.b16 %v8419
          %v8597 = vunpack.c.l.b16 %v8420
          %v8598 = vunpack.c.h.b16 %v8420
          %v8599 = vunpack.c.l.b16 %v8421
          %v8600 = vunpack.c.h.b16 %v8421
          %v8601 = vunpack.c.l.b16 %v8422
          %v8602 = vunpack.c.h.b16 %v8422
          %v8603 = vunpack.c.l.b16 %v8423
          %v8604 = vunpack.c.h.b16 %v8423
          %v8605 = vunpack.c.l.b16 %v8424
          %v8606 = vunpack.c.h.b16 %v8424
          %v8607 = vunpack.c.l.b16 %v8425
          %v8608 = vunpack.c.h.b16 %v8425
          %v8609 = vunpack.c.l.b16 %v8426
          %v8610 = vunpack.c.h.b16 %v8426
          %v8611 = vunpack.c.l.b16 %v8427
          %v8612 = vunpack.c.h.b16 %v8427
          %v8613 = vunpack.c.l.b16 %v8428
          %v8614 = vunpack.c.h.b16 %v8428
          %v8615 = vunpack.c.l.b16 %v8429
          %v8616 = vunpack.c.h.b16 %v8429
          %v8617 = vunpack.c.l.b16 %v8430
          %v8618 = vunpack.c.h.b16 %v8430
          %v8619 = vunpack.c.l.b16 %v8431
          %v8620 = vunpack.c.h.b16 %v8431
          %v8621 = vunpack.c.l.b16 %v8432
          %v8622 = vunpack.c.h.b16 %v8432
          %v8623 = vunpack.c.l.b16 %v8433
          %v8624 = vunpack.c.h.b16 %v8433
          %v8625 = vunpack.c.l.b16 %v8434
          %v8626 = vunpack.c.h.b16 %v8434
          %v8627 = vpack.c.b16 %v8503, %v8499
          %v8628 = vpack.c.b16 %v8504, %v8500
          %v8629 = vpack.c.b16 %v8505, %v8501
          %v8630 = vpack.c.b16 %v8506, %v8502
          %v8631 = vpack.c.b16 %v8511, %v8507
          %v8632 = vpack.c.b16 %v8512, %v8508
          %v8633 = vpack.c.b16 %v8513, %v8509
          %v8634 = vpack.c.b16 %v8514, %v8510
          %v8635 = vpack.c.b16 %v8519, %v8515
          %v8636 = vpack.c.b16 %v8520, %v8516
          %v8637 = vpack.c.b16 %v8521, %v8517
          %v8638 = vpack.c.b16 %v8522, %v8518
          %v8639 = vpack.c.b16 %v8527, %v8523
          %v8640 = vpack.c.b16 %v8528, %v8524
          %v8641 = vpack.c.b16 %v8529, %v8525
          %v8642 = vpack.c.b16 %v8530, %v8526
          %v8643 = vpack.c.b16 %v8535, %v8531
          %v8644 = vpack.c.b16 %v8536, %v8532
          %v8645 = vpack.c.b16 %v8537, %v8533
          %v8646 = vpack.c.b16 %v8538, %v8534
          %v8647 = vpack.c.b16 %v8543, %v8539
          %v8648 = vpack.c.b16 %v8544, %v8540
          %v8649 = vpack.c.b16 %v8545, %v8541
          %v8650 = vpack.c.b16 %v8546, %v8542
          %v8651 = vpack.c.b16 %v8551, %v8547
          %v8652 = vpack.c.b16 %v8552, %v8548
          %v8653 = vpack.c.b16 %v8553, %v8549
          %v8654 = vpack.c.b16 %v8554, %v8550
          %v8655 = vpack.c.b16 %v8559, %v8555
          %v8656 = vpack.c.b16 %v8560, %v8556
          %v8657 = vpack.c.b16 %v8561, %v8557
          %v8658 = vpack.c.b16 %v8562, %v8558
          %v8659 = vpack.c.b16 %v8567, %v8563
          %v8660 = vpack.c.b16 %v8568, %v8564
          %v8661 = vpack.c.b16 %v8569, %v8565
          %v8662 = vpack.c.b16 %v8570, %v8566
          %v8663 = vpack.c.b16 %v8575, %v8571
          %v8664 = vpack.c.b16 %v8576, %v8572
          %v8665 = vpack.c.b16 %v8577, %v8573
          %v8666 = vpack.c.b16 %v8578, %v8574
          %v8667 = vpack.c.b16 %v8583, %v8579
          %v8668 = vpack.c.b16 %v8584, %v8580
          %v8669 = vpack.c.b16 %v8585, %v8581
          %v8670 = vpack.c.b16 %v8586, %v8582
          %v8671 = vpack.c.b16 %v8591, %v8587
          %v8672 = vpack.c.b16 %v8592, %v8588
          %v8673 = vpack.c.b16 %v8593, %v8589
          %v8674 = vpack.c.b16 %v8594, %v8590
          %v8675 = vpack.c.b16 %v8599, %v8595
          %v8676 = vpack.c.b16 %v8600, %v8596
          %v8677 = vpack.c.b16 %v8601, %v8597
          %v8678 = vpack.c.b16 %v8602, %v8598
          %v8679 = vpack.c.b16 %v8607, %v8603
          %v8680 = vpack.c.b16 %v8608, %v8604
          %v8681 = vpack.c.b16 %v8609, %v8605
          %v8682 = vpack.c.b16 %v8610, %v8606
          %v8683 = vpack.c.b16 %v8615, %v8611
          %v8684 = vpack.c.b16 %v8616, %v8612
          %v8685 = vpack.c.b16 %v8617, %v8613
          %v8686 = vpack.c.b16 %v8618, %v8614
          %v8687 = vpack.c.b16 %v8623, %v8619
          %v8688 = vpack.c.b16 %v8624, %v8620
          %v8689 = vpack.c.b16 %v8625, %v8621
          %v8690 = vpack.c.b16 %v8626, %v8622
          %8755 = vmatprep.subr.bf16.mxu0 %v8656
          %8756 = vmatpush1.bf16.msra.mxu0 %v8655
          %8757 = vmatprep.subr.bf16.mxu0 %v8652
          %8758 = vmatpush1.bf16.msra.mxu0 %v8651
          %8759 = vmatprep.subr.bf16.mxu0 %v8648
          %8760 = vmatpush1.bf16.msra.mxu0 %v8647
          %8761 = vmatprep.subr.bf16.mxu0 %v8644
          %8762 = vmatpush1.bf16.msra.mxu0 %v8643
          %8763 = vmatprep.subr.bf16.mxu0 %v8640
          %8764 = vmatpush1.bf16.msra.mxu0 %v8639
          %8765 = vmatprep.subr.bf16.mxu0 %v8636
          %8766 = vmatpush1.bf16.msra.mxu0 %v8635
          %8767 = vmatprep.subr.bf16.mxu0 %v8632
          %8768 = vmatpush1.bf16.msra.mxu0 %v8631
          %8769 = vmatprep.subr.bf16.mxu0 %v8628
          %8770 = vmatpush1.bf16.msra.mxu0 %v8627
          %8771 = vmatprep.subr.bf16.mxu0 %v8688
          %8772 = vmatpush2.bf16.msra.mxu0 %v8687
          %8773 = vmatprep.subr.bf16.mxu0 %v8684
          %8774 = vmatpush2.bf16.msra.mxu0 %v8683
          %8775 = vmatprep.subr.bf16.mxu0 %v8680
          %8776 = vmatpush2.bf16.msra.mxu0 %v8679
          %8777 = vmatprep.subr.bf16.mxu0 %v8676
          %8778 = vmatpush2.bf16.msra.mxu0 %v8675
          %8779 = vmatprep.subr.bf16.mxu0 %v8672
          %8780 = vmatpush2.bf16.msra.mxu0 %v8671
          %8781 = vmatprep.subr.bf16.mxu0 %v8668
          %8782 = vmatpush2.bf16.msra.mxu0 %v8667
          %8783 = vmatprep.subr.bf16.mxu0 %v8664
          %8784 = vmatpush2.bf16.msra.mxu0 %v8663
          %8785 = vmatprep.subr.bf16.mxu0 %v8660
          %8786 = vmatpush2.bf16.msra.mxu0 %v8659
          %8787 = vmatprep.mubr.bf16.mxu0 %v8370
          %8788 = vmatmul.mubr.bf16.gmra.mxu0 %v8369
          %v8789 = vpop.f32.mrf.mxu0
          %v8790 = vadd.f32 0.0, %v8789
          %v8791 = vpop.f32.mrf.mxu0
          %v8792 = vadd.f32 0.0, %v8791
          %v8793 = vpop.f32.mrf.mxu0
          %v8794 = vpop.f32.mrf.mxu0
          %8795 = vdwg.mxu0
          %8796 = vmatprep.subr.bf16.mxu0 %v8658
          %8797 = vmatpush1.bf16.msra.mxu0 %v8657
          %8798 = vmatprep.subr.bf16.mxu0 %v8654
          %8799 = vmatpush1.bf16.msra.mxu0 %v8653
          %8800 = vmatprep.subr.bf16.mxu0 %v8650
          %8801 = vmatpush1.bf16.msra.mxu0 %v8649
          %8802 = vmatprep.subr.bf16.mxu0 %v8646
          %8803 = vmatpush1.bf16.msra.mxu0 %v8645
          %8804 = vmatprep.subr.bf16.mxu0 %v8642
          %8805 = vmatpush1.bf16.msra.mxu0 %v8641
          %8806 = vmatprep.subr.bf16.mxu0 %v8638
          %8807 = vmatpush1.bf16.msra.mxu0 %v8637
          %8808 = vmatprep.subr.bf16.mxu0 %v8634
          %8809 = vmatpush1.bf16.msra.mxu0 %v8633
          %8810 = vmatprep.subr.bf16.mxu0 %v8630
          %8811 = vmatpush1.bf16.msra.mxu0 %v8629
          %8812 = vmatprep.subr.bf16.mxu0 %v8690
          %8813 = vmatpush2.bf16.msra.mxu0 %v8689
          %8814 = vmatprep.subr.bf16.mxu0 %v8686
          %8815 = vmatpush2.bf16.msra.mxu0 %v8685
          %8816 = vmatprep.subr.bf16.mxu0 %v8682
          %8817 = vmatpush2.bf16.msra.mxu0 %v8681
          %8818 = vmatprep.subr.bf16.mxu0 %v8678
          %8819 = vmatpush2.bf16.msra.mxu0 %v8677
          %8820 = vmatprep.subr.bf16.mxu0 %v8674
          %8821 = vmatpush2.bf16.msra.mxu0 %v8673
          %8822 = vmatprep.subr.bf16.mxu0 %v8670
          %8823 = vmatpush2.bf16.msra.mxu0 %v8669
          %8824 = vmatprep.subr.bf16.mxu0 %v8666
          %8825 = vmatpush2.bf16.msra.mxu0 %v8665
          %8826 = vmatprep.subr.bf16.mxu0 %v8662
          %8827 = vmatpush2.bf16.msra.mxu0 %v8661
          %8828 = vmatprep.mubr.bf16.mxu0 %v8370
          %8829 = vmatmul.mubr.bf16.gmra.mxu0 %v8369
          %v8830 = vpop.f32.mrf.mxu0
          %v8831 = vadd.f32 0.0, %v8830
          %v8832 = vpop.f32.mrf.mxu0
          %v8833 = vadd.f32 0.0, %v8832
          %v8834 = vpop.f32.mrf.mxu0
          %v8835 = vpop.f32.mrf.mxu0
          %8836 = vdwg.mxu0
          %v8841 = vcombine.low %v8790, %v8792
          %v8842 = vcombine.low %v8831, %v8833
          %v8844 = vunpack.c.l.s4 1966171168
          %v8845 = vunpack.c.0.s8 %v8844
          %v8846 = vlaneseq
          %v8847 = vshrl.u32 %v8846, 7
          %v8848 = vsub.s32 %v8845, %v8847
          %v8849 = vrot.slane %v8841, %v8848
          %v8851 = vunpack.c.l.s4 1966171168
          %v8852 = vunpack.c.0.s8 %v8851
          %v8853 = vlaneseq
          %v8854 = vshrl.u32 %v8853, 7
          %v8855 = vsub.s32 %v8852, %v8854
          %v8856 = vrot.slane %v8842, %v8855
          %v8857 = vcombine.low %v8849, %v8856
          %v8859 = vunpack.c.l.s4 1966171168
          %v8860 = vunpack.c.0.s8 %v8859
          %v8861 = vlaneseq
          %v8862 = vshrl.u32 %v8861, 7
          %v8863 = vsub.s32 %v8860, %v8862
          %v8864 = vrot.slane %v8857, %v8863
          %v8866 = vadd.f32 %v8368, %v8864
          %s8867 = scalar_lea.vmem [#allocation9], 512
          %v8868 = vld [vmem:[%s8867] sm:$0xff]
          %v8869 = vld [vmem:[%s8867 + $0x8] sm:$0xff]
          %v8870 = vld [vmem:[%s8867 + $0x10] sm:$0xff]
          %v8871 = vld [vmem:[%s8867 + $0x18] sm:$0xff]
          %v8872 = vld [vmem:[%s8867 + $0x20] sm:$0xff]
          %v8873 = vld [vmem:[%s8867 + $0x28] sm:$0xff]
          %v8874 = vld [vmem:[%s8867 + $0x30] sm:$0xff]
          %v8875 = vld [vmem:[%s8867 + $0x38] sm:$0xff]
          %v8876 = vld [vmem:[%s8867 + $0x40] sm:$0xff]
          %v8877 = vld [vmem:[%s8867 + $0x48] sm:$0xff]
          %v8878 = vld [vmem:[%s8867 + $0x50] sm:$0xff]
          %v8879 = vld [vmem:[%s8867 + $0x58] sm:$0xff]
          %v8880 = vld [vmem:[%s8867 + $0x60] sm:$0xff]
          %v8881 = vld [vmem:[%s8867 + $0x68] sm:$0xff]
          %v8882 = vld [vmem:[%s8867 + $0x70] sm:$0xff]
          %v8883 = vld [vmem:[%s8867 + $0x78] sm:$0xff]
          %v8884 = vld [vmem:[%s8867 + $0x80] sm:$0xff]
          %v8885 = vld [vmem:[%s8867 + $0x88] sm:$0xff]
          %v8886 = vld [vmem:[%s8867 + $0x90] sm:$0xff]
          %v8887 = vld [vmem:[%s8867 + $0x98] sm:$0xff]
          %v8888 = vld [vmem:[%s8867 + $0xa0] sm:$0xff]
          %v8889 = vld [vmem:[%s8867 + $0xa8] sm:$0xff]
          %v8890 = vld [vmem:[%s8867 + $0xb0] sm:$0xff]
          %v8891 = vld [vmem:[%s8867 + $0xb8] sm:$0xff]
          %v8892 = vld [vmem:[%s8867 + $0xc0] sm:$0xff]
          %v8893 = vld [vmem:[%s8867 + $0xc8] sm:$0xff]
          %v8894 = vld [vmem:[%s8867 + $0xd0] sm:$0xff]
          %v8895 = vld [vmem:[%s8867 + $0xd8] sm:$0xff]
          %v8896 = vld [vmem:[%s8867 + $0xe0] sm:$0xff]
          %v8897 = vld [vmem:[%s8867 + $0xe8] sm:$0xff]
          %v8898 = vld [vmem:[%s8867 + $0xf0] sm:$0xff]
          %v8899 = vld [vmem:[%s8867 + $0xf8] sm:$0xff]
          %v8900 = vld [vmem:[%s8867 + $0x100] sm:$0xff]
          %v8901 = vld [vmem:[%s8867 + $0x108] sm:$0xff]
          %v8902 = vld [vmem:[%s8867 + $0x110] sm:$0xff]
          %v8903 = vld [vmem:[%s8867 + $0x118] sm:$0xff]
          %v8904 = vld [vmem:[%s8867 + $0x120] sm:$0xff]
          %v8905 = vld [vmem:[%s8867 + $0x128] sm:$0xff]
          %v8906 = vld [vmem:[%s8867 + $0x130] sm:$0xff]
          %v8907 = vld [vmem:[%s8867 + $0x138] sm:$0xff]
          %v8908 = vld [vmem:[%s8867 + $0x140] sm:$0xff]
          %v8909 = vld [vmem:[%s8867 + $0x148] sm:$0xff]
          %v8910 = vld [vmem:[%s8867 + $0x150] sm:$0xff]
          %v8911 = vld [vmem:[%s8867 + $0x158] sm:$0xff]
          %v8912 = vld [vmem:[%s8867 + $0x160] sm:$0xff]
          %v8913 = vld [vmem:[%s8867 + $0x168] sm:$0xff]
          %v8914 = vld [vmem:[%s8867 + $0x170] sm:$0xff]
          %v8915 = vld [vmem:[%s8867 + $0x178] sm:$0xff]
          %v8916 = vld [vmem:[%s8867 + $0x180] sm:$0xff]
          %v8917 = vld [vmem:[%s8867 + $0x188] sm:$0xff]
          %v8918 = vld [vmem:[%s8867 + $0x190] sm:$0xff]
          %v8919 = vld [vmem:[%s8867 + $0x198] sm:$0xff]
          %v8920 = vld [vmem:[%s8867 + $0x1a0] sm:$0xff]
          %v8921 = vld [vmem:[%s8867 + $0x1a8] sm:$0xff]
          %v8922 = vld [vmem:[%s8867 + $0x1b0] sm:$0xff]
          %v8923 = vld [vmem:[%s8867 + $0x1b8] sm:$0xff]
          %v8924 = vld [vmem:[%s8867 + $0x1c0] sm:$0xff]
          %v8925 = vld [vmem:[%s8867 + $0x1c8] sm:$0xff]
          %v8926 = vld [vmem:[%s8867 + $0x1d0] sm:$0xff]
          %v8927 = vld [vmem:[%s8867 + $0x1d8] sm:$0xff]
          %v8928 = vld [vmem:[%s8867 + $0x1e0] sm:$0xff]
          %v8929 = vld [vmem:[%s8867 + $0x1e8] sm:$0xff]
          %v8930 = vld [vmem:[%s8867 + $0x1f0] sm:$0xff]
          %v8931 = vld [vmem:[%s8867 + $0x1f8] sm:$0xff]
          %v8933 = vshrl.u32 %v8369, 16
          %v8936 = vshrl.u32 %v8370, 16
          %v9004 = vunpack.c.l.b16 %v8868
          %v9005 = vunpack.c.h.b16 %v8868
          %v9006 = vunpack.c.l.b16 %v8869
          %v9007 = vunpack.c.h.b16 %v8869
          %v9008 = vunpack.c.l.b16 %v8870
          %v9009 = vunpack.c.h.b16 %v8870
          %v9010 = vunpack.c.l.b16 %v8871
          %v9011 = vunpack.c.h.b16 %v8871
          %v9012 = vunpack.c.l.b16 %v8872
          %v9013 = vunpack.c.h.b16 %v8872
          %v9014 = vunpack.c.l.b16 %v8873
          %v9015 = vunpack.c.h.b16 %v8873
          %v9016 = vunpack.c.l.b16 %v8874
          %v9017 = vunpack.c.h.b16 %v8874
          %v9018 = vunpack.c.l.b16 %v8875
          %v9019 = vunpack.c.h.b16 %v8875
          %v9020 = vunpack.c.l.b16 %v8876
          %v9021 = vunpack.c.h.b16 %v8876
          %v9022 = vunpack.c.l.b16 %v8877
          %v9023 = vunpack.c.h.b16 %v8877
          %v9024 = vunpack.c.l.b16 %v8878
          %v9025 = vunpack.c.h.b16 %v8878
          %v9026 = vunpack.c.l.b16 %v8879
          %v9027 = vunpack.c.h.b16 %v8879
          %v9028 = vunpack.c.l.b16 %v8880
          %v9029 = vunpack.c.h.b16 %v8880
          %v9030 = vunpack.c.l.b16 %v8881
          %v9031 = vunpack.c.h.b16 %v8881
          %v9032 = vunpack.c.l.b16 %v8882
          %v9033 = vunpack.c.h.b16 %v8882
          %v9034 = vunpack.c.l.b16 %v8883
          %v9035 = vunpack.c.h.b16 %v8883
          %v9036 = vunpack.c.l.b16 %v8884
          %v9037 = vunpack.c.h.b16 %v8884
          %v9038 = vunpack.c.l.b16 %v8885
          %v9039 = vunpack.c.h.b16 %v8885
          %v9040 = vunpack.c.l.b16 %v8886
          %v9041 = vunpack.c.h.b16 %v8886
          %v9042 = vunpack.c.l.b16 %v8887
          %v9043 = vunpack.c.h.b16 %v8887
          %v9044 = vunpack.c.l.b16 %v8888
          %v9045 = vunpack.c.h.b16 %v8888
          %v9046 = vunpack.c.l.b16 %v8889
          %v9047 = vunpack.c.h.b16 %v8889
          %v9048 = vunpack.c.l.b16 %v8890
          %v9049 = vunpack.c.h.b16 %v8890
          %v9050 = vunpack.c.l.b16 %v8891
          %v9051 = vunpack.c.h.b16 %v8891
          %v9052 = vunpack.c.l.b16 %v8892
          %v9053 = vunpack.c.h.b16 %v8892
          %v9054 = vunpack.c.l.b16 %v8893
          %v9055 = vunpack.c.h.b16 %v8893
          %v9056 = vunpack.c.l.b16 %v8894
          %v9057 = vunpack.c.h.b16 %v8894
          %v9058 = vunpack.c.l.b16 %v8895
          %v9059 = vunpack.c.h.b16 %v8895
          %v9060 = vunpack.c.l.b16 %v8896
          %v9061 = vunpack.c.h.b16 %v8896
          %v9062 = vunpack.c.l.b16 %v8897
          %v9063 = vunpack.c.h.b16 %v8897
          %v9064 = vunpack.c.l.b16 %v8898
          %v9065 = vunpack.c.h.b16 %v8898
          %v9066 = vunpack.c.l.b16 %v8899
          %v9067 = vunpack.c.h.b16 %v8899
          %v9068 = vunpack.c.l.b16 %v8900
          %v9069 = vunpack.c.h.b16 %v8900
          %v9070 = vunpack.c.l.b16 %v8901
          %v9071 = vunpack.c.h.b16 %v8901
          %v9072 = vunpack.c.l.b16 %v8902
          %v9073 = vunpack.c.h.b16 %v8902
          %v9074 = vunpack.c.l.b16 %v8903
          %v9075 = vunpack.c.h.b16 %v8903
          %v9076 = vunpack.c.l.b16 %v8904
          %v9077 = vunpack.c.h.b16 %v8904
          %v9078 = vunpack.c.l.b16 %v8905
          %v9079 = vunpack.c.h.b16 %v8905
          %v9080 = vunpack.c.l.b16 %v8906
          %v9081 = vunpack.c.h.b16 %v8906
          %v9082 = vunpack.c.l.b16 %v8907
          %v9083 = vunpack.c.h.b16 %v8907
          %v9084 = vunpack.c.l.b16 %v8908
          %v9085 = vunpack.c.h.b16 %v8908
          %v9086 = vunpack.c.l.b16 %v8909
          %v9087 = vunpack.c.h.b16 %v8909
          %v9088 = vunpack.c.l.b16 %v8910
          %v9089 = vunpack.c.h.b16 %v8910
          %v9090 = vunpack.c.l.b16 %v8911
          %v9091 = vunpack.c.h.b16 %v8911
          %v9092 = vunpack.c.l.b16 %v8912
          %v9093 = vunpack.c.h.b16 %v8912
          %v9094 = vunpack.c.l.b16 %v8913
          %v9095 = vunpack.c.h.b16 %v8913
          %v9096 = vunpack.c.l.b16 %v8914
          %v9097 = vunpack.c.h.b16 %v8914
          %v9098 = vunpack.c.l.b16 %v8915
          %v9099 = vunpack.c.h.b16 %v8915
          %v9100 = vunpack.c.l.b16 %v8916
          %v9101 = vunpack.c.h.b16 %v8916
          %v9102 = vunpack.c.l.b16 %v8917
          %v9103 = vunpack.c.h.b16 %v8917
          %v9104 = vunpack.c.l.b16 %v8918
          %v9105 = vunpack.c.h.b16 %v8918
          %v9106 = vunpack.c.l.b16 %v8919
          %v9107 = vunpack.c.h.b16 %v8919
          %v9108 = vunpack.c.l.b16 %v8920
          %v9109 = vunpack.c.h.b16 %v8920
          %v9110 = vunpack.c.l.b16 %v8921
          %v9111 = vunpack.c.h.b16 %v8921
          %v9112 = vunpack.c.l.b16 %v8922
          %v9113 = vunpack.c.h.b16 %v8922
          %v9114 = vunpack.c.l.b16 %v8923
          %v9115 = vunpack.c.h.b16 %v8923
          %v9116 = vunpack.c.l.b16 %v8924
          %v9117 = vunpack.c.h.b16 %v8924
          %v9118 = vunpack.c.l.b16 %v8925
          %v9119 = vunpack.c.h.b16 %v8925
          %v9120 = vunpack.c.l.b16 %v8926
          %v9121 = vunpack.c.h.b16 %v8926
          %v9122 = vunpack.c.l.b16 %v8927
          %v9123 = vunpack.c.h.b16 %v8927
          %v9124 = vunpack.c.l.b16 %v8928
          %v9125 = vunpack.c.h.b16 %v8928
          %v9126 = vunpack.c.l.b16 %v8929
          %v9127 = vunpack.c.h.b16 %v8929
          %v9128 = vunpack.c.l.b16 %v8930
          %v9129 = vunpack.c.h.b16 %v8930
          %v9130 = vunpack.c.l.b16 %v8931
          %v9131 = vunpack.c.h.b16 %v8931
          %v9132 = vpack.c.b16 %v9008, %v9004
          %v9133 = vpack.c.b16 %v9009, %v9005
          %v9134 = vpack.c.b16 %v9010, %v9006
          %v9135 = vpack.c.b16 %v9011, %v9007
          %v9136 = vpack.c.b16 %v9016, %v9012
          %v9137 = vpack.c.b16 %v9017, %v9013
          %v9138 = vpack.c.b16 %v9018, %v9014
          %v9139 = vpack.c.b16 %v9019, %v9015
          %v9140 = vpack.c.b16 %v9024, %v9020
          %v9141 = vpack.c.b16 %v9025, %v9021
          %v9142 = vpack.c.b16 %v9026, %v9022
          %v9143 = vpack.c.b16 %v9027, %v9023
          %v9144 = vpack.c.b16 %v9032, %v9028
          %v9145 = vpack.c.b16 %v9033, %v9029
          %v9146 = vpack.c.b16 %v9034, %v9030
          %v9147 = vpack.c.b16 %v9035, %v9031
          %v9148 = vpack.c.b16 %v9040, %v9036
          %v9149 = vpack.c.b16 %v9041, %v9037
          %v9150 = vpack.c.b16 %v9042, %v9038
          %v9151 = vpack.c.b16 %v9043, %v9039
          %v9152 = vpack.c.b16 %v9048, %v9044
          %v9153 = vpack.c.b16 %v9049, %v9045
          %v9154 = vpack.c.b16 %v9050, %v9046
          %v9155 = vpack.c.b16 %v9051, %v9047
          %v9156 = vpack.c.b16 %v9056, %v9052
          %v9157 = vpack.c.b16 %v9057, %v9053
          %v9158 = vpack.c.b16 %v9058, %v9054
          %v9159 = vpack.c.b16 %v9059, %v9055
          %v9160 = vpack.c.b16 %v9064, %v9060
          %v9161 = vpack.c.b16 %v9065, %v9061
          %v9162 = vpack.c.b16 %v9066, %v9062
          %v9163 = vpack.c.b16 %v9067, %v9063
          %v9164 = vpack.c.b16 %v9072, %v9068
          %v9165 = vpack.c.b16 %v9073, %v9069
          %v9166 = vpack.c.b16 %v9074, %v9070
          %v9167 = vpack.c.b16 %v9075, %v9071
          %v9168 = vpack.c.b16 %v9080, %v9076
          %v9169 = vpack.c.b16 %v9081, %v9077
          %v9170 = vpack.c.b16 %v9082, %v9078
          %v9171 = vpack.c.b16 %v9083, %v9079
          %v9172 = vpack.c.b16 %v9088, %v9084
          %v9173 = vpack.c.b16 %v9089, %v9085
          %v9174 = vpack.c.b16 %v9090, %v9086
          %v9175 = vpack.c.b16 %v9091, %v9087
          %v9176 = vpack.c.b16 %v9096, %v9092
          %v9177 = vpack.c.b16 %v9097, %v9093
          %v9178 = vpack.c.b16 %v9098, %v9094
          %v9179 = vpack.c.b16 %v9099, %v9095
          %v9180 = vpack.c.b16 %v9104, %v9100
          %v9181 = vpack.c.b16 %v9105, %v9101
          %v9182 = vpack.c.b16 %v9106, %v9102
          %v9183 = vpack.c.b16 %v9107, %v9103
          %v9184 = vpack.c.b16 %v9112, %v9108
          %v9185 = vpack.c.b16 %v9113, %v9109
          %v9186 = vpack.c.b16 %v9114, %v9110
          %v9187 = vpack.c.b16 %v9115, %v9111
          %v9188 = vpack.c.b16 %v9120, %v9116
          %v9189 = vpack.c.b16 %v9121, %v9117
          %v9190 = vpack.c.b16 %v9122, %v9118
          %v9191 = vpack.c.b16 %v9123, %v9119
          %v9192 = vpack.c.b16 %v9128, %v9124
          %v9193 = vpack.c.b16 %v9129, %v9125
          %v9194 = vpack.c.b16 %v9130, %v9126
          %v9195 = vpack.c.b16 %v9131, %v9127
          %9260 = vmatprep.subr.bf16.mxu0 %v9161
          %9261 = vmatpush1.bf16.msra.mxu0 %v9160
          %9262 = vmatprep.subr.bf16.mxu0 %v9157
          %9263 = vmatpush1.bf16.msra.mxu0 %v9156
          %9264 = vmatprep.subr.bf16.mxu0 %v9153
          %9265 = vmatpush1.bf16.msra.mxu0 %v9152
          %9266 = vmatprep.subr.bf16.mxu0 %v9149
          %9267 = vmatpush1.bf16.msra.mxu0 %v9148
          %9268 = vmatprep.subr.bf16.mxu0 %v9145
          %9269 = vmatpush1.bf16.msra.mxu0 %v9144
          %9270 = vmatprep.subr.bf16.mxu0 %v9141
          %9271 = vmatpush1.bf16.msra.mxu0 %v9140
          %9272 = vmatprep.subr.bf16.mxu0 %v9137
          %9273 = vmatpush1.bf16.msra.mxu0 %v9136
          %9274 = vmatprep.subr.bf16.mxu0 %v9133
          %9275 = vmatpush1.bf16.msra.mxu0 %v9132
          %9276 = vmatprep.subr.bf16.mxu0 %v9193
          %9277 = vmatpush2.bf16.msra.mxu0 %v9192
          %9278 = vmatprep.subr.bf16.mxu0 %v9189
          %9279 = vmatpush2.bf16.msra.mxu0 %v9188
          %9280 = vmatprep.subr.bf16.mxu0 %v9185
          %9281 = vmatpush2.bf16.msra.mxu0 %v9184
          %9282 = vmatprep.subr.bf16.mxu0 %v9181
          %9283 = vmatpush2.bf16.msra.mxu0 %v9180
          %9284 = vmatprep.subr.bf16.mxu0 %v9177
          %9285 = vmatpush2.bf16.msra.mxu0 %v9176
          %9286 = vmatprep.subr.bf16.mxu0 %v9173
          %9287 = vmatpush2.bf16.msra.mxu0 %v9172
          %9288 = vmatprep.subr.bf16.mxu0 %v9169
          %9289 = vmatpush2.bf16.msra.mxu0 %v9168
          %9290 = vmatprep.subr.bf16.mxu0 %v9165
          %9291 = vmatpush2.bf16.msra.mxu0 %v9164
          %9292 = vmatprep.mubr.bf16.mxu0 %v8936
          %9293 = vmatmul.mubr.bf16.gmra.mxu0 %v8933
          %v9294 = vpop.f32.mrf.mxu0
          %v9295 = vadd.f32 0.0, %v9294
          %v9296 = vpop.f32.mrf.mxu0
          %v9297 = vadd.f32 0.0, %v9296
          %v9298 = vpop.f32.mrf.mxu0
          %v9299 = vpop.f32.mrf.mxu0
          %9300 = vdwg.mxu0
          %9301 = vmatprep.subr.bf16.mxu0 %v9163
          %9302 = vmatpush1.bf16.msra.mxu0 %v9162
          %9303 = vmatprep.subr.bf16.mxu0 %v9159
          %9304 = vmatpush1.bf16.msra.mxu0 %v9158
          %9305 = vmatprep.subr.bf16.mxu0 %v9155
          %9306 = vmatpush1.bf16.msra.mxu0 %v9154
          %9307 = vmatprep.subr.bf16.mxu0 %v9151
          %9308 = vmatpush1.bf16.msra.mxu0 %v9150
          %9309 = vmatprep.subr.bf16.mxu0 %v9147
          %9310 = vmatpush1.bf16.msra.mxu0 %v9146
          %9311 = vmatprep.subr.bf16.mxu0 %v9143
          %9312 = vmatpush1.bf16.msra.mxu0 %v9142
          %9313 = vmatprep.subr.bf16.mxu0 %v9139
          %9314 = vmatpush1.bf16.msra.mxu0 %v9138
          %9315 = vmatprep.subr.bf16.mxu0 %v9135
          %9316 = vmatpush1.bf16.msra.mxu0 %v9134
          %9317 = vmatprep.subr.bf16.mxu0 %v9195
          %9318 = vmatpush2.bf16.msra.mxu0 %v9194
          %9319 = vmatprep.subr.bf16.mxu0 %v9191
          %9320 = vmatpush2.bf16.msra.mxu0 %v9190
          %9321 = vmatprep.subr.bf16.mxu0 %v9187
          %9322 = vmatpush2.bf16.msra.mxu0 %v9186
          %9323 = vmatprep.subr.bf16.mxu0 %v9183
          %9324 = vmatpush2.bf16.msra.mxu0 %v9182
          %9325 = vmatprep.subr.bf16.mxu0 %v9179
          %9326 = vmatpush2.bf16.msra.mxu0 %v9178
          %9327 = vmatprep.subr.bf16.mxu0 %v9175
          %9328 = vmatpush2.bf16.msra.mxu0 %v9174
          %9329 = vmatprep.subr.bf16.mxu0 %v9171
          %9330 = vmatpush2.bf16.msra.mxu0 %v9170
          %9331 = vmatprep.subr.bf16.mxu0 %v9167
          %9332 = vmatpush2.bf16.msra.mxu0 %v9166
          %9333 = vmatprep.mubr.bf16.mxu0 %v8936
          %9334 = vmatmul.mubr.bf16.gmra.mxu0 %v8933
          %v9335 = vpop.f32.mrf.mxu0
          %v9336 = vadd.f32 0.0, %v9335
          %v9337 = vpop.f32.mrf.mxu0
          %v9338 = vadd.f32 0.0, %v9337
          %v9339 = vpop.f32.mrf.mxu0
          %v9340 = vpop.f32.mrf.mxu0
          %9341 = vdwg.mxu0
          %v9346 = vcombine.low %v9295, %v9297
          %v9347 = vcombine.low %v9336, %v9338
          %v9349 = vunpack.c.l.s4 1966171168
          %v9350 = vunpack.c.0.s8 %v9349
          %v9351 = vlaneseq
          %v9352 = vshrl.u32 %v9351, 7
          %v9353 = vsub.s32 %v9350, %v9352
          %v9354 = vrot.slane %v9346, %v9353
          %v9356 = vunpack.c.l.s4 1966171168
          %v9357 = vunpack.c.0.s8 %v9356
          %v9358 = vlaneseq
          %v9359 = vshrl.u32 %v9358, 7
          %v9360 = vsub.s32 %v9357, %v9359
          %v9361 = vrot.slane %v9347, %v9360
          %v9362 = vcombine.low %v9354, %v9361
          %v9364 = vunpack.c.l.s4 1966171168
          %v9365 = vunpack.c.0.s8 %v9364
          %v9366 = vlaneseq
          %v9367 = vshrl.u32 %v9366, 7
          %v9368 = vsub.s32 %v9365, %v9367
          %v9369 = vrot.slane %v9362, %v9368
          %v9371 = vadd.f32 %v8866, %v9369
          %s9372 = scalar_lea.vmem [#allocation9], 1024
          %v9373 = vld [vmem:[%s9372] sm:$0xff]
          %v9374 = vld [vmem:[%s9372 + $0x8] sm:$0xff]
          %v9375 = vld [vmem:[%s9372 + $0x10] sm:$0xff]
          %v9376 = vld [vmem:[%s9372 + $0x18] sm:$0xff]
          %v9377 = vld [vmem:[%s9372 + $0x20] sm:$0xff]
          %v9378 = vld [vmem:[%s9372 + $0x28] sm:$0xff]
          %v9379 = vld [vmem:[%s9372 + $0x30] sm:$0xff]
          %v9380 = vld [vmem:[%s9372 + $0x38] sm:$0xff]
          %v9381 = vld [vmem:[%s9372 + $0x40] sm:$0xff]
          %v9382 = vld [vmem:[%s9372 + $0x48] sm:$0xff]
          %v9383 = vld [vmem:[%s9372 + $0x50] sm:$0xff]
          %v9384 = vld [vmem:[%s9372 + $0x58] sm:$0xff]
          %v9385 = vld [vmem:[%s9372 + $0x60] sm:$0xff]
          %v9386 = vld [vmem:[%s9372 + $0x68] sm:$0xff]
          %v9387 = vld [vmem:[%s9372 + $0x70] sm:$0xff]
          %v9388 = vld [vmem:[%s9372 + $0x78] sm:$0xff]
          %v9389 = vld [vmem:[%s9372 + $0x80] sm:$0xff]
          %v9390 = vld [vmem:[%s9372 + $0x88] sm:$0xff]
          %v9391 = vld [vmem:[%s9372 + $0x90] sm:$0xff]
          %v9392 = vld [vmem:[%s9372 + $0x98] sm:$0xff]
          %v9393 = vld [vmem:[%s9372 + $0xa0] sm:$0xff]
          %v9394 = vld [vmem:[%s9372 + $0xa8] sm:$0xff]
          %v9395 = vld [vmem:[%s9372 + $0xb0] sm:$0xff]
          %v9396 = vld [vmem:[%s9372 + $0xb8] sm:$0xff]
          %v9397 = vld [vmem:[%s9372 + $0xc0] sm:$0xff]
          %v9398 = vld [vmem:[%s9372 + $0xc8] sm:$0xff]
          %v9399 = vld [vmem:[%s9372 + $0xd0] sm:$0xff]
          %v9400 = vld [vmem:[%s9372 + $0xd8] sm:$0xff]
          %v9401 = vld [vmem:[%s9372 + $0xe0] sm:$0xff]
          %v9402 = vld [vmem:[%s9372 + $0xe8] sm:$0xff]
          %v9403 = vld [vmem:[%s9372 + $0xf0] sm:$0xff]
          %v9404 = vld [vmem:[%s9372 + $0xf8] sm:$0xff]
          %v9405 = vld [vmem:[%s9372 + $0x100] sm:$0xff]
          %v9406 = vld [vmem:[%s9372 + $0x108] sm:$0xff]
          %v9407 = vld [vmem:[%s9372 + $0x110] sm:$0xff]
          %v9408 = vld [vmem:[%s9372 + $0x118] sm:$0xff]
          %v9409 = vld [vmem:[%s9372 + $0x120] sm:$0xff]
          %v9410 = vld [vmem:[%s9372 + $0x128] sm:$0xff]
          %v9411 = vld [vmem:[%s9372 + $0x130] sm:$0xff]
          %v9412 = vld [vmem:[%s9372 + $0x138] sm:$0xff]
          %v9413 = vld [vmem:[%s9372 + $0x140] sm:$0xff]
          %v9414 = vld [vmem:[%s9372 + $0x148] sm:$0xff]
          %v9415 = vld [vmem:[%s9372 + $0x150] sm:$0xff]
          %v9416 = vld [vmem:[%s9372 + $0x158] sm:$0xff]
          %v9417 = vld [vmem:[%s9372 + $0x160] sm:$0xff]
          %v9418 = vld [vmem:[%s9372 + $0x168] sm:$0xff]
          %v9419 = vld [vmem:[%s9372 + $0x170] sm:$0xff]
          %v9420 = vld [vmem:[%s9372 + $0x178] sm:$0xff]
          %v9421 = vld [vmem:[%s9372 + $0x180] sm:$0xff]
          %v9422 = vld [vmem:[%s9372 + $0x188] sm:$0xff]
          %v9423 = vld [vmem:[%s9372 + $0x190] sm:$0xff]
          %v9424 = vld [vmem:[%s9372 + $0x198] sm:$0xff]
          %v9425 = vld [vmem:[%s9372 + $0x1a0] sm:$0xff]
          %v9426 = vld [vmem:[%s9372 + $0x1a8] sm:$0xff]
          %v9427 = vld [vmem:[%s9372 + $0x1b0] sm:$0xff]
          %v9428 = vld [vmem:[%s9372 + $0x1b8] sm:$0xff]
          %v9429 = vld [vmem:[%s9372 + $0x1c0] sm:$0xff]
          %v9430 = vld [vmem:[%s9372 + $0x1c8] sm:$0xff]
          %v9431 = vld [vmem:[%s9372 + $0x1d0] sm:$0xff]
          %v9432 = vld [vmem:[%s9372 + $0x1d8] sm:$0xff]
          %v9433 = vld [vmem:[%s9372 + $0x1e0] sm:$0xff]
          %v9434 = vld [vmem:[%s9372 + $0x1e8] sm:$0xff]
          %v9435 = vld [vmem:[%s9372 + $0x1f0] sm:$0xff]
          %v9436 = vld [vmem:[%s9372 + $0x1f8] sm:$0xff]
          %v9439 = vrot.slane %v8369, 1
          %v9440 = vrot.slane %v8370, 1
          %v9507 = vunpack.c.l.b16 %v9373
          %v9508 = vunpack.c.h.b16 %v9373
          %v9509 = vunpack.c.l.b16 %v9374
          %v9510 = vunpack.c.h.b16 %v9374
          %v9511 = vunpack.c.l.b16 %v9375
          %v9512 = vunpack.c.h.b16 %v9375
          %v9513 = vunpack.c.l.b16 %v9376
          %v9514 = vunpack.c.h.b16 %v9376
          %v9515 = vunpack.c.l.b16 %v9377
          %v9516 = vunpack.c.h.b16 %v9377
          %v9517 = vunpack.c.l.b16 %v9378
          %v9518 = vunpack.c.h.b16 %v9378
          %v9519 = vunpack.c.l.b16 %v9379
          %v9520 = vunpack.c.h.b16 %v9379
          %v9521 = vunpack.c.l.b16 %v9380
          %v9522 = vunpack.c.h.b16 %v9380
          %v9523 = vunpack.c.l.b16 %v9381
          %v9524 = vunpack.c.h.b16 %v9381
          %v9525 = vunpack.c.l.b16 %v9382
          %v9526 = vunpack.c.h.b16 %v9382
          %v9527 = vunpack.c.l.b16 %v9383
          %v9528 = vunpack.c.h.b16 %v9383
          %v9529 = vunpack.c.l.b16 %v9384
          %v9530 = vunpack.c.h.b16 %v9384
          %v9531 = vunpack.c.l.b16 %v9385
          %v9532 = vunpack.c.h.b16 %v9385
          %v9533 = vunpack.c.l.b16 %v9386
          %v9534 = vunpack.c.h.b16 %v9386
          %v9535 = vunpack.c.l.b16 %v9387
          %v9536 = vunpack.c.h.b16 %v9387
          %v9537 = vunpack.c.l.b16 %v9388
          %v9538 = vunpack.c.h.b16 %v9388
          %v9539 = vunpack.c.l.b16 %v9389
          %v9540 = vunpack.c.h.b16 %v9389
          %v9541 = vunpack.c.l.b16 %v9390
          %v9542 = vunpack.c.h.b16 %v9390
          %v9543 = vunpack.c.l.b16 %v9391
          %v9544 = vunpack.c.h.b16 %v9391
          %v9545 = vunpack.c.l.b16 %v9392
          %v9546 = vunpack.c.h.b16 %v9392
          %v9547 = vunpack.c.l.b16 %v9393
          %v9548 = vunpack.c.h.b16 %v9393
          %v9549 = vunpack.c.l.b16 %v9394
          %v9550 = vunpack.c.h.b16 %v9394
          %v9551 = vunpack.c.l.b16 %v9395
          %v9552 = vunpack.c.h.b16 %v9395
          %v9553 = vunpack.c.l.b16 %v9396
          %v9554 = vunpack.c.h.b16 %v9396
          %v9555 = vunpack.c.l.b16 %v9397
          %v9556 = vunpack.c.h.b16 %v9397
          %v9557 = vunpack.c.l.b16 %v9398
          %v9558 = vunpack.c.h.b16 %v9398
          %v9559 = vunpack.c.l.b16 %v9399
          %v9560 = vunpack.c.h.b16 %v9399
          %v9561 = vunpack.c.l.b16 %v9400
          %v9562 = vunpack.c.h.b16 %v9400
          %v9563 = vunpack.c.l.b16 %v9401
          %v9564 = vunpack.c.h.b16 %v9401
          %v9565 = vunpack.c.l.b16 %v9402
          %v9566 = vunpack.c.h.b16 %v9402
          %v9567 = vunpack.c.l.b16 %v9403
          %v9568 = vunpack.c.h.b16 %v9403
          %v9569 = vunpack.c.l.b16 %v9404
          %v9570 = vunpack.c.h.b16 %v9404
          %v9571 = vunpack.c.l.b16 %v9405
          %v9572 = vunpack.c.h.b16 %v9405
          %v9573 = vunpack.c.l.b16 %v9406
          %v9574 = vunpack.c.h.b16 %v9406
          %v9575 = vunpack.c.l.b16 %v9407
          %v9576 = vunpack.c.h.b16 %v9407
          %v9577 = vunpack.c.l.b16 %v9408
          %v9578 = vunpack.c.h.b16 %v9408
          %v9579 = vunpack.c.l.b16 %v9409
          %v9580 = vunpack.c.h.b16 %v9409
          %v9581 = vunpack.c.l.b16 %v9410
          %v9582 = vunpack.c.h.b16 %v9410
          %v9583 = vunpack.c.l.b16 %v9411
          %v9584 = vunpack.c.h.b16 %v9411
          %v9585 = vunpack.c.l.b16 %v9412
          %v9586 = vunpack.c.h.b16 %v9412
          %v9587 = vunpack.c.l.b16 %v9413
          %v9588 = vunpack.c.h.b16 %v9413
          %v9589 = vunpack.c.l.b16 %v9414
          %v9590 = vunpack.c.h.b16 %v9414
          %v9591 = vunpack.c.l.b16 %v9415
          %v9592 = vunpack.c.h.b16 %v9415
          %v9593 = vunpack.c.l.b16 %v9416
          %v9594 = vunpack.c.h.b16 %v9416
          %v9595 = vunpack.c.l.b16 %v9417
          %v9596 = vunpack.c.h.b16 %v9417
          %v9597 = vunpack.c.l.b16 %v9418
          %v9598 = vunpack.c.h.b16 %v9418
          %v9599 = vunpack.c.l.b16 %v9419
          %v9600 = vunpack.c.h.b16 %v9419
          %v9601 = vunpack.c.l.b16 %v9420
          %v9602 = vunpack.c.h.b16 %v9420
          %v9603 = vunpack.c.l.b16 %v9421
          %v9604 = vunpack.c.h.b16 %v9421
          %v9605 = vunpack.c.l.b16 %v9422
          %v9606 = vunpack.c.h.b16 %v9422
          %v9607 = vunpack.c.l.b16 %v9423
          %v9608 = vunpack.c.h.b16 %v9423
          %v9609 = vunpack.c.l.b16 %v9424
          %v9610 = vunpack.c.h.b16 %v9424
          %v9611 = vunpack.c.l.b16 %v9425
          %v9612 = vunpack.c.h.b16 %v9425
          %v9613 = vunpack.c.l.b16 %v9426
          %v9614 = vunpack.c.h.b16 %v9426
          %v9615 = vunpack.c.l.b16 %v9427
          %v9616 = vunpack.c.h.b16 %v9427
          %v9617 = vunpack.c.l.b16 %v9428
          %v9618 = vunpack.c.h.b16 %v9428
          %v9619 = vunpack.c.l.b16 %v9429
          %v9620 = vunpack.c.h.b16 %v9429
          %v9621 = vunpack.c.l.b16 %v9430
          %v9622 = vunpack.c.h.b16 %v9430
          %v9623 = vunpack.c.l.b16 %v9431
          %v9624 = vunpack.c.h.b16 %v9431
          %v9625 = vunpack.c.l.b16 %v9432
          %v9626 = vunpack.c.h.b16 %v9432
          %v9627 = vunpack.c.l.b16 %v9433
          %v9628 = vunpack.c.h.b16 %v9433
          %v9629 = vunpack.c.l.b16 %v9434
          %v9630 = vunpack.c.h.b16 %v9434
          %v9631 = vunpack.c.l.b16 %v9435
          %v9632 = vunpack.c.h.b16 %v9435
          %v9633 = vunpack.c.l.b16 %v9436
          %v9634 = vunpack.c.h.b16 %v9436
          %v9635 = vpack.c.b16 %v9511, %v9507
          %v9636 = vpack.c.b16 %v9512, %v9508
          %v9637 = vpack.c.b16 %v9513, %v9509
          %v9638 = vpack.c.b16 %v9514, %v9510
          %v9639 = vpack.c.b16 %v9519, %v9515
          %v9640 = vpack.c.b16 %v9520, %v9516
          %v9641 = vpack.c.b16 %v9521, %v9517
          %v9642 = vpack.c.b16 %v9522, %v9518
          %v9643 = vpack.c.b16 %v9527, %v9523
          %v9644 = vpack.c.b16 %v9528, %v9524
          %v9645 = vpack.c.b16 %v9529, %v9525
          %v9646 = vpack.c.b16 %v9530, %v9526
          %v9647 = vpack.c.b16 %v9535, %v9531
          %v9648 = vpack.c.b16 %v9536, %v9532
          %v9649 = vpack.c.b16 %v9537, %v9533
          %v9650 = vpack.c.b16 %v9538, %v9534
          %v9651 = vpack.c.b16 %v9543, %v9539
          %v9652 = vpack.c.b16 %v9544, %v9540
          %v9653 = vpack.c.b16 %v9545, %v9541
          %v9654 = vpack.c.b16 %v9546, %v9542
          %v9655 = vpack.c.b16 %v9551, %v9547
          %v9656 = vpack.c.b16 %v9552, %v9548
          %v9657 = vpack.c.b16 %v9553, %v9549
          %v9658 = vpack.c.b16 %v9554, %v9550
          %v9659 = vpack.c.b16 %v9559, %v9555
          %v9660 = vpack.c.b16 %v9560, %v9556
          %v9661 = vpack.c.b16 %v9561, %v9557
          %v9662 = vpack.c.b16 %v9562, %v9558
          %v9663 = vpack.c.b16 %v9567, %v9563
          %v9664 = vpack.c.b16 %v9568, %v9564
          %v9665 = vpack.c.b16 %v9569, %v9565
          %v9666 = vpack.c.b16 %v9570, %v9566
          %v9667 = vpack.c.b16 %v9575, %v9571
          %v9668 = vpack.c.b16 %v9576, %v9572
          %v9669 = vpack.c.b16 %v9577, %v9573
          %v9670 = vpack.c.b16 %v9578, %v9574
          %v9671 = vpack.c.b16 %v9583, %v9579
          %v9672 = vpack.c.b16 %v9584, %v9580
          %v9673 = vpack.c.b16 %v9585, %v9581
          %v9674 = vpack.c.b16 %v9586, %v9582
          %v9675 = vpack.c.b16 %v9591, %v9587
          %v9676 = vpack.c.b16 %v9592, %v9588
          %v9677 = vpack.c.b16 %v9593, %v9589
          %v9678 = vpack.c.b16 %v9594, %v9590
          %v9679 = vpack.c.b16 %v9599, %v9595
          %v9680 = vpack.c.b16 %v9600, %v9596
          %v9681 = vpack.c.b16 %v9601, %v9597
          %v9682 = vpack.c.b16 %v9602, %v9598
          %v9683 = vpack.c.b16 %v9607, %v9603
          %v9684 = vpack.c.b16 %v9608, %v9604
          %v9685 = vpack.c.b16 %v9609, %v9605
          %v9686 = vpack.c.b16 %v9610, %v9606
          %v9687 = vpack.c.b16 %v9615, %v9611
          %v9688 = vpack.c.b16 %v9616, %v9612
          %v9689 = vpack.c.b16 %v9617, %v9613
          %v9690 = vpack.c.b16 %v9618, %v9614
          %v9691 = vpack.c.b16 %v9623, %v9619
          %v9692 = vpack.c.b16 %v9624, %v9620
          %v9693 = vpack.c.b16 %v9625, %v9621
          %v9694 = vpack.c.b16 %v9626, %v9622
          %v9695 = vpack.c.b16 %v9631, %v9627
          %v9696 = vpack.c.b16 %v9632, %v9628
          %v9697 = vpack.c.b16 %v9633, %v9629
          %v9698 = vpack.c.b16 %v9634, %v9630
          %9763 = vmatprep.subr.bf16.mxu0 %v9664
          %9764 = vmatpush1.bf16.msra.mxu0 %v9663
          %9765 = vmatprep.subr.bf16.mxu0 %v9660
          %9766 = vmatpush1.bf16.msra.mxu0 %v9659
          %9767 = vmatprep.subr.bf16.mxu0 %v9656
          %9768 = vmatpush1.bf16.msra.mxu0 %v9655
          %9769 = vmatprep.subr.bf16.mxu0 %v9652
          %9770 = vmatpush1.bf16.msra.mxu0 %v9651
          %9771 = vmatprep.subr.bf16.mxu0 %v9648
          %9772 = vmatpush1.bf16.msra.mxu0 %v9647
          %9773 = vmatprep.subr.bf16.mxu0 %v9644
          %9774 = vmatpush1.bf16.msra.mxu0 %v9643
          %9775 = vmatprep.subr.bf16.mxu0 %v9640
          %9776 = vmatpush1.bf16.msra.mxu0 %v9639
          %9777 = vmatprep.subr.bf16.mxu0 %v9636
          %9778 = vmatpush1.bf16.msra.mxu0 %v9635
          %9779 = vmatprep.subr.bf16.mxu0 %v9696
          %9780 = vmatpush2.bf16.msra.mxu0 %v9695
          %9781 = vmatprep.subr.bf16.mxu0 %v9692
          %9782 = vmatpush2.bf16.msra.mxu0 %v9691
          %9783 = vmatprep.subr.bf16.mxu0 %v9688
          %9784 = vmatpush2.bf16.msra.mxu0 %v9687
          %9785 = vmatprep.subr.bf16.mxu0 %v9684
          %9786 = vmatpush2.bf16.msra.mxu0 %v9683
          %9787 = vmatprep.subr.bf16.mxu0 %v9680
          %9788 = vmatpush2.bf16.msra.mxu0 %v9679
          %9789 = vmatprep.subr.bf16.mxu0 %v9676
          %9790 = vmatpush2.bf16.msra.mxu0 %v9675
          %9791 = vmatprep.subr.bf16.mxu0 %v9672
          %9792 = vmatpush2.bf16.msra.mxu0 %v9671
          %9793 = vmatprep.subr.bf16.mxu0 %v9668
          %9794 = vmatpush2.bf16.msra.mxu0 %v9667
          %9795 = vmatprep.mubr.bf16.mxu0 %v9440
          %9796 = vmatmul.mubr.bf16.gmra.mxu0 %v9439
          %v9797 = vpop.f32.mrf.mxu0
          %v9798 = vadd.f32 0.0, %v9797
          %v9799 = vpop.f32.mrf.mxu0
          %v9800 = vadd.f32 0.0, %v9799
          %v9801 = vpop.f32.mrf.mxu0
          %v9802 = vpop.f32.mrf.mxu0
          %9803 = vdwg.mxu0
          %9804 = vmatprep.subr.bf16.mxu0 %v9666
          %9805 = vmatpush1.bf16.msra.mxu0 %v9665
          %9806 = vmatprep.subr.bf16.mxu0 %v9662
          %9807 = vmatpush1.bf16.msra.mxu0 %v9661
          %9808 = vmatprep.subr.bf16.mxu0 %v9658
          %9809 = vmatpush1.bf16.msra.mxu0 %v9657
          %9810 = vmatprep.subr.bf16.mxu0 %v9654
          %9811 = vmatpush1.bf16.msra.mxu0 %v9653
          %9812 = vmatprep.subr.bf16.mxu0 %v9650
          %9813 = vmatpush1.bf16.msra.mxu0 %v9649
          %9814 = vmatprep.subr.bf16.mxu0 %v9646
          %9815 = vmatpush1.bf16.msra.mxu0 %v9645
          %9816 = vmatprep.subr.bf16.mxu0 %v9642
          %9817 = vmatpush1.bf16.msra.mxu0 %v9641
          %9818 = vmatprep.subr.bf16.mxu0 %v9638
          %9819 = vmatpush1.bf16.msra.mxu0 %v9637
          %9820 = vmatprep.subr.bf16.mxu0 %v9698
          %9821 = vmatpush2.bf16.msra.mxu0 %v9697
          %9822 = vmatprep.subr.bf16.mxu0 %v9694
          %9823 = vmatpush2.bf16.msra.mxu0 %v9693
          %9824 = vmatprep.subr.bf16.mxu0 %v9690
          %9825 = vmatpush2.bf16.msra.mxu0 %v9689
          %9826 = vmatprep.subr.bf16.mxu0 %v9686
          %9827 = vmatpush2.bf16.msra.mxu0 %v9685
          %9828 = vmatprep.subr.bf16.mxu0 %v9682
          %9829 = vmatpush2.bf16.msra.mxu0 %v9681
          %9830 = vmatprep.subr.bf16.mxu0 %v9678
          %9831 = vmatpush2.bf16.msra.mxu0 %v9677
          %9832 = vmatprep.subr.bf16.mxu0 %v9674
          %9833 = vmatpush2.bf16.msra.mxu0 %v9673
          %9834 = vmatprep.subr.bf16.mxu0 %v9670
          %9835 = vmatpush2.bf16.msra.mxu0 %v9669
          %9836 = vmatprep.mubr.bf16.mxu0 %v9440
          %9837 = vmatmul.mubr.bf16.gmra.mxu0 %v9439
          %v9838 = vpop.f32.mrf.mxu0
          %v9839 = vadd.f32 0.0, %v9838
          %v9840 = vpop.f32.mrf.mxu0
          %v9841 = vadd.f32 0.0, %v9840
          %v9842 = vpop.f32.mrf.mxu0
          %v9843 = vpop.f32.mrf.mxu0
          %9844 = vdwg.mxu0
          %v9849 = vcombine.low %v9798, %v9800
          %v9850 = vcombine.low %v9839, %v9841
          %v9852 = vunpack.c.l.s4 1966171168
          %v9853 = vunpack.c.0.s8 %v9852
          %v9854 = vlaneseq
          %v9855 = vshrl.u32 %v9854, 7
          %v9856 = vsub.s32 %v9853, %v9855
          %v9857 = vrot.slane %v9849, %v9856
          %v9859 = vunpack.c.l.s4 1966171168
          %v9860 = vunpack.c.0.s8 %v9859
          %v9861 = vlaneseq
          %v9862 = vshrl.u32 %v9861, 7
          %v9863 = vsub.s32 %v9860, %v9862
          %v9864 = vrot.slane %v9850, %v9863
          %v9865 = vcombine.low %v9857, %v9864
          %v9867 = vunpack.c.l.s4 1966171168
          %v9868 = vunpack.c.0.s8 %v9867
          %v9869 = vlaneseq
          %v9870 = vshrl.u32 %v9869, 7
          %v9871 = vsub.s32 %v9868, %v9870
          %v9872 = vrot.slane %v9865, %v9871
          %v9874 = vadd.f32 %v9371, %v9872
          %s9875 = scalar_lea.vmem [#allocation9], 1536
          %v9876 = vld [vmem:[%s9875] sm:$0xff]
          %v9877 = vld [vmem:[%s9875 + $0x8] sm:$0xff]
          %v9878 = vld [vmem:[%s9875 + $0x10] sm:$0xff]
          %v9879 = vld [vmem:[%s9875 + $0x18] sm:$0xff]
          %v9880 = vld [vmem:[%s9875 + $0x20] sm:$0xff]
          %v9881 = vld [vmem:[%s9875 + $0x28] sm:$0xff]
          %v9882 = vld [vmem:[%s9875 + $0x30] sm:$0xff]
          %v9883 = vld [vmem:[%s9875 + $0x38] sm:$0xff]
          %v9884 = vld [vmem:[%s9875 + $0x40] sm:$0xff]
          %v9885 = vld [vmem:[%s9875 + $0x48] sm:$0xff]
          %v9886 = vld [vmem:[%s9875 + $0x50] sm:$0xff]
          %v9887 = vld [vmem:[%s9875 + $0x58] sm:$0xff]
          %v9888 = vld [vmem:[%s9875 + $0x60] sm:$0xff]
          %v9889 = vld [vmem:[%s9875 + $0x68] sm:$0xff]
          %v9890 = vld [vmem:[%s9875 + $0x70] sm:$0xff]
          %v9891 = vld [vmem:[%s9875 + $0x78] sm:$0xff]
          %v9892 = vld [vmem:[%s9875 + $0x80] sm:$0xff]
          %v9893 = vld [vmem:[%s9875 + $0x88] sm:$0xff]
          %v9894 = vld [vmem:[%s9875 + $0x90] sm:$0xff]
          %v9895 = vld [vmem:[%s9875 + $0x98] sm:$0xff]
          %v9896 = vld [vmem:[%s9875 + $0xa0] sm:$0xff]
          %v9897 = vld [vmem:[%s9875 + $0xa8] sm:$0xff]
          %v9898 = vld [vmem:[%s9875 + $0xb0] sm:$0xff]
          %v9899 = vld [vmem:[%s9875 + $0xb8] sm:$0xff]
          %v9900 = vld [vmem:[%s9875 + $0xc0] sm:$0xff]
          %v9901 = vld [vmem:[%s9875 + $0xc8] sm:$0xff]
          %v9902 = vld [vmem:[%s9875 + $0xd0] sm:$0xff]
          %v9903 = vld [vmem:[%s9875 + $0xd8] sm:$0xff]
          %v9904 = vld [vmem:[%s9875 + $0xe0] sm:$0xff]
          %v9905 = vld [vmem:[%s9875 + $0xe8] sm:$0xff]
          %v9906 = vld [vmem:[%s9875 + $0xf0] sm:$0xff]
          %v9907 = vld [vmem:[%s9875 + $0xf8] sm:$0xff]
          %v9908 = vld [vmem:[%s9875 + $0x100] sm:$0xff]
          %v9909 = vld [vmem:[%s9875 + $0x108] sm:$0xff]
          %v9910 = vld [vmem:[%s9875 + $0x110] sm:$0xff]
          %v9911 = vld [vmem:[%s9875 + $0x118] sm:$0xff]
          %v9912 = vld [vmem:[%s9875 + $0x120] sm:$0xff]
          %v9913 = vld [vmem:[%s9875 + $0x128] sm:$0xff]
          %v9914 = vld [vmem:[%s9875 + $0x130] sm:$0xff]
          %v9915 = vld [vmem:[%s9875 + $0x138] sm:$0xff]
          %v9916 = vld [vmem:[%s9875 + $0x140] sm:$0xff]
          %v9917 = vld [vmem:[%s9875 + $0x148] sm:$0xff]
          %v9918 = vld [vmem:[%s9875 + $0x150] sm:$0xff]
          %v9919 = vld [vmem:[%s9875 + $0x158] sm:$0xff]
          %v9920 = vld [vmem:[%s9875 + $0x160] sm:$0xff]
          %v9921 = vld [vmem:[%s9875 + $0x168] sm:$0xff]
          %v9922 = vld [vmem:[%s9875 + $0x170] sm:$0xff]
          %v9923 = vld [vmem:[%s9875 + $0x178] sm:$0xff]
          %v9924 = vld [vmem:[%s9875 + $0x180] sm:$0xff]
          %v9925 = vld [vmem:[%s9875 + $0x188] sm:$0xff]
          %v9926 = vld [vmem:[%s9875 + $0x190] sm:$0xff]
          %v9927 = vld [vmem:[%s9875 + $0x198] sm:$0xff]
          %v9928 = vld [vmem:[%s9875 + $0x1a0] sm:$0xff]
          %v9929 = vld [vmem:[%s9875 + $0x1a8] sm:$0xff]
          %v9930 = vld [vmem:[%s9875 + $0x1b0] sm:$0xff]
          %v9931 = vld [vmem:[%s9875 + $0x1b8] sm:$0xff]
          %v9932 = vld [vmem:[%s9875 + $0x1c0] sm:$0xff]
          %v9933 = vld [vmem:[%s9875 + $0x1c8] sm:$0xff]
          %v9934 = vld [vmem:[%s9875 + $0x1d0] sm:$0xff]
          %v9935 = vld [vmem:[%s9875 + $0x1d8] sm:$0xff]
          %v9936 = vld [vmem:[%s9875 + $0x1e0] sm:$0xff]
          %v9937 = vld [vmem:[%s9875 + $0x1e8] sm:$0xff]
          %v9938 = vld [vmem:[%s9875 + $0x1f0] sm:$0xff]
          %v9939 = vld [vmem:[%s9875 + $0x1f8] sm:$0xff]
          %v9940 = vrot.slane %v8933, 1
          %v9941 = vrot.slane %v8936, 1
          %v10008 = vunpack.c.l.b16 %v9876
          %v10009 = vunpack.c.h.b16 %v9876
          %v10010 = vunpack.c.l.b16 %v9877
          %v10011 = vunpack.c.h.b16 %v9877
          %v10012 = vunpack.c.l.b16 %v9878
          %v10013 = vunpack.c.h.b16 %v9878
          %v10014 = vunpack.c.l.b16 %v9879
          %v10015 = vunpack.c.h.b16 %v9879
          %v10016 = vunpack.c.l.b16 %v9880
          %v10017 = vunpack.c.h.b16 %v9880
          %v10018 = vunpack.c.l.b16 %v9881
          %v10019 = vunpack.c.h.b16 %v9881
          %v10020 = vunpack.c.l.b16 %v9882
          %v10021 = vunpack.c.h.b16 %v9882
          %v10022 = vunpack.c.l.b16 %v9883
          %v10023 = vunpack.c.h.b16 %v9883
          %v10024 = vunpack.c.l.b16 %v9884
          %v10025 = vunpack.c.h.b16 %v9884
          %v10026 = vunpack.c.l.b16 %v9885
          %v10027 = vunpack.c.h.b16 %v9885
          %v10028 = vunpack.c.l.b16 %v9886
          %v10029 = vunpack.c.h.b16 %v9886
          %v10030 = vunpack.c.l.b16 %v9887
          %v10031 = vunpack.c.h.b16 %v9887
          %v10032 = vunpack.c.l.b16 %v9888
          %v10033 = vunpack.c.h.b16 %v9888
          %v10034 = vunpack.c.l.b16 %v9889
          %v10035 = vunpack.c.h.b16 %v9889
          %v10036 = vunpack.c.l.b16 %v9890
          %v10037 = vunpack.c.h.b16 %v9890
          %v10038 = vunpack.c.l.b16 %v9891
          %v10039 = vunpack.c.h.b16 %v9891
          %v10040 = vunpack.c.l.b16 %v9892
          %v10041 = vunpack.c.h.b16 %v9892
          %v10042 = vunpack.c.l.b16 %v9893
          %v10043 = vunpack.c.h.b16 %v9893
          %v10044 = vunpack.c.l.b16 %v9894
          %v10045 = vunpack.c.h.b16 %v9894
          %v10046 = vunpack.c.l.b16 %v9895
          %v10047 = vunpack.c.h.b16 %v9895
          %v10048 = vunpack.c.l.b16 %v9896
          %v10049 = vunpack.c.h.b16 %v9896
          %v10050 = vunpack.c.l.b16 %v9897
          %v10051 = vunpack.c.h.b16 %v9897
          %v10052 = vunpack.c.l.b16 %v9898
          %v10053 = vunpack.c.h.b16 %v9898
          %v10054 = vunpack.c.l.b16 %v9899
          %v10055 = vunpack.c.h.b16 %v9899
          %v10056 = vunpack.c.l.b16 %v9900
          %v10057 = vunpack.c.h.b16 %v9900
          %v10058 = vunpack.c.l.b16 %v9901
          %v10059 = vunpack.c.h.b16 %v9901
          %v10060 = vunpack.c.l.b16 %v9902
          %v10061 = vunpack.c.h.b16 %v9902
          %v10062 = vunpack.c.l.b16 %v9903
          %v10063 = vunpack.c.h.b16 %v9903
          %v10064 = vunpack.c.l.b16 %v9904
          %v10065 = vunpack.c.h.b16 %v9904
          %v10066 = vunpack.c.l.b16 %v9905
          %v10067 = vunpack.c.h.b16 %v9905
          %v10068 = vunpack.c.l.b16 %v9906
          %v10069 = vunpack.c.h.b16 %v9906
          %v10070 = vunpack.c.l.b16 %v9907
          %v10071 = vunpack.c.h.b16 %v9907
          %v10072 = vunpack.c.l.b16 %v9908
          %v10073 = vunpack.c.h.b16 %v9908
          %v10074 = vunpack.c.l.b16 %v9909
          %v10075 = vunpack.c.h.b16 %v9909
          %v10076 = vunpack.c.l.b16 %v9910
          %v10077 = vunpack.c.h.b16 %v9910
          %v10078 = vunpack.c.l.b16 %v9911
          %v10079 = vunpack.c.h.b16 %v9911
          %v10080 = vunpack.c.l.b16 %v9912
          %v10081 = vunpack.c.h.b16 %v9912
          %v10082 = vunpack.c.l.b16 %v9913
          %v10083 = vunpack.c.h.b16 %v9913
          %v10084 = vunpack.c.l.b16 %v9914
          %v10085 = vunpack.c.h.b16 %v9914
          %v10086 = vunpack.c.l.b16 %v9915
          %v10087 = vunpack.c.h.b16 %v9915
          %v10088 = vunpack.c.l.b16 %v9916
          %v10089 = vunpack.c.h.b16 %v9916
          %v10090 = vunpack.c.l.b16 %v9917
          %v10091 = vunpack.c.h.b16 %v9917
          %v10092 = vunpack.c.l.b16 %v9918
          %v10093 = vunpack.c.h.b16 %v9918
          %v10094 = vunpack.c.l.b16 %v9919
          %v10095 = vunpack.c.h.b16 %v9919
          %v10096 = vunpack.c.l.b16 %v9920
          %v10097 = vunpack.c.h.b16 %v9920
          %v10098 = vunpack.c.l.b16 %v9921
          %v10099 = vunpack.c.h.b16 %v9921
          %v10100 = vunpack.c.l.b16 %v9922
          %v10101 = vunpack.c.h.b16 %v9922
          %v10102 = vunpack.c.l.b16 %v9923
          %v10103 = vunpack.c.h.b16 %v9923
          %v10104 = vunpack.c.l.b16 %v9924
          %v10105 = vunpack.c.h.b16 %v9924
          %v10106 = vunpack.c.l.b16 %v9925
          %v10107 = vunpack.c.h.b16 %v9925
          %v10108 = vunpack.c.l.b16 %v9926
          %v10109 = vunpack.c.h.b16 %v9926
          %v10110 = vunpack.c.l.b16 %v9927
          %v10111 = vunpack.c.h.b16 %v9927
          %v10112 = vunpack.c.l.b16 %v9928
          %v10113 = vunpack.c.h.b16 %v9928
          %v10114 = vunpack.c.l.b16 %v9929
          %v10115 = vunpack.c.h.b16 %v9929
          %v10116 = vunpack.c.l.b16 %v9930
          %v10117 = vunpack.c.h.b16 %v9930
          %v10118 = vunpack.c.l.b16 %v9931
          %v10119 = vunpack.c.h.b16 %v9931
          %v10120 = vunpack.c.l.b16 %v9932
          %v10121 = vunpack.c.h.b16 %v9932
          %v10122 = vunpack.c.l.b16 %v9933
          %v10123 = vunpack.c.h.b16 %v9933
          %v10124 = vunpack.c.l.b16 %v9934
          %v10125 = vunpack.c.h.b16 %v9934
          %v10126 = vunpack.c.l.b16 %v9935
          %v10127 = vunpack.c.h.b16 %v9935
          %v10128 = vunpack.c.l.b16 %v9936
          %v10129 = vunpack.c.h.b16 %v9936
          %v10130 = vunpack.c.l.b16 %v9937
          %v10131 = vunpack.c.h.b16 %v9937
          %v10132 = vunpack.c.l.b16 %v9938
          %v10133 = vunpack.c.h.b16 %v9938
          %v10134 = vunpack.c.l.b16 %v9939
          %v10135 = vunpack.c.h.b16 %v9939
          %v10136 = vpack.c.b16 %v10012, %v10008
          %v10137 = vpack.c.b16 %v10013, %v10009
          %v10138 = vpack.c.b16 %v10014, %v10010
          %v10139 = vpack.c.b16 %v10015, %v10011
          %v10140 = vpack.c.b16 %v10020, %v10016
          %v10141 = vpack.c.b16 %v10021, %v10017
          %v10142 = vpack.c.b16 %v10022, %v10018
          %v10143 = vpack.c.b16 %v10023, %v10019
          %v10144 = vpack.c.b16 %v10028, %v10024
          %v10145 = vpack.c.b16 %v10029, %v10025
          %v10146 = vpack.c.b16 %v10030, %v10026
          %v10147 = vpack.c.b16 %v10031, %v10027
          %v10148 = vpack.c.b16 %v10036, %v10032
          %v10149 = vpack.c.b16 %v10037, %v10033
          %v10150 = vpack.c.b16 %v10038, %v10034
          %v10151 = vpack.c.b16 %v10039, %v10035
          %v10152 = vpack.c.b16 %v10044, %v10040
          %v10153 = vpack.c.b16 %v10045, %v10041
          %v10154 = vpack.c.b16 %v10046, %v10042
          %v10155 = vpack.c.b16 %v10047, %v10043
          %v10156 = vpack.c.b16 %v10052, %v10048
          %v10157 = vpack.c.b16 %v10053, %v10049
          %v10158 = vpack.c.b16 %v10054, %v10050
          %v10159 = vpack.c.b16 %v10055, %v10051
          %v10160 = vpack.c.b16 %v10060, %v10056
          %v10161 = vpack.c.b16 %v10061, %v10057
          %v10162 = vpack.c.b16 %v10062, %v10058
          %v10163 = vpack.c.b16 %v10063, %v10059
          %v10164 = vpack.c.b16 %v10068, %v10064
          %v10165 = vpack.c.b16 %v10069, %v10065
          %v10166 = vpack.c.b16 %v10070, %v10066
          %v10167 = vpack.c.b16 %v10071, %v10067
          %v10168 = vpack.c.b16 %v10076, %v10072
          %v10169 = vpack.c.b16 %v10077, %v10073
          %v10170 = vpack.c.b16 %v10078, %v10074
          %v10171 = vpack.c.b16 %v10079, %v10075
          %v10172 = vpack.c.b16 %v10084, %v10080
          %v10173 = vpack.c.b16 %v10085, %v10081
          %v10174 = vpack.c.b16 %v10086, %v10082
          %v10175 = vpack.c.b16 %v10087, %v10083
          %v10176 = vpack.c.b16 %v10092, %v10088
          %v10177 = vpack.c.b16 %v10093, %v10089
          %v10178 = vpack.c.b16 %v10094, %v10090
          %v10179 = vpack.c.b16 %v10095, %v10091
          %v10180 = vpack.c.b16 %v10100, %v10096
          %v10181 = vpack.c.b16 %v10101, %v10097
          %v10182 = vpack.c.b16 %v10102, %v10098
          %v10183 = vpack.c.b16 %v10103, %v10099
          %v10184 = vpack.c.b16 %v10108, %v10104
          %v10185 = vpack.c.b16 %v10109, %v10105
          %v10186 = vpack.c.b16 %v10110, %v10106
          %v10187 = vpack.c.b16 %v10111, %v10107
          %v10188 = vpack.c.b16 %v10116, %v10112
          %v10189 = vpack.c.b16 %v10117, %v10113
          %v10190 = vpack.c.b16 %v10118, %v10114
          %v10191 = vpack.c.b16 %v10119, %v10115
          %v10192 = vpack.c.b16 %v10124, %v10120
          %v10193 = vpack.c.b16 %v10125, %v10121
          %v10194 = vpack.c.b16 %v10126, %v10122
          %v10195 = vpack.c.b16 %v10127, %v10123
          %v10196 = vpack.c.b16 %v10132, %v10128
          %v10197 = vpack.c.b16 %v10133, %v10129
          %v10198 = vpack.c.b16 %v10134, %v10130
          %v10199 = vpack.c.b16 %v10135, %v10131
          %10264 = vmatprep.subr.bf16.mxu0 %v10165
          %10265 = vmatpush1.bf16.msra.mxu0 %v10164
          %10266 = vmatprep.subr.bf16.mxu0 %v10161
          %10267 = vmatpush1.bf16.msra.mxu0 %v10160
          %10268 = vmatprep.subr.bf16.mxu0 %v10157
          %10269 = vmatpush1.bf16.msra.mxu0 %v10156
          %10270 = vmatprep.subr.bf16.mxu0 %v10153
          %10271 = vmatpush1.bf16.msra.mxu0 %v10152
          %10272 = vmatprep.subr.bf16.mxu0 %v10149
          %10273 = vmatpush1.bf16.msra.mxu0 %v10148
          %10274 = vmatprep.subr.bf16.mxu0 %v10145
          %10275 = vmatpush1.bf16.msra.mxu0 %v10144
          %10276 = vmatprep.subr.bf16.mxu0 %v10141
          %10277 = vmatpush1.bf16.msra.mxu0 %v10140
          %10278 = vmatprep.subr.bf16.mxu0 %v10137
          %10279 = vmatpush1.bf16.msra.mxu0 %v10136
          %10280 = vmatprep.subr.bf16.mxu0 %v10197
          %10281 = vmatpush2.bf16.msra.mxu0 %v10196
          %10282 = vmatprep.subr.bf16.mxu0 %v10193
          %10283 = vmatpush2.bf16.msra.mxu0 %v10192
          %10284 = vmatprep.subr.bf16.mxu0 %v10189
          %10285 = vmatpush2.bf16.msra.mxu0 %v10188
          %10286 = vmatprep.subr.bf16.mxu0 %v10185
          %10287 = vmatpush2.bf16.msra.mxu0 %v10184
          %10288 = vmatprep.subr.bf16.mxu0 %v10181
          %10289 = vmatpush2.bf16.msra.mxu0 %v10180
          %10290 = vmatprep.subr.bf16.mxu0 %v10177
          %10291 = vmatpush2.bf16.msra.mxu0 %v10176
          %10292 = vmatprep.subr.bf16.mxu0 %v10173
          %10293 = vmatpush2.bf16.msra.mxu0 %v10172
          %10294 = vmatprep.subr.bf16.mxu0 %v10169
          %10295 = vmatpush2.bf16.msra.mxu0 %v10168
          %10296 = vmatprep.mubr.bf16.mxu0 %v9941
          %10297 = vmatmul.mubr.bf16.gmra.mxu0 %v9940
          %v10298 = vpop.f32.mrf.mxu0
          %v10299 = vadd.f32 0.0, %v10298
          %v10300 = vpop.f32.mrf.mxu0
          %v10301 = vadd.f32 0.0, %v10300
          %v10302 = vpop.f32.mrf.mxu0
          %v10303 = vpop.f32.mrf.mxu0
          %10304 = vdwg.mxu0
          %10305 = vmatprep.subr.bf16.mxu0 %v10167
          %10306 = vmatpush1.bf16.msra.mxu0 %v10166
          %10307 = vmatprep.subr.bf16.mxu0 %v10163
          %10308 = vmatpush1.bf16.msra.mxu0 %v10162
          %10309 = vmatprep.subr.bf16.mxu0 %v10159
          %10310 = vmatpush1.bf16.msra.mxu0 %v10158
          %10311 = vmatprep.subr.bf16.mxu0 %v10155
          %10312 = vmatpush1.bf16.msra.mxu0 %v10154
          %10313 = vmatprep.subr.bf16.mxu0 %v10151
          %10314 = vmatpush1.bf16.msra.mxu0 %v10150
          %10315 = vmatprep.subr.bf16.mxu0 %v10147
          %10316 = vmatpush1.bf16.msra.mxu0 %v10146
          %10317 = vmatprep.subr.bf16.mxu0 %v10143
          %10318 = vmatpush1.bf16.msra.mxu0 %v10142
          %10319 = vmatprep.subr.bf16.mxu0 %v10139
          %10320 = vmatpush1.bf16.msra.mxu0 %v10138
          %10321 = vmatprep.subr.bf16.mxu0 %v10199
          %10322 = vmatpush2.bf16.msra.mxu0 %v10198
          %10323 = vmatprep.subr.bf16.mxu0 %v10195
          %10324 = vmatpush2.bf16.msra.mxu0 %v10194
          %10325 = vmatprep.subr.bf16.mxu0 %v10191
          %10326 = vmatpush2.bf16.msra.mxu0 %v10190
          %10327 = vmatprep.subr.bf16.mxu0 %v10187
          %10328 = vmatpush2.bf16.msra.mxu0 %v10186
          %10329 = vmatprep.subr.bf16.mxu0 %v10183
          %10330 = vmatpush2.bf16.msra.mxu0 %v10182
          %10331 = vmatprep.subr.bf16.mxu0 %v10179
          %10332 = vmatpush2.bf16.msra.mxu0 %v10178
          %10333 = vmatprep.subr.bf16.mxu0 %v10175
          %10334 = vmatpush2.bf16.msra.mxu0 %v10174
          %10335 = vmatprep.subr.bf16.mxu0 %v10171
          %10336 = vmatpush2.bf16.msra.mxu0 %v10170
          %10337 = vmatprep.mubr.bf16.mxu0 %v9941
          %10338 = vmatmul.mubr.bf16.gmra.mxu0 %v9940
          %v10339 = vpop.f32.mrf.mxu0
          %v10340 = vadd.f32 0.0, %v10339
          %v10341 = vpop.f32.mrf.mxu0
          %v10342 = vadd.f32 0.0, %v10341
          %v10343 = vpop.f32.mrf.mxu0
          %v10344 = vpop.f32.mrf.mxu0
          %10345 = vdwg.mxu0
          %v10350 = vcombine.low %v10299, %v10301
          %v10351 = vcombine.low %v10340, %v10342
          %v10353 = vunpack.c.l.s4 1966171168
          %v10354 = vunpack.c.0.s8 %v10353
          %v10355 = vlaneseq
          %v10356 = vshrl.u32 %v10355, 7
          %v10357 = vsub.s32 %v10354, %v10356
          %v10358 = vrot.slane %v10350, %v10357
          %v10360 = vunpack.c.l.s4 1966171168
          %v10361 = vunpack.c.0.s8 %v10360
          %v10362 = vlaneseq
          %v10363 = vshrl.u32 %v10362, 7
          %v10364 = vsub.s32 %v10361, %v10363
          %v10365 = vrot.slane %v10351, %v10364
          %v10366 = vcombine.low %v10358, %v10365
          %v10368 = vunpack.c.l.s4 1966171168
          %v10369 = vunpack.c.0.s8 %v10368
          %v10370 = vlaneseq
          %v10371 = vshrl.u32 %v10370, 7
          %v10372 = vsub.s32 %v10369, %v10371
          %v10373 = vrot.slane %v10366, %v10372
          %v10375 = vadd.f32 %v9874, %v10373
          %vm10376 = vcmp.gt.f32.partialorder %v10375, 0.0
          %v10377 = vmin.f32 %v10375, 0.0
          %v10378 = vmul.f32 %v10377, 1.442695
          %v10379 = vpow.pop %v10378
          %v10380 = vsub.f32 %v10379, 1.0
          %v10381 = vsel %vm10376, %v10375, %v10380
          %v10383 = vlaneseq
          %v10384 = vshrl.u32 %v10383, 7
          %v10385 = vsub.s32 0, %v10384
          %v10386 = vrot.slane %v10381, %v10385
          %v10387 = vlaneseq
          %v10388 = vshrl.u32 %v10387, 7
          %v10389 = vsub.s32 1, %v10388
          %v10390 = vrot.slane %v10381, %v10389
          %v10391 = vlaneseq
          %v10392 = vshrl.u32 %v10391, 7
          %v10393 = vsub.s32 2, %v10392
          %v10394 = vrot.slane %v10381, %v10393
          %v10395 = vlaneseq
          %v10396 = vshrl.u32 %v10395, 7
          %v10397 = vsub.s32 3, %v10396
          %v10398 = vrot.slane %v10381, %v10397
          %v10403 = vpack.c.bf16 %v10386, %v10386
          %v10404 = vpack.c.bf16 %v10390, %v10390
          %v10405 = vpack.c.bf16 %v10394, %v10394
          %v10406 = vpack.c.bf16 %v10398, %v10398
          %v10407 = vld [vmem:[%s19] sm:$0xf]
          %v10408 = vld [vmem:[%s19 + $0x4] sm:$0xf]
          %v10409 = vld [vmem:[%s19 + $0x8] sm:$0xf]
          %v10410 = vld [vmem:[%s19 + $0xc] sm:$0xf]
          %v10411 = vld [vmem:[%s19 + $0x10] sm:$0xf]
          %v10412 = vld [vmem:[%s19 + $0x14] sm:$0xf]
          %v10413 = vld [vmem:[%s19 + $0x18] sm:$0xf]
          %v10414 = vld [vmem:[%s19 + $0x1c] sm:$0xf]
          %v10415 = vld [vmem:[%s19 + $0x20] sm:$0xf]
          %v10416 = vld [vmem:[%s19 + $0x24] sm:$0xf]
          %v10417 = vld [vmem:[%s19 + $0x28] sm:$0xf]
          %v10418 = vld [vmem:[%s19 + $0x2c] sm:$0xf]
          %v10419 = vld [vmem:[%s19 + $0x30] sm:$0xf]
          %v10420 = vld [vmem:[%s19 + $0x34] sm:$0xf]
          %v10421 = vld [vmem:[%s19 + $0x38] sm:$0xf]
          %v10422 = vld [vmem:[%s19 + $0x3c] sm:$0xf]
          %v10423 = vld [vmem:[%s19 + $0x40] sm:$0xf]
          %v10424 = vld [vmem:[%s19 + $0x44] sm:$0xf]
          %v10425 = vld [vmem:[%s19 + $0x48] sm:$0xf]
          %v10426 = vld [vmem:[%s19 + $0x4c] sm:$0xf]
          %v10427 = vld [vmem:[%s19 + $0x50] sm:$0xf]
          %v10428 = vld [vmem:[%s19 + $0x54] sm:$0xf]
          %v10429 = vld [vmem:[%s19 + $0x58] sm:$0xf]
          %v10430 = vld [vmem:[%s19 + $0x5c] sm:$0xf]
          %v10431 = vld [vmem:[%s19 + $0x60] sm:$0xf]
          %v10432 = vld [vmem:[%s19 + $0x64] sm:$0xf]
          %v10433 = vld [vmem:[%s19 + $0x68] sm:$0xf]
          %v10434 = vld [vmem:[%s19 + $0x6c] sm:$0xf]
          %v10435 = vld [vmem:[%s19 + $0x70] sm:$0xf]
          %v10436 = vld [vmem:[%s19 + $0x74] sm:$0xf]
          %v10437 = vld [vmem:[%s19 + $0x78] sm:$0xf]
          %v10438 = vld [vmem:[%s19 + $0x7c] sm:$0xf]
          %v10439 = vld [vmem:[%s19 + $0x80] sm:$0xf]
          %v10440 = vld [vmem:[%s19 + $0x84] sm:$0xf]
          %v10441 = vld [vmem:[%s19 + $0x88] sm:$0xf]
          %v10442 = vld [vmem:[%s19 + $0x8c] sm:$0xf]
          %v10443 = vld [vmem:[%s19 + $0x90] sm:$0xf]
          %v10444 = vld [vmem:[%s19 + $0x94] sm:$0xf]
          %v10445 = vld [vmem:[%s19 + $0x98] sm:$0xf]
          %v10446 = vld [vmem:[%s19 + $0x9c] sm:$0xf]
          %v10447 = vld [vmem:[%s19 + $0xa0] sm:$0xf]
          %v10448 = vld [vmem:[%s19 + $0xa4] sm:$0xf]
          %v10449 = vld [vmem:[%s19 + $0xa8] sm:$0xf]
          %v10450 = vld [vmem:[%s19 + $0xac] sm:$0xf]
          %v10451 = vld [vmem:[%s19 + $0xb0] sm:$0xf]
          %v10452 = vld [vmem:[%s19 + $0xb4] sm:$0xf]
          %v10453 = vld [vmem:[%s19 + $0xb8] sm:$0xf]
          %v10454 = vld [vmem:[%s19 + $0xbc] sm:$0xf]
          %v10455 = vld [vmem:[%s19 + $0xc0] sm:$0xf]
          %v10456 = vld [vmem:[%s19 + $0xc4] sm:$0xf]
          %v10457 = vld [vmem:[%s19 + $0xc8] sm:$0xf]
          %v10458 = vld [vmem:[%s19 + $0xcc] sm:$0xf]
          %v10459 = vld [vmem:[%s19 + $0xd0] sm:$0xf]
          %v10460 = vld [vmem:[%s19 + $0xd4] sm:$0xf]
          %v10461 = vld [vmem:[%s19 + $0xd8] sm:$0xf]
          %v10462 = vld [vmem:[%s19 + $0xdc] sm:$0xf]
          %v10463 = vld [vmem:[%s19 + $0xe0] sm:$0xf]
          %v10464 = vld [vmem:[%s19 + $0xe4] sm:$0xf]
          %v10465 = vld [vmem:[%s19 + $0xe8] sm:$0xf]
          %v10466 = vld [vmem:[%s19 + $0xec] sm:$0xf]
          %v10467 = vld [vmem:[%s19 + $0xf0] sm:$0xf]
          %v10468 = vld [vmem:[%s19 + $0xf4] sm:$0xf]
          %v10469 = vld [vmem:[%s19 + $0xf8] sm:$0xf]
          %v10470 = vld [vmem:[%s19 + $0xfc] sm:$0xf]
          %v10471 = vld [vmem:[%s20] sm:$0x1]
          %v10536 = vunpack.c.l.b16 %v10407
          %v10537 = vunpack.c.l.b16 %v10408
          %v10538 = vunpack.c.l.b16 %v10409
          %v10539 = vunpack.c.l.b16 %v10410
          %v10540 = vunpack.c.l.b16 %v10411
          %v10541 = vunpack.c.l.b16 %v10412
          %v10542 = vunpack.c.l.b16 %v10413
          %v10543 = vunpack.c.l.b16 %v10414
          %v10544 = vunpack.c.l.b16 %v10415
          %v10545 = vunpack.c.l.b16 %v10416
          %v10546 = vunpack.c.l.b16 %v10417
          %v10547 = vunpack.c.l.b16 %v10418
          %v10548 = vunpack.c.l.b16 %v10419
          %v10549 = vunpack.c.l.b16 %v10420
          %v10550 = vunpack.c.l.b16 %v10421
          %v10551 = vunpack.c.l.b16 %v10422
          %v10552 = vunpack.c.l.b16 %v10423
          %v10553 = vunpack.c.l.b16 %v10424
          %v10554 = vunpack.c.l.b16 %v10425
          %v10555 = vunpack.c.l.b16 %v10426
          %v10556 = vunpack.c.l.b16 %v10427
          %v10557 = vunpack.c.l.b16 %v10428
          %v10558 = vunpack.c.l.b16 %v10429
          %v10559 = vunpack.c.l.b16 %v10430
          %v10560 = vunpack.c.l.b16 %v10431
          %v10561 = vunpack.c.l.b16 %v10432
          %v10562 = vunpack.c.l.b16 %v10433
          %v10563 = vunpack.c.l.b16 %v10434
          %v10564 = vunpack.c.l.b16 %v10435
          %v10565 = vunpack.c.l.b16 %v10436
          %v10566 = vunpack.c.l.b16 %v10437
          %v10567 = vunpack.c.l.b16 %v10438
          %v10568 = vunpack.c.l.b16 %v10439
          %v10569 = vunpack.c.l.b16 %v10440
          %v10570 = vunpack.c.l.b16 %v10441
          %v10571 = vunpack.c.l.b16 %v10442
          %v10572 = vunpack.c.l.b16 %v10443
          %v10573 = vunpack.c.l.b16 %v10444
          %v10574 = vunpack.c.l.b16 %v10445
          %v10575 = vunpack.c.l.b16 %v10446
          %v10576 = vunpack.c.l.b16 %v10447
          %v10577 = vunpack.c.l.b16 %v10448
          %v10578 = vunpack.c.l.b16 %v10449
          %v10579 = vunpack.c.l.b16 %v10450
          %v10580 = vunpack.c.l.b16 %v10451
          %v10581 = vunpack.c.l.b16 %v10452
          %v10582 = vunpack.c.l.b16 %v10453
          %v10583 = vunpack.c.l.b16 %v10454
          %v10584 = vunpack.c.l.b16 %v10455
          %v10585 = vunpack.c.l.b16 %v10456
          %v10586 = vunpack.c.l.b16 %v10457
          %v10587 = vunpack.c.l.b16 %v10458
          %v10588 = vunpack.c.l.b16 %v10459
          %v10589 = vunpack.c.l.b16 %v10460
          %v10590 = vunpack.c.l.b16 %v10461
          %v10591 = vunpack.c.l.b16 %v10462
          %v10592 = vunpack.c.l.b16 %v10463
          %v10593 = vunpack.c.l.b16 %v10464
          %v10594 = vunpack.c.l.b16 %v10465
          %v10595 = vunpack.c.l.b16 %v10466
          %v10596 = vunpack.c.l.b16 %v10467
          %v10597 = vunpack.c.l.b16 %v10468
          %v10598 = vunpack.c.l.b16 %v10469
          %v10599 = vunpack.c.l.b16 %v10470
          %v10600 = vpack.c.b16 %v10537, %v10536
          %v10601 = vpack.c.b16 %v10539, %v10538
          %v10602 = vpack.c.b16 %v10541, %v10540
          %v10603 = vpack.c.b16 %v10543, %v10542
          %v10604 = vpack.c.b16 %v10545, %v10544
          %v10605 = vpack.c.b16 %v10547, %v10546
          %v10606 = vpack.c.b16 %v10549, %v10548
          %v10607 = vpack.c.b16 %v10551, %v10550
          %v10608 = vpack.c.b16 %v10553, %v10552
          %v10609 = vpack.c.b16 %v10555, %v10554
          %v10610 = vpack.c.b16 %v10557, %v10556
          %v10611 = vpack.c.b16 %v10559, %v10558
          %v10612 = vpack.c.b16 %v10561, %v10560
          %v10613 = vpack.c.b16 %v10563, %v10562
          %v10614 = vpack.c.b16 %v10565, %v10564
          %v10615 = vpack.c.b16 %v10567, %v10566
          %v10616 = vpack.c.b16 %v10569, %v10568
          %v10617 = vpack.c.b16 %v10571, %v10570
          %v10618 = vpack.c.b16 %v10573, %v10572
          %v10619 = vpack.c.b16 %v10575, %v10574
          %v10620 = vpack.c.b16 %v10577, %v10576
          %v10621 = vpack.c.b16 %v10579, %v10578
          %v10622 = vpack.c.b16 %v10581, %v10580
          %v10623 = vpack.c.b16 %v10583, %v10582
          %v10624 = vpack.c.b16 %v10585, %v10584
          %v10625 = vpack.c.b16 %v10587, %v10586
          %v10626 = vpack.c.b16 %v10589, %v10588
          %v10627 = vpack.c.b16 %v10591, %v10590
          %v10628 = vpack.c.b16 %v10593, %v10592
          %v10629 = vpack.c.b16 %v10595, %v10594
          %v10630 = vpack.c.b16 %v10597, %v10596
          %v10631 = vpack.c.b16 %v10599, %v10598
          %10664 = vmatprep.subr.bf16.mxu0 0
          %10665 = vmatpush1.bf16.msra.mxu0 %v10607
          %10666 = vmatprep.subr.bf16.mxu0 0
          %10667 = vmatpush1.bf16.msra.mxu0 %v10606
          %10668 = vmatprep.subr.bf16.mxu0 0
          %10669 = vmatpush1.bf16.msra.mxu0 %v10605
          %10670 = vmatprep.subr.bf16.mxu0 0
          %10671 = vmatpush1.bf16.msra.mxu0 %v10604
          %10672 = vmatprep.subr.bf16.mxu0 0
          %10673 = vmatpush1.bf16.msra.mxu0 %v10603
          %10674 = vmatprep.subr.bf16.mxu0 0
          %10675 = vmatpush1.bf16.msra.mxu0 %v10602
          %10676 = vmatprep.subr.bf16.mxu0 0
          %10677 = vmatpush1.bf16.msra.mxu0 %v10601
          %10678 = vmatprep.subr.bf16.mxu0 0
          %10679 = vmatpush1.bf16.msra.mxu0 %v10600
          %10680 = vmatprep.subr.bf16.mxu0 0
          %10681 = vmatpush2.bf16.msra.mxu0 %v10615
          %10682 = vmatprep.subr.bf16.mxu0 0
          %10683 = vmatpush2.bf16.msra.mxu0 %v10614
          %10684 = vmatprep.subr.bf16.mxu0 0
          %10685 = vmatpush2.bf16.msra.mxu0 %v10613
          %10686 = vmatprep.subr.bf16.mxu0 0
          %10687 = vmatpush2.bf16.msra.mxu0 %v10612
          %10688 = vmatprep.subr.bf16.mxu0 0
          %10689 = vmatpush2.bf16.msra.mxu0 %v10611
          %10690 = vmatprep.subr.bf16.mxu0 0
          %10691 = vmatpush2.bf16.msra.mxu0 %v10610
          %10692 = vmatprep.subr.bf16.mxu0 0
          %10693 = vmatpush2.bf16.msra.mxu0 %v10609
          %10694 = vmatprep.subr.bf16.mxu0 0
          %10695 = vmatpush2.bf16.msra.mxu0 %v10608
          %10696 = vmatprep.mubr.bf16.mxu0 %v10404
          %10697 = vmatmul.mubr.bf16.gmra.mxu0 %v10403
          %v10698 = vpop.f32.mrf.mxu0
          %v10699 = vadd.f32 %v10471, %v10698
          %v10700 = vpop.f32.mrf.mxu0
          %v10701 = vpop.f32.mrf.mxu0
          %v10702 = vpop.f32.mrf.mxu0
          %10703 = vdwg.mxu0
          %10704 = vmatprep.subr.bf16.mxu0 0
          %10705 = vmatpush1.bf16.msra.mxu0 %v10623
          %10706 = vmatprep.subr.bf16.mxu0 0
          %10707 = vmatpush1.bf16.msra.mxu0 %v10622
          %10708 = vmatprep.subr.bf16.mxu0 0
          %10709 = vmatpush1.bf16.msra.mxu0 %v10621
          %10710 = vmatprep.subr.bf16.mxu0 0
          %10711 = vmatpush1.bf16.msra.mxu0 %v10620
          %10712 = vmatprep.subr.bf16.mxu0 0
          %10713 = vmatpush1.bf16.msra.mxu0 %v10619
          %10714 = vmatprep.subr.bf16.mxu0 0
          %10715 = vmatpush1.bf16.msra.mxu0 %v10618
          %10716 = vmatprep.subr.bf16.mxu0 0
          %10717 = vmatpush1.bf16.msra.mxu0 %v10617
          %10718 = vmatprep.subr.bf16.mxu0 0
          %10719 = vmatpush1.bf16.msra.mxu0 %v10616
          %10720 = vmatprep.subr.bf16.mxu0 0
          %10721 = vmatpush2.bf16.msra.mxu0 %v10631
          %10722 = vmatprep.subr.bf16.mxu0 0
          %10723 = vmatpush2.bf16.msra.mxu0 %v10630
          %10724 = vmatprep.subr.bf16.mxu0 0
          %10725 = vmatpush2.bf16.msra.mxu0 %v10629
          %10726 = vmatprep.subr.bf16.mxu0 0
          %10727 = vmatpush2.bf16.msra.mxu0 %v10628
          %10728 = vmatprep.subr.bf16.mxu0 0
          %10729 = vmatpush2.bf16.msra.mxu0 %v10627
          %10730 = vmatprep.subr.bf16.mxu0 0
          %10731 = vmatpush2.bf16.msra.mxu0 %v10626
          %10732 = vmatprep.subr.bf16.mxu0 0
          %10733 = vmatpush2.bf16.msra.mxu0 %v10625
          %10734 = vmatprep.subr.bf16.mxu0 0
          %10735 = vmatpush2.bf16.msra.mxu0 %v10624
          %10736 = vmatprep.mubr.bf16.mxu0 %v10406
          %10737 = vmatmul.mubr.bf16.gmra.mxu0 %v10405
          %v10738 = vpop.f32.mrf.mxu0
          %v10739 = vadd.f32 %v10699, %v10738
          %v10740 = vpop.f32.mrf.mxu0
          %v10741 = vpop.f32.mrf.mxu0
          %v10742 = vpop.f32.mrf.mxu0
          %10743 = vdwg.mxu0
          %10744 = vst [vmem:[%s946] sm:$0x1] %v10739
        $region128: #{cbramod_text_classifier_forward.1} parent=103 // pred_fallthru
          _
        %p10745 = scmp.lt.s32.totalorder %s48, 1
        %s10746 = scalar_select %p10745, %s48, 1
        %s10747 = smul.addr %s10746, 2
        %s10748 = smul.addr %s10747, 4
        %s10749 = scalar_lea.vmem %s21, %s10748
        %s10750 = sand.u32 %s596, 1
        %s10751 = scalar_lea.sflag [#allocation5], %s10750
        %s10752 = sand.u32 %s596, 1
        %s10753 = scalar_lea.vmem [#allocation11], %s10752
        // Predicated region
        $region129: #{cbramod_text_classifier_forward.1} parent=103 // pred_check
          %p10754 = pneg %p580
        $region130: #{cbramod_text_classifier_forward.1} parent=103 // pred_check_branch
          %10756 = sbr.rel (%p10754) target = $region132
        $region131: #{cbramod_text_classifier_forward.1} parent=103 // pred_region
          _
        $region132: #{cbramod_text_classifier_forward.1} parent=103 // pred_fallthru
          _
        // Predicated region
        $region133: #{cbramod_text_classifier_forward.1} parent=103 // pred_check
          %p10757 = pneg %p606
        $region134: #{cbramod_text_classifier_forward.1} parent=103 // pred_check_branch
          %10759 = sbr.rel (%p10757) target = $region136
        $region135: #{cbramod_text_classifier_forward.1} parent=103 // pred_region
          %s10761 = ssub.s32 16, 16
          %10762 = vsyncadd %s10751, %s10761
          %s10763 = smul.addr %s48, 16
          %s10764 = scalar_lea.hbm %s22, %s10763
          %s10766 = sshll.u32 %s10753, 4
          %s10767 = int_to_ptr.vmem [resolvable:$true] %s10766
          %10769 = dma.vmem_to_hbm [thread:$0]  %s10767, 16, %s10764, %s10751
        $region136: #{cbramod_text_classifier_forward.1} parent=103 // pred_fallthru
          _
      $region104: #{cbramod_text_classifier_forward.1} parent=5 // pred_fallthru
        _
      %p10770 = scmp.le.s32.totalorder 2, %s39
      // Predicated region
      $region137: #{cbramod_text_classifier_forward.1} parent=5 // pred_check
        %p10771 = pneg %p10770
      $region138: #{cbramod_text_classifier_forward.1} parent=5 // pred_check_branch
        %10773 = sbr.rel (%p10771) target = $region140
      $region139: #{cbramod_text_classifier_forward.1} parent=5 // pred_region
        %s10774 = ssub.s32 %s39, 2
        // Predicated region
        $region141: #{cbramod_text_classifier_forward.1} parent=139 // pred_check
          %p10775 = pneg %p586
        $region142: #{cbramod_text_classifier_forward.1} parent=139 // pred_check_branch
          %10777 = sbr.rel (%p10775) target = $region144
        $region143: #{cbramod_text_classifier_forward.1} parent=139 // pred_region
          %p10778 = scmp.lt.s32.totalorder %s50, 1
          %s10779 = scalar_select %p10778, %s50, 1
          %s10780 = smul.addr %s10779, 2
          %s10781 = smul.addr %s10780, 4
          %s10782 = scalar_lea.vmem %s21, %s10781
        $region144: #{cbramod_text_classifier_forward.1} parent=139 // pred_fallthru
          _
        // Predicated region
        $region145: #{cbramod_text_classifier_forward.1} parent=139 // pred_check
          %p10783 = pneg %p612
        $region146: #{cbramod_text_classifier_forward.1} parent=139 // pred_check_branch
          %10785 = sbr.rel (%p10783) target = $region148
        $region147: #{cbramod_text_classifier_forward.1} parent=139 // pred_region
          %s10786 = sand.u32 %s597, 1
          %s10787 = scalar_lea.sflag [#allocation5], %s10786
          %s10788 = sand.u32 %s597, 1
          %s10789 = scalar_lea.vmem [#allocation11], %s10788
          %10790 = dma.done %s10787, 16
        $region148: #{cbramod_text_classifier_forward.1} parent=139 // pred_fallthru
          _
      $region140: #{cbramod_text_classifier_forward.1} parent=5 // pred_fallthru
        _
    $region6: #{cbramod_text_classifier_forward.1} parent=1 // loop_footer
      %s43 = sadd.s32 1, %s39
    $region7: #{cbramod_text_classifier_forward.1} parent=1 // loop_footer_branch
      %38 = sbr.rel target = $region3
    $region8: #{cbramod_text_classifier_forward.1} parent=1 // loop_exit
      _
    %10791 = vsyncpa [#allocation4], 1
    %s10792 = scalar_lea.sflag [#allocation4], 1
    %10793 = vsyncpa %s10792, 1
    %10794 = vsyncpa [#allocation7], 1
    %s10795 = scalar_lea.sflag [#allocation7], 1
    %10796 = vsyncpa %s10795, 1
    %10797 = vsyncpa [#allocation10], 1
    %10798 = vsyncpa [#allocation5], 1
    %s10799 = scalar_lea.sflag [#allocation5], 1
    %10800 = vsyncpa %s10799, 1

</llo_original>
